<compile_context>
chip_gen: v7x
topology: tpu7x:2x2x1
jax: 0.10.0
libtpu: 0.0.40
codegen_flags: <defaults>
</compile_context>

<pallas_src>
import functools
import math

import jax
import jax.numpy as jnp
from jax.experimental import pallas as pl
from jax.experimental.pallas import tpu as pltpu

NUM_HEADS = 2                       # MultiHeadAttention(2, 25, 50)
HEAD_SIZE = 25
D_NEWS = NUM_HEADS * HEAD_SIZE      # 50 (= word_embed_size = userpre_embed_size)
SLOT = 32                           # 32-lane-aligned slot width per q/k/v-per-head block
DQKV_PAD = 3 * NUM_HEADS * SLOT     # 192 padded fused-QKV width
POOL_HID = D_NEWS // 4              # AttentionPooling fc1 out = (word_embed//2)//2 = 12


# ----------------------------------------------------------------------------------
# Kernel 1: TitleLayer core (self-attention + user-preference-query pooling)
# ----------------------------------------------------------------------------------
def title_attention_kernel(x_ref, tok_ref, u_ref, wqkv_ref, w1_ref, b1_ref, out_ref):
    """One batch tile (TB rows) per grid step.

    x_ref   : (TB, T, 50)   word embeddings of the tokens (dropout1 == identity)
    tok_ref : (TB, T) int32 token ids (0 == padding -> -1e9 key bias)
    u_ref   : (TB, 50)      user-preference embedding rows
    wqkv_ref: (50, 192)     fused [q0|q1|k0|k1|v0|v1], 25-wide slots at 32-aligned offsets
    w1_ref  : (50, 50)      dense1 weight (transposed)
    b1_ref  : (1, 50)
    out_ref : (TB, 50)      pooled self-attention output (head-concat order, lane-dense)

    NOTE: every op is row-local in the batch dim (matmuls contract features, softmaxes
    reduce over T), so ragged last blocks are safe -- garbage stays confined to rows
    Pallas drops on store.  Do not add anything that reduces across batch rows.
    """
    tb, seq, d = x_ref.shape
    scale = 1.0 / math.sqrt(HEAD_SIZE)

    # --- fused Q|K|V projection: one lane-dense MXU matmul ---
    x = x_ref[...]                                                     # (TB, T, 50)
    qkv = jnp.dot(x.reshape(tb * seq, d), wqkv_ref[...],
                  preferred_element_type=jnp.float32)                  # (TB*T, 192) f32
    qkv = qkv.reshape(tb, seq, DQKV_PAD)

    # Padding-key bias rebuilt in-kernel from the token ids (faithful masked_fill:
    # pad token -> -1e9, valid token -> 0.0).
    bias = jnp.where(tok_ref[...] == 0, -1e9, 0.0).astype(jnp.float32)[:, None, :]

    # Pooling query a = tanh(dense1(user_pre_embedding)) -- once per batch row (not per
    # token), so there is no per-token dense matmul pair in this kernel at all.
    a = jnp.tanh(jnp.dot(u_ref[...], w1_ref[...],
                         preferred_element_type=jnp.float32) + b1_ref[...])   # (TB, 50)

    pool_logits = jnp.zeros((tb, seq), jnp.float32)
    o_heads = []
    for h in range(NUM_HEADS):                                         # static 2-iter loop
        q_off = h * SLOT
        k_off = (NUM_HEADS + h) * SLOT
        v_off = (2 * NUM_HEADS + h) * SLOT
        qh = qkv[:, :, q_off:q_off + HEAD_SIZE].astype(jnp.bfloat16)   # (TB, T, 25)
        kh = qkv[:, :, k_off:k_off + HEAD_SIZE].astype(jnp.bfloat16)
        vh = qkv[:, :, v_off:v_off + HEAD_SIZE].astype(jnp.bfloat16)

        logits = jnp.einsum('bqc,bkc->bqk', qh, kh,
                            preferred_element_type=jnp.float32) * scale + bias
        m = jnp.max(logits, axis=-1, keepdims=True)
        e = jnp.exp(logits - m)
        p = e * pl.reciprocal(jnp.sum(e, axis=-1, keepdims=True), approx=True)
        oh = jnp.einsum('bqk,bkc->bqc', p.astype(jnp.bfloat16), vh,
                        preferred_element_type=jnp.float32)            # (TB, T, 25) f32
        o_heads.append(oh)

        # per-head pooling-logit contribution: VPU multiply + lane reduce (no MXU push)
        ah = a[:, h * HEAD_SIZE:(h + 1) * HEAD_SIZE]
        pool_logits = pool_logits + jnp.sum(oh * ah[:, None, :], axis=-1)

    # softmax over the sequence (not masked -- faithful to the PyTorch TitleLayer)
    pm = jnp.max(pool_logits, axis=-1, keepdims=True)
    pe = jnp.exp(pool_logits - pm)
    pw = pe * pl.reciprocal(jnp.sum(pe, axis=-1, keepdims=True), approx=True)  # (TB, T)

    # pool per head, then concatenate only the two (TB, 25) halves (lane-dense store)
    pooled = [jnp.sum(pw[:, :, None] * oh, axis=1) for oh in o_heads]
    out_ref[...] = jnp.concatenate(pooled, axis=-1).astype(out_ref.dtype)


def _fused_wqkv(wq, wk, wv, dtype):
    """(50, 192) fused projection; each 25-wide head slot at a 32-lane-aligned offset
    (zero columns in the gaps) so in-kernel slices never straddle a vreg boundary."""
    wqkv = jnp.zeros((D_NEWS, DQKV_PAD), jnp.float32)
    for r, m in enumerate((wq.T, wk.T, wv.T)):          # PyTorch Linear weight is (out,in)
        for h in range(NUM_HEADS):
            off = (r * NUM_HEADS + h) * SLOT
            wqkv = wqkv.at[:, off:off + HEAD_SIZE].set(m[:, h * HEAD_SIZE:(h + 1) * HEAD_SIZE])
    return wqkv.astype(dtype)


def _pick_block_b(batch, seq, itemsize, *, num_cores=1, row_target=8192,
                  vmem_budget_bytes=16 * 1024 * 1024):
    """Batch tile: target thousands of matmul rows/step, capped by a VMEM budget so
    block double-buffers + f32 temps stay well inside the 32 MiB scoped limit (v7x has
    only 64 MiB/TensorCore).  Single-core chips (v5e/v6e) get no forced split; pass
    num_cores=2 on v7x so the "parallel" grid axis gives each TensorCore work."""
    if batch <= 8:
        return batch
    per_row = (seq * (2 * D_NEWS * itemsize            # x block (double buffered)
                      + 2 * 4                          # token-id block (double buffered)
                      + 4 * DQKV_PAD                   # fused qkv f32 temp
                      + 2 * seq * 4                    # per-head logits / exp temps
                      + 4 * 4 * HEAD_SIZE)             # p / o_heads temps
               + 4 * 4 * D_NEWS)                       # u / a / out / pooled rows
    tb = min(batch,
             max(8, row_target // max(seq, 1)),
             max(8, vmem_budget_bytes // max(per_row, 1)))
    if num_cores > 1:
        tb = min(tb, -(-batch // num_cores))
    tb = max(8, (tb // 8) * 8)
    return min(tb, batch)


@functools.partial(jax.jit, static_argnames=("block_b", "compute_dtype", "num_cores"))
def title_layer_forward(x_embed, tokens, u_embed, wq, wk, wv, w1, b1,
                        block_b=None, compute_dtype=jnp.bfloat16, num_cores=1):
    B, T, D = x_embed.shape
    assert D == D_NEWS
    cd = compute_dtype

    wqkv = _fused_wqkv(wq, wk, wv, cd)                       # (50, 192)
    w1t = w1.T.astype(cd)                                    # (50, 50)
    b1r = b1.reshape(1, D_NEWS).astype(jnp.float32)
    x = x_embed.astype(cd)
    tok = tokens.astype(jnp.int32)
    u = u_embed.astype(cd)

    tb = (_pick_block_b(B, T, jnp.dtype(cd).itemsize, num_cores=num_cores)
          if block_b is None else min(block_b, B))
    if tb < B:
        tb = max(8, (tb // 8) * 8)                           # 8-aligned sublane block

    grid_spec = pltpu.PrefetchScalarGridSpec(
        num_scalar_prefetch=0,
        grid=(pl.cdiv(B, tb),),
        in_specs=[
            pl.BlockSpec((tb, T, D_NEWS), lambda b: (b, 0, 0)),    # x
            pl.BlockSpec((tb, T), lambda b: (b, 0)),               # token ids
            pl.BlockSpec((tb, D_NEWS), lambda b: (b, 0)),          # user-pre embedding
            pl.BlockSpec((D_NEWS, DQKV_PAD), lambda b: (0, 0)),    # fused Wqkv (padded)
            pl.BlockSpec((D_NEWS, D_NEWS), lambda b: (0, 0)),      # W1^T
            pl.BlockSpec((1, D_NEWS), lambda b: (0, 0)),           # b1
        ],
        out_specs=pl.BlockSpec((tb, D_NEWS), lambda b: (b, 0)),
    )
    return pl.pallas_call(
        title_attention_kernel,
        out_shape=jax.ShapeDtypeStruct((B, D_NEWS), jnp.float32),
        grid_spec=grid_spec,
        compiler_params=pltpu.CompilerParams(
            dimension_semantics=("parallel",),
            vmem_limit_bytes=32 * 1024 * 1024),
    )(x, tok, u, wqkv, w1t, b1r)


# ----------------------------------------------------------------------------------
# Kernel 2: final AttentionPooling over the 4-slot news embedding
# ----------------------------------------------------------------------------------
def attention_pooling_kernel(x_ref, w1_ref, b1_ref, w2_ref, b2_ref, out_ref):
    tb, s, d = x_ref.shape
    x = x_ref[...].astype(jnp.float32)                                   # (TB, S, 50)
    e = jnp.tanh(jnp.dot(x.reshape(tb * s, d), w1_ref[...],
                         preferred_element_type=jnp.float32) + b1_ref[...])   # (TB*S, 12)
    alpha = jnp.exp(jnp.dot(e, w2_ref[...],
                            preferred_element_type=jnp.float32) + b2_ref[...])
    alpha = alpha.reshape(tb, s, 1)
    alpha = alpha * pl.reciprocal(jnp.sum(alpha, axis=1, keepdims=True) + 1e-8,
                                  approx=True)
    out_ref[...] = jnp.sum(alpha * x, axis=1).astype(out_ref.dtype)


@functools.partial(jax.jit, static_argnames=("block_b",))
def attention_pooling_forward(x, fc1_w, fc1_b, fc2_w, fc2_b, block_b=None):
    B, S, D = x.shape
    Hh = fc1_w.shape[0]
    w1 = fc1_w.T.astype(jnp.float32)
    b1 = fc1_b.reshape(1, Hh).astype(jnp.float32)
    w2 = fc2_w.T.astype(jnp.float32)
    b2 = fc2_b.reshape(1, 1).astype(jnp.float32)

    tb = B if block_b is None else min(block_b, B)
    if tb < B:
        tb = max(8, (tb // 8) * 8)

    grid_spec = pltpu.PrefetchScalarGridSpec(
        num_scalar_prefetch=0,
        grid=(pl.cdiv(B, tb),),
        in_specs=[
            pl.BlockSpec((tb, S, D), lambda b: (b, 0, 0)),
            pl.BlockSpec((D, Hh), lambda b: (0, 0)),
            pl.BlockSpec((1, Hh), lambda b: (0, 0)),
            pl.BlockSpec((Hh, 1), lambda b: (0, 0)),
            pl.BlockSpec((1, 1), lambda b: (0, 0)),
        ],
        out_specs=pl.BlockSpec((tb, D), lambda b: (b, 0)),
    )
    return pl.pallas_call(
        attention_pooling_kernel,
        out_shape=jax.ShapeDtypeStruct((B, D), jnp.float32),
        grid_spec=grid_spec,
        compiler_params=pltpu.CompilerParams(
            dimension_semantics=("parallel",),
            vmem_limit_bytes=32 * 1024 * 1024),
    )(x.astype(jnp.float32), w1, b1, w2, b2)


# ----------------------------------------------------------------------------------
# NewsEncoder.forward: plain-JAX glue (embedding gathers) + the two Pallas kernels
# ----------------------------------------------------------------------------------
def news_encoder_forward(inputs, user_pre, expand_num, params, title_size, body_size,
                         compute_dtype=jnp.bfloat16, num_cores=1):
    B = inputs.shape[0]
    # TODO(synk): embedding lookups (word / user-pre / category / author) and the
    # user_pre expand are tiny plain-JAX gathers outside the kernels.
    up = jnp.repeat(user_pre, expand_num)                     # (B0,) -> (B,)
    userpre_embed = params["userpre_emb"][up]                 # (B, 50)

    title_tok = inputs[:, :title_size]
    body_tok = inputs[:, title_size:title_size + body_size]
    title_x = params["word_emb"][title_tok]                   # (B, T, 50)
    body_x = params["word_emb"][body_tok]                     # (B, Tb, 50)

    kw = dict(compute_dtype=compute_dtype, num_cores=num_cores)
    title_embed = title_layer_forward(title_x, title_tok, userpre_embed,
                                      params["Wq"], params["Wk"], params["Wv"],
                                      params["W1"], params["b1"], **kw)
    body_embed = title_layer_forward(body_x, body_tok, userpre_embed,
                                     params["Wq"], params["Wk"], params["Wv"],
                                     params["W1"], params["b1"], **kw)

    categ_embed = params["categ_emb"][inputs[:, -2]]          # (B, 50)
    author_embed = params["author_emb"][inputs[:, -1]]        # (B, 50)

    news_embed = jnp.concatenate([title_embed, body_embed, categ_embed, author_embed],
                                 axis=-1).reshape(B, -1, D_NEWS)          # (B, 4, 50)
    return attention_pooling_forward(news_embed, params["fc1_w"], params["fc1_b"],
                                     params["fc2_w"], params["fc2_b"])


# ----------------------------------------------------------------------------------
# Pure-JAX reference (mirrors the PyTorch forward) for verification
# ----------------------------------------------------------------------------------
def news_encoder_reference(inputs, user_pre, expand_num, params, title_size, body_size):
    B = inputs.shape[0]
    u = params["userpre_emb"][jnp.repeat(user_pre, expand_num)]

    def title_layer(tok):
        x = params["word_emb"][tok]
        mask = jnp.where(tok == 0, -1e9, 0.0)[:, None, None, :]
        q = x @ params["Wq"].T
        k = x @ params["Wk"].T
        v = x @ params["Wv"].T

        def split(t):
            return t.reshape(B, -1, NUM_HEADS, HEAD_SIZE).transpose(0, 2, 1, 3)

        q, k, v = split(q), split(k), split(v)
        logits = q @ k.transpose(0, 1, 3, 2) / math.sqrt(HEAD_SIZE) + mask
        w = jax.nn.softmax(logits, axis=3)
        sa = (w @ v).transpose(0, 2, 1, 3).reshape(B, -1, D_NEWS)
        a = jnp.tanh(u @ params["W1"].T + params["b1"])
        att = jnp.einsum('btd,bd->bt', sa, a)
        aw = jax.nn.softmax(att, axis=1)[:, :, None]
        return jnp.sum(aw * sa, axis=1)

    title_embed = title_layer(inputs[:, :title_size])
    body_embed = title_layer(inputs[:, title_size:title_size + body_size])
    categ_embed = params["categ_emb"][inputs[:, -2]]
    author_embed = params["author_emb"][inputs[:, -1]]
    ne = jnp.concatenate([title_embed, body_embed, categ_embed, author_embed],
                         axis=-1).reshape(B, -1, D_NEWS)
    e = jnp.tanh(ne @ params["fc1_w"].T + params["fc1_b"])
    alpha = jnp.exp(e @ params["fc2_w"].T + params["fc2_b"])
    alpha = alpha / (jnp.sum(alpha, axis=1, keepdims=True) + 1e-8)
    return jnp.sum(alpha * ne, axis=1)


if __name__ == "__main__":
    B0, EXPAND = 4, 4
    B = B0 * EXPAND                       # 16 news rows
    TITLE, BODY = 12, 20
    VOCAB, N_CATEG, N_AUTHOR, N_PREFER = 100, 20, 30, 11

    key = jax.random.PRNGKey(0)
    ks = jax.random.split(key, 20)

    def init(k, shape, fan_in):
        bound = 1.0 / math.sqrt(fan_in)
        return jax.random.uniform(k, shape, jnp.float32, -bound, bound)

    params = {
        # TitleLayer / MultiHeadAttention (PyTorch Linear weight = (out, in))
        "Wq": init(ks[0], (D_NEWS, D_NEWS), D_NEWS),
        "Wk": init(ks[1], (D_NEWS, D_NEWS), D_NEWS),
        "Wv": init(ks[2], (D_NEWS, D_NEWS), D_NEWS),
        "W1": init(ks[3], (D_NEWS, D_NEWS), D_NEWS),        # dense1: userpre 50 -> 50
        "b1": init(ks[4], (D_NEWS,), D_NEWS),
        # final AttentionPooling(d_h=50, hidden=25): fc1 50->12, fc2 12->1
        "fc1_w": init(ks[5], (POOL_HID, D_NEWS), D_NEWS),
        "fc1_b": init(ks[6], (POOL_HID,), D_NEWS),
        "fc2_w": init(ks[7], (1, POOL_HID), POOL_HID),
        "fc2_b": init(ks[8], (1,), POOL_HID),
        # embedding tables (category/author embed size 50 so cat+view(B,-1,50) is valid)
        "word_emb": 0.5 * jax.random.normal(ks[9], (VOCAB, D_NEWS), jnp.float32),
        "userpre_emb": 0.5 * jax.random.normal(ks[10], (N_PREFER, D_NEWS), jnp.float32),
        "categ_emb": 0.5 * jax.random.normal(ks[11], (N_CATEG, D_NEWS), jnp.float32),
        "author_emb": 0.5 * jax.random.normal(ks[12], (N_AUTHOR, D_NEWS), jnp.float32),
    }

    # inputs = [title tokens | body tokens | category id | author id]; token 0 == padding
    title_tok = jax.random.randint(ks[13], (B, TITLE), 1, VOCAB, dtype=jnp.int32)
    title_len = jax.random.randint(ks[14], (B,), 1, TITLE + 1, dtype=jnp.int32)
    title_tok = jnp.where(jnp.arange(TITLE)[None, :] < title_len[:, None], title_tok, 0)
    body_tok = jax.random.randint(ks[15], (B, BODY), 1, VOCAB, dtype=jnp.int32)
    body_len = jax.random.randint(ks[16], (B,), 1, BODY + 1, dtype=jnp.int32)
    body_tok = jnp.where(jnp.arange(BODY)[None, :] < body_len[:, None], body_tok, 0)
    categ_id = jax.random.randint(ks[17], (B, 1), 0, N_CATEG, dtype=jnp.int32)
    author_id = jax.random.randint(ks[18], (B, 1), 0, N_AUTHOR, dtype=jnp.int32)
    inputs = jnp.concatenate([title_tok, body_tok, categ_id, author_id], axis=1)
    user_pre = jax.random.randint(ks[19], (B0,), 0, N_PREFER, dtype=jnp.int32)

    ref = news_encoder_reference(inputs, user_pre, EXPAND, params, TITLE, BODY)

    # default: bf16-streamed inputs/weights, bf16 MXU operands, f32 softmax math
    out = news_encoder_forward(inputs, user_pre, EXPAND, params, TITLE, BODY)
    out = jax.block_until_ready(out)
    assert out.shape == (B, D_NEWS)
    assert jnp.allclose(out, ref, atol=2e-2, rtol=2e-2), "bf16 Pallas NewsEncoder mismatch"

    # f32-streamed run (attention einsums still use bf16 operands with f32 accumulation)
    out_f32 = news_encoder_forward(inputs, user_pre, EXPAND, params, TITLE, BODY,
                                   compute_dtype=jnp.float32)
    out_f32 = jax.block_until_ready(out_f32)
    assert jnp.allclose(out_f32, ref, atol=1e-2, rtol=1e-2), "f32 Pallas NewsEncoder mismatch"

    print("KERNEL_OK")
</pallas_src>

<mosaic_0001>
module attributes {stable_mosaic.version = 11 : i64} {
  func.func @title_attention_kernel(%arg0: i32, %arg1: memref<16x12x50xbf16, #tpu.memory_space<vmem>>, %arg2: memref<16x12xi32, #tpu.memory_space<vmem>>, %arg3: memref<16x50xbf16, #tpu.memory_space<vmem>>, %arg4: memref<50x192xbf16, #tpu.memory_space<vmem>>, %arg5: memref<50x50xbf16, #tpu.memory_space<vmem>>, %arg6: memref<1x50xf32, #tpu.memory_space<vmem>>, %arg7: memref<16x50xf32, #tpu.memory_space<vmem>>) attributes {dimension_semantics = [#tpu.dimension_semantics<parallel>], iteration_bounds = array<i64: 1>, scalar_prefetch = 0 : i64, scratch_operands = 0 : i64, tpu.core_type = #tpu.core_type<tc>, window_params = [{transform_indices = @transform_0, window_bounds = array<i64: 16, 12, 50>}, {transform_indices = @transform_1, window_bounds = array<i64: 16, 12>}, {transform_indices = @transform_2, window_bounds = array<i64: 16, 50>}, {pipeline_mode = #tpu.pipeline_mode<synchronous>, transform_indices = @transform_3, window_bounds = array<i64: 50, 192>}, {pipeline_mode = #tpu.pipeline_mode<synchronous>, transform_indices = @transform_4, window_bounds = array<i64: 50, 50>}, {pipeline_mode = #tpu.pipeline_mode<synchronous>, transform_indices = @transform_5, window_bounds = array<i64: 1, 50>}, {transform_indices = @transform_6, window_bounds = array<i64: 16, 50>}]} {
    %c0 = arith.constant 0 : index
    %c0_0 = arith.constant 0 : index
    %c0_1 = arith.constant 0 : index
    %0 = vector.load %arg1[%c0, %c0_0, %c0_1] : memref<16x12x50xbf16, #tpu.memory_space<vmem>>, vector<16x12x50xbf16>
    %1 = vector.shape_cast %0 : vector<16x12x50xbf16> to vector<192x50xbf16>
    %c0_2 = arith.constant 0 : index
    %c0_3 = arith.constant 0 : index
    %2 = vector.load %arg4[%c0_2, %c0_3] : memref<50x192xbf16, #tpu.memory_space<vmem>>, vector<50x192xbf16>
    %cst = arith.constant dense<0.000000e+00> : vector<192x192xf32>
    %3 = tpu.matmul %1, %2, %cst {dimension_numbers = #tpu.dot_dimension_numbers<[1], [0], [0], [1], [0, 0, 1, 1], [], []>} : vector<192x50xbf16>, vector<50x192xbf16>, vector<192x192xf32> -> vector<192x192xf32>
    %4 = vector.shape_cast %3 : vector<192x192xf32> to vector<16x12x192xf32>
    %c0_4 = arith.constant 0 : index
    %c0_5 = arith.constant 0 : index
    %5 = vector.load %arg2[%c0_4, %c0_5] : memref<16x12xi32, #tpu.memory_space<vmem>>, vector<16x12xi32>
    %c0_i32 = arith.constant 0 : i32
    %6 = vector.broadcast %c0_i32 : i32 to vector<16x12xi32>
    %7 = arith.cmpi eq, %5, %6 : vector<16x12xi32>
    %cst_6 = arith.constant -1.000000e+09 : f32
    %cst_7 = arith.constant 0.000000e+00 : f32
    %8 = vector.broadcast %cst_6 : f32 to vector<16x12xf32>
    %9 = vector.broadcast %cst_7 : f32 to vector<16x12xf32>
    %10 = arith.select %7, %8, %9 : vector<16x12xi1>, vector<16x12xf32>
    %11 = vector.shape_cast %10 : vector<16x12xf32> to vector<16x1x12xf32>
    %c0_8 = arith.constant 0 : index
    %c0_9 = arith.constant 0 : index
    %12 = vector.load %arg3[%c0_8, %c0_9] : memref<16x50xbf16, #tpu.memory_space<vmem>>, vector<16x50xbf16>
    %c0_10 = arith.constant 0 : index
    %c0_11 = arith.constant 0 : index
    %13 = vector.load %arg5[%c0_10, %c0_11] : memref<50x50xbf16, #tpu.memory_space<vmem>>, vector<50x50xbf16>
    %cst_12 = arith.constant dense<0.000000e+00> : vector<16x50xf32>
    %14 = tpu.matmul %12, %13, %cst_12 {dimension_numbers = #tpu.dot_dimension_numbers<[1], [0], [0], [1], [0, 0, 1, 1], [], []>} : vector<16x50xbf16>, vector<50x50xbf16>, vector<16x50xf32> -> vector<16x50xf32>
    %c0_13 = arith.constant 0 : index
    %c0_14 = arith.constant 0 : index
    %15 = vector.load %arg6[%c0_13, %c0_14] : memref<1x50xf32, #tpu.memory_space<vmem>>, vector<1x50xf32>
    %16 = vector.broadcast %15 : vector<1x50xf32> to vector<16x50xf32>
    %17 = arith.addf %14, %16 : vector<16x50xf32>
    %18 = math.tanh %17 : vector<16x50xf32>
    %cst_15 = arith.constant 0.000000e+00 : f32
    %19 = vector.broadcast %cst_15 : f32 to vector<16x12xf32>
    %20 = vector.extract_strided_slice %4 {offsets = [0, 0, 0], sizes = [16, 12, 25], strides = [1, 1, 1]} : vector<16x12x192xf32> to vector<16x12x25xf32>
    %21 = arith.truncf %20 : vector<16x12x25xf32> to vector<16x12x25xbf16>
    %22 = vector.extract_strided_slice %4 {offsets = [0, 0, 64], sizes = [16, 12, 25], strides = [1, 1, 1]} : vector<16x12x192xf32> to vector<16x12x25xf32>
    %23 = arith.truncf %22 : vector<16x12x25xf32> to vector<16x12x25xbf16>
    %24 = vector.extract_strided_slice %4 {offsets = [0, 0, 128], sizes = [16, 12, 25], strides = [1, 1, 1]} : vector<16x12x192xf32> to vector<16x12x25xf32>
    %25 = arith.truncf %24 : vector<16x12x25xf32> to vector<16x12x25xbf16>
    "tpu.trace_start"() <{level = 10 : i32, message = "bqc,bkc->bqk"}> : () -> ()
    %cst_16 = arith.constant dense<0.000000e+00> : vector<16x12x12xf32>
    %26 = tpu.matmul %21, %23, %cst_16 {dimension_numbers = #tpu.dot_dimension_numbers<[2], [2], [1], [1], [0, 0, 0, 1, 1, 1], [0], [0]>} : vector<16x12x25xbf16>, vector<16x12x25xbf16>, vector<16x12x12xf32> -> vector<16x12x12xf32>
    "tpu.trace_stop"() : () -> ()
    %cst_17 = arith.constant 2.000000e-01 : f32
    %27 = vector.broadcast %cst_17 : f32 to vector<16x12x12xf32>
    %28 = arith.mulf %26, %27 : vector<16x12x12xf32>
    %29 = vector.broadcast %11 : vector<16x1x12xf32> to vector<16x12x12xf32>
    %30 = arith.addf %28, %29 : vector<16x12x12xf32>
    %cst_18 = arith.constant dense<0xFF800000> : vector<16x12xf32>
    %31 = vector.multi_reduction <maximumf>, %30, %cst_18 [2] : vector<16x12x12xf32> to vector<16x12xf32>
    %32 = vector.shape_cast %31 : vector<16x12xf32> to vector<16x12x1xf32>
    %33 = vector.broadcast %32 : vector<16x12x1xf32> to vector<16x12x12xf32>
    %34 = arith.subf %30, %33 : vector<16x12x12xf32>
    %35 = math.exp %34 : vector<16x12x12xf32>
    %cst_19 = arith.constant dense<0.000000e+00> : vector<16x12xf32>
    %36 = vector.multi_reduction <add>, %35, %cst_19 [2] : vector<16x12x12xf32> to vector<16x12xf32>
    %37 = vector.shape_cast %36 : vector<16x12xf32> to vector<16x12x1xf32>
    %38 = tpu.reciprocal %37 {approx = true} : vector<16x12x1xf32> -> vector<16x12x1xf32>
    %39 = vector.broadcast %38 : vector<16x12x1xf32> to vector<16x12x12xf32>
    %40 = arith.mulf %35, %39 : vector<16x12x12xf32>
    %41 = arith.truncf %40 : vector<16x12x12xf32> to vector<16x12x12xbf16>
    "tpu.trace_start"() <{level = 10 : i32, message = "bqk,bkc->bqc"}> : () -> ()
    %cst_20 = arith.constant dense<0.000000e+00> : vector<16x12x25xf32>
    %42 = tpu.matmul %41, %25, %cst_20 {dimension_numbers = #tpu.dot_dimension_numbers<[2], [1], [1], [2], [0, 0, 0, 1, 1, 2], [0], [0]>} : vector<16x12x12xbf16>, vector<16x12x25xbf16>, vector<16x12x25xf32> -> vector<16x12x25xf32>
    "tpu.trace_stop"() : () -> ()
    %43 = vector.extract_strided_slice %18 {offsets = [0, 0], sizes = [16, 25], strides = [1, 1]} : vector<16x50xf32> to vector<16x25xf32>
    %44 = vector.shape_cast %43 : vector<16x25xf32> to vector<16x1x25xf32>
    %45 = vector.broadcast %44 : vector<16x1x25xf32> to vector<16x12x25xf32>
    %46 = arith.mulf %42, %45 : vector<16x12x25xf32>
    %cst_21 = arith.constant dense<0.000000e+00> : vector<16x12xf32>
    %47 = vector.multi_reduction <add>, %46, %cst_21 [2] : vector<16x12x25xf32> to vector<16x12xf32>
    %48 = arith.addf %19, %47 : vector<16x12xf32>
    %49 = vector.extract_strided_slice %4 {offsets = [0, 0, 32], sizes = [16, 12, 25], strides = [1, 1, 1]} : vector<16x12x192xf32> to vector<16x12x25xf32>
    %50 = arith.truncf %49 : vector<16x12x25xf32> to vector<16x12x25xbf16>
    %51 = vector.extract_strided_slice %4 {offsets = [0, 0, 96], sizes = [16, 12, 25], strides = [1, 1, 1]} : vector<16x12x192xf32> to vector<16x12x25xf32>
    %52 = arith.truncf %51 : vector<16x12x25xf32> to vector<16x12x25xbf16>
    %53 = vector.extract_strided_slice %4 {offsets = [0, 0, 160], sizes = [16, 12, 25], strides = [1, 1, 1]} : vector<16x12x192xf32> to vector<16x12x25xf32>
    %54 = arith.truncf %53 : vector<16x12x25xf32> to vector<16x12x25xbf16>
    "tpu.trace_start"() <{level = 10 : i32, message = "bqc,bkc->bqk"}> : () -> ()
    %cst_22 = arith.constant dense<0.000000e+00> : vector<16x12x12xf32>
    %55 = tpu.matmul %50, %52, %cst_22 {dimension_numbers = #tpu.dot_dimension_numbers<[2], [2], [1], [1], [0, 0, 0, 1, 1, 1], [0], [0]>} : vector<16x12x25xbf16>, vector<16x12x25xbf16>, vector<16x12x12xf32> -> vector<16x12x12xf32>
    "tpu.trace_stop"() : () -> ()
    %cst_23 = arith.constant 2.000000e-01 : f32
    %56 = vector.broadcast %cst_23 : f32 to vector<16x12x12xf32>
    %57 = arith.mulf %55, %56 : vector<16x12x12xf32>
    %58 = vector.broadcast %11 : vector<16x1x12xf32> to vector<16x12x12xf32>
    %59 = arith.addf %57, %58 : vector<16x12x12xf32>
    %cst_24 = arith.constant dense<0xFF800000> : vector<16x12xf32>
    %60 = vector.multi_reduction <maximumf>, %59, %cst_24 [2] : vector<16x12x12xf32> to vector<16x12xf32>
    %61 = vector.shape_cast %60 : vector<16x12xf32> to vector<16x12x1xf32>
    %62 = vector.broadcast %61 : vector<16x12x1xf32> to vector<16x12x12xf32>
    %63 = arith.subf %59, %62 : vector<16x12x12xf32>
    %64 = math.exp %63 : vector<16x12x12xf32>
    %cst_25 = arith.constant dense<0.000000e+00> : vector<16x12xf32>
    %65 = vector.multi_reduction <add>, %64, %cst_25 [2] : vector<16x12x12xf32> to vector<16x12xf32>
    %66 = vector.shape_cast %65 : vector<16x12xf32> to vector<16x12x1xf32>
    %67 = tpu.reciprocal %66 {approx = true} : vector<16x12x1xf32> -> vector<16x12x1xf32>
    %68 = vector.broadcast %67 : vector<16x12x1xf32> to vector<16x12x12xf32>
    %69 = arith.mulf %64, %68 : vector<16x12x12xf32>
    %70 = arith.truncf %69 : vector<16x12x12xf32> to vector<16x12x12xbf16>
    "tpu.trace_start"() <{level = 10 : i32, message = "bqk,bkc->bqc"}> : () -> ()
    %cst_26 = arith.constant dense<0.000000e+00> : vector<16x12x25xf32>
    %71 = tpu.matmul %70, %54, %cst_26 {dimension_numbers = #tpu.dot_dimension_numbers<[2], [1], [1], [2], [0, 0, 0, 1, 1, 2], [0], [0]>} : vector<16x12x12xbf16>, vector<16x12x25xbf16>, vector<16x12x25xf32> -> vector<16x12x25xf32>
    "tpu.trace_stop"() : () -> ()
    %72 = vector.extract_strided_slice %18 {offsets = [0, 25], sizes = [16, 25], strides = [1, 1]} : vector<16x50xf32> to vector<16x25xf32>
    %73 = vector.shape_cast %72 : vector<16x25xf32> to vector<16x1x25xf32>
    %74 = vector.broadcast %73 : vector<16x1x25xf32> to vector<16x12x25xf32>
    %75 = arith.mulf %71, %74 : vector<16x12x25xf32>
    %cst_27 = arith.constant dense<0.000000e+00> : vector<16x12xf32>
    %76 = vector.multi_reduction <add>, %75, %cst_27 [2] : vector<16x12x25xf32> to vector<16x12xf32>
    %77 = arith.addf %48, %76 : vector<16x12xf32>
    %cst_28 = arith.constant dense<0xFF800000> : vector<16xf32>
    %78 = vector.multi_reduction <maximumf>, %77, %cst_28 [1] : vector<16x12xf32> to vector<16xf32>
    %79 = vector.shape_cast %78 : vector<16xf32> to vector<16x1xf32>
    %80 = vector.broadcast %79 : vector<16x1xf32> to vector<16x12xf32>
    %81 = arith.subf %77, %80 : vector<16x12xf32>
    %82 = math.exp %81 : vector<16x12xf32>
    %cst_29 = arith.constant dense<0.000000e+00> : vector<16xf32>
    %83 = vector.multi_reduction <add>, %82, %cst_29 [1] : vector<16x12xf32> to vector<16xf32>
    %84 = vector.shape_cast %83 : vector<16xf32> to vector<16x1xf32>
    %85 = tpu.reciprocal %84 {approx = true} : vector<16x1xf32> -> vector<16x1xf32>
    %86 = vector.broadcast %85 : vector<16x1xf32> to vector<16x12xf32>
    %87 = arith.mulf %82, %86 : vector<16x12xf32>
    %88 = vector.shape_cast %87 : vector<16x12xf32> to vector<16x12x1xf32>
    %89 = vector.broadcast %88 : vector<16x12x1xf32> to vector<16x12x25xf32>
    %90 = arith.mulf %89, %42 : vector<16x12x25xf32>
    %cst_30 = arith.constant dense<0.000000e+00> : vector<16x25xf32>
    %91 = vector.multi_reduction <add>, %90, %cst_30 [1] : vector<16x12x25xf32> to vector<16x25xf32>
    %92 = vector.shape_cast %87 : vector<16x12xf32> to vector<16x12x1xf32>
    %93 = vector.broadcast %92 : vector<16x12x1xf32> to vector<16x12x25xf32>
    %94 = arith.mulf %93, %71 : vector<16x12x25xf32>
    %cst_31 = arith.constant dense<0.000000e+00> : vector<16x25xf32>
    %95 = vector.multi_reduction <add>, %94, %cst_31 [1] : vector<16x12x25xf32> to vector<16x25xf32>
    %96 = tpu.concatenate %91, %95 in 1 : vector<16x25xf32>, vector<16x25xf32> -> vector<16x50xf32>
    %c0_32 = arith.constant 0 : index
    %c0_33 = arith.constant 0 : index
    %97 = vector.load %arg7[%c0_32, %c0_33] : memref<16x50xf32, #tpu.memory_space<vmem>>, vector<16x50xf32>
    tpu.vector_store %arg7[%c0_32, %c0_33], %96 {strides = array<i32>} : memref<16x50xf32, #tpu.memory_space<vmem>>, vector<16x50xf32>,
    return
  }
  func.func @transform_0(%arg0: i32) -> (i32, i32, i32) {
    %c0_i32 = arith.constant 0 : i32
    %c0_i32_0 = arith.constant 0 : i32
    %c0_i32_1 = arith.constant 0 : i32
    return %arg0, %c0_i32, %c0_i32_0 : i32, i32, i32
  }
  func.func @transform_1(%arg0: i32) -> (i32, i32) {
    %c0_i32 = arith.constant 0 : i32
    %c0_i32_0 = arith.constant 0 : i32
    return %arg0, %c0_i32 : i32, i32
  }
  func.func @transform_2(%arg0: i32) -> (i32, i32) {
    %c0_i32 = arith.constant 0 : i32
    %c0_i32_0 = arith.constant 0 : i32
    return %arg0, %c0_i32 : i32, i32
  }
  func.func @transform_3(%arg0: i32) -> (i32, i32) {
    %c0_i32 = arith.constant 0 : i32
    %c0_i32_0 = arith.constant 0 : i32
    %c0_i32_1 = arith.constant 0 : i32
    return %c0_i32, %c0_i32_0 : i32, i32
  }
  func.func @transform_4(%arg0: i32) -> (i32, i32) {
    %c0_i32 = arith.constant 0 : i32
    %c0_i32_0 = arith.constant 0 : i32
    %c0_i32_1 = arith.constant 0 : i32
    return %c0_i32, %c0_i32_0 : i32, i32
  }
  func.func @transform_5(%arg0: i32) -> (i32, i32) {
    %c0_i32 = arith.constant 0 : i32
    %c0_i32_0 = arith.constant 0 : i32
    %c0_i32_1 = arith.constant 0 : i32
    return %c0_i32, %c0_i32_0 : i32, i32
  }
  func.func @transform_6(%arg0: i32) -> (i32, i32) {
    %c0_i32 = arith.constant 0 : i32
    %c0_i32_0 = arith.constant 0 : i32
    return %arg0, %c0_i32 : i32, i32
  }
}

</mosaic_0001>

<llo_original>
// kernel: title_layer_forward.1
$region0: #{title_layer_forward.1}
  #allocation0 [shape = 'u32[]', space=smem, size = 0x4, offset = 0x4, fixed_abs, tag = 'smem constant byte address 0x4 - core index']
  #allocation1 [shape = 'u32[144,128]{1,0:T(1,128)}', space=vmem, size = 0x12000, scoped, tag = 'internal scratch']
  %s0 = inlined_call_operand.vmem [shape: bf16[16,12,50], index: 0, kind: input, shape index: {}]
  %s1 = inlined_call_operand.vmem [shape: s32[16,12], index: 1, kind: input, shape index: {}]
  %s2 = inlined_call_operand.vmem [shape: bf16[16,50], index: 2, kind: input, shape index: {}]
  %s3 = inlined_call_operand.vmem [shape: bf16[50,192], index: 3, kind: input, shape index: {}]
  %s4 = inlined_call_operand.vmem [shape: bf16[50,50], index: 4, kind: input, shape index: {}]
  %s5 = inlined_call_operand.vmem [shape: f32[1,50], index: 5, kind: input, shape index: {}]
  %s6 = inlined_call_operand.hbm [shape: f32[16,50], index: 6, kind: output, shape index: {}]
  %s7 = sld [smem:[#allocation0]]
  $region34: #{title_layer_forward.1} parent=0
    _
  %s9 = ssub.s32 1, %s7
  %s10 = scalar_select 0, %s9, %s7
  $region1: #{title_layer_forward.1} parent=0
    #allocation2 [shape = 'u8[8192]{0}', space=vmem, size = 0x2000, scoped, tag = 'output window, operand 0, single buffered']
    #allocation3 [shape = 's32[1]{0}', space=sflag, size = 0x4, scoped, tag = 'scoped memory for title_layer_forward.1']
    %11 = vsyncpa [#allocation3], 0
    // Predicated region
    $region2: #{title_layer_forward.1} parent=1 // pred_check
      _
    $region3: #{title_layer_forward.1} parent=1 // pred_check_branch
      %13 = sbr.rel (0) target = $region5
    $region4: #{title_layer_forward.1} parent=1 // pred_region
      _
    $region5: #{title_layer_forward.1} parent=1 // pred_fallthru
      _
    // Predicated region
    $region6: #{title_layer_forward.1} parent=1 // pred_check
      _
    $region7: #{title_layer_forward.1} parent=1 // pred_check_branch
      %15 = sbr.rel (0) target = $region9
    $region8: #{title_layer_forward.1} parent=1 // pred_region
      _
    $region9: #{title_layer_forward.1} parent=1 // pred_fallthru
      _
    // Predicated region
    $region10: #{title_layer_forward.1} parent=1 // pred_check
      _
    $region11: #{title_layer_forward.1} parent=1 // pred_check_branch
      %17 = sbr.rel (0) target = $region13
    $region12: #{title_layer_forward.1} parent=1 // pred_region
      _
    $region13: #{title_layer_forward.1} parent=1 // pred_fallthru
      _
    // Predicated region
    $region14: #{title_layer_forward.1} parent=1 // pred_check
      _
    $region15: #{title_layer_forward.1} parent=1 // pred_check_branch
      %19 = sbr.rel (0) target = $region17
    $region16: #{title_layer_forward.1} parent=1 // pred_region
      _
    $region17: #{title_layer_forward.1} parent=1 // pred_fallthru
      _
    // Predicated region
    $region18: #{title_layer_forward.1} parent=1 // pred_check
      _
    $region19: #{title_layer_forward.1} parent=1 // pred_check_branch
      %21 = sbr.rel (0) target = $region21
    $region20: #{title_layer_forward.1} parent=1 // pred_region
      _
    $region21: #{title_layer_forward.1} parent=1 // pred_fallthru
      _
    // Predicated region
    $region22: #{title_layer_forward.1} parent=1 // pred_check
      _
    $region23: #{title_layer_forward.1} parent=1 // pred_check_branch
      %23 = sbr.rel (0) target = $region25
    $region24: #{title_layer_forward.1} parent=1 // pred_region
      _
    $region25: #{title_layer_forward.1} parent=1 // pred_fallthru
      _
    %v25 = vld [vmem:[%s0] sm:$0xf]
    %v26 = vld [vmem:[%s0 + $0x4] sm:$0x3]
    %v27 = vld [vmem:[%s0 + $0x8] sm:$0xf]
    %v28 = vld [vmem:[%s0 + $0xc] sm:$0x3]
    %v29 = vld [vmem:[%s0 + $0x10] sm:$0xf]
    %v30 = vld [vmem:[%s0 + $0x14] sm:$0x3]
    %v31 = vld [vmem:[%s0 + $0x18] sm:$0xf]
    %v32 = vld [vmem:[%s0 + $0x1c] sm:$0x3]
    %v33 = vld [vmem:[%s0 + $0x20] sm:$0xf]
    %v34 = vld [vmem:[%s0 + $0x24] sm:$0x3]
    %v35 = vld [vmem:[%s0 + $0x28] sm:$0xf]
    %v36 = vld [vmem:[%s0 + $0x2c] sm:$0x3]
    %v37 = vld [vmem:[%s0 + $0x30] sm:$0xf]
    %v38 = vld [vmem:[%s0 + $0x34] sm:$0x3]
    %v39 = vld [vmem:[%s0 + $0x38] sm:$0xf]
    %v40 = vld [vmem:[%s0 + $0x3c] sm:$0x3]
    %v41 = vld [vmem:[%s0 + $0x40] sm:$0xf]
    %v42 = vld [vmem:[%s0 + $0x44] sm:$0x3]
    %v43 = vld [vmem:[%s0 + $0x48] sm:$0xf]
    %v44 = vld [vmem:[%s0 + $0x4c] sm:$0x3]
    %v45 = vld [vmem:[%s0 + $0x50] sm:$0xf]
    %v46 = vld [vmem:[%s0 + $0x54] sm:$0x3]
    %v47 = vld [vmem:[%s0 + $0x58] sm:$0xf]
    %v48 = vld [vmem:[%s0 + $0x5c] sm:$0x3]
    %v49 = vld [vmem:[%s0 + $0x60] sm:$0xf]
    %v50 = vld [vmem:[%s0 + $0x64] sm:$0x3]
    %v51 = vld [vmem:[%s0 + $0x68] sm:$0xf]
    %v52 = vld [vmem:[%s0 + $0x6c] sm:$0x3]
    %v53 = vld [vmem:[%s0 + $0x70] sm:$0xf]
    %v54 = vld [vmem:[%s0 + $0x74] sm:$0x3]
    %v55 = vld [vmem:[%s0 + $0x78] sm:$0xf]
    %v56 = vld [vmem:[%s0 + $0x7c] sm:$0x3]
    %v90 = vunpack.c.l.s4 1983009808
    %v91 = vunpack.c.0.s8 %v90
    %v92 = vlaneseq
    %v93 = vshrl.u32 %v92, 7
    %v94 = vsub.s32 %v91, %v93
    %v95 = vrot.slane %v25, %v94
    %v96 = vcombine.high %v95, %v95
    %v98 = vunpack.c.l.s4 1983009808
    %v99 = vunpack.c.0.s8 %v98
    %v100 = vlaneseq
    %v101 = vshrl.u32 %v100, 7
    %v102 = vsub.s32 %v99, %v101
    %v103 = vrot.slane %v26, %v102
    %v105 = vunpack.c.l.s4 1983009808
    %v106 = vunpack.c.0.s8 %v105
    %v107 = vlaneseq
    %v108 = vshrl.u32 %v107, 7
    %v109 = vsub.s32 %v106, %v108
    %v110 = vrot.slane %v27, %v109
    %v111 = vcombine.high %v110, %v110
    %v113 = vunpack.c.l.s4 1983009808
    %v114 = vunpack.c.0.s8 %v113
    %v115 = vlaneseq
    %v116 = vshrl.u32 %v115, 7
    %v117 = vsub.s32 %v114, %v116
    %v118 = vrot.slane %v28, %v117
    %v120 = vunpack.c.l.s4 1983009808
    %v121 = vunpack.c.0.s8 %v120
    %v122 = vlaneseq
    %v123 = vshrl.u32 %v122, 7
    %v124 = vsub.s32 %v121, %v123
    %v125 = vrot.slane %v29, %v124
    %v126 = vcombine.high %v125, %v125
    %v128 = vunpack.c.l.s4 1983009808
    %v129 = vunpack.c.0.s8 %v128
    %v130 = vlaneseq
    %v131 = vshrl.u32 %v130, 7
    %v132 = vsub.s32 %v129, %v131
    %v133 = vrot.slane %v30, %v132
    %v135 = vunpack.c.l.s4 1983009808
    %v136 = vunpack.c.0.s8 %v135
    %v137 = vlaneseq
    %v138 = vshrl.u32 %v137, 7
    %v139 = vsub.s32 %v136, %v138
    %v140 = vrot.slane %v31, %v139
    %v141 = vcombine.high %v140, %v140
    %v143 = vunpack.c.l.s4 1983009808
    %v144 = vunpack.c.0.s8 %v143
    %v145 = vlaneseq
    %v146 = vshrl.u32 %v145, 7
    %v147 = vsub.s32 %v144, %v146
    %v148 = vrot.slane %v32, %v147
    %v150 = vunpack.c.l.s4 1983009808
    %v151 = vunpack.c.0.s8 %v150
    %v152 = vlaneseq
    %v153 = vshrl.u32 %v152, 7
    %v154 = vsub.s32 %v151, %v153
    %v155 = vrot.slane %v33, %v154
    %v156 = vcombine.high %v155, %v155
    %v158 = vunpack.c.l.s4 1983009808
    %v159 = vunpack.c.0.s8 %v158
    %v160 = vlaneseq
    %v161 = vshrl.u32 %v160, 7
    %v162 = vsub.s32 %v159, %v161
    %v163 = vrot.slane %v34, %v162
    %v165 = vunpack.c.l.s4 1983009808
    %v166 = vunpack.c.0.s8 %v165
    %v167 = vlaneseq
    %v168 = vshrl.u32 %v167, 7
    %v169 = vsub.s32 %v166, %v168
    %v170 = vrot.slane %v35, %v169
    %v171 = vcombine.high %v170, %v170
    %v173 = vunpack.c.l.s4 1983009808
    %v174 = vunpack.c.0.s8 %v173
    %v175 = vlaneseq
    %v176 = vshrl.u32 %v175, 7
    %v177 = vsub.s32 %v174, %v176
    %v178 = vrot.slane %v36, %v177
    %v180 = vunpack.c.l.s4 1983009808
    %v181 = vunpack.c.0.s8 %v180
    %v182 = vlaneseq
    %v183 = vshrl.u32 %v182, 7
    %v184 = vsub.s32 %v181, %v183
    %v185 = vrot.slane %v37, %v184
    %v186 = vcombine.high %v185, %v185
    %v188 = vunpack.c.l.s4 1983009808
    %v189 = vunpack.c.0.s8 %v188
    %v190 = vlaneseq
    %v191 = vshrl.u32 %v190, 7
    %v192 = vsub.s32 %v189, %v191
    %v193 = vrot.slane %v38, %v192
    %v195 = vunpack.c.l.s4 1983009808
    %v196 = vunpack.c.0.s8 %v195
    %v197 = vlaneseq
    %v198 = vshrl.u32 %v197, 7
    %v199 = vsub.s32 %v196, %v198
    %v200 = vrot.slane %v39, %v199
    %v201 = vcombine.high %v200, %v200
    %v203 = vunpack.c.l.s4 1983009808
    %v204 = vunpack.c.0.s8 %v203
    %v205 = vlaneseq
    %v206 = vshrl.u32 %v205, 7
    %v207 = vsub.s32 %v204, %v206
    %v208 = vrot.slane %v40, %v207
    %v210 = vunpack.c.l.s4 1983009808
    %v211 = vunpack.c.0.s8 %v210
    %v212 = vlaneseq
    %v213 = vshrl.u32 %v212, 7
    %v214 = vsub.s32 %v211, %v213
    %v215 = vrot.slane %v41, %v214
    %v216 = vcombine.high %v215, %v215
    %v218 = vunpack.c.l.s4 1983009808
    %v219 = vunpack.c.0.s8 %v218
    %v220 = vlaneseq
    %v221 = vshrl.u32 %v220, 7
    %v222 = vsub.s32 %v219, %v221
    %v223 = vrot.slane %v42, %v222
    %v225 = vunpack.c.l.s4 1983009808
    %v226 = vunpack.c.0.s8 %v225
    %v227 = vlaneseq
    %v228 = vshrl.u32 %v227, 7
    %v229 = vsub.s32 %v226, %v228
    %v230 = vrot.slane %v43, %v229
    %v231 = vcombine.high %v230, %v230
    %v233 = vunpack.c.l.s4 1983009808
    %v234 = vunpack.c.0.s8 %v233
    %v235 = vlaneseq
    %v236 = vshrl.u32 %v235, 7
    %v237 = vsub.s32 %v234, %v236
    %v238 = vrot.slane %v44, %v237
    %v240 = vunpack.c.l.s4 1983009808
    %v241 = vunpack.c.0.s8 %v240
    %v242 = vlaneseq
    %v243 = vshrl.u32 %v242, 7
    %v244 = vsub.s32 %v241, %v243
    %v245 = vrot.slane %v45, %v244
    %v246 = vcombine.high %v245, %v245
    %v248 = vunpack.c.l.s4 1983009808
    %v249 = vunpack.c.0.s8 %v248
    %v250 = vlaneseq
    %v251 = vshrl.u32 %v250, 7
    %v252 = vsub.s32 %v249, %v251
    %v253 = vrot.slane %v46, %v252
    %v255 = vunpack.c.l.s4 1983009808
    %v256 = vunpack.c.0.s8 %v255
    %v257 = vlaneseq
    %v258 = vshrl.u32 %v257, 7
    %v259 = vsub.s32 %v256, %v258
    %v260 = vrot.slane %v47, %v259
    %v261 = vcombine.high %v260, %v260
    %v263 = vunpack.c.l.s4 1983009808
    %v264 = vunpack.c.0.s8 %v263
    %v265 = vlaneseq
    %v266 = vshrl.u32 %v265, 7
    %v267 = vsub.s32 %v264, %v266
    %v268 = vrot.slane %v48, %v267
    %v270 = vunpack.c.l.s4 1983009808
    %v271 = vunpack.c.0.s8 %v270
    %v272 = vlaneseq
    %v273 = vshrl.u32 %v272, 7
    %v274 = vsub.s32 %v271, %v273
    %v275 = vrot.slane %v49, %v274
    %v276 = vcombine.high %v275, %v275
    %v278 = vunpack.c.l.s4 1983009808
    %v279 = vunpack.c.0.s8 %v278
    %v280 = vlaneseq
    %v281 = vshrl.u32 %v280, 7
    %v282 = vsub.s32 %v279, %v281
    %v283 = vrot.slane %v50, %v282
    %v285 = vunpack.c.l.s4 1983009808
    %v286 = vunpack.c.0.s8 %v285
    %v287 = vlaneseq
    %v288 = vshrl.u32 %v287, 7
    %v289 = vsub.s32 %v286, %v288
    %v290 = vrot.slane %v51, %v289
    %v291 = vcombine.high %v290, %v290
    %v293 = vunpack.c.l.s4 1983009808
    %v294 = vunpack.c.0.s8 %v293
    %v295 = vlaneseq
    %v296 = vshrl.u32 %v295, 7
    %v297 = vsub.s32 %v294, %v296
    %v298 = vrot.slane %v52, %v297
    %v300 = vunpack.c.l.s4 1983009808
    %v301 = vunpack.c.0.s8 %v300
    %v302 = vlaneseq
    %v303 = vshrl.u32 %v302, 7
    %v304 = vsub.s32 %v301, %v303
    %v305 = vrot.slane %v53, %v304
    %v306 = vcombine.high %v305, %v305
    %v308 = vunpack.c.l.s4 1983009808
    %v309 = vunpack.c.0.s8 %v308
    %v310 = vlaneseq
    %v311 = vshrl.u32 %v310, 7
    %v312 = vsub.s32 %v309, %v311
    %v313 = vrot.slane %v54, %v312
    %v315 = vunpack.c.l.s4 1983009808
    %v316 = vunpack.c.0.s8 %v315
    %v317 = vlaneseq
    %v318 = vshrl.u32 %v317, 7
    %v319 = vsub.s32 %v316, %v318
    %v320 = vrot.slane %v55, %v319
    %v321 = vcombine.high %v320, %v320
    %v323 = vunpack.c.l.s4 1983009808
    %v324 = vunpack.c.0.s8 %v323
    %v325 = vlaneseq
    %v326 = vshrl.u32 %v325, 7
    %v327 = vsub.s32 %v324, %v326
    %v328 = vrot.slane %v56, %v327
    %v329 = vld [vmem:[%s3] sm:$0xff]
    %v330 = vld [vmem:[%s3 + $0x8] sm:$0xff]
    %v331 = vld [vmem:[%s3 + $0x10] sm:$0xff]
    %v332 = vld [vmem:[%s3 + $0x18] sm:$0xff]
    %v333 = vld [vmem:[%s3 + $0x20] sm:$0xff]
    %v334 = vld [vmem:[%s3 + $0x28] sm:$0xff]
    %v335 = vld [vmem:[%s3 + $0x30] sm:$0x11]
    %v336 = vcombine.low %v95, %v96
    %v337 = vcombine.low %v103, %v110
    %v339 = vunpack.c.l.s4 1983009808
    %v340 = vunpack.c.0.s8 %v339
    %v341 = vlaneseq
    %v342 = vshrl.u32 %v341, 7
    %v343 = vsub.s32 %v340, %v342
    %v344 = vrot.slane %v336, %v343
    %v346 = vunpack.c.l.s4 1983009808
    %v347 = vunpack.c.0.s8 %v346
    %v348 = vlaneseq
    %v349 = vshrl.u32 %v348, 7
    %v350 = vsub.s32 %v347, %v349
    %v351 = vrot.slane %v337, %v350
    %v352 = vcombine.low %v344, %v351
    %v353 = vcombine.low %v111, %v118
    %v354 = vcombine.low %v125, %v126
    %v356 = vunpack.c.l.s4 1983009808
    %v357 = vunpack.c.0.s8 %v356
    %v358 = vlaneseq
    %v359 = vshrl.u32 %v358, 7
    %v360 = vsub.s32 %v357, %v359
    %v361 = vrot.slane %v353, %v360
    %v363 = vunpack.c.l.s4 1983009808
    %v364 = vunpack.c.0.s8 %v363
    %v365 = vlaneseq
    %v366 = vshrl.u32 %v365, 7
    %v367 = vsub.s32 %v364, %v366
    %v368 = vrot.slane %v354, %v367
    %v369 = vcombine.low %v361, %v368
    %v370 = vcombine.low %v133, %v140
    %v371 = vcombine.low %v141, %v148
    %v373 = vunpack.c.l.s4 1983009808
    %v374 = vunpack.c.0.s8 %v373
    %v375 = vlaneseq
    %v376 = vshrl.u32 %v375, 7
    %v377 = vsub.s32 %v374, %v376
    %v378 = vrot.slane %v370, %v377
    %v380 = vunpack.c.l.s4 1983009808
    %v381 = vunpack.c.0.s8 %v380
    %v382 = vlaneseq
    %v383 = vshrl.u32 %v382, 7
    %v384 = vsub.s32 %v381, %v383
    %v385 = vrot.slane %v371, %v384
    %v386 = vcombine.low %v378, %v385
    %v387 = vcombine.low %v155, %v156
    %v388 = vcombine.low %v163, %v170
    %v390 = vunpack.c.l.s4 1983009808
    %v391 = vunpack.c.0.s8 %v390
    %v392 = vlaneseq
    %v393 = vshrl.u32 %v392, 7
    %v394 = vsub.s32 %v391, %v393
    %v395 = vrot.slane %v387, %v394
    %v397 = vunpack.c.l.s4 1983009808
    %v398 = vunpack.c.0.s8 %v397
    %v399 = vlaneseq
    %v400 = vshrl.u32 %v399, 7
    %v401 = vsub.s32 %v398, %v400
    %v402 = vrot.slane %v388, %v401
    %v403 = vcombine.low %v395, %v402
    %v404 = vcombine.low %v171, %v178
    %v405 = vcombine.low %v185, %v186
    %v407 = vunpack.c.l.s4 1983009808
    %v408 = vunpack.c.0.s8 %v407
    %v409 = vlaneseq
    %v410 = vshrl.u32 %v409, 7
    %v411 = vsub.s32 %v408, %v410
    %v412 = vrot.slane %v404, %v411
    %v414 = vunpack.c.l.s4 1983009808
    %v415 = vunpack.c.0.s8 %v414
    %v416 = vlaneseq
    %v417 = vshrl.u32 %v416, 7
    %v418 = vsub.s32 %v415, %v417
    %v419 = vrot.slane %v405, %v418
    %v420 = vcombine.low %v412, %v419
    %v421 = vcombine.low %v193, %v200
    %v422 = vcombine.low %v201, %v208
    %v424 = vunpack.c.l.s4 1983009808
    %v425 = vunpack.c.0.s8 %v424
    %v426 = vlaneseq
    %v427 = vshrl.u32 %v426, 7
    %v428 = vsub.s32 %v425, %v427
    %v429 = vrot.slane %v421, %v428
    %v431 = vunpack.c.l.s4 1983009808
    %v432 = vunpack.c.0.s8 %v431
    %v433 = vlaneseq
    %v434 = vshrl.u32 %v433, 7
    %v435 = vsub.s32 %v432, %v434
    %v436 = vrot.slane %v422, %v435
    %v437 = vcombine.low %v429, %v436
    %v438 = vcombine.low %v215, %v216
    %v439 = vcombine.low %v223, %v230
    %v441 = vunpack.c.l.s4 1983009808
    %v442 = vunpack.c.0.s8 %v441
    %v443 = vlaneseq
    %v444 = vshrl.u32 %v443, 7
    %v445 = vsub.s32 %v442, %v444
    %v446 = vrot.slane %v438, %v445
    %v448 = vunpack.c.l.s4 1983009808
    %v449 = vunpack.c.0.s8 %v448
    %v450 = vlaneseq
    %v451 = vshrl.u32 %v450, 7
    %v452 = vsub.s32 %v449, %v451
    %v453 = vrot.slane %v439, %v452
    %v454 = vcombine.low %v446, %v453
    %v455 = vcombine.low %v231, %v238
    %v456 = vcombine.low %v245, %v246
    %v458 = vunpack.c.l.s4 1983009808
    %v459 = vunpack.c.0.s8 %v458
    %v460 = vlaneseq
    %v461 = vshrl.u32 %v460, 7
    %v462 = vsub.s32 %v459, %v461
    %v463 = vrot.slane %v455, %v462
    %v465 = vunpack.c.l.s4 1983009808
    %v466 = vunpack.c.0.s8 %v465
    %v467 = vlaneseq
    %v468 = vshrl.u32 %v467, 7
    %v469 = vsub.s32 %v466, %v468
    %v470 = vrot.slane %v456, %v469
    %v471 = vcombine.low %v463, %v470
    %v472 = vcombine.low %v253, %v260
    %v473 = vcombine.low %v261, %v268
    %v475 = vunpack.c.l.s4 1983009808
    %v476 = vunpack.c.0.s8 %v475
    %v477 = vlaneseq
    %v478 = vshrl.u32 %v477, 7
    %v479 = vsub.s32 %v476, %v478
    %v480 = vrot.slane %v472, %v479
    %v482 = vunpack.c.l.s4 1983009808
    %v483 = vunpack.c.0.s8 %v482
    %v484 = vlaneseq
    %v485 = vshrl.u32 %v484, 7
    %v486 = vsub.s32 %v483, %v485
    %v487 = vrot.slane %v473, %v486
    %v488 = vcombine.low %v480, %v487
    %v489 = vcombine.low %v275, %v276
    %v490 = vcombine.low %v283, %v290
    %v492 = vunpack.c.l.s4 1983009808
    %v493 = vunpack.c.0.s8 %v492
    %v494 = vlaneseq
    %v495 = vshrl.u32 %v494, 7
    %v496 = vsub.s32 %v493, %v495
    %v497 = vrot.slane %v489, %v496
    %v499 = vunpack.c.l.s4 1983009808
    %v500 = vunpack.c.0.s8 %v499
    %v501 = vlaneseq
    %v502 = vshrl.u32 %v501, 7
    %v503 = vsub.s32 %v500, %v502
    %v504 = vrot.slane %v490, %v503
    %v505 = vcombine.low %v497, %v504
    %v506 = vcombine.low %v291, %v298
    %v507 = vcombine.low %v305, %v306
    %v509 = vunpack.c.l.s4 1983009808
    %v510 = vunpack.c.0.s8 %v509
    %v511 = vlaneseq
    %v512 = vshrl.u32 %v511, 7
    %v513 = vsub.s32 %v510, %v512
    %v514 = vrot.slane %v506, %v513
    %v516 = vunpack.c.l.s4 1983009808
    %v517 = vunpack.c.0.s8 %v516
    %v518 = vlaneseq
    %v519 = vshrl.u32 %v518, 7
    %v520 = vsub.s32 %v517, %v519
    %v521 = vrot.slane %v507, %v520
    %v522 = vcombine.low %v514, %v521
    %v523 = vcombine.low %v313, %v320
    %v524 = vcombine.low %v321, %v328
    %v526 = vunpack.c.l.s4 1983009808
    %v527 = vunpack.c.0.s8 %v526
    %v528 = vlaneseq
    %v529 = vshrl.u32 %v528, 7
    %v530 = vsub.s32 %v527, %v529
    %v531 = vrot.slane %v523, %v530
    %v533 = vunpack.c.l.s4 1983009808
    %v534 = vunpack.c.0.s8 %v533
    %v535 = vlaneseq
    %v536 = vshrl.u32 %v535, 7
    %v537 = vsub.s32 %v534, %v536
    %v538 = vrot.slane %v524, %v537
    %v539 = vcombine.low %v531, %v538
    %v547 = vunpack.c.l.b16 %v329
    %v548 = vunpack.c.h.b16 %v329
    %v549 = vunpack.c.l.b16 %v330
    %v550 = vunpack.c.h.b16 %v330
    %v551 = vunpack.c.l.b16 %v331
    %v552 = vunpack.c.h.b16 %v331
    %v553 = vunpack.c.l.b16 %v332
    %v554 = vunpack.c.h.b16 %v332
    %v555 = vunpack.c.l.b16 %v333
    %v556 = vunpack.c.h.b16 %v333
    %v557 = vunpack.c.l.b16 %v334
    %v558 = vunpack.c.h.b16 %v334
    %v559 = vunpack.c.l.b16 %v335
    %v560 = vunpack.c.h.b16 %v335
    %v561 = vpack.c.b16 %v549, %v547
    %v562 = vpack.c.b16 %v550, %v548
    %v563 = vpack.c.b16 %v553, %v551
    %v564 = vpack.c.b16 %v554, %v552
    %v565 = vpack.c.b16 %v557, %v555
    %v566 = vpack.c.b16 %v558, %v556
    %v567 = vpack.c.b16 %v559, %v559
    %v568 = vpack.c.b16 %v560, %v560
    %vm575 = vcmask 408576
    %v577 = vsel %vm575, %v352, 0
    %v580 = vsel %vm575, %v369, 0
    %v583 = vsel %vm575, %v386, 0
    %v586 = vsel %vm575, %v403, 0
    %v589 = vsel %vm575, %v420, 0
    %v592 = vsel %vm575, %v437, 0
    %v595 = vsel %vm575, %v454, 0
    %v598 = vsel %vm575, %v471, 0
    %v601 = vsel %vm575, %v488, 0
    %v604 = vsel %vm575, %v505, 0
    %v607 = vsel %vm575, %v522, 0
    %v610 = vsel %vm575, %v539, 0
    %vm612 = vcmask 1040384
    %v614 = vsel %vm612, %v567, 0
    %v617 = vsel %vm612, %v568, 0
    %619 = vmatprep.subr.bf16.mxu0 %v562
    %620 = vmatpush1.bf16.msra.mxu0 %v561
    %621 = vmatprep.subr.bf16.mxu0 %v564
    %622 = vmatpush1.bf16.msra.mxu0 %v563
    %623 = vmatprep.subr.bf16.mxu0 %v566
    %624 = vmatpush1.bf16.msra.mxu0 %v565
    %625 = vmatprep.subr.bf16.mxu0 %v617
    %626 = vmatpush1.bf16.msra.mxu0 %v614
    %627 = vmatprep.subr.bf16.mxu0 0
    %628 = vmatpush1.bf16.msra.mxu0 0
    %629 = vmatprep.subr.bf16.mxu0 0
    %630 = vmatpush1.bf16.msra.mxu0 0
    %631 = vmatprep.subr.bf16.mxu0 0
    %632 = vmatpush1.bf16.msra.mxu0 0
    %633 = vmatprep.subr.bf16.mxu0 0
    %634 = vmatpush1.bf16.msra.mxu0 0
    %635 = vmatprep.subr.bf16.mxu0 0
    %636 = vmatpush1.bf16.msra.mxu0 0
    %637 = vmatprep.subr.bf16.mxu0 0
    %638 = vmatpush1.bf16.msra.mxu0 0
    %639 = vmatprep.subr.bf16.mxu0 0
    %640 = vmatpush1.bf16.msra.mxu0 0
    %641 = vmatprep.subr.bf16.mxu0 0
    %642 = vmatpush1.bf16.msra.mxu0 0
    %643 = vmatprep.subr.bf16.mxu0 0
    %644 = vmatpush1.bf16.msra.mxu0 0
    %645 = vmatprep.subr.bf16.mxu0 0
    %646 = vmatpush1.bf16.msra.mxu0 0
    %647 = vmatprep.subr.bf16.mxu0 0
    %648 = vmatpush1.bf16.msra.mxu0 0
    %649 = vmatprep.subr.bf16.mxu0 0
    %650 = vmatpush1.bf16.msra.mxu0 0
    %651 = vmatprep.mubr.bf16.mxu0 0
    %652 = vmatmul.mubr.bf16.gmra.mrb[0].mxu0 %v577
    %v653 = vpop.f32.mrb[0].mxu0
    %v654 = vadd.f32 0.0, %v653
    %v655 = vpop.f32.mrb[0].mxu0
    %v656 = vadd.f32 0.0, %v655
    %v657 = vpop.f32.mrb[0].mxu0
    %v658 = vadd.f32 0.0, %v657
    %v659 = vpop.f32.mrb[0].mxu0
    %v660 = vadd.f32 0.0, %v659
    %661 = vmatprep.mubr.bf16.mxu0 0
    %662 = vmatmul.mubr.bf16.gmra.mrb[0].mxu0 %v580
    %v663 = vpop.f32.mrb[0].mxu0
    %v664 = vadd.f32 0.0, %v663
    %v665 = vpop.f32.mrb[0].mxu0
    %v666 = vadd.f32 0.0, %v665
    %v667 = vpop.f32.mrb[0].mxu0
    %v668 = vadd.f32 0.0, %v667
    %v669 = vpop.f32.mrb[0].mxu0
    %v670 = vadd.f32 0.0, %v669
    %671 = vmatprep.mubr.bf16.mxu0 0
    %672 = vmatmul.mubr.bf16.gmra.mrb[0].mxu0 %v583
    %v673 = vpop.f32.mrb[0].mxu0
    %v674 = vadd.f32 0.0, %v673
    %v675 = vpop.f32.mrb[0].mxu0
    %v676 = vadd.f32 0.0, %v675
    %v677 = vpop.f32.mrb[0].mxu0
    %v678 = vadd.f32 0.0, %v677
    %v679 = vpop.f32.mrb[0].mxu0
    %v680 = vadd.f32 0.0, %v679
    %681 = vmatprep.mubr.bf16.mxu0 0
    %682 = vmatmul.mubr.bf16.gmra.mrb[0].mxu0 %v586
    %v683 = vpop.f32.mrb[0].mxu0
    %v684 = vadd.f32 0.0, %v683
    %v685 = vpop.f32.mrb[0].mxu0
    %v686 = vadd.f32 0.0, %v685
    %v687 = vpop.f32.mrb[0].mxu0
    %v688 = vadd.f32 0.0, %v687
    %v689 = vpop.f32.mrb[0].mxu0
    %v690 = vadd.f32 0.0, %v689
    %691 = vmatprep.mubr.bf16.mxu0 0
    %692 = vmatmul.mubr.bf16.gmra.mrb[0].mxu0 %v589
    %v693 = vpop.f32.mrb[0].mxu0
    %v694 = vadd.f32 0.0, %v693
    %v695 = vpop.f32.mrb[0].mxu0
    %v696 = vadd.f32 0.0, %v695
    %v697 = vpop.f32.mrb[0].mxu0
    %v698 = vadd.f32 0.0, %v697
    %v699 = vpop.f32.mrb[0].mxu0
    %v700 = vadd.f32 0.0, %v699
    %701 = vmatprep.mubr.bf16.mxu0 0
    %702 = vmatmul.mubr.bf16.gmra.mrb[0].mxu0 %v592
    %v703 = vpop.f32.mrb[0].mxu0
    %v704 = vadd.f32 0.0, %v703
    %v705 = vpop.f32.mrb[0].mxu0
    %v706 = vadd.f32 0.0, %v705
    %v707 = vpop.f32.mrb[0].mxu0
    %v708 = vadd.f32 0.0, %v707
    %v709 = vpop.f32.mrb[0].mxu0
    %v710 = vadd.f32 0.0, %v709
    %711 = vmatprep.mubr.bf16.mxu0 0
    %712 = vmatmul.mubr.bf16.gmra.mrb[0].mxu0 %v595
    %v713 = vpop.f32.mrb[0].mxu0
    %v714 = vadd.f32 0.0, %v713
    %v715 = vpop.f32.mrb[0].mxu0
    %v716 = vadd.f32 0.0, %v715
    %v717 = vpop.f32.mrb[0].mxu0
    %v718 = vadd.f32 0.0, %v717
    %v719 = vpop.f32.mrb[0].mxu0
    %v720 = vadd.f32 0.0, %v719
    %721 = vmatprep.mubr.bf16.mxu0 0
    %722 = vmatmul.mubr.bf16.gmra.mrb[0].mxu0 %v598
    %v723 = vpop.f32.mrb[0].mxu0
    %v724 = vadd.f32 0.0, %v723
    %v725 = vpop.f32.mrb[0].mxu0
    %v726 = vadd.f32 0.0, %v725
    %v727 = vpop.f32.mrb[0].mxu0
    %v728 = vadd.f32 0.0, %v727
    %v729 = vpop.f32.mrb[0].mxu0
    %v730 = vadd.f32 0.0, %v729
    %731 = vmatprep.mubr.bf16.mxu0 0
    %732 = vmatmul.mubr.bf16.gmra.mrb[0].mxu0 %v601
    %v733 = vpop.f32.mrb[0].mxu0
    %v734 = vadd.f32 0.0, %v733
    %v735 = vpop.f32.mrb[0].mxu0
    %v736 = vadd.f32 0.0, %v735
    %v737 = vpop.f32.mrb[0].mxu0
    %v738 = vadd.f32 0.0, %v737
    %v739 = vpop.f32.mrb[0].mxu0
    %v740 = vadd.f32 0.0, %v739
    %741 = vmatprep.mubr.bf16.mxu0 0
    %742 = vmatmul.mubr.bf16.gmra.mrb[0].mxu0 %v604
    %v743 = vpop.f32.mrb[0].mxu0
    %v744 = vadd.f32 0.0, %v743
    %v745 = vpop.f32.mrb[0].mxu0
    %v746 = vadd.f32 0.0, %v745
    %v747 = vpop.f32.mrb[0].mxu0
    %v748 = vadd.f32 0.0, %v747
    %v749 = vpop.f32.mrb[0].mxu0
    %v750 = vadd.f32 0.0, %v749
    %751 = vmatprep.mubr.bf16.mxu0 0
    %752 = vmatmul.mubr.bf16.gmra.mrb[0].mxu0 %v607
    %v753 = vpop.f32.mrb[0].mxu0
    %v754 = vadd.f32 0.0, %v753
    %v755 = vpop.f32.mrb[0].mxu0
    %v756 = vadd.f32 0.0, %v755
    %v757 = vpop.f32.mrb[0].mxu0
    %v758 = vadd.f32 0.0, %v757
    %v759 = vpop.f32.mrb[0].mxu0
    %v760 = vadd.f32 0.0, %v759
    %761 = vmatprep.mubr.bf16.mxu0 0
    %762 = vmatmul.mubr.bf16.gmra.mrb[0].mxu0 %v610
    %v763 = vpop.f32.mrb[0].mxu0
    %v764 = vadd.f32 0.0, %v763
    %v765 = vpop.f32.mrb[0].mxu0
    %v766 = vadd.f32 0.0, %v765
    %v767 = vpop.f32.mrb[0].mxu0
    %v768 = vadd.f32 0.0, %v767
    %v769 = vpop.f32.mrb[0].mxu0
    %v770 = vadd.f32 0.0, %v769
    %771 = vdwg.mxu0
    %v820 = vcombine.low %v654, %v656
    %v821 = vcombine.high %v654, %v656
    %v822 = vcombine.low %v658, %v660
    %v823 = vcombine.high %v658, %v660
    %v824 = vcombine.low %v664, %v666
    %v825 = vcombine.high %v664, %v666
    %v826 = vcombine.low %v668, %v670
    %v827 = vcombine.high %v668, %v670
    %v828 = vcombine.low %v674, %v676
    %v829 = vcombine.high %v674, %v676
    %v830 = vcombine.low %v678, %v680
    %v831 = vcombine.high %v678, %v680
    %v832 = vcombine.low %v684, %v686
    %v833 = vcombine.high %v684, %v686
    %v834 = vcombine.low %v688, %v690
    %v835 = vcombine.high %v688, %v690
    %v836 = vcombine.low %v694, %v696
    %v837 = vcombine.high %v694, %v696
    %v838 = vcombine.low %v698, %v700
    %v839 = vcombine.high %v698, %v700
    %v840 = vcombine.low %v704, %v706
    %v841 = vcombine.high %v704, %v706
    %v842 = vcombine.low %v708, %v710
    %v843 = vcombine.high %v708, %v710
    %v844 = vcombine.low %v714, %v716
    %v845 = vcombine.high %v714, %v716
    %v846 = vcombine.low %v718, %v720
    %v847 = vcombine.high %v718, %v720
    %v848 = vcombine.low %v724, %v726
    %v849 = vcombine.high %v724, %v726
    %v850 = vcombine.low %v728, %v730
    %v851 = vcombine.high %v728, %v730
    %v852 = vcombine.low %v734, %v736
    %v853 = vcombine.high %v734, %v736
    %v854 = vcombine.low %v738, %v740
    %v855 = vcombine.high %v738, %v740
    %v856 = vcombine.low %v744, %v746
    %v857 = vcombine.high %v744, %v746
    %v858 = vcombine.low %v748, %v750
    %v859 = vcombine.high %v748, %v750
    %v860 = vcombine.low %v754, %v756
    %v861 = vcombine.high %v754, %v756
    %v862 = vcombine.low %v758, %v760
    %v863 = vcombine.high %v758, %v760
    %v864 = vcombine.low %v764, %v766
    %v865 = vcombine.high %v764, %v766
    %v866 = vcombine.low %v768, %v770
    %v867 = vcombine.high %v768, %v770
    %v884 = vld [vmem:[%s1] sm:$0xff]
    %v885 = vld [vmem:[%s1 + $0x8] sm:$0xff]
    %vm886 = vcmp.eq.s32.totalorder %v884, 0
    %vm887 = vcmp.eq.s32.totalorder %v885, 0
    %v888 = vsel %vm886, -1e+09, 0.0
    %v889 = vsel %vm887, -1e+09, 0.0
    %v892 = vcombine.high %v888, %v888
    %v894 = vunpack.c.l.s4 1966171168
    %v895 = vunpack.c.0.s8 %v894
    %v896 = vlaneseq
    %v897 = vshrl.u32 %v896, 7
    %v898 = vsub.s32 %v895, %v897
    %v899 = vrot.slane %v888, %v898
    %v901 = vunpack.c.l.s4 1966171168
    %v902 = vunpack.c.0.s8 %v901
    %v903 = vlaneseq
    %v904 = vshrl.u32 %v903, 7
    %v905 = vsub.s32 %v902, %v904
    %v906 = vrot.slane %v892, %v905
    %v907 = vcombine.high %v899, %v899
    %v908 = vcombine.high %v906, %v906
    %v910 = vunpack.c.l.s4 1966171168
    %v911 = vunpack.c.0.s8 %v910
    %v912 = vlaneseq
    %v913 = vshrl.u32 %v912, 7
    %v914 = vsub.s32 %v911, %v913
    %v915 = vrot.slane %v899, %v914
    %v917 = vunpack.c.l.s4 1966171168
    %v918 = vunpack.c.0.s8 %v917
    %v919 = vlaneseq
    %v920 = vshrl.u32 %v919, 7
    %v921 = vsub.s32 %v918, %v920
    %v922 = vrot.slane %v906, %v921
    %v924 = vunpack.c.l.s4 1966171168
    %v925 = vunpack.c.0.s8 %v924
    %v926 = vlaneseq
    %v927 = vshrl.u32 %v926, 7
    %v928 = vsub.s32 %v925, %v927
    %v929 = vrot.slane %v907, %v928
    %v931 = vunpack.c.l.s4 1966171168
    %v932 = vunpack.c.0.s8 %v931
    %v933 = vlaneseq
    %v934 = vshrl.u32 %v933, 7
    %v935 = vsub.s32 %v932, %v934
    %v936 = vrot.slane %v908, %v935
    %v937 = vcombine.high %v915, %v915
    %v938 = vcombine.high %v922, %v922
    %v939 = vcombine.high %v929, %v929
    %v940 = vcombine.high %v936, %v936
    %v941 = vcombine.high %v889, %v889
    %v943 = vunpack.c.l.s4 1966171168
    %v944 = vunpack.c.0.s8 %v943
    %v945 = vlaneseq
    %v946 = vshrl.u32 %v945, 7
    %v947 = vsub.s32 %v944, %v946
    %v948 = vrot.slane %v889, %v947
    %v950 = vunpack.c.l.s4 1966171168
    %v951 = vunpack.c.0.s8 %v950
    %v952 = vlaneseq
    %v953 = vshrl.u32 %v952, 7
    %v954 = vsub.s32 %v951, %v953
    %v955 = vrot.slane %v941, %v954
    %v956 = vcombine.high %v948, %v948
    %v957 = vcombine.high %v955, %v955
    %v959 = vunpack.c.l.s4 1966171168
    %v960 = vunpack.c.0.s8 %v959
    %v961 = vlaneseq
    %v962 = vshrl.u32 %v961, 7
    %v963 = vsub.s32 %v960, %v962
    %v964 = vrot.slane %v948, %v963
    %v966 = vunpack.c.l.s4 1966171168
    %v967 = vunpack.c.0.s8 %v966
    %v968 = vlaneseq
    %v969 = vshrl.u32 %v968, 7
    %v970 = vsub.s32 %v967, %v969
    %v971 = vrot.slane %v955, %v970
    %v973 = vunpack.c.l.s4 1966171168
    %v974 = vunpack.c.0.s8 %v973
    %v975 = vlaneseq
    %v976 = vshrl.u32 %v975, 7
    %v977 = vsub.s32 %v974, %v976
    %v978 = vrot.slane %v956, %v977
    %v980 = vunpack.c.l.s4 1966171168
    %v981 = vunpack.c.0.s8 %v980
    %v982 = vlaneseq
    %v983 = vshrl.u32 %v982, 7
    %v984 = vsub.s32 %v981, %v983
    %v985 = vrot.slane %v957, %v984
    %v986 = vcombine.high %v964, %v964
    %v987 = vcombine.high %v971, %v971
    %v988 = vcombine.high %v978, %v978
    %v989 = vcombine.high %v985, %v985
    %v990 = vld [vmem:[%s2] sm:$0xf]
    %v991 = vld [vmem:[%s2 + $0x4] sm:$0xf]
    %v992 = vld [vmem:[%s4] sm:$0xf]
    %v993 = vld [vmem:[%s4 + $0x4] sm:$0xf]
    %v994 = vld [vmem:[%s4 + $0x8] sm:$0xf]
    %v995 = vld [vmem:[%s4 + $0xc] sm:$0xf]
    %v996 = vld [vmem:[%s4 + $0x10] sm:$0xf]
    %v997 = vld [vmem:[%s4 + $0x14] sm:$0xf]
    %v998 = vld [vmem:[%s4 + $0x18] sm:$0x1]
    %v999 = vld [vmem:[%s5] sm:$0x1]
    %v1001 = vlaneseq
    %v1002 = vshrl.u32 %v1001, 7
    %v1003 = vsub.s32 0, %v1002
    %v1004 = vrot.slane %v999, %v1003
    %v1008 = vunpack.c.l.b16 %v990
    %v1009 = vunpack.c.l.b16 %v991
    %v1010 = vpack.c.b16 %v1009, %v1008
    %v1018 = vunpack.c.l.b16 %v992
    %v1019 = vunpack.c.l.b16 %v993
    %v1020 = vunpack.c.l.b16 %v994
    %v1021 = vunpack.c.l.b16 %v995
    %v1022 = vunpack.c.l.b16 %v996
    %v1023 = vunpack.c.l.b16 %v997
    %v1024 = vunpack.c.l.b16 %v998
    %v1025 = vpack.c.b16 %v1019, %v1018
    %v1026 = vpack.c.b16 %v1021, %v1020
    %v1027 = vpack.c.b16 %v1023, %v1022
    %v1028 = vpack.c.b16 %v1024, %v1024
    %v1033 = vsel %vm575, %v1010, 0
    %v1036 = vsel %vm612, %v1028, 0
    %1038 = vmatprep.subr.bf16.mxu0 0
    %1039 = vmatpush1.bf16.msra.mxu0 %v1025
    %1040 = vmatprep.subr.bf16.mxu0 0
    %1041 = vmatpush1.bf16.msra.mxu0 %v1026
    %1042 = vmatprep.subr.bf16.mxu0 0
    %1043 = vmatpush1.bf16.msra.mxu0 %v1027
    %1044 = vmatprep.subr.bf16.mxu0 0
    %1045 = vmatpush1.bf16.msra.mxu0 %v1036
    %1046 = vmatprep.subr.bf16.mxu0 0
    %1047 = vmatpush1.bf16.msra.mxu0 0
    %1048 = vmatprep.subr.bf16.mxu0 0
    %1049 = vmatpush1.bf16.msra.mxu0 0
    %1050 = vmatprep.subr.bf16.mxu0 0
    %1051 = vmatpush1.bf16.msra.mxu0 0
    %1052 = vmatprep.subr.bf16.mxu0 0
    %1053 = vmatpush1.bf16.msra.mxu0 0
    %1054 = vmatprep.subr.bf16.mxu0 0
    %1055 = vmatpush1.bf16.msra.mxu0 0
    %1056 = vmatprep.subr.bf16.mxu0 0
    %1057 = vmatpush1.bf16.msra.mxu0 0
    %1058 = vmatprep.subr.bf16.mxu0 0
    %1059 = vmatpush1.bf16.msra.mxu0 0
    %1060 = vmatprep.subr.bf16.mxu0 0
    %1061 = vmatpush1.bf16.msra.mxu0 0
    %1062 = vmatprep.subr.bf16.mxu0 0
    %1063 = vmatpush1.bf16.msra.mxu0 0
    %1064 = vmatprep.subr.bf16.mxu0 0
    %1065 = vmatpush1.bf16.msra.mxu0 0
    %1066 = vmatprep.subr.bf16.mxu0 0
    %1067 = vmatpush1.bf16.msra.mxu0 0
    %1068 = vmatprep.subr.bf16.mxu0 0
    %1069 = vmatpush1.bf16.msra.mxu0 0
    %1070 = vmatprep.mubr.bf16.mxu0 0
    %1071 = vmatmul.mubr.bf16.gmra.mrb[0].mxu0 %v1033
    %v1072 = vpop.f32.mrb[0].mxu0
    %v1073 = vadd.f32 %v1004, %v1072
    %v1074 = vpop.f32.mrb[0].mxu0
    %v1075 = vpop.f32.mrb[0].mxu0
    %v1076 = vadd.f32 %v1004, %v1075
    %v1077 = vpop.f32.mrb[0].mxu0
    %1078 = vdwg.mxu0
    %v1079 = vtanh.pop %v1073
    %v1080 = vtanh.pop %v1076
    %v1081 = vcombine.low %v820, %v821
    %v1082 = vcombine.low %v823, %v824
    %v1083 = vcombine.low %v826, %v827
    %v1084 = vcombine.low %v829, %v830
    %v1085 = vcombine.low %v832, %v833
    %v1086 = vcombine.low %v835, %v836
    %v1087 = vcombine.low %v838, %v839
    %v1088 = vcombine.low %v841, %v842
    %v1089 = vcombine.low %v844, %v845
    %v1090 = vcombine.low %v847, %v848
    %v1091 = vcombine.low %v850, %v851
    %v1092 = vcombine.low %v853, %v854
    %v1093 = vcombine.low %v856, %v857
    %v1094 = vcombine.low %v859, %v860
    %v1095 = vcombine.low %v862, %v863
    %v1096 = vcombine.low %v865, %v866
    %v1113 = vpack.c.bf16 %v822, %v1081
    %v1114 = vpack.c.bf16 %v825, %v1082
    %v1115 = vpack.c.bf16 %v828, %v1083
    %v1116 = vpack.c.bf16 %v831, %v1084
    %v1117 = vpack.c.bf16 %v834, %v1085
    %v1118 = vpack.c.bf16 %v837, %v1086
    %v1119 = vpack.c.bf16 %v840, %v1087
    %v1120 = vpack.c.bf16 %v843, %v1088
    %v1121 = vpack.c.bf16 %v846, %v1089
    %v1122 = vpack.c.bf16 %v849, %v1090
    %v1123 = vpack.c.bf16 %v852, %v1091
    %v1124 = vpack.c.bf16 %v855, %v1092
    %v1125 = vpack.c.bf16 %v858, %v1093
    %v1126 = vpack.c.bf16 %v861, %v1094
    %v1127 = vpack.c.bf16 %v864, %v1095
    %v1128 = vpack.c.bf16 %v867, %v1096
    %v1129 = vcombine.high %v820, %v821
    %v1130 = vcombine.high %v822, %v822
    %v1131 = vcombine.high %v823, %v824
    %v1132 = vcombine.high %v825, %v825
    %v1133 = vcombine.high %v826, %v827
    %v1134 = vcombine.high %v828, %v828
    %v1135 = vcombine.high %v829, %v830
    %v1136 = vcombine.high %v831, %v831
    %v1137 = vcombine.high %v832, %v833
    %v1138 = vcombine.high %v834, %v834
    %v1139 = vcombine.high %v835, %v836
    %v1140 = vcombine.high %v837, %v837
    %v1141 = vcombine.high %v838, %v839
    %v1142 = vcombine.high %v840, %v840
    %v1143 = vcombine.high %v841, %v842
    %v1144 = vcombine.high %v843, %v843
    %v1145 = vcombine.high %v844, %v845
    %v1146 = vcombine.high %v846, %v846
    %v1147 = vcombine.high %v847, %v848
    %v1148 = vcombine.high %v849, %v849
    %v1149 = vcombine.high %v850, %v851
    %v1150 = vcombine.high %v852, %v852
    %v1151 = vcombine.high %v853, %v854
    %v1152 = vcombine.high %v855, %v855
    %v1153 = vcombine.high %v856, %v857
    %v1154 = vcombine.high %v858, %v858
    %v1155 = vcombine.high %v859, %v860
    %v1156 = vcombine.high %v861, %v861
    %v1157 = vcombine.high %v862, %v863
    %v1158 = vcombine.high %v864, %v864
    %v1159 = vcombine.high %v865, %v866
    %v1160 = vcombine.high %v867, %v867
    %v1193 = vpack.c.bf16 %v1130, %v1129
    %v1194 = vpack.c.bf16 %v1132, %v1131
    %v1195 = vpack.c.bf16 %v1134, %v1133
    %v1196 = vpack.c.bf16 %v1136, %v1135
    %v1197 = vpack.c.bf16 %v1138, %v1137
    %v1198 = vpack.c.bf16 %v1140, %v1139
    %v1199 = vpack.c.bf16 %v1142, %v1141
    %v1200 = vpack.c.bf16 %v1144, %v1143
    %v1201 = vpack.c.bf16 %v1146, %v1145
    %v1202 = vpack.c.bf16 %v1148, %v1147
    %v1203 = vpack.c.bf16 %v1150, %v1149
    %v1204 = vpack.c.bf16 %v1152, %v1151
    %v1205 = vpack.c.bf16 %v1154, %v1153
    %v1206 = vpack.c.bf16 %v1156, %v1155
    %v1207 = vpack.c.bf16 %v1158, %v1157
    %v1208 = vpack.c.bf16 %v1160, %v1159
    %1210 = vrot.lane.b32.xlu0 %v1113, 64
    %v1211 = vpop.permute.xlu0 %1210
    %vm1212 = vcmask 203776
    %v1214 = vsel %vm1212, %v1113, 0
    %v1217 = vsel %vm1212, %v1211, 0
    %1219 = vmatprep.subr.bf16.mxu0 0
    %1220 = vmatpush1.bf16.xpose.msra.mxu0 %v1217
    %1221 = vmatprep.subr.bf16.mxu0 0
    %1222 = vmatpush1.bf16.xpose.msra.mxu0 0
    %1223 = vmatprep.subr.bf16.mxu0 0
    %1224 = vmatpush1.bf16.xpose.msra.mxu0 0
    %1225 = vmatprep.subr.bf16.mxu0 0
    %1226 = vmatpush1.bf16.xpose.msra.mxu0 0
    %1227 = vmatprep.subr.bf16.mxu0 0
    %1228 = vmatpush1.bf16.xpose.msra.mxu0 0
    %1229 = vmatprep.subr.bf16.mxu0 0
    %1230 = vmatpush1.bf16.xpose.msra.mxu0 0
    %1231 = vmatprep.subr.bf16.mxu0 0
    %1232 = vmatpush1.bf16.xpose.msra.mxu0 0
    %1233 = vmatprep.subr.bf16.mxu0 0
    %1234 = vmatpush1.bf16.xpose.msra.mxu0 0
    %1235 = vmatprep.subr.bf16.mxu0 0
    %1236 = vmatpush1.bf16.xpose.msra.mxu0 0
    %1237 = vmatprep.subr.bf16.mxu0 0
    %1238 = vmatpush1.bf16.xpose.msra.mxu0 0
    %1239 = vmatprep.subr.bf16.mxu0 0
    %1240 = vmatpush1.bf16.xpose.msra.mxu0 0
    %1241 = vmatprep.subr.bf16.mxu0 0
    %1242 = vmatpush1.bf16.xpose.msra.mxu0 0
    %1243 = vmatprep.subr.bf16.mxu0 0
    %1244 = vmatpush1.bf16.xpose.msra.mxu0 0
    %1245 = vmatprep.subr.bf16.mxu0 0
    %1246 = vmatpush1.bf16.xpose.msra.mxu0 0
    %1247 = vmatprep.subr.bf16.mxu0 0
    %1248 = vmatpush1.bf16.xpose.msra.mxu0 0
    %1249 = vmatprep.subr.bf16.mxu0 0
    %1250 = vmatpush1.bf16.xpose.msra.mxu0 0
    %1251 = vmatprep.mubr.bf16.mxu0 0
    %1252 = vmatmul.mubr.bf16.gmra.mrb[0].mxu0 %v1214
    %v1253 = vpop.f32.mrb[0].mxu0
    %v1254 = vadd.f32 0.0, %v1253
    %v1255 = vpop.f32.mrb[0].mxu0
    %v1256 = vpop.f32.mrb[0].mxu0
    %v1257 = vadd.f32 0.0, %v1256
    %v1258 = vpop.f32.mrb[0].mxu0
    %1259 = vdwg.mxu0
    %1261 = vrot.lane.b32.xlu0 %v1114, 64
    %v1262 = vpop.permute.xlu0 %1261
    %v1264 = vsel %vm1212, %v1114, 0
    %v1267 = vsel %vm1212, %v1262, 0
    %1269 = vmatprep.subr.bf16.mxu0 0
    %1270 = vmatpush1.bf16.xpose.msra.mxu0 %v1267
    %1271 = vmatprep.subr.bf16.mxu0 0
    %1272 = vmatpush1.bf16.xpose.msra.mxu0 0
    %1273 = vmatprep.subr.bf16.mxu0 0
    %1274 = vmatpush1.bf16.xpose.msra.mxu0 0
    %1275 = vmatprep.subr.bf16.mxu0 0
    %1276 = vmatpush1.bf16.xpose.msra.mxu0 0
    %1277 = vmatprep.subr.bf16.mxu0 0
    %1278 = vmatpush1.bf16.xpose.msra.mxu0 0
    %1279 = vmatprep.subr.bf16.mxu0 0
    %1280 = vmatpush1.bf16.xpose.msra.mxu0 0
    %1281 = vmatprep.subr.bf16.mxu0 0
    %1282 = vmatpush1.bf16.xpose.msra.mxu0 0
    %1283 = vmatprep.subr.bf16.mxu0 0
    %1284 = vmatpush1.bf16.xpose.msra.mxu0 0
    %1285 = vmatprep.subr.bf16.mxu0 0
    %1286 = vmatpush1.bf16.xpose.msra.mxu0 0
    %1287 = vmatprep.subr.bf16.mxu0 0
    %1288 = vmatpush1.bf16.xpose.msra.mxu0 0
    %1289 = vmatprep.subr.bf16.mxu0 0
    %1290 = vmatpush1.bf16.xpose.msra.mxu0 0
    %1291 = vmatprep.subr.bf16.mxu0 0
    %1292 = vmatpush1.bf16.xpose.msra.mxu0 0
    %1293 = vmatprep.subr.bf16.mxu0 0
    %1294 = vmatpush1.bf16.xpose.msra.mxu0 0
    %1295 = vmatprep.subr.bf16.mxu0 0
    %1296 = vmatpush1.bf16.xpose.msra.mxu0 0
    %1297 = vmatprep.subr.bf16.mxu0 0
    %1298 = vmatpush1.bf16.xpose.msra.mxu0 0
    %1299 = vmatprep.subr.bf16.mxu0 0
    %1300 = vmatpush1.bf16.xpose.msra.mxu0 0
    %1301 = vmatprep.mubr.bf16.mxu0 0
    %1302 = vmatmul.mubr.bf16.gmra.mrb[0].mxu0 %v1264
    %v1303 = vpop.f32.mrb[0].mxu0
    %v1304 = vadd.f32 0.0, %v1303
    %v1305 = vpop.f32.mrb[0].mxu0
    %v1306 = vpop.f32.mrb[0].mxu0
    %v1307 = vadd.f32 0.0, %v1306
    %v1308 = vpop.f32.mrb[0].mxu0
    %1309 = vdwg.mxu0
    %1311 = vrot.lane.b32.xlu0 %v1115, 64
    %v1312 = vpop.permute.xlu0 %1311
    %v1314 = vsel %vm1212, %v1115, 0
    %v1317 = vsel %vm1212, %v1312, 0
    %1319 = vmatprep.subr.bf16.mxu0 0
    %1320 = vmatpush1.bf16.xpose.msra.mxu0 %v1317
    %1321 = vmatprep.subr.bf16.mxu0 0
    %1322 = vmatpush1.bf16.xpose.msra.mxu0 0
    %1323 = vmatprep.subr.bf16.mxu0 0
    %1324 = vmatpush1.bf16.xpose.msra.mxu0 0
    %1325 = vmatprep.subr.bf16.mxu0 0
    %1326 = vmatpush1.bf16.xpose.msra.mxu0 0
    %1327 = vmatprep.subr.bf16.mxu0 0
    %1328 = vmatpush1.bf16.xpose.msra.mxu0 0
    %1329 = vmatprep.subr.bf16.mxu0 0
    %1330 = vmatpush1.bf16.xpose.msra.mxu0 0
    %1331 = vmatprep.subr.bf16.mxu0 0
    %1332 = vmatpush1.bf16.xpose.msra.mxu0 0
    %1333 = vmatprep.subr.bf16.mxu0 0
    %1334 = vmatpush1.bf16.xpose.msra.mxu0 0
    %1335 = vmatprep.subr.bf16.mxu0 0
    %1336 = vmatpush1.bf16.xpose.msra.mxu0 0
    %1337 = vmatprep.subr.bf16.mxu0 0
    %1338 = vmatpush1.bf16.xpose.msra.mxu0 0
    %1339 = vmatprep.subr.bf16.mxu0 0
    %1340 = vmatpush1.bf16.xpose.msra.mxu0 0
    %1341 = vmatprep.subr.bf16.mxu0 0
    %1342 = vmatpush1.bf16.xpose.msra.mxu0 0
    %1343 = vmatprep.subr.bf16.mxu0 0
    %1344 = vmatpush1.bf16.xpose.msra.mxu0 0
    %1345 = vmatprep.subr.bf16.mxu0 0
    %1346 = vmatpush1.bf16.xpose.msra.mxu0 0
    %1347 = vmatprep.subr.bf16.mxu0 0
    %1348 = vmatpush1.bf16.xpose.msra.mxu0 0
    %1349 = vmatprep.subr.bf16.mxu0 0
    %1350 = vmatpush1.bf16.xpose.msra.mxu0 0
    %1351 = vmatprep.mubr.bf16.mxu0 0
    %1352 = vmatmul.mubr.bf16.gmra.mrb[0].mxu0 %v1314
    %v1353 = vpop.f32.mrb[0].mxu0
    %v1354 = vadd.f32 0.0, %v1353
    %v1355 = vpop.f32.mrb[0].mxu0
    %v1356 = vpop.f32.mrb[0].mxu0
    %v1357 = vadd.f32 0.0, %v1356
    %v1358 = vpop.f32.mrb[0].mxu0
    %1359 = vdwg.mxu0
    %1361 = vrot.lane.b32.xlu0 %v1116, 64
    %v1362 = vpop.permute.xlu0 %1361
    %v1364 = vsel %vm1212, %v1116, 0
    %v1367 = vsel %vm1212, %v1362, 0
    %1369 = vmatprep.subr.bf16.mxu0 0
    %1370 = vmatpush1.bf16.xpose.msra.mxu0 %v1367
    %1371 = vmatprep.subr.bf16.mxu0 0
    %1372 = vmatpush1.bf16.xpose.msra.mxu0 0
    %1373 = vmatprep.subr.bf16.mxu0 0
    %1374 = vmatpush1.bf16.xpose.msra.mxu0 0
    %1375 = vmatprep.subr.bf16.mxu0 0
    %1376 = vmatpush1.bf16.xpose.msra.mxu0 0
    %1377 = vmatprep.subr.bf16.mxu0 0
    %1378 = vmatpush1.bf16.xpose.msra.mxu0 0
    %1379 = vmatprep.subr.bf16.mxu0 0
    %1380 = vmatpush1.bf16.xpose.msra.mxu0 0
    %1381 = vmatprep.subr.bf16.mxu0 0
    %1382 = vmatpush1.bf16.xpose.msra.mxu0 0
    %1383 = vmatprep.subr.bf16.mxu0 0
    %1384 = vmatpush1.bf16.xpose.msra.mxu0 0
    %1385 = vmatprep.subr.bf16.mxu0 0
    %1386 = vmatpush1.bf16.xpose.msra.mxu0 0
    %1387 = vmatprep.subr.bf16.mxu0 0
    %1388 = vmatpush1.bf16.xpose.msra.mxu0 0
    %1389 = vmatprep.subr.bf16.mxu0 0
    %1390 = vmatpush1.bf16.xpose.msra.mxu0 0
    %1391 = vmatprep.subr.bf16.mxu0 0
    %1392 = vmatpush1.bf16.xpose.msra.mxu0 0
    %1393 = vmatprep.subr.bf16.mxu0 0
    %1394 = vmatpush1.bf16.xpose.msra.mxu0 0
    %1395 = vmatprep.subr.bf16.mxu0 0
    %1396 = vmatpush1.bf16.xpose.msra.mxu0 0
    %1397 = vmatprep.subr.bf16.mxu0 0
    %1398 = vmatpush1.bf16.xpose.msra.mxu0 0
    %1399 = vmatprep.subr.bf16.mxu0 0
    %1400 = vmatpush1.bf16.xpose.msra.mxu0 0
    %1401 = vmatprep.mubr.bf16.mxu0 0
    %1402 = vmatmul.mubr.bf16.gmra.mrb[0].mxu0 %v1364
    %v1403 = vpop.f32.mrb[0].mxu0
    %v1404 = vadd.f32 0.0, %v1403
    %v1405 = vpop.f32.mrb[0].mxu0
    %v1406 = vpop.f32.mrb[0].mxu0
    %v1407 = vadd.f32 0.0, %v1406
    %v1408 = vpop.f32.mrb[0].mxu0
    %1409 = vdwg.mxu0
    %1411 = vrot.lane.b32.xlu0 %v1117, 64
    %v1412 = vpop.permute.xlu0 %1411
    %v1414 = vsel %vm1212, %v1117, 0
    %v1417 = vsel %vm1212, %v1412, 0
    %1419 = vmatprep.subr.bf16.mxu0 0
    %1420 = vmatpush1.bf16.xpose.msra.mxu0 %v1417
    %1421 = vmatprep.subr.bf16.mxu0 0
    %1422 = vmatpush1.bf16.xpose.msra.mxu0 0
    %1423 = vmatprep.subr.bf16.mxu0 0
    %1424 = vmatpush1.bf16.xpose.msra.mxu0 0
    %1425 = vmatprep.subr.bf16.mxu0 0
    %1426 = vmatpush1.bf16.xpose.msra.mxu0 0
    %1427 = vmatprep.subr.bf16.mxu0 0
    %1428 = vmatpush1.bf16.xpose.msra.mxu0 0
    %1429 = vmatprep.subr.bf16.mxu0 0
    %1430 = vmatpush1.bf16.xpose.msra.mxu0 0
    %1431 = vmatprep.subr.bf16.mxu0 0
    %1432 = vmatpush1.bf16.xpose.msra.mxu0 0
    %1433 = vmatprep.subr.bf16.mxu0 0
    %1434 = vmatpush1.bf16.xpose.msra.mxu0 0
    %1435 = vmatprep.subr.bf16.mxu0 0
    %1436 = vmatpush1.bf16.xpose.msra.mxu0 0
    %1437 = vmatprep.subr.bf16.mxu0 0
    %1438 = vmatpush1.bf16.xpose.msra.mxu0 0
    %1439 = vmatprep.subr.bf16.mxu0 0
    %1440 = vmatpush1.bf16.xpose.msra.mxu0 0
    %1441 = vmatprep.subr.bf16.mxu0 0
    %1442 = vmatpush1.bf16.xpose.msra.mxu0 0
    %1443 = vmatprep.subr.bf16.mxu0 0
    %1444 = vmatpush1.bf16.xpose.msra.mxu0 0
    %1445 = vmatprep.subr.bf16.mxu0 0
    %1446 = vmatpush1.bf16.xpose.msra.mxu0 0
    %1447 = vmatprep.subr.bf16.mxu0 0
    %1448 = vmatpush1.bf16.xpose.msra.mxu0 0
    %1449 = vmatprep.subr.bf16.mxu0 0
    %1450 = vmatpush1.bf16.xpose.msra.mxu0 0
    %1451 = vmatprep.mubr.bf16.mxu0 0
    %1452 = vmatmul.mubr.bf16.gmra.mrb[0].mxu0 %v1414
    %v1453 = vpop.f32.mrb[0].mxu0
    %v1454 = vadd.f32 0.0, %v1453
    %v1455 = vpop.f32.mrb[0].mxu0
    %v1456 = vpop.f32.mrb[0].mxu0
    %v1457 = vadd.f32 0.0, %v1456
    %v1458 = vpop.f32.mrb[0].mxu0
    %1459 = vdwg.mxu0
    %1461 = vrot.lane.b32.xlu0 %v1118, 64
    %v1462 = vpop.permute.xlu0 %1461
    %v1464 = vsel %vm1212, %v1118, 0
    %v1467 = vsel %vm1212, %v1462, 0
    %1469 = vmatprep.subr.bf16.mxu0 0
    %1470 = vmatpush1.bf16.xpose.msra.mxu0 %v1467
    %1471 = vmatprep.subr.bf16.mxu0 0
    %1472 = vmatpush1.bf16.xpose.msra.mxu0 0
    %1473 = vmatprep.subr.bf16.mxu0 0
    %1474 = vmatpush1.bf16.xpose.msra.mxu0 0
    %1475 = vmatprep.subr.bf16.mxu0 0
    %1476 = vmatpush1.bf16.xpose.msra.mxu0 0
    %1477 = vmatprep.subr.bf16.mxu0 0
    %1478 = vmatpush1.bf16.xpose.msra.mxu0 0
    %1479 = vmatprep.subr.bf16.mxu0 0
    %1480 = vmatpush1.bf16.xpose.msra.mxu0 0
    %1481 = vmatprep.subr.bf16.mxu0 0
    %1482 = vmatpush1.bf16.xpose.msra.mxu0 0
    %1483 = vmatprep.subr.bf16.mxu0 0
    %1484 = vmatpush1.bf16.xpose.msra.mxu0 0
    %1485 = vmatprep.subr.bf16.mxu0 0
    %1486 = vmatpush1.bf16.xpose.msra.mxu0 0
    %1487 = vmatprep.subr.bf16.mxu0 0
    %1488 = vmatpush1.bf16.xpose.msra.mxu0 0
    %1489 = vmatprep.subr.bf16.mxu0 0
    %1490 = vmatpush1.bf16.xpose.msra.mxu0 0
    %1491 = vmatprep.subr.bf16.mxu0 0
    %1492 = vmatpush1.bf16.xpose.msra.mxu0 0
    %1493 = vmatprep.subr.bf16.mxu0 0
    %1494 = vmatpush1.bf16.xpose.msra.mxu0 0
    %1495 = vmatprep.subr.bf16.mxu0 0
    %1496 = vmatpush1.bf16.xpose.msra.mxu0 0
    %1497 = vmatprep.subr.bf16.mxu0 0
    %1498 = vmatpush1.bf16.xpose.msra.mxu0 0
    %1499 = vmatprep.subr.bf16.mxu0 0
    %1500 = vmatpush1.bf16.xpose.msra.mxu0 0
    %1501 = vmatprep.mubr.bf16.mxu0 0
    %1502 = vmatmul.mubr.bf16.gmra.mrb[0].mxu0 %v1464
    %v1503 = vpop.f32.mrb[0].mxu0
    %v1504 = vadd.f32 0.0, %v1503
    %v1505 = vpop.f32.mrb[0].mxu0
    %v1506 = vpop.f32.mrb[0].mxu0
    %v1507 = vadd.f32 0.0, %v1506
    %v1508 = vpop.f32.mrb[0].mxu0
    %1509 = vdwg.mxu0
    %1511 = vrot.lane.b32.xlu0 %v1119, 64
    %v1512 = vpop.permute.xlu0 %1511
    %v1514 = vsel %vm1212, %v1119, 0
    %v1517 = vsel %vm1212, %v1512, 0
    %1519 = vmatprep.subr.bf16.mxu0 0
    %1520 = vmatpush1.bf16.xpose.msra.mxu0 %v1517
    %1521 = vmatprep.subr.bf16.mxu0 0
    %1522 = vmatpush1.bf16.xpose.msra.mxu0 0
    %1523 = vmatprep.subr.bf16.mxu0 0
    %1524 = vmatpush1.bf16.xpose.msra.mxu0 0
    %1525 = vmatprep.subr.bf16.mxu0 0
    %1526 = vmatpush1.bf16.xpose.msra.mxu0 0
    %1527 = vmatprep.subr.bf16.mxu0 0
    %1528 = vmatpush1.bf16.xpose.msra.mxu0 0
    %1529 = vmatprep.subr.bf16.mxu0 0
    %1530 = vmatpush1.bf16.xpose.msra.mxu0 0
    %1531 = vmatprep.subr.bf16.mxu0 0
    %1532 = vmatpush1.bf16.xpose.msra.mxu0 0
    %1533 = vmatprep.subr.bf16.mxu0 0
    %1534 = vmatpush1.bf16.xpose.msra.mxu0 0
    %1535 = vmatprep.subr.bf16.mxu0 0
    %1536 = vmatpush1.bf16.xpose.msra.mxu0 0
    %1537 = vmatprep.subr.bf16.mxu0 0
    %1538 = vmatpush1.bf16.xpose.msra.mxu0 0
    %1539 = vmatprep.subr.bf16.mxu0 0
    %1540 = vmatpush1.bf16.xpose.msra.mxu0 0
    %1541 = vmatprep.subr.bf16.mxu0 0
    %1542 = vmatpush1.bf16.xpose.msra.mxu0 0
    %1543 = vmatprep.subr.bf16.mxu0 0
    %1544 = vmatpush1.bf16.xpose.msra.mxu0 0
    %1545 = vmatprep.subr.bf16.mxu0 0
    %1546 = vmatpush1.bf16.xpose.msra.mxu0 0
    %1547 = vmatprep.subr.bf16.mxu0 0
    %1548 = vmatpush1.bf16.xpose.msra.mxu0 0
    %1549 = vmatprep.subr.bf16.mxu0 0
    %1550 = vmatpush1.bf16.xpose.msra.mxu0 0
    %1551 = vmatprep.mubr.bf16.mxu0 0
    %1552 = vmatmul.mubr.bf16.gmra.mrb[0].mxu0 %v1514
    %v1553 = vpop.f32.mrb[0].mxu0
    %v1554 = vadd.f32 0.0, %v1553
    %v1555 = vpop.f32.mrb[0].mxu0
    %v1556 = vpop.f32.mrb[0].mxu0
    %v1557 = vadd.f32 0.0, %v1556
    %v1558 = vpop.f32.mrb[0].mxu0
    %1559 = vdwg.mxu0
    %1561 = vrot.lane.b32.xlu0 %v1120, 64
    %v1562 = vpop.permute.xlu0 %1561
    %v1564 = vsel %vm1212, %v1120, 0
    %v1567 = vsel %vm1212, %v1562, 0
    %1569 = vmatprep.subr.bf16.mxu0 0
    %1570 = vmatpush1.bf16.xpose.msra.mxu0 %v1567
    %1571 = vmatprep.subr.bf16.mxu0 0
    %1572 = vmatpush1.bf16.xpose.msra.mxu0 0
    %1573 = vmatprep.subr.bf16.mxu0 0
    %1574 = vmatpush1.bf16.xpose.msra.mxu0 0
    %1575 = vmatprep.subr.bf16.mxu0 0
    %1576 = vmatpush1.bf16.xpose.msra.mxu0 0
    %1577 = vmatprep.subr.bf16.mxu0 0
    %1578 = vmatpush1.bf16.xpose.msra.mxu0 0
    %1579 = vmatprep.subr.bf16.mxu0 0
    %1580 = vmatpush1.bf16.xpose.msra.mxu0 0
    %1581 = vmatprep.subr.bf16.mxu0 0
    %1582 = vmatpush1.bf16.xpose.msra.mxu0 0
    %1583 = vmatprep.subr.bf16.mxu0 0
    %1584 = vmatpush1.bf16.xpose.msra.mxu0 0
    %1585 = vmatprep.subr.bf16.mxu0 0
    %1586 = vmatpush1.bf16.xpose.msra.mxu0 0
    %1587 = vmatprep.subr.bf16.mxu0 0
    %1588 = vmatpush1.bf16.xpose.msra.mxu0 0
    %1589 = vmatprep.subr.bf16.mxu0 0
    %1590 = vmatpush1.bf16.xpose.msra.mxu0 0
    %1591 = vmatprep.subr.bf16.mxu0 0
    %1592 = vmatpush1.bf16.xpose.msra.mxu0 0
    %1593 = vmatprep.subr.bf16.mxu0 0
    %1594 = vmatpush1.bf16.xpose.msra.mxu0 0
    %1595 = vmatprep.subr.bf16.mxu0 0
    %1596 = vmatpush1.bf16.xpose.msra.mxu0 0
    %1597 = vmatprep.subr.bf16.mxu0 0
    %1598 = vmatpush1.bf16.xpose.msra.mxu0 0
    %1599 = vmatprep.subr.bf16.mxu0 0
    %1600 = vmatpush1.bf16.xpose.msra.mxu0 0
    %1601 = vmatprep.mubr.bf16.mxu0 0
    %1602 = vmatmul.mubr.bf16.gmra.mrb[0].mxu0 %v1564
    %v1603 = vpop.f32.mrb[0].mxu0
    %v1604 = vadd.f32 0.0, %v1603
    %v1605 = vpop.f32.mrb[0].mxu0
    %v1606 = vpop.f32.mrb[0].mxu0
    %v1607 = vadd.f32 0.0, %v1606
    %v1608 = vpop.f32.mrb[0].mxu0
    %1609 = vdwg.mxu0
    %1611 = vrot.lane.b32.xlu0 %v1121, 64
    %v1612 = vpop.permute.xlu0 %1611
    %v1614 = vsel %vm1212, %v1121, 0
    %v1617 = vsel %vm1212, %v1612, 0
    %1619 = vmatprep.subr.bf16.mxu0 0
    %1620 = vmatpush1.bf16.xpose.msra.mxu0 %v1617
    %1621 = vmatprep.subr.bf16.mxu0 0
    %1622 = vmatpush1.bf16.xpose.msra.mxu0 0
    %1623 = vmatprep.subr.bf16.mxu0 0
    %1624 = vmatpush1.bf16.xpose.msra.mxu0 0
    %1625 = vmatprep.subr.bf16.mxu0 0
    %1626 = vmatpush1.bf16.xpose.msra.mxu0 0
    %1627 = vmatprep.subr.bf16.mxu0 0
    %1628 = vmatpush1.bf16.xpose.msra.mxu0 0
    %1629 = vmatprep.subr.bf16.mxu0 0
    %1630 = vmatpush1.bf16.xpose.msra.mxu0 0
    %1631 = vmatprep.subr.bf16.mxu0 0
    %1632 = vmatpush1.bf16.xpose.msra.mxu0 0
    %1633 = vmatprep.subr.bf16.mxu0 0
    %1634 = vmatpush1.bf16.xpose.msra.mxu0 0
    %1635 = vmatprep.subr.bf16.mxu0 0
    %1636 = vmatpush1.bf16.xpose.msra.mxu0 0
    %1637 = vmatprep.subr.bf16.mxu0 0
    %1638 = vmatpush1.bf16.xpose.msra.mxu0 0
    %1639 = vmatprep.subr.bf16.mxu0 0
    %1640 = vmatpush1.bf16.xpose.msra.mxu0 0
    %1641 = vmatprep.subr.bf16.mxu0 0
    %1642 = vmatpush1.bf16.xpose.msra.mxu0 0
    %1643 = vmatprep.subr.bf16.mxu0 0
    %1644 = vmatpush1.bf16.xpose.msra.mxu0 0
    %1645 = vmatprep.subr.bf16.mxu0 0
    %1646 = vmatpush1.bf16.xpose.msra.mxu0 0
    %1647 = vmatprep.subr.bf16.mxu0 0
    %1648 = vmatpush1.bf16.xpose.msra.mxu0 0
    %1649 = vmatprep.subr.bf16.mxu0 0
    %1650 = vmatpush1.bf16.xpose.msra.mxu0 0
    %1651 = vmatprep.mubr.bf16.mxu0 0
    %1652 = vmatmul.mubr.bf16.gmra.mrb[0].mxu0 %v1614
    %v1653 = vpop.f32.mrb[0].mxu0
    %v1654 = vadd.f32 0.0, %v1653
    %v1655 = vpop.f32.mrb[0].mxu0
    %v1656 = vpop.f32.mrb[0].mxu0
    %v1657 = vadd.f32 0.0, %v1656
    %v1658 = vpop.f32.mrb[0].mxu0
    %1659 = vdwg.mxu0
    %1661 = vrot.lane.b32.xlu0 %v1122, 64
    %v1662 = vpop.permute.xlu0 %1661
    %v1664 = vsel %vm1212, %v1122, 0
    %v1667 = vsel %vm1212, %v1662, 0
    %1669 = vmatprep.subr.bf16.mxu0 0
    %1670 = vmatpush1.bf16.xpose.msra.mxu0 %v1667
    %1671 = vmatprep.subr.bf16.mxu0 0
    %1672 = vmatpush1.bf16.xpose.msra.mxu0 0
    %1673 = vmatprep.subr.bf16.mxu0 0
    %1674 = vmatpush1.bf16.xpose.msra.mxu0 0
    %1675 = vmatprep.subr.bf16.mxu0 0
    %1676 = vmatpush1.bf16.xpose.msra.mxu0 0
    %1677 = vmatprep.subr.bf16.mxu0 0
    %1678 = vmatpush1.bf16.xpose.msra.mxu0 0
    %1679 = vmatprep.subr.bf16.mxu0 0
    %1680 = vmatpush1.bf16.xpose.msra.mxu0 0
    %1681 = vmatprep.subr.bf16.mxu0 0
    %1682 = vmatpush1.bf16.xpose.msra.mxu0 0
    %1683 = vmatprep.subr.bf16.mxu0 0
    %1684 = vmatpush1.bf16.xpose.msra.mxu0 0
    %1685 = vmatprep.subr.bf16.mxu0 0
    %1686 = vmatpush1.bf16.xpose.msra.mxu0 0
    %1687 = vmatprep.subr.bf16.mxu0 0
    %1688 = vmatpush1.bf16.xpose.msra.mxu0 0
    %1689 = vmatprep.subr.bf16.mxu0 0
    %1690 = vmatpush1.bf16.xpose.msra.mxu0 0
    %1691 = vmatprep.subr.bf16.mxu0 0
    %1692 = vmatpush1.bf16.xpose.msra.mxu0 0
    %1693 = vmatprep.subr.bf16.mxu0 0
    %1694 = vmatpush1.bf16.xpose.msra.mxu0 0
    %1695 = vmatprep.subr.bf16.mxu0 0
    %1696 = vmatpush1.bf16.xpose.msra.mxu0 0
    %1697 = vmatprep.subr.bf16.mxu0 0
    %1698 = vmatpush1.bf16.xpose.msra.mxu0 0
    %1699 = vmatprep.subr.bf16.mxu0 0
    %1700 = vmatpush1.bf16.xpose.msra.mxu0 0
    %1701 = vmatprep.mubr.bf16.mxu0 0
    %1702 = vmatmul.mubr.bf16.gmra.mrb[0].mxu0 %v1664
    %v1703 = vpop.f32.mrb[0].mxu0
    %v1704 = vadd.f32 0.0, %v1703
    %v1705 = vpop.f32.mrb[0].mxu0
    %v1706 = vpop.f32.mrb[0].mxu0
    %v1707 = vadd.f32 0.0, %v1706
    %v1708 = vpop.f32.mrb[0].mxu0
    %1709 = vdwg.mxu0
    %1711 = vrot.lane.b32.xlu0 %v1123, 64
    %v1712 = vpop.permute.xlu0 %1711
    %v1714 = vsel %vm1212, %v1123, 0
    %v1717 = vsel %vm1212, %v1712, 0
    %1719 = vmatprep.subr.bf16.mxu0 0
    %1720 = vmatpush1.bf16.xpose.msra.mxu0 %v1717
    %1721 = vmatprep.subr.bf16.mxu0 0
    %1722 = vmatpush1.bf16.xpose.msra.mxu0 0
    %1723 = vmatprep.subr.bf16.mxu0 0
    %1724 = vmatpush1.bf16.xpose.msra.mxu0 0
    %1725 = vmatprep.subr.bf16.mxu0 0
    %1726 = vmatpush1.bf16.xpose.msra.mxu0 0
    %1727 = vmatprep.subr.bf16.mxu0 0
    %1728 = vmatpush1.bf16.xpose.msra.mxu0 0
    %1729 = vmatprep.subr.bf16.mxu0 0
    %1730 = vmatpush1.bf16.xpose.msra.mxu0 0
    %1731 = vmatprep.subr.bf16.mxu0 0
    %1732 = vmatpush1.bf16.xpose.msra.mxu0 0
    %1733 = vmatprep.subr.bf16.mxu0 0
    %1734 = vmatpush1.bf16.xpose.msra.mxu0 0
    %1735 = vmatprep.subr.bf16.mxu0 0
    %1736 = vmatpush1.bf16.xpose.msra.mxu0 0
    %1737 = vmatprep.subr.bf16.mxu0 0
    %1738 = vmatpush1.bf16.xpose.msra.mxu0 0
    %1739 = vmatprep.subr.bf16.mxu0 0
    %1740 = vmatpush1.bf16.xpose.msra.mxu0 0
    %1741 = vmatprep.subr.bf16.mxu0 0
    %1742 = vmatpush1.bf16.xpose.msra.mxu0 0
    %1743 = vmatprep.subr.bf16.mxu0 0
    %1744 = vmatpush1.bf16.xpose.msra.mxu0 0
    %1745 = vmatprep.subr.bf16.mxu0 0
    %1746 = vmatpush1.bf16.xpose.msra.mxu0 0
    %1747 = vmatprep.subr.bf16.mxu0 0
    %1748 = vmatpush1.bf16.xpose.msra.mxu0 0
    %1749 = vmatprep.subr.bf16.mxu0 0
    %1750 = vmatpush1.bf16.xpose.msra.mxu0 0
    %1751 = vmatprep.mubr.bf16.mxu0 0
    %1752 = vmatmul.mubr.bf16.gmra.mrb[0].mxu0 %v1714
    %v1753 = vpop.f32.mrb[0].mxu0
    %v1754 = vadd.f32 0.0, %v1753
    %v1755 = vpop.f32.mrb[0].mxu0
    %v1756 = vpop.f32.mrb[0].mxu0
    %v1757 = vadd.f32 0.0, %v1756
    %v1758 = vpop.f32.mrb[0].mxu0
    %1759 = vdwg.mxu0
    %1761 = vrot.lane.b32.xlu0 %v1124, 64
    %v1762 = vpop.permute.xlu0 %1761
    %v1764 = vsel %vm1212, %v1124, 0
    %v1767 = vsel %vm1212, %v1762, 0
    %1769 = vmatprep.subr.bf16.mxu0 0
    %1770 = vmatpush1.bf16.xpose.msra.mxu0 %v1767
    %1771 = vmatprep.subr.bf16.mxu0 0
    %1772 = vmatpush1.bf16.xpose.msra.mxu0 0
    %1773 = vmatprep.subr.bf16.mxu0 0
    %1774 = vmatpush1.bf16.xpose.msra.mxu0 0
    %1775 = vmatprep.subr.bf16.mxu0 0
    %1776 = vmatpush1.bf16.xpose.msra.mxu0 0
    %1777 = vmatprep.subr.bf16.mxu0 0
    %1778 = vmatpush1.bf16.xpose.msra.mxu0 0
    %1779 = vmatprep.subr.bf16.mxu0 0
    %1780 = vmatpush1.bf16.xpose.msra.mxu0 0
    %1781 = vmatprep.subr.bf16.mxu0 0
    %1782 = vmatpush1.bf16.xpose.msra.mxu0 0
    %1783 = vmatprep.subr.bf16.mxu0 0
    %1784 = vmatpush1.bf16.xpose.msra.mxu0 0
    %1785 = vmatprep.subr.bf16.mxu0 0
    %1786 = vmatpush1.bf16.xpose.msra.mxu0 0
    %1787 = vmatprep.subr.bf16.mxu0 0
    %1788 = vmatpush1.bf16.xpose.msra.mxu0 0
    %1789 = vmatprep.subr.bf16.mxu0 0
    %1790 = vmatpush1.bf16.xpose.msra.mxu0 0
    %1791 = vmatprep.subr.bf16.mxu0 0
    %1792 = vmatpush1.bf16.xpose.msra.mxu0 0
    %1793 = vmatprep.subr.bf16.mxu0 0
    %1794 = vmatpush1.bf16.xpose.msra.mxu0 0
    %1795 = vmatprep.subr.bf16.mxu0 0
    %1796 = vmatpush1.bf16.xpose.msra.mxu0 0
    %1797 = vmatprep.subr.bf16.mxu0 0
    %1798 = vmatpush1.bf16.xpose.msra.mxu0 0
    %1799 = vmatprep.subr.bf16.mxu0 0
    %1800 = vmatpush1.bf16.xpose.msra.mxu0 0
    %1801 = vmatprep.mubr.bf16.mxu0 0
    %1802 = vmatmul.mubr.bf16.gmra.mrb[0].mxu0 %v1764
    %v1803 = vpop.f32.mrb[0].mxu0
    %v1804 = vadd.f32 0.0, %v1803
    %v1805 = vpop.f32.mrb[0].mxu0
    %v1806 = vpop.f32.mrb[0].mxu0
    %v1807 = vadd.f32 0.0, %v1806
    %v1808 = vpop.f32.mrb[0].mxu0
    %1809 = vdwg.mxu0
    %1811 = vrot.lane.b32.xlu0 %v1125, 64
    %v1812 = vpop.permute.xlu0 %1811
    %v1814 = vsel %vm1212, %v1125, 0
    %v1817 = vsel %vm1212, %v1812, 0
    %1819 = vmatprep.subr.bf16.mxu0 0
    %1820 = vmatpush1.bf16.xpose.msra.mxu0 %v1817
    %1821 = vmatprep.subr.bf16.mxu0 0
    %1822 = vmatpush1.bf16.xpose.msra.mxu0 0
    %1823 = vmatprep.subr.bf16.mxu0 0
    %1824 = vmatpush1.bf16.xpose.msra.mxu0 0
    %1825 = vmatprep.subr.bf16.mxu0 0
    %1826 = vmatpush1.bf16.xpose.msra.mxu0 0
    %1827 = vmatprep.subr.bf16.mxu0 0
    %1828 = vmatpush1.bf16.xpose.msra.mxu0 0
    %1829 = vmatprep.subr.bf16.mxu0 0
    %1830 = vmatpush1.bf16.xpose.msra.mxu0 0
    %1831 = vmatprep.subr.bf16.mxu0 0
    %1832 = vmatpush1.bf16.xpose.msra.mxu0 0
    %1833 = vmatprep.subr.bf16.mxu0 0
    %1834 = vmatpush1.bf16.xpose.msra.mxu0 0
    %1835 = vmatprep.subr.bf16.mxu0 0
    %1836 = vmatpush1.bf16.xpose.msra.mxu0 0
    %1837 = vmatprep.subr.bf16.mxu0 0
    %1838 = vmatpush1.bf16.xpose.msra.mxu0 0
    %1839 = vmatprep.subr.bf16.mxu0 0
    %1840 = vmatpush1.bf16.xpose.msra.mxu0 0
    %1841 = vmatprep.subr.bf16.mxu0 0
    %1842 = vmatpush1.bf16.xpose.msra.mxu0 0
    %1843 = vmatprep.subr.bf16.mxu0 0
    %1844 = vmatpush1.bf16.xpose.msra.mxu0 0
    %1845 = vmatprep.subr.bf16.mxu0 0
    %1846 = vmatpush1.bf16.xpose.msra.mxu0 0
    %1847 = vmatprep.subr.bf16.mxu0 0
    %1848 = vmatpush1.bf16.xpose.msra.mxu0 0
    %1849 = vmatprep.subr.bf16.mxu0 0
    %1850 = vmatpush1.bf16.xpose.msra.mxu0 0
    %1851 = vmatprep.mubr.bf16.mxu0 0
    %1852 = vmatmul.mubr.bf16.gmra.mrb[0].mxu0 %v1814
    %v1853 = vpop.f32.mrb[0].mxu0
    %v1854 = vadd.f32 0.0, %v1853
    %v1855 = vpop.f32.mrb[0].mxu0
    %v1856 = vpop.f32.mrb[0].mxu0
    %v1857 = vadd.f32 0.0, %v1856
    %v1858 = vpop.f32.mrb[0].mxu0
    %1859 = vdwg.mxu0
    %1861 = vrot.lane.b32.xlu0 %v1126, 64
    %v1862 = vpop.permute.xlu0 %1861
    %v1864 = vsel %vm1212, %v1126, 0
    %v1867 = vsel %vm1212, %v1862, 0
    %1869 = vmatprep.subr.bf16.mxu0 0
    %1870 = vmatpush1.bf16.xpose.msra.mxu0 %v1867
    %1871 = vmatprep.subr.bf16.mxu0 0
    %1872 = vmatpush1.bf16.xpose.msra.mxu0 0
    %1873 = vmatprep.subr.bf16.mxu0 0
    %1874 = vmatpush1.bf16.xpose.msra.mxu0 0
    %1875 = vmatprep.subr.bf16.mxu0 0
    %1876 = vmatpush1.bf16.xpose.msra.mxu0 0
    %1877 = vmatprep.subr.bf16.mxu0 0
    %1878 = vmatpush1.bf16.xpose.msra.mxu0 0
    %1879 = vmatprep.subr.bf16.mxu0 0
    %1880 = vmatpush1.bf16.xpose.msra.mxu0 0
    %1881 = vmatprep.subr.bf16.mxu0 0
    %1882 = vmatpush1.bf16.xpose.msra.mxu0 0
    %1883 = vmatprep.subr.bf16.mxu0 0
    %1884 = vmatpush1.bf16.xpose.msra.mxu0 0
    %1885 = vmatprep.subr.bf16.mxu0 0
    %1886 = vmatpush1.bf16.xpose.msra.mxu0 0
    %1887 = vmatprep.subr.bf16.mxu0 0
    %1888 = vmatpush1.bf16.xpose.msra.mxu0 0
    %1889 = vmatprep.subr.bf16.mxu0 0
    %1890 = vmatpush1.bf16.xpose.msra.mxu0 0
    %1891 = vmatprep.subr.bf16.mxu0 0
    %1892 = vmatpush1.bf16.xpose.msra.mxu0 0
    %1893 = vmatprep.subr.bf16.mxu0 0
    %1894 = vmatpush1.bf16.xpose.msra.mxu0 0
    %1895 = vmatprep.subr.bf16.mxu0 0
    %1896 = vmatpush1.bf16.xpose.msra.mxu0 0
    %1897 = vmatprep.subr.bf16.mxu0 0
    %1898 = vmatpush1.bf16.xpose.msra.mxu0 0
    %1899 = vmatprep.subr.bf16.mxu0 0
    %1900 = vmatpush1.bf16.xpose.msra.mxu0 0
    %1901 = vmatprep.mubr.bf16.mxu0 0
    %1902 = vmatmul.mubr.bf16.gmra.mrb[0].mxu0 %v1864
    %v1903 = vpop.f32.mrb[0].mxu0
    %v1904 = vadd.f32 0.0, %v1903
    %v1905 = vpop.f32.mrb[0].mxu0
    %v1906 = vpop.f32.mrb[0].mxu0
    %v1907 = vadd.f32 0.0, %v1906
    %v1908 = vpop.f32.mrb[0].mxu0
    %1909 = vdwg.mxu0
    %1911 = vrot.lane.b32.xlu0 %v1127, 64
    %v1912 = vpop.permute.xlu0 %1911
    %v1914 = vsel %vm1212, %v1127, 0
    %v1917 = vsel %vm1212, %v1912, 0
    %1919 = vmatprep.subr.bf16.mxu0 0
    %1920 = vmatpush1.bf16.xpose.msra.mxu0 %v1917
    %1921 = vmatprep.subr.bf16.mxu0 0
    %1922 = vmatpush1.bf16.xpose.msra.mxu0 0
    %1923 = vmatprep.subr.bf16.mxu0 0
    %1924 = vmatpush1.bf16.xpose.msra.mxu0 0
    %1925 = vmatprep.subr.bf16.mxu0 0
    %1926 = vmatpush1.bf16.xpose.msra.mxu0 0
    %1927 = vmatprep.subr.bf16.mxu0 0
    %1928 = vmatpush1.bf16.xpose.msra.mxu0 0
    %1929 = vmatprep.subr.bf16.mxu0 0
    %1930 = vmatpush1.bf16.xpose.msra.mxu0 0
    %1931 = vmatprep.subr.bf16.mxu0 0
    %1932 = vmatpush1.bf16.xpose.msra.mxu0 0
    %1933 = vmatprep.subr.bf16.mxu0 0
    %1934 = vmatpush1.bf16.xpose.msra.mxu0 0
    %1935 = vmatprep.subr.bf16.mxu0 0
    %1936 = vmatpush1.bf16.xpose.msra.mxu0 0
    %1937 = vmatprep.subr.bf16.mxu0 0
    %1938 = vmatpush1.bf16.xpose.msra.mxu0 0
    %1939 = vmatprep.subr.bf16.mxu0 0
    %1940 = vmatpush1.bf16.xpose.msra.mxu0 0
    %1941 = vmatprep.subr.bf16.mxu0 0
    %1942 = vmatpush1.bf16.xpose.msra.mxu0 0
    %1943 = vmatprep.subr.bf16.mxu0 0
    %1944 = vmatpush1.bf16.xpose.msra.mxu0 0
    %1945 = vmatprep.subr.bf16.mxu0 0
    %1946 = vmatpush1.bf16.xpose.msra.mxu0 0
    %1947 = vmatprep.subr.bf16.mxu0 0
    %1948 = vmatpush1.bf16.xpose.msra.mxu0 0
    %1949 = vmatprep.subr.bf16.mxu0 0
    %1950 = vmatpush1.bf16.xpose.msra.mxu0 0
    %1951 = vmatprep.mubr.bf16.mxu0 0
    %1952 = vmatmul.mubr.bf16.gmra.mrb[0].mxu0 %v1914
    %v1953 = vpop.f32.mrb[0].mxu0
    %v1954 = vadd.f32 0.0, %v1953
    %v1955 = vpop.f32.mrb[0].mxu0
    %v1956 = vpop.f32.mrb[0].mxu0
    %v1957 = vadd.f32 0.0, %v1956
    %v1958 = vpop.f32.mrb[0].mxu0
    %1959 = vdwg.mxu0
    %1961 = vrot.lane.b32.xlu0 %v1128, 64
    %v1962 = vpop.permute.xlu0 %1961
    %v1964 = vsel %vm1212, %v1128, 0
    %v1967 = vsel %vm1212, %v1962, 0
    %1969 = vmatprep.subr.bf16.mxu0 0
    %1970 = vmatpush1.bf16.xpose.msra.mxu0 %v1967
    %1971 = vmatprep.subr.bf16.mxu0 0
    %1972 = vmatpush1.bf16.xpose.msra.mxu0 0
    %1973 = vmatprep.subr.bf16.mxu0 0
    %1974 = vmatpush1.bf16.xpose.msra.mxu0 0
    %1975 = vmatprep.subr.bf16.mxu0 0
    %1976 = vmatpush1.bf16.xpose.msra.mxu0 0
    %1977 = vmatprep.subr.bf16.mxu0 0
    %1978 = vmatpush1.bf16.xpose.msra.mxu0 0
    %1979 = vmatprep.subr.bf16.mxu0 0
    %1980 = vmatpush1.bf16.xpose.msra.mxu0 0
    %1981 = vmatprep.subr.bf16.mxu0 0
    %1982 = vmatpush1.bf16.xpose.msra.mxu0 0
    %1983 = vmatprep.subr.bf16.mxu0 0
    %1984 = vmatpush1.bf16.xpose.msra.mxu0 0
    %1985 = vmatprep.subr.bf16.mxu0 0
    %1986 = vmatpush1.bf16.xpose.msra.mxu0 0
    %1987 = vmatprep.subr.bf16.mxu0 0
    %1988 = vmatpush1.bf16.xpose.msra.mxu0 0
    %1989 = vmatprep.subr.bf16.mxu0 0
    %1990 = vmatpush1.bf16.xpose.msra.mxu0 0
    %1991 = vmatprep.subr.bf16.mxu0 0
    %1992 = vmatpush1.bf16.xpose.msra.mxu0 0
    %1993 = vmatprep.subr.bf16.mxu0 0
    %1994 = vmatpush1.bf16.xpose.msra.mxu0 0
    %1995 = vmatprep.subr.bf16.mxu0 0
    %1996 = vmatpush1.bf16.xpose.msra.mxu0 0
    %1997 = vmatprep.subr.bf16.mxu0 0
    %1998 = vmatpush1.bf16.xpose.msra.mxu0 0
    %1999 = vmatprep.subr.bf16.mxu0 0
    %2000 = vmatpush1.bf16.xpose.msra.mxu0 0
    %2001 = vmatprep.mubr.bf16.mxu0 0
    %2002 = vmatmul.mubr.bf16.gmra.mrb[0].mxu0 %v1964
    %v2003 = vpop.f32.mrb[0].mxu0
    %v2004 = vadd.f32 0.0, %v2003
    %v2005 = vpop.f32.mrb[0].mxu0
    %v2006 = vpop.f32.mrb[0].mxu0
    %v2007 = vadd.f32 0.0, %v2006
    %v2008 = vpop.f32.mrb[0].mxu0
    %2009 = vdwg.mxu0
    %v2010 = vmul.f32 %v1254, 0.2
    %v2011 = vmul.f32 %v1257, 0.2
    %v2012 = vmul.f32 %v1304, 0.2
    %v2013 = vmul.f32 %v1307, 0.2
    %v2014 = vmul.f32 %v1354, 0.2
    %v2015 = vmul.f32 %v1357, 0.2
    %v2016 = vmul.f32 %v1404, 0.2
    %v2017 = vmul.f32 %v1407, 0.2
    %v2018 = vmul.f32 %v1454, 0.2
    %v2019 = vmul.f32 %v1457, 0.2
    %v2020 = vmul.f32 %v1504, 0.2
    %v2021 = vmul.f32 %v1507, 0.2
    %v2022 = vmul.f32 %v1554, 0.2
    %v2023 = vmul.f32 %v1557, 0.2
    %v2024 = vmul.f32 %v1604, 0.2
    %v2025 = vmul.f32 %v1607, 0.2
    %v2026 = vmul.f32 %v1654, 0.2
    %v2027 = vmul.f32 %v1657, 0.2
    %v2028 = vmul.f32 %v1704, 0.2
    %v2029 = vmul.f32 %v1707, 0.2
    %v2030 = vmul.f32 %v1754, 0.2
    %v2031 = vmul.f32 %v1757, 0.2
    %v2032 = vmul.f32 %v1804, 0.2
    %v2033 = vmul.f32 %v1807, 0.2
    %v2034 = vmul.f32 %v1854, 0.2
    %v2035 = vmul.f32 %v1857, 0.2
    %v2036 = vmul.f32 %v1904, 0.2
    %v2037 = vmul.f32 %v1907, 0.2
    %v2038 = vmul.f32 %v1954, 0.2
    %v2039 = vmul.f32 %v1957, 0.2
    %v2040 = vmul.f32 %v2004, 0.2
    %v2041 = vmul.f32 %v2007, 0.2
    %v2042 = vlaneseq
    %v2043 = vshrl.u32 %v2042, 7
    %v2044 = vsub.s32 0, %v2043
    %v2045 = vrot.slane %v915, %v2044
    %v2046 = vlaneseq
    %v2047 = vshrl.u32 %v2046, 7
    %v2048 = vsub.s32 0, %v2047
    %v2049 = vrot.slane %v929, %v2048
    %v2050 = vlaneseq
    %v2051 = vshrl.u32 %v2050, 7
    %v2052 = vsub.s32 0, %v2051
    %v2053 = vrot.slane %v937, %v2052
    %v2054 = vlaneseq
    %v2055 = vshrl.u32 %v2054, 7
    %v2056 = vsub.s32 0, %v2055
    %v2057 = vrot.slane %v939, %v2056
    %v2058 = vlaneseq
    %v2059 = vshrl.u32 %v2058, 7
    %v2060 = vsub.s32 0, %v2059
    %v2061 = vrot.slane %v922, %v2060
    %v2062 = vlaneseq
    %v2063 = vshrl.u32 %v2062, 7
    %v2064 = vsub.s32 0, %v2063
    %v2065 = vrot.slane %v936, %v2064
    %v2066 = vlaneseq
    %v2067 = vshrl.u32 %v2066, 7
    %v2068 = vsub.s32 0, %v2067
    %v2069 = vrot.slane %v938, %v2068
    %v2070 = vlaneseq
    %v2071 = vshrl.u32 %v2070, 7
    %v2072 = vsub.s32 0, %v2071
    %v2073 = vrot.slane %v940, %v2072
    %v2074 = vlaneseq
    %v2075 = vshrl.u32 %v2074, 7
    %v2076 = vsub.s32 0, %v2075
    %v2077 = vrot.slane %v964, %v2076
    %v2078 = vlaneseq
    %v2079 = vshrl.u32 %v2078, 7
    %v2080 = vsub.s32 0, %v2079
    %v2081 = vrot.slane %v978, %v2080
    %v2082 = vlaneseq
    %v2083 = vshrl.u32 %v2082, 7
    %v2084 = vsub.s32 0, %v2083
    %v2085 = vrot.slane %v986, %v2084
    %v2086 = vlaneseq
    %v2087 = vshrl.u32 %v2086, 7
    %v2088 = vsub.s32 0, %v2087
    %v2089 = vrot.slane %v988, %v2088
    %v2090 = vlaneseq
    %v2091 = vshrl.u32 %v2090, 7
    %v2092 = vsub.s32 0, %v2091
    %v2093 = vrot.slane %v971, %v2092
    %v2094 = vlaneseq
    %v2095 = vshrl.u32 %v2094, 7
    %v2096 = vsub.s32 0, %v2095
    %v2097 = vrot.slane %v985, %v2096
    %v2098 = vlaneseq
    %v2099 = vshrl.u32 %v2098, 7
    %v2100 = vsub.s32 0, %v2099
    %v2101 = vrot.slane %v987, %v2100
    %v2102 = vlaneseq
    %v2103 = vshrl.u32 %v2102, 7
    %v2104 = vsub.s32 0, %v2103
    %v2105 = vrot.slane %v989, %v2104
    %v2122 = vadd.f32 %v2010, %v2045
    %v2123 = vadd.f32 %v2011, %v2045
    %v2124 = vadd.f32 %v2012, %v2049
    %v2125 = vadd.f32 %v2013, %v2049
    %v2126 = vadd.f32 %v2014, %v2053
    %v2127 = vadd.f32 %v2015, %v2053
    %v2128 = vadd.f32 %v2016, %v2057
    %v2129 = vadd.f32 %v2017, %v2057
    %v2130 = vadd.f32 %v2018, %v2061
    %v2131 = vadd.f32 %v2019, %v2061
    %v2132 = vadd.f32 %v2020, %v2065
    %v2133 = vadd.f32 %v2021, %v2065
    %v2134 = vadd.f32 %v2022, %v2069
    %v2135 = vadd.f32 %v2023, %v2069
    %v2136 = vadd.f32 %v2024, %v2073
    %v2137 = vadd.f32 %v2025, %v2073
    %v2138 = vadd.f32 %v2026, %v2077
    %v2139 = vadd.f32 %v2027, %v2077
    %v2140 = vadd.f32 %v2028, %v2081
    %v2141 = vadd.f32 %v2029, %v2081
    %v2142 = vadd.f32 %v2030, %v2085
    %v2143 = vadd.f32 %v2031, %v2085
    %v2144 = vadd.f32 %v2032, %v2089
    %v2145 = vadd.f32 %v2033, %v2089
    %v2146 = vadd.f32 %v2034, %v2093
    %v2147 = vadd.f32 %v2035, %v2093
    %v2148 = vadd.f32 %v2036, %v2097
    %v2149 = vadd.f32 %v2037, %v2097
    %v2150 = vadd.f32 %v2038, %v2101
    %v2151 = vadd.f32 %v2039, %v2101
    %v2152 = vadd.f32 %v2040, %v2105
    %v2153 = vadd.f32 %v2041, %v2105
    %vm2154 = vcmask 97280
    %v2155 = vsel %vm2154, %v2122, -inf
    %2156 = vmax.xlane.f32.xlu0 %v2155
    %v2157 = vpop.xlane.xlu0 %2156
    %vm2158 = vcmask 93184
    %v2159 = vsel %vm2158, %v2123, -inf
    %2160 = vmax.xlane.f32.xlu0 %v2159
    %v2161 = vpop.xlane.xlu0 %2160
    %v2162 = vsel %vm2154, %v2124, -inf
    %2163 = vmax.xlane.f32.xlu0 %v2162
    %v2164 = vpop.xlane.xlu0 %2163
    %v2165 = vsel %vm2158, %v2125, -inf
    %2166 = vmax.xlane.f32.xlu0 %v2165
    %v2167 = vpop.xlane.xlu0 %2166
    %v2168 = vsel %vm2154, %v2126, -inf
    %2169 = vmax.xlane.f32.xlu0 %v2168
    %v2170 = vpop.xlane.xlu0 %2169
    %v2171 = vsel %vm2158, %v2127, -inf
    %2172 = vmax.xlane.f32.xlu0 %v2171
    %v2173 = vpop.xlane.xlu0 %2172
    %v2174 = vsel %vm2154, %v2128, -inf
    %2175 = vmax.xlane.f32.xlu0 %v2174
    %v2176 = vpop.xlane.xlu0 %2175
    %v2177 = vsel %vm2158, %v2129, -inf
    %2178 = vmax.xlane.f32.xlu0 %v2177
    %v2179 = vpop.xlane.xlu0 %2178
    %v2180 = vsel %vm2154, %v2130, -inf
    %2181 = vmax.xlane.f32.xlu0 %v2180
    %v2182 = vpop.xlane.xlu0 %2181
    %v2183 = vsel %vm2158, %v2131, -inf
    %2184 = vmax.xlane.f32.xlu0 %v2183
    %v2185 = vpop.xlane.xlu0 %2184
    %v2186 = vsel %vm2154, %v2132, -inf
    %2187 = vmax.xlane.f32.xlu0 %v2186
    %v2188 = vpop.xlane.xlu0 %2187
    %v2189 = vsel %vm2158, %v2133, -inf
    %2190 = vmax.xlane.f32.xlu0 %v2189
    %v2191 = vpop.xlane.xlu0 %2190
    %v2192 = vsel %vm2154, %v2134, -inf
    %2193 = vmax.xlane.f32.xlu0 %v2192
    %v2194 = vpop.xlane.xlu0 %2193
    %v2195 = vsel %vm2158, %v2135, -inf
    %2196 = vmax.xlane.f32.xlu0 %v2195
    %v2197 = vpop.xlane.xlu0 %2196
    %v2198 = vsel %vm2154, %v2136, -inf
    %2199 = vmax.xlane.f32.xlu0 %v2198
    %v2200 = vpop.xlane.xlu0 %2199
    %v2201 = vsel %vm2158, %v2137, -inf
    %2202 = vmax.xlane.f32.xlu0 %v2201
    %v2203 = vpop.xlane.xlu0 %2202
    %v2204 = vsel %vm2154, %v2138, -inf
    %2205 = vmax.xlane.f32.xlu0 %v2204
    %v2206 = vpop.xlane.xlu0 %2205
    %v2207 = vsel %vm2158, %v2139, -inf
    %2208 = vmax.xlane.f32.xlu0 %v2207
    %v2209 = vpop.xlane.xlu0 %2208
    %v2210 = vsel %vm2154, %v2140, -inf
    %2211 = vmax.xlane.f32.xlu0 %v2210
    %v2212 = vpop.xlane.xlu0 %2211
    %v2213 = vsel %vm2158, %v2141, -inf
    %2214 = vmax.xlane.f32.xlu0 %v2213
    %v2215 = vpop.xlane.xlu0 %2214
    %v2216 = vsel %vm2154, %v2142, -inf
    %2217 = vmax.xlane.f32.xlu0 %v2216
    %v2218 = vpop.xlane.xlu0 %2217
    %v2219 = vsel %vm2158, %v2143, -inf
    %2220 = vmax.xlane.f32.xlu0 %v2219
    %v2221 = vpop.xlane.xlu0 %2220
    %v2222 = vsel %vm2154, %v2144, -inf
    %2223 = vmax.xlane.f32.xlu0 %v2222
    %v2224 = vpop.xlane.xlu0 %2223
    %v2225 = vsel %vm2158, %v2145, -inf
    %2226 = vmax.xlane.f32.xlu0 %v2225
    %v2227 = vpop.xlane.xlu0 %2226
    %v2228 = vsel %vm2154, %v2146, -inf
    %2229 = vmax.xlane.f32.xlu0 %v2228
    %v2230 = vpop.xlane.xlu0 %2229
    %v2231 = vsel %vm2158, %v2147, -inf
    %2232 = vmax.xlane.f32.xlu0 %v2231
    %v2233 = vpop.xlane.xlu0 %2232
    %v2234 = vsel %vm2154, %v2148, -inf
    %2235 = vmax.xlane.f32.xlu0 %v2234
    %v2236 = vpop.xlane.xlu0 %2235
    %v2237 = vsel %vm2158, %v2149, -inf
    %2238 = vmax.xlane.f32.xlu0 %v2237
    %v2239 = vpop.xlane.xlu0 %2238
    %v2240 = vsel %vm2154, %v2150, -inf
    %2241 = vmax.xlane.f32.xlu0 %v2240
    %v2242 = vpop.xlane.xlu0 %2241
    %v2243 = vsel %vm2158, %v2151, -inf
    %2244 = vmax.xlane.f32.xlu0 %v2243
    %v2245 = vpop.xlane.xlu0 %2244
    %v2246 = vsel %vm2154, %v2152, -inf
    %2247 = vmax.xlane.f32.xlu0 %v2246
    %v2248 = vpop.xlane.xlu0 %2247
    %v2249 = vsel %vm2158, %v2153, -inf
    %2250 = vmax.xlane.f32.xlu0 %v2249
    %v2251 = vpop.xlane.xlu0 %2250
    %v2252 = vsub.f32 %v2122, %v2157
    %v2253 = vsub.f32 %v2123, %v2161
    %v2254 = vsub.f32 %v2124, %v2164
    %v2255 = vsub.f32 %v2125, %v2167
    %v2256 = vsub.f32 %v2126, %v2170
    %v2257 = vsub.f32 %v2127, %v2173
    %v2258 = vsub.f32 %v2128, %v2176
    %v2259 = vsub.f32 %v2129, %v2179
    %v2260 = vsub.f32 %v2130, %v2182
    %v2261 = vsub.f32 %v2131, %v2185
    %v2262 = vsub.f32 %v2132, %v2188
    %v2263 = vsub.f32 %v2133, %v2191
    %v2264 = vsub.f32 %v2134, %v2194
    %v2265 = vsub.f32 %v2135, %v2197
    %v2266 = vsub.f32 %v2136, %v2200
    %v2267 = vsub.f32 %v2137, %v2203
    %v2268 = vsub.f32 %v2138, %v2206
    %v2269 = vsub.f32 %v2139, %v2209
    %v2270 = vsub.f32 %v2140, %v2212
    %v2271 = vsub.f32 %v2141, %v2215
    %v2272 = vsub.f32 %v2142, %v2218
    %v2273 = vsub.f32 %v2143, %v2221
    %v2274 = vsub.f32 %v2144, %v2224
    %v2275 = vsub.f32 %v2145, %v2227
    %v2276 = vsub.f32 %v2146, %v2230
    %v2277 = vsub.f32 %v2147, %v2233
    %v2278 = vsub.f32 %v2148, %v2236
    %v2279 = vsub.f32 %v2149, %v2239
    %v2280 = vsub.f32 %v2150, %v2242
    %v2281 = vsub.f32 %v2151, %v2245
    %v2282 = vsub.f32 %v2152, %v2248
    %v2283 = vsub.f32 %v2153, %v2251
    %v2284 = vmul.f32 %v2252, 1.442695
    %v2285 = vpow.pop %v2284
    %v2286 = vmul.f32 %v2253, 1.442695
    %v2287 = vpow.pop %v2286
    %v2288 = vmul.f32 %v2254, 1.442695
    %v2289 = vpow.pop %v2288
    %v2290 = vmul.f32 %v2255, 1.442695
    %v2291 = vpow.pop %v2290
    %v2292 = vmul.f32 %v2256, 1.442695
    %v2293 = vpow.pop %v2292
    %v2294 = vmul.f32 %v2257, 1.442695
    %v2295 = vpow.pop %v2294
    %v2296 = vmul.f32 %v2258, 1.442695
    %v2297 = vpow.pop %v2296
    %v2298 = vmul.f32 %v2259, 1.442695
    %v2299 = vpow.pop %v2298
    %v2300 = vmul.f32 %v2260, 1.442695
    %v2301 = vpow.pop %v2300
    %v2302 = vmul.f32 %v2261, 1.442695
    %v2303 = vpow.pop %v2302
    %v2304 = vmul.f32 %v2262, 1.442695
    %v2305 = vpow.pop %v2304
    %v2306 = vmul.f32 %v2263, 1.442695
    %v2307 = vpow.pop %v2306
    %v2308 = vmul.f32 %v2264, 1.442695
    %v2309 = vpow.pop %v2308
    %v2310 = vmul.f32 %v2265, 1.442695
    %v2311 = vpow.pop %v2310
    %v2312 = vmul.f32 %v2266, 1.442695
    %v2313 = vpow.pop %v2312
    %v2314 = vmul.f32 %v2267, 1.442695
    %v2315 = vpow.pop %v2314
    %v2316 = vmul.f32 %v2268, 1.442695
    %v2317 = vpow.pop %v2316
    %v2318 = vmul.f32 %v2269, 1.442695
    %v2319 = vpow.pop %v2318
    %v2320 = vmul.f32 %v2270, 1.442695
    %v2321 = vpow.pop %v2320
    %v2322 = vmul.f32 %v2271, 1.442695
    %v2323 = vpow.pop %v2322
    %v2324 = vmul.f32 %v2272, 1.442695
    %v2325 = vpow.pop %v2324
    %v2326 = vmul.f32 %v2273, 1.442695
    %v2327 = vpow.pop %v2326
    %v2328 = vmul.f32 %v2274, 1.442695
    %v2329 = vpow.pop %v2328
    %v2330 = vmul.f32 %v2275, 1.442695
    %v2331 = vpow.pop %v2330
    %v2332 = vmul.f32 %v2276, 1.442695
    %v2333 = vpow.pop %v2332
    %v2334 = vmul.f32 %v2277, 1.442695
    %v2335 = vpow.pop %v2334
    %v2336 = vmul.f32 %v2278, 1.442695
    %v2337 = vpow.pop %v2336
    %v2338 = vmul.f32 %v2279, 1.442695
    %v2339 = vpow.pop %v2338
    %v2340 = vmul.f32 %v2280, 1.442695
    %v2341 = vpow.pop %v2340
    %v2342 = vmul.f32 %v2281, 1.442695
    %v2343 = vpow.pop %v2342
    %v2344 = vmul.f32 %v2282, 1.442695
    %v2345 = vpow.pop %v2344
    %v2346 = vmul.f32 %v2283, 1.442695
    %v2347 = vpow.pop %v2346
    %v2348 = vsel %vm2154, %v2285, 0.0
    %2349 = vadd.xlane.f32.xlu0 %v2348
    %v2350 = vpop.xlane.xlu0 %2349
    %v2351 = vsel %vm2158, %v2287, 0.0
    %2352 = vadd.xlane.f32.xlu0 %v2351
    %v2353 = vpop.xlane.xlu0 %2352
    %v2354 = vsel %vm2154, %v2289, 0.0
    %2355 = vadd.xlane.f32.xlu0 %v2354
    %v2356 = vpop.xlane.xlu0 %2355
    %v2357 = vsel %vm2158, %v2291, 0.0
    %2358 = vadd.xlane.f32.xlu0 %v2357
    %v2359 = vpop.xlane.xlu0 %2358
    %v2360 = vsel %vm2154, %v2293, 0.0
    %2361 = vadd.xlane.f32.xlu0 %v2360
    %v2362 = vpop.xlane.xlu0 %2361
    %v2363 = vsel %vm2158, %v2295, 0.0
    %2364 = vadd.xlane.f32.xlu0 %v2363
    %v2365 = vpop.xlane.xlu0 %2364
    %v2366 = vsel %vm2154, %v2297, 0.0
    %2367 = vadd.xlane.f32.xlu0 %v2366
    %v2368 = vpop.xlane.xlu0 %2367
    %v2369 = vsel %vm2158, %v2299, 0.0
    %2370 = vadd.xlane.f32.xlu0 %v2369
    %v2371 = vpop.xlane.xlu0 %2370
    %v2372 = vsel %vm2154, %v2301, 0.0
    %2373 = vadd.xlane.f32.xlu0 %v2372
    %v2374 = vpop.xlane.xlu0 %2373
    %v2375 = vsel %vm2158, %v2303, 0.0
    %2376 = vadd.xlane.f32.xlu0 %v2375
    %v2377 = vpop.xlane.xlu0 %2376
    %v2378 = vsel %vm2154, %v2305, 0.0
    %2379 = vadd.xlane.f32.xlu0 %v2378
    %v2380 = vpop.xlane.xlu0 %2379
    %v2381 = vsel %vm2158, %v2307, 0.0
    %2382 = vadd.xlane.f32.xlu0 %v2381
    %v2383 = vpop.xlane.xlu0 %2382
    %v2384 = vsel %vm2154, %v2309, 0.0
    %2385 = vadd.xlane.f32.xlu0 %v2384
    %v2386 = vpop.xlane.xlu0 %2385
    %v2387 = vsel %vm2158, %v2311, 0.0
    %2388 = vadd.xlane.f32.xlu0 %v2387
    %v2389 = vpop.xlane.xlu0 %2388
    %v2390 = vsel %vm2154, %v2313, 0.0
    %2391 = vadd.xlane.f32.xlu0 %v2390
    %v2392 = vpop.xlane.xlu0 %2391
    %v2393 = vsel %vm2158, %v2315, 0.0
    %2394 = vadd.xlane.f32.xlu0 %v2393
    %v2395 = vpop.xlane.xlu0 %2394
    %v2396 = vsel %vm2154, %v2317, 0.0
    %2397 = vadd.xlane.f32.xlu0 %v2396
    %v2398 = vpop.xlane.xlu0 %2397
    %v2399 = vsel %vm2158, %v2319, 0.0
    %2400 = vadd.xlane.f32.xlu0 %v2399
    %v2401 = vpop.xlane.xlu0 %2400
    %v2402 = vsel %vm2154, %v2321, 0.0
    %2403 = vadd.xlane.f32.xlu0 %v2402
    %v2404 = vpop.xlane.xlu0 %2403
    %v2405 = vsel %vm2158, %v2323, 0.0
    %2406 = vadd.xlane.f32.xlu0 %v2405
    %v2407 = vpop.xlane.xlu0 %2406
    %v2408 = vsel %vm2154, %v2325, 0.0
    %2409 = vadd.xlane.f32.xlu0 %v2408
    %v2410 = vpop.xlane.xlu0 %2409
    %v2411 = vsel %vm2158, %v2327, 0.0
    %2412 = vadd.xlane.f32.xlu0 %v2411
    %v2413 = vpop.xlane.xlu0 %2412
    %v2414 = vsel %vm2154, %v2329, 0.0
    %2415 = vadd.xlane.f32.xlu0 %v2414
    %v2416 = vpop.xlane.xlu0 %2415
    %v2417 = vsel %vm2158, %v2331, 0.0
    %2418 = vadd.xlane.f32.xlu0 %v2417
    %v2419 = vpop.xlane.xlu0 %2418
    %v2420 = vsel %vm2154, %v2333, 0.0
    %2421 = vadd.xlane.f32.xlu0 %v2420
    %v2422 = vpop.xlane.xlu0 %2421
    %v2423 = vsel %vm2158, %v2335, 0.0
    %2424 = vadd.xlane.f32.xlu0 %v2423
    %v2425 = vpop.xlane.xlu0 %2424
    %v2426 = vsel %vm2154, %v2337, 0.0
    %2427 = vadd.xlane.f32.xlu0 %v2426
    %v2428 = vpop.xlane.xlu0 %2427
    %v2429 = vsel %vm2158, %v2339, 0.0
    %2430 = vadd.xlane.f32.xlu0 %v2429
    %v2431 = vpop.xlane.xlu0 %2430
    %v2432 = vsel %vm2154, %v2341, 0.0
    %2433 = vadd.xlane.f32.xlu0 %v2432
    %v2434 = vpop.xlane.xlu0 %2433
    %v2435 = vsel %vm2158, %v2343, 0.0
    %2436 = vadd.xlane.f32.xlu0 %v2435
    %v2437 = vpop.xlane.xlu0 %2436
    %v2438 = vsel %vm2154, %v2345, 0.0
    %2439 = vadd.xlane.f32.xlu0 %v2438
    %v2440 = vpop.xlane.xlu0 %2439
    %v2441 = vsel %vm2158, %v2347, 0.0
    %2442 = vadd.xlane.f32.xlu0 %v2441
    %v2443 = vpop.xlane.xlu0 %2442
    %v2444 = vrcp.pop %v2350
    %v2445 = vrcp.pop %v2353
    %v2446 = vrcp.pop %v2356
    %v2447 = vrcp.pop %v2359
    %v2448 = vrcp.pop %v2362
    %v2449 = vrcp.pop %v2365
    %v2450 = vrcp.pop %v2368
    %v2451 = vrcp.pop %v2371
    %v2452 = vrcp.pop %v2374
    %v2453 = vrcp.pop %v2377
    %v2454 = vrcp.pop %v2380
    %v2455 = vrcp.pop %v2383
    %v2456 = vrcp.pop %v2386
    %v2457 = vrcp.pop %v2389
    %v2458 = vrcp.pop %v2392
    %v2459 = vrcp.pop %v2395
    %v2460 = vrcp.pop %v2398
    %v2461 = vrcp.pop %v2401
    %v2462 = vrcp.pop %v2404
    %v2463 = vrcp.pop %v2407
    %v2464 = vrcp.pop %v2410
    %v2465 = vrcp.pop %v2413
    %v2466 = vrcp.pop %v2416
    %v2467 = vrcp.pop %v2419
    %v2468 = vrcp.pop %v2422
    %v2469 = vrcp.pop %v2425
    %v2470 = vrcp.pop %v2428
    %v2471 = vrcp.pop %v2431
    %v2472 = vrcp.pop %v2434
    %v2473 = vrcp.pop %v2437
    %v2474 = vrcp.pop %v2440
    %v2475 = vrcp.pop %v2443
    %v2476 = vmul.f32 %v2285, %v2444
    %v2477 = vmul.f32 %v2287, %v2445
    %v2478 = vmul.f32 %v2289, %v2446
    %v2479 = vmul.f32 %v2291, %v2447
    %v2480 = vmul.f32 %v2293, %v2448
    %v2481 = vmul.f32 %v2295, %v2449
    %v2482 = vmul.f32 %v2297, %v2450
    %v2483 = vmul.f32 %v2299, %v2451
    %v2484 = vmul.f32 %v2301, %v2452
    %v2485 = vmul.f32 %v2303, %v2453
    %v2486 = vmul.f32 %v2305, %v2454
    %v2487 = vmul.f32 %v2307, %v2455
    %v2488 = vmul.f32 %v2309, %v2456
    %v2489 = vmul.f32 %v2311, %v2457
    %v2490 = vmul.f32 %v2313, %v2458
    %v2491 = vmul.f32 %v2315, %v2459
    %v2492 = vmul.f32 %v2317, %v2460
    %v2493 = vmul.f32 %v2319, %v2461
    %v2494 = vmul.f32 %v2321, %v2462
    %v2495 = vmul.f32 %v2323, %v2463
    %v2496 = vmul.f32 %v2325, %v2464
    %v2497 = vmul.f32 %v2327, %v2465
    %v2498 = vmul.f32 %v2329, %v2466
    %v2499 = vmul.f32 %v2331, %v2467
    %v2500 = vmul.f32 %v2333, %v2468
    %v2501 = vmul.f32 %v2335, %v2469
    %v2502 = vmul.f32 %v2337, %v2470
    %v2503 = vmul.f32 %v2339, %v2471
    %v2504 = vmul.f32 %v2341, %v2472
    %v2505 = vmul.f32 %v2343, %v2473
    %v2506 = vmul.f32 %v2345, %v2474
    %v2507 = vmul.f32 %v2347, %v2475
    %v2508 = vpack.c.bf16 %v2477, %v2476
    %v2509 = vpack.c.bf16 %v2479, %v2478
    %v2510 = vpack.c.bf16 %v2481, %v2480
    %v2511 = vpack.c.bf16 %v2483, %v2482
    %v2512 = vpack.c.bf16 %v2485, %v2484
    %v2513 = vpack.c.bf16 %v2487, %v2486
    %v2514 = vpack.c.bf16 %v2489, %v2488
    %v2515 = vpack.c.bf16 %v2491, %v2490
    %v2516 = vpack.c.bf16 %v2493, %v2492
    %v2517 = vpack.c.bf16 %v2495, %v2494
    %v2518 = vpack.c.bf16 %v2497, %v2496
    %v2519 = vpack.c.bf16 %v2499, %v2498
    %v2520 = vpack.c.bf16 %v2501, %v2500
    %v2521 = vpack.c.bf16 %v2503, %v2502
    %v2522 = vpack.c.bf16 %v2505, %v2504
    %v2523 = vpack.c.bf16 %v2507, %v2506
    %v2525 = vsel %vm2154, %v2508, 0
    %vm2527 = vcmask 1045504
    %v2529 = vsel %vm2527, %v1193, 0
    %2531 = vmatprep.subr.bf16.mxu0 0
    %2532 = vmatpush1.bf16.msra.mxu0 %v2529
    %2533 = vmatprep.subr.bf16.mxu0 0
    %2534 = vmatpush1.bf16.msra.mxu0 0
    %2535 = vmatprep.subr.bf16.mxu0 0
    %2536 = vmatpush1.bf16.msra.mxu0 0
    %2537 = vmatprep.subr.bf16.mxu0 0
    %2538 = vmatpush1.bf16.msra.mxu0 0
    %2539 = vmatprep.subr.bf16.mxu0 0
    %2540 = vmatpush1.bf16.msra.mxu0 0
    %2541 = vmatprep.subr.bf16.mxu0 0
    %2542 = vmatpush1.bf16.msra.mxu0 0
    %2543 = vmatprep.subr.bf16.mxu0 0
    %2544 = vmatpush1.bf16.msra.mxu0 0
    %2545 = vmatprep.subr.bf16.mxu0 0
    %2546 = vmatpush1.bf16.msra.mxu0 0
    %2547 = vmatprep.subr.bf16.mxu0 0
    %2548 = vmatpush1.bf16.msra.mxu0 0
    %2549 = vmatprep.subr.bf16.mxu0 0
    %2550 = vmatpush1.bf16.msra.mxu0 0
    %2551 = vmatprep.subr.bf16.mxu0 0
    %2552 = vmatpush1.bf16.msra.mxu0 0
    %2553 = vmatprep.subr.bf16.mxu0 0
    %2554 = vmatpush1.bf16.msra.mxu0 0
    %2555 = vmatprep.subr.bf16.mxu0 0
    %2556 = vmatpush1.bf16.msra.mxu0 0
    %2557 = vmatprep.subr.bf16.mxu0 0
    %2558 = vmatpush1.bf16.msra.mxu0 0
    %2559 = vmatprep.subr.bf16.mxu0 0
    %2560 = vmatpush1.bf16.msra.mxu0 0
    %2561 = vmatprep.subr.bf16.mxu0 0
    %2562 = vmatpush1.bf16.msra.mxu0 0
    %2563 = vmatprep.mubr.bf16.mxu0 0
    %2564 = vmatmul.mubr.bf16.gmra.mrb[0].mxu0 %v2525
    %v2565 = vpop.f32.mrb[0].mxu0
    %v2566 = vadd.f32 0.0, %v2565
    %v2567 = vpop.f32.mrb[0].mxu0
    %v2568 = vpop.f32.mrb[0].mxu0
    %v2569 = vadd.f32 0.0, %v2568
    %v2570 = vpop.f32.mrb[0].mxu0
    %2571 = vdwg.mxu0
    %v2573 = vsel %vm2154, %v2509, 0
    %v2576 = vsel %vm2527, %v1194, 0
    %2578 = vmatprep.subr.bf16.mxu0 0
    %2579 = vmatpush1.bf16.msra.mxu0 %v2576
    %2580 = vmatprep.subr.bf16.mxu0 0
    %2581 = vmatpush1.bf16.msra.mxu0 0
    %2582 = vmatprep.subr.bf16.mxu0 0
    %2583 = vmatpush1.bf16.msra.mxu0 0
    %2584 = vmatprep.subr.bf16.mxu0 0
    %2585 = vmatpush1.bf16.msra.mxu0 0
    %2586 = vmatprep.subr.bf16.mxu0 0
    %2587 = vmatpush1.bf16.msra.mxu0 0
    %2588 = vmatprep.subr.bf16.mxu0 0
    %2589 = vmatpush1.bf16.msra.mxu0 0
    %2590 = vmatprep.subr.bf16.mxu0 0
    %2591 = vmatpush1.bf16.msra.mxu0 0
    %2592 = vmatprep.subr.bf16.mxu0 0
    %2593 = vmatpush1.bf16.msra.mxu0 0
    %2594 = vmatprep.subr.bf16.mxu0 0
    %2595 = vmatpush1.bf16.msra.mxu0 0
    %2596 = vmatprep.subr.bf16.mxu0 0
    %2597 = vmatpush1.bf16.msra.mxu0 0
    %2598 = vmatprep.subr.bf16.mxu0 0
    %2599 = vmatpush1.bf16.msra.mxu0 0
    %2600 = vmatprep.subr.bf16.mxu0 0
    %2601 = vmatpush1.bf16.msra.mxu0 0
    %2602 = vmatprep.subr.bf16.mxu0 0
    %2603 = vmatpush1.bf16.msra.mxu0 0
    %2604 = vmatprep.subr.bf16.mxu0 0
    %2605 = vmatpush1.bf16.msra.mxu0 0
    %2606 = vmatprep.subr.bf16.mxu0 0
    %2607 = vmatpush1.bf16.msra.mxu0 0
    %2608 = vmatprep.subr.bf16.mxu0 0
    %2609 = vmatpush1.bf16.msra.mxu0 0
    %2610 = vmatprep.mubr.bf16.mxu0 0
    %2611 = vmatmul.mubr.bf16.gmra.mrb[0].mxu0 %v2573
    %v2612 = vpop.f32.mrb[0].mxu0
    %v2613 = vadd.f32 0.0, %v2612
    %v2614 = vpop.f32.mrb[0].mxu0
    %v2615 = vpop.f32.mrb[0].mxu0
    %v2616 = vadd.f32 0.0, %v2615
    %v2617 = vpop.f32.mrb[0].mxu0
    %2618 = vdwg.mxu0
    %v2620 = vsel %vm2154, %v2510, 0
    %v2623 = vsel %vm2527, %v1195, 0
    %2625 = vmatprep.subr.bf16.mxu0 0
    %2626 = vmatpush1.bf16.msra.mxu0 %v2623
    %2627 = vmatprep.subr.bf16.mxu0 0
    %2628 = vmatpush1.bf16.msra.mxu0 0
    %2629 = vmatprep.subr.bf16.mxu0 0
    %2630 = vmatpush1.bf16.msra.mxu0 0
    %2631 = vmatprep.subr.bf16.mxu0 0
    %2632 = vmatpush1.bf16.msra.mxu0 0
    %2633 = vmatprep.subr.bf16.mxu0 0
    %2634 = vmatpush1.bf16.msra.mxu0 0
    %2635 = vmatprep.subr.bf16.mxu0 0
    %2636 = vmatpush1.bf16.msra.mxu0 0
    %2637 = vmatprep.subr.bf16.mxu0 0
    %2638 = vmatpush1.bf16.msra.mxu0 0
    %2639 = vmatprep.subr.bf16.mxu0 0
    %2640 = vmatpush1.bf16.msra.mxu0 0
    %2641 = vmatprep.subr.bf16.mxu0 0
    %2642 = vmatpush1.bf16.msra.mxu0 0
    %2643 = vmatprep.subr.bf16.mxu0 0
    %2644 = vmatpush1.bf16.msra.mxu0 0
    %2645 = vmatprep.subr.bf16.mxu0 0
    %2646 = vmatpush1.bf16.msra.mxu0 0
    %2647 = vmatprep.subr.bf16.mxu0 0
    %2648 = vmatpush1.bf16.msra.mxu0 0
    %2649 = vmatprep.subr.bf16.mxu0 0
    %2650 = vmatpush1.bf16.msra.mxu0 0
    %2651 = vmatprep.subr.bf16.mxu0 0
    %2652 = vmatpush1.bf16.msra.mxu0 0
    %2653 = vmatprep.subr.bf16.mxu0 0
    %2654 = vmatpush1.bf16.msra.mxu0 0
    %2655 = vmatprep.subr.bf16.mxu0 0
    %2656 = vmatpush1.bf16.msra.mxu0 0
    %2657 = vmatprep.mubr.bf16.mxu0 0
    %2658 = vmatmul.mubr.bf16.gmra.mrb[0].mxu0 %v2620
    %v2659 = vpop.f32.mrb[0].mxu0
    %v2660 = vadd.f32 0.0, %v2659
    %v2661 = vpop.f32.mrb[0].mxu0
    %v2662 = vpop.f32.mrb[0].mxu0
    %v2663 = vadd.f32 0.0, %v2662
    %v2664 = vpop.f32.mrb[0].mxu0
    %2665 = vdwg.mxu0
    %v2667 = vsel %vm2154, %v2511, 0
    %v2670 = vsel %vm2527, %v1196, 0
    %2672 = vmatprep.subr.bf16.mxu0 0
    %2673 = vmatpush1.bf16.msra.mxu0 %v2670
    %2674 = vmatprep.subr.bf16.mxu0 0
    %2675 = vmatpush1.bf16.msra.mxu0 0
    %2676 = vmatprep.subr.bf16.mxu0 0
    %2677 = vmatpush1.bf16.msra.mxu0 0
    %2678 = vmatprep.subr.bf16.mxu0 0
    %2679 = vmatpush1.bf16.msra.mxu0 0
    %2680 = vmatprep.subr.bf16.mxu0 0
    %2681 = vmatpush1.bf16.msra.mxu0 0
    %2682 = vmatprep.subr.bf16.mxu0 0
    %2683 = vmatpush1.bf16.msra.mxu0 0
    %2684 = vmatprep.subr.bf16.mxu0 0
    %2685 = vmatpush1.bf16.msra.mxu0 0
    %2686 = vmatprep.subr.bf16.mxu0 0
    %2687 = vmatpush1.bf16.msra.mxu0 0
    %2688 = vmatprep.subr.bf16.mxu0 0
    %2689 = vmatpush1.bf16.msra.mxu0 0
    %2690 = vmatprep.subr.bf16.mxu0 0
    %2691 = vmatpush1.bf16.msra.mxu0 0
    %2692 = vmatprep.subr.bf16.mxu0 0
    %2693 = vmatpush1.bf16.msra.mxu0 0
    %2694 = vmatprep.subr.bf16.mxu0 0
    %2695 = vmatpush1.bf16.msra.mxu0 0
    %2696 = vmatprep.subr.bf16.mxu0 0
    %2697 = vmatpush1.bf16.msra.mxu0 0
    %2698 = vmatprep.subr.bf16.mxu0 0
    %2699 = vmatpush1.bf16.msra.mxu0 0
    %2700 = vmatprep.subr.bf16.mxu0 0
    %2701 = vmatpush1.bf16.msra.mxu0 0
    %2702 = vmatprep.subr.bf16.mxu0 0
    %2703 = vmatpush1.bf16.msra.mxu0 0
    %2704 = vmatprep.mubr.bf16.mxu0 0
    %2705 = vmatmul.mubr.bf16.gmra.mrb[0].mxu0 %v2667
    %v2706 = vpop.f32.mrb[0].mxu0
    %v2707 = vadd.f32 0.0, %v2706
    %v2708 = vpop.f32.mrb[0].mxu0
    %v2709 = vpop.f32.mrb[0].mxu0
    %v2710 = vadd.f32 0.0, %v2709
    %v2711 = vpop.f32.mrb[0].mxu0
    %2712 = vdwg.mxu0
    %v2714 = vsel %vm2154, %v2512, 0
    %v2717 = vsel %vm2527, %v1197, 0
    %2719 = vmatprep.subr.bf16.mxu0 0
    %2720 = vmatpush1.bf16.msra.mxu0 %v2717
    %2721 = vmatprep.subr.bf16.mxu0 0
    %2722 = vmatpush1.bf16.msra.mxu0 0
    %2723 = vmatprep.subr.bf16.mxu0 0
    %2724 = vmatpush1.bf16.msra.mxu0 0
    %2725 = vmatprep.subr.bf16.mxu0 0
    %2726 = vmatpush1.bf16.msra.mxu0 0
    %2727 = vmatprep.subr.bf16.mxu0 0
    %2728 = vmatpush1.bf16.msra.mxu0 0
    %2729 = vmatprep.subr.bf16.mxu0 0
    %2730 = vmatpush1.bf16.msra.mxu0 0
    %2731 = vmatprep.subr.bf16.mxu0 0
    %2732 = vmatpush1.bf16.msra.mxu0 0
    %2733 = vmatprep.subr.bf16.mxu0 0
    %2734 = vmatpush1.bf16.msra.mxu0 0
    %2735 = vmatprep.subr.bf16.mxu0 0
    %2736 = vmatpush1.bf16.msra.mxu0 0
    %2737 = vmatprep.subr.bf16.mxu0 0
    %2738 = vmatpush1.bf16.msra.mxu0 0
    %2739 = vmatprep.subr.bf16.mxu0 0
    %2740 = vmatpush1.bf16.msra.mxu0 0
    %2741 = vmatprep.subr.bf16.mxu0 0
    %2742 = vmatpush1.bf16.msra.mxu0 0
    %2743 = vmatprep.subr.bf16.mxu0 0
    %2744 = vmatpush1.bf16.msra.mxu0 0
    %2745 = vmatprep.subr.bf16.mxu0 0
    %2746 = vmatpush1.bf16.msra.mxu0 0
    %2747 = vmatprep.subr.bf16.mxu0 0
    %2748 = vmatpush1.bf16.msra.mxu0 0
    %2749 = vmatprep.subr.bf16.mxu0 0
    %2750 = vmatpush1.bf16.msra.mxu0 0
    %2751 = vmatprep.mubr.bf16.mxu0 0
    %2752 = vmatmul.mubr.bf16.gmra.mrb[0].mxu0 %v2714
    %v2753 = vpop.f32.mrb[0].mxu0
    %v2754 = vadd.f32 0.0, %v2753
    %v2755 = vpop.f32.mrb[0].mxu0
    %v2756 = vpop.f32.mrb[0].mxu0
    %v2757 = vadd.f32 0.0, %v2756
    %v2758 = vpop.f32.mrb[0].mxu0
    %2759 = vdwg.mxu0
    %v2761 = vsel %vm2154, %v2513, 0
    %v2764 = vsel %vm2527, %v1198, 0
    %2766 = vmatprep.subr.bf16.mxu0 0
    %2767 = vmatpush1.bf16.msra.mxu0 %v2764
    %2768 = vmatprep.subr.bf16.mxu0 0
    %2769 = vmatpush1.bf16.msra.mxu0 0
    %2770 = vmatprep.subr.bf16.mxu0 0
    %2771 = vmatpush1.bf16.msra.mxu0 0
    %2772 = vmatprep.subr.bf16.mxu0 0
    %2773 = vmatpush1.bf16.msra.mxu0 0
    %2774 = vmatprep.subr.bf16.mxu0 0
    %2775 = vmatpush1.bf16.msra.mxu0 0
    %2776 = vmatprep.subr.bf16.mxu0 0
    %2777 = vmatpush1.bf16.msra.mxu0 0
    %2778 = vmatprep.subr.bf16.mxu0 0
    %2779 = vmatpush1.bf16.msra.mxu0 0
    %2780 = vmatprep.subr.bf16.mxu0 0
    %2781 = vmatpush1.bf16.msra.mxu0 0
    %2782 = vmatprep.subr.bf16.mxu0 0
    %2783 = vmatpush1.bf16.msra.mxu0 0
    %2784 = vmatprep.subr.bf16.mxu0 0
    %2785 = vmatpush1.bf16.msra.mxu0 0
    %2786 = vmatprep.subr.bf16.mxu0 0
    %2787 = vmatpush1.bf16.msra.mxu0 0
    %2788 = vmatprep.subr.bf16.mxu0 0
    %2789 = vmatpush1.bf16.msra.mxu0 0
    %2790 = vmatprep.subr.bf16.mxu0 0
    %2791 = vmatpush1.bf16.msra.mxu0 0
    %2792 = vmatprep.subr.bf16.mxu0 0
    %2793 = vmatpush1.bf16.msra.mxu0 0
    %2794 = vmatprep.subr.bf16.mxu0 0
    %2795 = vmatpush1.bf16.msra.mxu0 0
    %2796 = vmatprep.subr.bf16.mxu0 0
    %2797 = vmatpush1.bf16.msra.mxu0 0
    %2798 = vmatprep.mubr.bf16.mxu0 0
    %2799 = vmatmul.mubr.bf16.gmra.mrb[0].mxu0 %v2761
    %v2800 = vpop.f32.mrb[0].mxu0
    %v2801 = vadd.f32 0.0, %v2800
    %v2802 = vpop.f32.mrb[0].mxu0
    %v2803 = vpop.f32.mrb[0].mxu0
    %v2804 = vadd.f32 0.0, %v2803
    %v2805 = vpop.f32.mrb[0].mxu0
    %2806 = vdwg.mxu0
    %v2808 = vsel %vm2154, %v2514, 0
    %v2811 = vsel %vm2527, %v1199, 0
    %2813 = vmatprep.subr.bf16.mxu0 0
    %2814 = vmatpush1.bf16.msra.mxu0 %v2811
    %2815 = vmatprep.subr.bf16.mxu0 0
    %2816 = vmatpush1.bf16.msra.mxu0 0
    %2817 = vmatprep.subr.bf16.mxu0 0
    %2818 = vmatpush1.bf16.msra.mxu0 0
    %2819 = vmatprep.subr.bf16.mxu0 0
    %2820 = vmatpush1.bf16.msra.mxu0 0
    %2821 = vmatprep.subr.bf16.mxu0 0
    %2822 = vmatpush1.bf16.msra.mxu0 0
    %2823 = vmatprep.subr.bf16.mxu0 0
    %2824 = vmatpush1.bf16.msra.mxu0 0
    %2825 = vmatprep.subr.bf16.mxu0 0
    %2826 = vmatpush1.bf16.msra.mxu0 0
    %2827 = vmatprep.subr.bf16.mxu0 0
    %2828 = vmatpush1.bf16.msra.mxu0 0
    %2829 = vmatprep.subr.bf16.mxu0 0
    %2830 = vmatpush1.bf16.msra.mxu0 0
    %2831 = vmatprep.subr.bf16.mxu0 0
    %2832 = vmatpush1.bf16.msra.mxu0 0
    %2833 = vmatprep.subr.bf16.mxu0 0
    %2834 = vmatpush1.bf16.msra.mxu0 0
    %2835 = vmatprep.subr.bf16.mxu0 0
    %2836 = vmatpush1.bf16.msra.mxu0 0
    %2837 = vmatprep.subr.bf16.mxu0 0
    %2838 = vmatpush1.bf16.msra.mxu0 0
    %2839 = vmatprep.subr.bf16.mxu0 0
    %2840 = vmatpush1.bf16.msra.mxu0 0
    %2841 = vmatprep.subr.bf16.mxu0 0
    %2842 = vmatpush1.bf16.msra.mxu0 0
    %2843 = vmatprep.subr.bf16.mxu0 0
    %2844 = vmatpush1.bf16.msra.mxu0 0
    %2845 = vmatprep.mubr.bf16.mxu0 0
    %2846 = vmatmul.mubr.bf16.gmra.mrb[0].mxu0 %v2808
    %v2847 = vpop.f32.mrb[0].mxu0
    %v2848 = vadd.f32 0.0, %v2847
    %v2849 = vpop.f32.mrb[0].mxu0
    %v2850 = vpop.f32.mrb[0].mxu0
    %v2851 = vadd.f32 0.0, %v2850
    %v2852 = vpop.f32.mrb[0].mxu0
    %2853 = vdwg.mxu0
    %v2855 = vsel %vm2154, %v2515, 0
    %v2858 = vsel %vm2527, %v1200, 0
    %2860 = vmatprep.subr.bf16.mxu0 0
    %2861 = vmatpush1.bf16.msra.mxu0 %v2858
    %2862 = vmatprep.subr.bf16.mxu0 0
    %2863 = vmatpush1.bf16.msra.mxu0 0
    %2864 = vmatprep.subr.bf16.mxu0 0
    %2865 = vmatpush1.bf16.msra.mxu0 0
    %2866 = vmatprep.subr.bf16.mxu0 0
    %2867 = vmatpush1.bf16.msra.mxu0 0
    %2868 = vmatprep.subr.bf16.mxu0 0
    %2869 = vmatpush1.bf16.msra.mxu0 0
    %2870 = vmatprep.subr.bf16.mxu0 0
    %2871 = vmatpush1.bf16.msra.mxu0 0
    %2872 = vmatprep.subr.bf16.mxu0 0
    %2873 = vmatpush1.bf16.msra.mxu0 0
    %2874 = vmatprep.subr.bf16.mxu0 0
    %2875 = vmatpush1.bf16.msra.mxu0 0
    %2876 = vmatprep.subr.bf16.mxu0 0
    %2877 = vmatpush1.bf16.msra.mxu0 0
    %2878 = vmatprep.subr.bf16.mxu0 0
    %2879 = vmatpush1.bf16.msra.mxu0 0
    %2880 = vmatprep.subr.bf16.mxu0 0
    %2881 = vmatpush1.bf16.msra.mxu0 0
    %2882 = vmatprep.subr.bf16.mxu0 0
    %2883 = vmatpush1.bf16.msra.mxu0 0
    %2884 = vmatprep.subr.bf16.mxu0 0
    %2885 = vmatpush1.bf16.msra.mxu0 0
    %2886 = vmatprep.subr.bf16.mxu0 0
    %2887 = vmatpush1.bf16.msra.mxu0 0
    %2888 = vmatprep.subr.bf16.mxu0 0
    %2889 = vmatpush1.bf16.msra.mxu0 0
    %2890 = vmatprep.subr.bf16.mxu0 0
    %2891 = vmatpush1.bf16.msra.mxu0 0
    %2892 = vmatprep.mubr.bf16.mxu0 0
    %2893 = vmatmul.mubr.bf16.gmra.mrb[0].mxu0 %v2855
    %v2894 = vpop.f32.mrb[0].mxu0
    %v2895 = vadd.f32 0.0, %v2894
    %v2896 = vpop.f32.mrb[0].mxu0
    %v2897 = vpop.f32.mrb[0].mxu0
    %v2898 = vadd.f32 0.0, %v2897
    %v2899 = vpop.f32.mrb[0].mxu0
    %2900 = vdwg.mxu0
    %v2902 = vsel %vm2154, %v2516, 0
    %v2905 = vsel %vm2527, %v1201, 0
    %2907 = vmatprep.subr.bf16.mxu0 0
    %2908 = vmatpush1.bf16.msra.mxu0 %v2905
    %2909 = vmatprep.subr.bf16.mxu0 0
    %2910 = vmatpush1.bf16.msra.mxu0 0
    %2911 = vmatprep.subr.bf16.mxu0 0
    %2912 = vmatpush1.bf16.msra.mxu0 0
    %2913 = vmatprep.subr.bf16.mxu0 0
    %2914 = vmatpush1.bf16.msra.mxu0 0
    %2915 = vmatprep.subr.bf16.mxu0 0
    %2916 = vmatpush1.bf16.msra.mxu0 0
    %2917 = vmatprep.subr.bf16.mxu0 0
    %2918 = vmatpush1.bf16.msra.mxu0 0
    %2919 = vmatprep.subr.bf16.mxu0 0
    %2920 = vmatpush1.bf16.msra.mxu0 0
    %2921 = vmatprep.subr.bf16.mxu0 0
    %2922 = vmatpush1.bf16.msra.mxu0 0
    %2923 = vmatprep.subr.bf16.mxu0 0
    %2924 = vmatpush1.bf16.msra.mxu0 0
    %2925 = vmatprep.subr.bf16.mxu0 0
    %2926 = vmatpush1.bf16.msra.mxu0 0
    %2927 = vmatprep.subr.bf16.mxu0 0
    %2928 = vmatpush1.bf16.msra.mxu0 0
    %2929 = vmatprep.subr.bf16.mxu0 0
    %2930 = vmatpush1.bf16.msra.mxu0 0
    %2931 = vmatprep.subr.bf16.mxu0 0
    %2932 = vmatpush1.bf16.msra.mxu0 0
    %2933 = vmatprep.subr.bf16.mxu0 0
    %2934 = vmatpush1.bf16.msra.mxu0 0
    %2935 = vmatprep.subr.bf16.mxu0 0
    %2936 = vmatpush1.bf16.msra.mxu0 0
    %2937 = vmatprep.subr.bf16.mxu0 0
    %2938 = vmatpush1.bf16.msra.mxu0 0
    %2939 = vmatprep.mubr.bf16.mxu0 0
    %2940 = vmatmul.mubr.bf16.gmra.mrb[0].mxu0 %v2902
    %v2941 = vpop.f32.mrb[0].mxu0
    %v2942 = vadd.f32 0.0, %v2941
    %v2943 = vpop.f32.mrb[0].mxu0
    %v2944 = vpop.f32.mrb[0].mxu0
    %v2945 = vadd.f32 0.0, %v2944
    %v2946 = vpop.f32.mrb[0].mxu0
    %2947 = vdwg.mxu0
    %v2949 = vsel %vm2154, %v2517, 0
    %v2952 = vsel %vm2527, %v1202, 0
    %2954 = vmatprep.subr.bf16.mxu0 0
    %2955 = vmatpush1.bf16.msra.mxu0 %v2952
    %2956 = vmatprep.subr.bf16.mxu0 0
    %2957 = vmatpush1.bf16.msra.mxu0 0
    %2958 = vmatprep.subr.bf16.mxu0 0
    %2959 = vmatpush1.bf16.msra.mxu0 0
    %2960 = vmatprep.subr.bf16.mxu0 0
    %2961 = vmatpush1.bf16.msra.mxu0 0
    %2962 = vmatprep.subr.bf16.mxu0 0
    %2963 = vmatpush1.bf16.msra.mxu0 0
    %2964 = vmatprep.subr.bf16.mxu0 0
    %2965 = vmatpush1.bf16.msra.mxu0 0
    %2966 = vmatprep.subr.bf16.mxu0 0
    %2967 = vmatpush1.bf16.msra.mxu0 0
    %2968 = vmatprep.subr.bf16.mxu0 0
    %2969 = vmatpush1.bf16.msra.mxu0 0
    %2970 = vmatprep.subr.bf16.mxu0 0
    %2971 = vmatpush1.bf16.msra.mxu0 0
    %2972 = vmatprep.subr.bf16.mxu0 0
    %2973 = vmatpush1.bf16.msra.mxu0 0
    %2974 = vmatprep.subr.bf16.mxu0 0
    %2975 = vmatpush1.bf16.msra.mxu0 0
    %2976 = vmatprep.subr.bf16.mxu0 0
    %2977 = vmatpush1.bf16.msra.mxu0 0
    %2978 = vmatprep.subr.bf16.mxu0 0
    %2979 = vmatpush1.bf16.msra.mxu0 0
    %2980 = vmatprep.subr.bf16.mxu0 0
    %2981 = vmatpush1.bf16.msra.mxu0 0
    %2982 = vmatprep.subr.bf16.mxu0 0
    %2983 = vmatpush1.bf16.msra.mxu0 0
    %2984 = vmatprep.subr.bf16.mxu0 0
    %2985 = vmatpush1.bf16.msra.mxu0 0
    %2986 = vmatprep.mubr.bf16.mxu0 0
    %2987 = vmatmul.mubr.bf16.gmra.mrb[0].mxu0 %v2949
    %v2988 = vpop.f32.mrb[0].mxu0
    %v2989 = vadd.f32 0.0, %v2988
    %v2990 = vpop.f32.mrb[0].mxu0
    %v2991 = vpop.f32.mrb[0].mxu0
    %v2992 = vadd.f32 0.0, %v2991
    %v2993 = vpop.f32.mrb[0].mxu0
    %2994 = vdwg.mxu0
    %v2996 = vsel %vm2154, %v2518, 0
    %v2999 = vsel %vm2527, %v1203, 0
    %3001 = vmatprep.subr.bf16.mxu0 0
    %3002 = vmatpush1.bf16.msra.mxu0 %v2999
    %3003 = vmatprep.subr.bf16.mxu0 0
    %3004 = vmatpush1.bf16.msra.mxu0 0
    %3005 = vmatprep.subr.bf16.mxu0 0
    %3006 = vmatpush1.bf16.msra.mxu0 0
    %3007 = vmatprep.subr.bf16.mxu0 0
    %3008 = vmatpush1.bf16.msra.mxu0 0
    %3009 = vmatprep.subr.bf16.mxu0 0
    %3010 = vmatpush1.bf16.msra.mxu0 0
    %3011 = vmatprep.subr.bf16.mxu0 0
    %3012 = vmatpush1.bf16.msra.mxu0 0
    %3013 = vmatprep.subr.bf16.mxu0 0
    %3014 = vmatpush1.bf16.msra.mxu0 0
    %3015 = vmatprep.subr.bf16.mxu0 0
    %3016 = vmatpush1.bf16.msra.mxu0 0
    %3017 = vmatprep.subr.bf16.mxu0 0
    %3018 = vmatpush1.bf16.msra.mxu0 0
    %3019 = vmatprep.subr.bf16.mxu0 0
    %3020 = vmatpush1.bf16.msra.mxu0 0
    %3021 = vmatprep.subr.bf16.mxu0 0
    %3022 = vmatpush1.bf16.msra.mxu0 0
    %3023 = vmatprep.subr.bf16.mxu0 0
    %3024 = vmatpush1.bf16.msra.mxu0 0
    %3025 = vmatprep.subr.bf16.mxu0 0
    %3026 = vmatpush1.bf16.msra.mxu0 0
    %3027 = vmatprep.subr.bf16.mxu0 0
    %3028 = vmatpush1.bf16.msra.mxu0 0
    %3029 = vmatprep.subr.bf16.mxu0 0
    %3030 = vmatpush1.bf16.msra.mxu0 0
    %3031 = vmatprep.subr.bf16.mxu0 0
    %3032 = vmatpush1.bf16.msra.mxu0 0
    %3033 = vmatprep.mubr.bf16.mxu0 0
    %3034 = vmatmul.mubr.bf16.gmra.mrb[0].mxu0 %v2996
    %v3035 = vpop.f32.mrb[0].mxu0
    %v3036 = vadd.f32 0.0, %v3035
    %v3037 = vpop.f32.mrb[0].mxu0
    %v3038 = vpop.f32.mrb[0].mxu0
    %v3039 = vadd.f32 0.0, %v3038
    %v3040 = vpop.f32.mrb[0].mxu0
    %3041 = vdwg.mxu0
    %v3043 = vsel %vm2154, %v2519, 0
    %v3046 = vsel %vm2527, %v1204, 0
    %3048 = vmatprep.subr.bf16.mxu0 0
    %3049 = vmatpush1.bf16.msra.mxu0 %v3046
    %3050 = vmatprep.subr.bf16.mxu0 0
    %3051 = vmatpush1.bf16.msra.mxu0 0
    %3052 = vmatprep.subr.bf16.mxu0 0
    %3053 = vmatpush1.bf16.msra.mxu0 0
    %3054 = vmatprep.subr.bf16.mxu0 0
    %3055 = vmatpush1.bf16.msra.mxu0 0
    %3056 = vmatprep.subr.bf16.mxu0 0
    %3057 = vmatpush1.bf16.msra.mxu0 0
    %3058 = vmatprep.subr.bf16.mxu0 0
    %3059 = vmatpush1.bf16.msra.mxu0 0
    %3060 = vmatprep.subr.bf16.mxu0 0
    %3061 = vmatpush1.bf16.msra.mxu0 0
    %3062 = vmatprep.subr.bf16.mxu0 0
    %3063 = vmatpush1.bf16.msra.mxu0 0
    %3064 = vmatprep.subr.bf16.mxu0 0
    %3065 = vmatpush1.bf16.msra.mxu0 0
    %3066 = vmatprep.subr.bf16.mxu0 0
    %3067 = vmatpush1.bf16.msra.mxu0 0
    %3068 = vmatprep.subr.bf16.mxu0 0
    %3069 = vmatpush1.bf16.msra.mxu0 0
    %3070 = vmatprep.subr.bf16.mxu0 0
    %3071 = vmatpush1.bf16.msra.mxu0 0
    %3072 = vmatprep.subr.bf16.mxu0 0
    %3073 = vmatpush1.bf16.msra.mxu0 0
    %3074 = vmatprep.subr.bf16.mxu0 0
    %3075 = vmatpush1.bf16.msra.mxu0 0
    %3076 = vmatprep.subr.bf16.mxu0 0
    %3077 = vmatpush1.bf16.msra.mxu0 0
    %3078 = vmatprep.subr.bf16.mxu0 0
    %3079 = vmatpush1.bf16.msra.mxu0 0
    %3080 = vmatprep.mubr.bf16.mxu0 0
    %3081 = vmatmul.mubr.bf16.gmra.mrb[0].mxu0 %v3043
    %v3082 = vpop.f32.mrb[0].mxu0
    %v3083 = vadd.f32 0.0, %v3082
    %v3084 = vpop.f32.mrb[0].mxu0
    %v3085 = vpop.f32.mrb[0].mxu0
    %v3086 = vadd.f32 0.0, %v3085
    %v3087 = vpop.f32.mrb[0].mxu0
    %3088 = vdwg.mxu0
    %v3090 = vsel %vm2154, %v2520, 0
    %v3093 = vsel %vm2527, %v1205, 0
    %3095 = vmatprep.subr.bf16.mxu0 0
    %3096 = vmatpush1.bf16.msra.mxu0 %v3093
    %3097 = vmatprep.subr.bf16.mxu0 0
    %3098 = vmatpush1.bf16.msra.mxu0 0
    %3099 = vmatprep.subr.bf16.mxu0 0
    %3100 = vmatpush1.bf16.msra.mxu0 0
    %3101 = vmatprep.subr.bf16.mxu0 0
    %3102 = vmatpush1.bf16.msra.mxu0 0
    %3103 = vmatprep.subr.bf16.mxu0 0
    %3104 = vmatpush1.bf16.msra.mxu0 0
    %3105 = vmatprep.subr.bf16.mxu0 0
    %3106 = vmatpush1.bf16.msra.mxu0 0
    %3107 = vmatprep.subr.bf16.mxu0 0
    %3108 = vmatpush1.bf16.msra.mxu0 0
    %3109 = vmatprep.subr.bf16.mxu0 0
    %3110 = vmatpush1.bf16.msra.mxu0 0
    %3111 = vmatprep.subr.bf16.mxu0 0
    %3112 = vmatpush1.bf16.msra.mxu0 0
    %3113 = vmatprep.subr.bf16.mxu0 0
    %3114 = vmatpush1.bf16.msra.mxu0 0
    %3115 = vmatprep.subr.bf16.mxu0 0
    %3116 = vmatpush1.bf16.msra.mxu0 0
    %3117 = vmatprep.subr.bf16.mxu0 0
    %3118 = vmatpush1.bf16.msra.mxu0 0
    %3119 = vmatprep.subr.bf16.mxu0 0
    %3120 = vmatpush1.bf16.msra.mxu0 0
    %3121 = vmatprep.subr.bf16.mxu0 0
    %3122 = vmatpush1.bf16.msra.mxu0 0
    %3123 = vmatprep.subr.bf16.mxu0 0
    %3124 = vmatpush1.bf16.msra.mxu0 0
    %3125 = vmatprep.subr.bf16.mxu0 0
    %3126 = vmatpush1.bf16.msra.mxu0 0
    %3127 = vmatprep.mubr.bf16.mxu0 0
    %3128 = vmatmul.mubr.bf16.gmra.mrb[0].mxu0 %v3090
    %v3129 = vpop.f32.mrb[0].mxu0
    %v3130 = vadd.f32 0.0, %v3129
    %v3131 = vpop.f32.mrb[0].mxu0
    %v3132 = vpop.f32.mrb[0].mxu0
    %v3133 = vadd.f32 0.0, %v3132
    %v3134 = vpop.f32.mrb[0].mxu0
    %3135 = vdwg.mxu0
    %v3137 = vsel %vm2154, %v2521, 0
    %v3140 = vsel %vm2527, %v1206, 0
    %3142 = vmatprep.subr.bf16.mxu0 0
    %3143 = vmatpush1.bf16.msra.mxu0 %v3140
    %3144 = vmatprep.subr.bf16.mxu0 0
    %3145 = vmatpush1.bf16.msra.mxu0 0
    %3146 = vmatprep.subr.bf16.mxu0 0
    %3147 = vmatpush1.bf16.msra.mxu0 0
    %3148 = vmatprep.subr.bf16.mxu0 0
    %3149 = vmatpush1.bf16.msra.mxu0 0
    %3150 = vmatprep.subr.bf16.mxu0 0
    %3151 = vmatpush1.bf16.msra.mxu0 0
    %3152 = vmatprep.subr.bf16.mxu0 0
    %3153 = vmatpush1.bf16.msra.mxu0 0
    %3154 = vmatprep.subr.bf16.mxu0 0
    %3155 = vmatpush1.bf16.msra.mxu0 0
    %3156 = vmatprep.subr.bf16.mxu0 0
    %3157 = vmatpush1.bf16.msra.mxu0 0
    %3158 = vmatprep.subr.bf16.mxu0 0
    %3159 = vmatpush1.bf16.msra.mxu0 0
    %3160 = vmatprep.subr.bf16.mxu0 0
    %3161 = vmatpush1.bf16.msra.mxu0 0
    %3162 = vmatprep.subr.bf16.mxu0 0
    %3163 = vmatpush1.bf16.msra.mxu0 0
    %3164 = vmatprep.subr.bf16.mxu0 0
    %3165 = vmatpush1.bf16.msra.mxu0 0
    %3166 = vmatprep.subr.bf16.mxu0 0
    %3167 = vmatpush1.bf16.msra.mxu0 0
    %3168 = vmatprep.subr.bf16.mxu0 0
    %3169 = vmatpush1.bf16.msra.mxu0 0
    %3170 = vmatprep.subr.bf16.mxu0 0
    %3171 = vmatpush1.bf16.msra.mxu0 0
    %3172 = vmatprep.subr.bf16.mxu0 0
    %3173 = vmatpush1.bf16.msra.mxu0 0
    %3174 = vmatprep.mubr.bf16.mxu0 0
    %3175 = vmatmul.mubr.bf16.gmra.mrb[0].mxu0 %v3137
    %v3176 = vpop.f32.mrb[0].mxu0
    %v3177 = vadd.f32 0.0, %v3176
    %v3178 = vpop.f32.mrb[0].mxu0
    %v3179 = vpop.f32.mrb[0].mxu0
    %v3180 = vadd.f32 0.0, %v3179
    %v3181 = vpop.f32.mrb[0].mxu0
    %3182 = vdwg.mxu0
    %v3184 = vsel %vm2154, %v2522, 0
    %v3187 = vsel %vm2527, %v1207, 0
    %3189 = vmatprep.subr.bf16.mxu0 0
    %3190 = vmatpush1.bf16.msra.mxu0 %v3187
    %3191 = vmatprep.subr.bf16.mxu0 0
    %3192 = vmatpush1.bf16.msra.mxu0 0
    %3193 = vmatprep.subr.bf16.mxu0 0
    %3194 = vmatpush1.bf16.msra.mxu0 0
    %3195 = vmatprep.subr.bf16.mxu0 0
    %3196 = vmatpush1.bf16.msra.mxu0 0
    %3197 = vmatprep.subr.bf16.mxu0 0
    %3198 = vmatpush1.bf16.msra.mxu0 0
    %3199 = vmatprep.subr.bf16.mxu0 0
    %3200 = vmatpush1.bf16.msra.mxu0 0
    %3201 = vmatprep.subr.bf16.mxu0 0
    %3202 = vmatpush1.bf16.msra.mxu0 0
    %3203 = vmatprep.subr.bf16.mxu0 0
    %3204 = vmatpush1.bf16.msra.mxu0 0
    %3205 = vmatprep.subr.bf16.mxu0 0
    %3206 = vmatpush1.bf16.msra.mxu0 0
    %3207 = vmatprep.subr.bf16.mxu0 0
    %3208 = vmatpush1.bf16.msra.mxu0 0
    %3209 = vmatprep.subr.bf16.mxu0 0
    %3210 = vmatpush1.bf16.msra.mxu0 0
    %3211 = vmatprep.subr.bf16.mxu0 0
    %3212 = vmatpush1.bf16.msra.mxu0 0
    %3213 = vmatprep.subr.bf16.mxu0 0
    %3214 = vmatpush1.bf16.msra.mxu0 0
    %3215 = vmatprep.subr.bf16.mxu0 0
    %3216 = vmatpush1.bf16.msra.mxu0 0
    %3217 = vmatprep.subr.bf16.mxu0 0
    %3218 = vmatpush1.bf16.msra.mxu0 0
    %3219 = vmatprep.subr.bf16.mxu0 0
    %3220 = vmatpush1.bf16.msra.mxu0 0
    %3221 = vmatprep.mubr.bf16.mxu0 0
    %3222 = vmatmul.mubr.bf16.gmra.mrb[0].mxu0 %v3184
    %v3223 = vpop.f32.mrb[0].mxu0
    %v3224 = vadd.f32 0.0, %v3223
    %v3225 = vpop.f32.mrb[0].mxu0
    %v3226 = vpop.f32.mrb[0].mxu0
    %v3227 = vadd.f32 0.0, %v3226
    %v3228 = vpop.f32.mrb[0].mxu0
    %3229 = vdwg.mxu0
    %v3231 = vsel %vm2154, %v2523, 0
    %v3234 = vsel %vm2527, %v1208, 0
    %3236 = vmatprep.subr.bf16.mxu0 0
    %3237 = vmatpush1.bf16.msra.mxu0 %v3234
    %3238 = vmatprep.subr.bf16.mxu0 0
    %3239 = vmatpush1.bf16.msra.mxu0 0
    %3240 = vmatprep.subr.bf16.mxu0 0
    %3241 = vmatpush1.bf16.msra.mxu0 0
    %3242 = vmatprep.subr.bf16.mxu0 0
    %3243 = vmatpush1.bf16.msra.mxu0 0
    %3244 = vmatprep.subr.bf16.mxu0 0
    %3245 = vmatpush1.bf16.msra.mxu0 0
    %3246 = vmatprep.subr.bf16.mxu0 0
    %3247 = vmatpush1.bf16.msra.mxu0 0
    %3248 = vmatprep.subr.bf16.mxu0 0
    %3249 = vmatpush1.bf16.msra.mxu0 0
    %3250 = vmatprep.subr.bf16.mxu0 0
    %3251 = vmatpush1.bf16.msra.mxu0 0
    %3252 = vmatprep.subr.bf16.mxu0 0
    %3253 = vmatpush1.bf16.msra.mxu0 0
    %3254 = vmatprep.subr.bf16.mxu0 0
    %3255 = vmatpush1.bf16.msra.mxu0 0
    %3256 = vmatprep.subr.bf16.mxu0 0
    %3257 = vmatpush1.bf16.msra.mxu0 0
    %3258 = vmatprep.subr.bf16.mxu0 0
    %3259 = vmatpush1.bf16.msra.mxu0 0
    %3260 = vmatprep.subr.bf16.mxu0 0
    %3261 = vmatpush1.bf16.msra.mxu0 0
    %3262 = vmatprep.subr.bf16.mxu0 0
    %3263 = vmatpush1.bf16.msra.mxu0 0
    %3264 = vmatprep.subr.bf16.mxu0 0
    %3265 = vmatpush1.bf16.msra.mxu0 0
    %3266 = vmatprep.subr.bf16.mxu0 0
    %3267 = vmatpush1.bf16.msra.mxu0 0
    %3268 = vmatprep.mubr.bf16.mxu0 0
    %3269 = vmatmul.mubr.bf16.gmra.mrb[0].mxu0 %v3231
    %v3270 = vpop.f32.mrb[0].mxu0
    %v3271 = vadd.f32 0.0, %v3270
    %v3272 = vpop.f32.mrb[0].mxu0
    %v3273 = vpop.f32.mrb[0].mxu0
    %v3274 = vadd.f32 0.0, %v3273
    %v3275 = vpop.f32.mrb[0].mxu0
    %3276 = vdwg.mxu0
    %v3279 = vcombine.high %v1079, %v1079
    %v3281 = vunpack.c.l.s4 1966171168
    %v3282 = vunpack.c.0.s8 %v3281
    %v3283 = vlaneseq
    %v3284 = vshrl.u32 %v3283, 7
    %v3285 = vsub.s32 %v3282, %v3284
    %v3286 = vrot.slane %v1079, %v3285
    %v3288 = vunpack.c.l.s4 1966171168
    %v3289 = vunpack.c.0.s8 %v3288
    %v3290 = vlaneseq
    %v3291 = vshrl.u32 %v3290, 7
    %v3292 = vsub.s32 %v3289, %v3291
    %v3293 = vrot.slane %v3279, %v3292
    %v3294 = vcombine.high %v3286, %v3286
    %v3295 = vcombine.high %v3293, %v3293
    %v3297 = vunpack.c.l.s4 1966171168
    %v3298 = vunpack.c.0.s8 %v3297
    %v3299 = vlaneseq
    %v3300 = vshrl.u32 %v3299, 7
    %v3301 = vsub.s32 %v3298, %v3300
    %v3302 = vrot.slane %v3286, %v3301
    %v3304 = vunpack.c.l.s4 1966171168
    %v3305 = vunpack.c.0.s8 %v3304
    %v3306 = vlaneseq
    %v3307 = vshrl.u32 %v3306, 7
    %v3308 = vsub.s32 %v3305, %v3307
    %v3309 = vrot.slane %v3293, %v3308
    %v3311 = vunpack.c.l.s4 1966171168
    %v3312 = vunpack.c.0.s8 %v3311
    %v3313 = vlaneseq
    %v3314 = vshrl.u32 %v3313, 7
    %v3315 = vsub.s32 %v3312, %v3314
    %v3316 = vrot.slane %v3294, %v3315
    %v3318 = vunpack.c.l.s4 1966171168
    %v3319 = vunpack.c.0.s8 %v3318
    %v3320 = vlaneseq
    %v3321 = vshrl.u32 %v3320, 7
    %v3322 = vsub.s32 %v3319, %v3321
    %v3323 = vrot.slane %v3295, %v3322
    %v3324 = vcombine.high %v3302, %v3302
    %v3325 = vcombine.high %v3309, %v3309
    %v3326 = vcombine.high %v3316, %v3316
    %v3327 = vcombine.high %v3323, %v3323
    %v3328 = vcombine.high %v1080, %v1080
    %v3330 = vunpack.c.l.s4 1966171168
    %v3331 = vunpack.c.0.s8 %v3330
    %v3332 = vlaneseq
    %v3333 = vshrl.u32 %v3332, 7
    %v3334 = vsub.s32 %v3331, %v3333
    %v3335 = vrot.slane %v1080, %v3334
    %v3337 = vunpack.c.l.s4 1966171168
    %v3338 = vunpack.c.0.s8 %v3337
    %v3339 = vlaneseq
    %v3340 = vshrl.u32 %v3339, 7
    %v3341 = vsub.s32 %v3338, %v3340
    %v3342 = vrot.slane %v3328, %v3341
    %v3343 = vcombine.high %v3335, %v3335
    %v3344 = vcombine.high %v3342, %v3342
    %v3346 = vunpack.c.l.s4 1966171168
    %v3347 = vunpack.c.0.s8 %v3346
    %v3348 = vlaneseq
    %v3349 = vshrl.u32 %v3348, 7
    %v3350 = vsub.s32 %v3347, %v3349
    %v3351 = vrot.slane %v3335, %v3350
    %v3353 = vunpack.c.l.s4 1966171168
    %v3354 = vunpack.c.0.s8 %v3353
    %v3355 = vlaneseq
    %v3356 = vshrl.u32 %v3355, 7
    %v3357 = vsub.s32 %v3354, %v3356
    %v3358 = vrot.slane %v3342, %v3357
    %v3360 = vunpack.c.l.s4 1966171168
    %v3361 = vunpack.c.0.s8 %v3360
    %v3362 = vlaneseq
    %v3363 = vshrl.u32 %v3362, 7
    %v3364 = vsub.s32 %v3361, %v3363
    %v3365 = vrot.slane %v3343, %v3364
    %v3367 = vunpack.c.l.s4 1966171168
    %v3368 = vunpack.c.0.s8 %v3367
    %v3369 = vlaneseq
    %v3370 = vshrl.u32 %v3369, 7
    %v3371 = vsub.s32 %v3368, %v3370
    %v3372 = vrot.slane %v3344, %v3371
    %v3373 = vcombine.high %v3351, %v3351
    %v3374 = vcombine.high %v3358, %v3358
    %v3375 = vcombine.high %v3365, %v3365
    %v3376 = vcombine.high %v3372, %v3372
    %v3377 = vlaneseq
    %v3378 = vshrl.u32 %v3377, 7
    %v3379 = vsub.s32 0, %v3378
    %v3380 = vrot.slane %v3302, %v3379
    %v3381 = vlaneseq
    %v3382 = vshrl.u32 %v3381, 7
    %v3383 = vsub.s32 0, %v3382
    %v3384 = vrot.slane %v3316, %v3383
    %v3385 = vlaneseq
    %v3386 = vshrl.u32 %v3385, 7
    %v3387 = vsub.s32 0, %v3386
    %v3388 = vrot.slane %v3324, %v3387
    %v3389 = vlaneseq
    %v3390 = vshrl.u32 %v3389, 7
    %v3391 = vsub.s32 0, %v3390
    %v3392 = vrot.slane %v3326, %v3391
    %v3393 = vlaneseq
    %v3394 = vshrl.u32 %v3393, 7
    %v3395 = vsub.s32 0, %v3394
    %v3396 = vrot.slane %v3309, %v3395
    %v3397 = vlaneseq
    %v3398 = vshrl.u32 %v3397, 7
    %v3399 = vsub.s32 0, %v3398
    %v3400 = vrot.slane %v3323, %v3399
    %v3401 = vlaneseq
    %v3402 = vshrl.u32 %v3401, 7
    %v3403 = vsub.s32 0, %v3402
    %v3404 = vrot.slane %v3325, %v3403
    %v3405 = vlaneseq
    %v3406 = vshrl.u32 %v3405, 7
    %v3407 = vsub.s32 0, %v3406
    %v3408 = vrot.slane %v3327, %v3407
    %v3409 = vlaneseq
    %v3410 = vshrl.u32 %v3409, 7
    %v3411 = vsub.s32 0, %v3410
    %v3412 = vrot.slane %v3351, %v3411
    %v3413 = vlaneseq
    %v3414 = vshrl.u32 %v3413, 7
    %v3415 = vsub.s32 0, %v3414
    %v3416 = vrot.slane %v3365, %v3415
    %v3417 = vlaneseq
    %v3418 = vshrl.u32 %v3417, 7
    %v3419 = vsub.s32 0, %v3418
    %v3420 = vrot.slane %v3373, %v3419
    %v3421 = vlaneseq
    %v3422 = vshrl.u32 %v3421, 7
    %v3423 = vsub.s32 0, %v3422
    %v3424 = vrot.slane %v3375, %v3423
    %v3425 = vlaneseq
    %v3426 = vshrl.u32 %v3425, 7
    %v3427 = vsub.s32 0, %v3426
    %v3428 = vrot.slane %v3358, %v3427
    %v3429 = vlaneseq
    %v3430 = vshrl.u32 %v3429, 7
    %v3431 = vsub.s32 0, %v3430
    %v3432 = vrot.slane %v3372, %v3431
    %v3433 = vlaneseq
    %v3434 = vshrl.u32 %v3433, 7
    %v3435 = vsub.s32 0, %v3434
    %v3436 = vrot.slane %v3374, %v3435
    %v3437 = vlaneseq
    %v3438 = vshrl.u32 %v3437, 7
    %v3439 = vsub.s32 0, %v3438
    %v3440 = vrot.slane %v3376, %v3439
    %v3457 = vmul.f32 %v2566, %v3380
    %v3458 = vmul.f32 %v2569, %v3380
    %v3459 = vmul.f32 %v2613, %v3384
    %v3460 = vmul.f32 %v2616, %v3384
    %v3461 = vmul.f32 %v2660, %v3388
    %v3462 = vmul.f32 %v2663, %v3388
    %v3463 = vmul.f32 %v2707, %v3392
    %v3464 = vmul.f32 %v2710, %v3392
    %v3465 = vmul.f32 %v2754, %v3396
    %v3466 = vmul.f32 %v2757, %v3396
    %v3467 = vmul.f32 %v2801, %v3400
    %v3468 = vmul.f32 %v2804, %v3400
    %v3469 = vmul.f32 %v2848, %v3404
    %v3470 = vmul.f32 %v2851, %v3404
    %v3471 = vmul.f32 %v2895, %v3408
    %v3472 = vmul.f32 %v2898, %v3408
    %v3473 = vmul.f32 %v2942, %v3412
    %v3474 = vmul.f32 %v2945, %v3412
    %v3475 = vmul.f32 %v2989, %v3416
    %v3476 = vmul.f32 %v2992, %v3416
    %v3477 = vmul.f32 %v3036, %v3420
    %v3478 = vmul.f32 %v3039, %v3420
    %v3479 = vmul.f32 %v3083, %v3424
    %v3480 = vmul.f32 %v3086, %v3424
    %v3481 = vmul.f32 %v3130, %v3428
    %v3482 = vmul.f32 %v3133, %v3428
    %v3483 = vmul.f32 %v3177, %v3432
    %v3484 = vmul.f32 %v3180, %v3432
    %v3485 = vmul.f32 %v3224, %v3436
    %v3486 = vmul.f32 %v3227, %v3436
    %v3487 = vmul.f32 %v3271, %v3440
    %v3488 = vmul.f32 %v3274, %v3440
    %v3489 = vsel %vm1212, %v3457, 0.0
    %3490 = vadd.xlane.f32.xlu0 %v3489
    %v3491 = vpop.xlane.xlu0 %3490
    %vm3492 = vcmask 199680
    %v3493 = vsel %vm3492, %v3458, 0.0
    %3494 = vadd.xlane.f32.xlu0 %v3493
    %v3495 = vpop.xlane.xlu0 %3494
    %v3496 = vsel %vm1212, %v3459, 0.0
    %3497 = vadd.xlane.f32.xlu0 %v3496
    %v3498 = vpop.xlane.xlu0 %3497
    %v3499 = vsel %vm3492, %v3460, 0.0
    %3500 = vadd.xlane.f32.xlu0 %v3499
    %v3501 = vpop.xlane.xlu0 %3500
    %v3502 = vsel %vm1212, %v3461, 0.0
    %3503 = vadd.xlane.f32.xlu0 %v3502
    %v3504 = vpop.xlane.xlu0 %3503
    %v3505 = vsel %vm3492, %v3462, 0.0
    %3506 = vadd.xlane.f32.xlu0 %v3505
    %v3507 = vpop.xlane.xlu0 %3506
    %v3508 = vsel %vm1212, %v3463, 0.0
    %3509 = vadd.xlane.f32.xlu0 %v3508
    %v3510 = vpop.xlane.xlu0 %3509
    %v3511 = vsel %vm3492, %v3464, 0.0
    %3512 = vadd.xlane.f32.xlu0 %v3511
    %v3513 = vpop.xlane.xlu0 %3512
    %v3514 = vsel %vm1212, %v3465, 0.0
    %3515 = vadd.xlane.f32.xlu0 %v3514
    %v3516 = vpop.xlane.xlu0 %3515
    %v3517 = vsel %vm3492, %v3466, 0.0
    %3518 = vadd.xlane.f32.xlu0 %v3517
    %v3519 = vpop.xlane.xlu0 %3518
    %v3520 = vsel %vm1212, %v3467, 0.0
    %3521 = vadd.xlane.f32.xlu0 %v3520
    %v3522 = vpop.xlane.xlu0 %3521
    %v3523 = vsel %vm3492, %v3468, 0.0
    %3524 = vadd.xlane.f32.xlu0 %v3523
    %v3525 = vpop.xlane.xlu0 %3524
    %v3526 = vsel %vm1212, %v3469, 0.0
    %3527 = vadd.xlane.f32.xlu0 %v3526
    %v3528 = vpop.xlane.xlu0 %3527
    %v3529 = vsel %vm3492, %v3470, 0.0
    %3530 = vadd.xlane.f32.xlu0 %v3529
    %v3531 = vpop.xlane.xlu0 %3530
    %v3532 = vsel %vm1212, %v3471, 0.0
    %3533 = vadd.xlane.f32.xlu0 %v3532
    %v3534 = vpop.xlane.xlu0 %3533
    %v3535 = vsel %vm3492, %v3472, 0.0
    %3536 = vadd.xlane.f32.xlu0 %v3535
    %v3537 = vpop.xlane.xlu0 %3536
    %v3538 = vsel %vm1212, %v3473, 0.0
    %3539 = vadd.xlane.f32.xlu0 %v3538
    %v3540 = vpop.xlane.xlu0 %3539
    %v3541 = vsel %vm3492, %v3474, 0.0
    %3542 = vadd.xlane.f32.xlu0 %v3541
    %v3543 = vpop.xlane.xlu0 %3542
    %v3544 = vsel %vm1212, %v3475, 0.0
    %3545 = vadd.xlane.f32.xlu0 %v3544
    %v3546 = vpop.xlane.xlu0 %3545
    %v3547 = vsel %vm3492, %v3476, 0.0
    %3548 = vadd.xlane.f32.xlu0 %v3547
    %v3549 = vpop.xlane.xlu0 %3548
    %v3550 = vsel %vm1212, %v3477, 0.0
    %3551 = vadd.xlane.f32.xlu0 %v3550
    %v3552 = vpop.xlane.xlu0 %3551
    %v3553 = vsel %vm3492, %v3478, 0.0
    %3554 = vadd.xlane.f32.xlu0 %v3553
    %v3555 = vpop.xlane.xlu0 %3554
    %v3556 = vsel %vm1212, %v3479, 0.0
    %3557 = vadd.xlane.f32.xlu0 %v3556
    %v3558 = vpop.xlane.xlu0 %3557
    %v3559 = vsel %vm3492, %v3480, 0.0
    %3560 = vadd.xlane.f32.xlu0 %v3559
    %v3561 = vpop.xlane.xlu0 %3560
    %v3562 = vsel %vm1212, %v3481, 0.0
    %3563 = vadd.xlane.f32.xlu0 %v3562
    %v3564 = vpop.xlane.xlu0 %3563
    %v3565 = vsel %vm3492, %v3482, 0.0
    %3566 = vadd.xlane.f32.xlu0 %v3565
    %v3567 = vpop.xlane.xlu0 %3566
    %v3568 = vsel %vm1212, %v3483, 0.0
    %3569 = vadd.xlane.f32.xlu0 %v3568
    %v3570 = vpop.xlane.xlu0 %3569
    %v3571 = vsel %vm3492, %v3484, 0.0
    %3572 = vadd.xlane.f32.xlu0 %v3571
    %v3573 = vpop.xlane.xlu0 %3572
    %v3574 = vsel %vm1212, %v3485, 0.0
    %3575 = vadd.xlane.f32.xlu0 %v3574
    %v3576 = vpop.xlane.xlu0 %3575
    %v3577 = vsel %vm3492, %v3486, 0.0
    %3578 = vadd.xlane.f32.xlu0 %v3577
    %v3579 = vpop.xlane.xlu0 %3578
    %v3580 = vsel %vm1212, %v3487, 0.0
    %3581 = vadd.xlane.f32.xlu0 %v3580
    %v3582 = vpop.xlane.xlu0 %3581
    %v3583 = vsel %vm3492, %v3488, 0.0
    %3584 = vadd.xlane.f32.xlu0 %v3583
    %v3585 = vpop.xlane.xlu0 %3584
    %v3586 = vadd.f32 %v3491, 0.0
    %v3587 = vadd.f32 %v3495, 0.0
    %v3588 = vadd.f32 %v3498, 0.0
    %v3589 = vadd.f32 %v3501, 0.0
    %v3590 = vadd.f32 %v3504, 0.0
    %v3591 = vadd.f32 %v3507, 0.0
    %v3592 = vadd.f32 %v3510, 0.0
    %v3593 = vadd.f32 %v3513, 0.0
    %v3594 = vadd.f32 %v3516, 0.0
    %v3595 = vadd.f32 %v3519, 0.0
    %v3596 = vadd.f32 %v3522, 0.0
    %v3597 = vadd.f32 %v3525, 0.0
    %v3598 = vadd.f32 %v3528, 0.0
    %v3599 = vadd.f32 %v3531, 0.0
    %v3600 = vadd.f32 %v3534, 0.0
    %v3601 = vadd.f32 %v3537, 0.0
    %v3602 = vadd.f32 %v3540, 0.0
    %v3603 = vadd.f32 %v3543, 0.0
    %v3604 = vadd.f32 %v3546, 0.0
    %v3605 = vadd.f32 %v3549, 0.0
    %v3606 = vadd.f32 %v3552, 0.0
    %v3607 = vadd.f32 %v3555, 0.0
    %v3608 = vadd.f32 %v3558, 0.0
    %v3609 = vadd.f32 %v3561, 0.0
    %v3610 = vadd.f32 %v3564, 0.0
    %v3611 = vadd.f32 %v3567, 0.0
    %v3612 = vadd.f32 %v3570, 0.0
    %v3613 = vadd.f32 %v3573, 0.0
    %v3614 = vadd.f32 %v3576, 0.0
    %v3615 = vadd.f32 %v3579, 0.0
    %v3616 = vadd.f32 %v3582, 0.0
    %v3617 = vadd.f32 %v3585, 0.0
    %3618 = vrot.lane.b32.xlu0 %v1129, 96
    %v3619 = vpop.permute.xlu0 %3618
    %3620 = vrot.lane.b32.xlu0 %v1130, 96
    %v3621 = vpop.permute.xlu0 %3620
    %3622 = vrot.lane.b32.xlu0 %v1131, 96
    %v3623 = vpop.permute.xlu0 %3622
    %3624 = vrot.lane.b32.xlu0 %v1132, 96
    %v3625 = vpop.permute.xlu0 %3624
    %3626 = vrot.lane.b32.xlu0 %v1133, 96
    %v3627 = vpop.permute.xlu0 %3626
    %3628 = vrot.lane.b32.xlu0 %v1134, 96
    %v3629 = vpop.permute.xlu0 %3628
    %3630 = vrot.lane.b32.xlu0 %v1135, 96
    %v3631 = vpop.permute.xlu0 %3630
    %3632 = vrot.lane.b32.xlu0 %v1136, 96
    %v3633 = vpop.permute.xlu0 %3632
    %3634 = vrot.lane.b32.xlu0 %v1137, 96
    %v3635 = vpop.permute.xlu0 %3634
    %3636 = vrot.lane.b32.xlu0 %v1138, 96
    %v3637 = vpop.permute.xlu0 %3636
    %3638 = vrot.lane.b32.xlu0 %v1139, 96
    %v3639 = vpop.permute.xlu0 %3638
    %3640 = vrot.lane.b32.xlu0 %v1140, 96
    %v3641 = vpop.permute.xlu0 %3640
    %3642 = vrot.lane.b32.xlu0 %v1141, 96
    %v3643 = vpop.permute.xlu0 %3642
    %3644 = vrot.lane.b32.xlu0 %v1142, 96
    %v3645 = vpop.permute.xlu0 %3644
    %3646 = vrot.lane.b32.xlu0 %v1143, 96
    %v3647 = vpop.permute.xlu0 %3646
    %3648 = vrot.lane.b32.xlu0 %v1144, 96
    %v3649 = vpop.permute.xlu0 %3648
    %3650 = vrot.lane.b32.xlu0 %v1145, 96
    %v3651 = vpop.permute.xlu0 %3650
    %3652 = vrot.lane.b32.xlu0 %v1146, 96
    %v3653 = vpop.permute.xlu0 %3652
    %3654 = vrot.lane.b32.xlu0 %v1147, 96
    %v3655 = vpop.permute.xlu0 %3654
    %3656 = vrot.lane.b32.xlu0 %v1148, 96
    %v3657 = vpop.permute.xlu0 %3656
    %3658 = vrot.lane.b32.xlu0 %v1149, 96
    %v3659 = vpop.permute.xlu0 %3658
    %3660 = vrot.lane.b32.xlu0 %v1150, 96
    %v3661 = vpop.permute.xlu0 %3660
    %3662 = vrot.lane.b32.xlu0 %v1151, 96
    %v3663 = vpop.permute.xlu0 %3662
    %3664 = vrot.lane.b32.xlu0 %v1152, 96
    %v3665 = vpop.permute.xlu0 %3664
    %3666 = vrot.lane.b32.xlu0 %v1153, 96
    %v3667 = vpop.permute.xlu0 %3666
    %3668 = vrot.lane.b32.xlu0 %v1154, 96
    %v3669 = vpop.permute.xlu0 %3668
    %3670 = vrot.lane.b32.xlu0 %v1155, 96
    %v3671 = vpop.permute.xlu0 %3670
    %3672 = vrot.lane.b32.xlu0 %v1156, 96
    %v3673 = vpop.permute.xlu0 %3672
    %3674 = vrot.lane.b32.xlu0 %v1157, 96
    %v3675 = vpop.permute.xlu0 %3674
    %3676 = vrot.lane.b32.xlu0 %v1158, 96
    %v3677 = vpop.permute.xlu0 %3676
    %3678 = vrot.lane.b32.xlu0 %v1159, 96
    %v3679 = vpop.permute.xlu0 %3678
    %3680 = vrot.lane.b32.xlu0 %v1160, 96
    %v3681 = vpop.permute.xlu0 %3680
    %v3714 = vpack.c.bf16 %v3621, %v3619
    %v3715 = vpack.c.bf16 %v3625, %v3623
    %v3716 = vpack.c.bf16 %v3629, %v3627
    %v3717 = vpack.c.bf16 %v3633, %v3631
    %v3718 = vpack.c.bf16 %v3637, %v3635
    %v3719 = vpack.c.bf16 %v3641, %v3639
    %v3720 = vpack.c.bf16 %v3645, %v3643
    %v3721 = vpack.c.bf16 %v3649, %v3647
    %v3722 = vpack.c.bf16 %v3653, %v3651
    %v3723 = vpack.c.bf16 %v3657, %v3655
    %v3724 = vpack.c.bf16 %v3661, %v3659
    %v3725 = vpack.c.bf16 %v3665, %v3663
    %v3726 = vpack.c.bf16 %v3669, %v3667
    %v3727 = vpack.c.bf16 %v3673, %v3671
    %v3728 = vpack.c.bf16 %v3677, %v3675
    %v3729 = vpack.c.bf16 %v3681, %v3679
    %3730 = vrot.lane.b32.xlu0 %v1113, 96
    %v3731 = vpop.permute.xlu0 %3730
    %3732 = vrot.lane.b32.xlu0 %v1113, 32
    %v3733 = vpop.permute.xlu0 %3732
    %v3735 = vsel %vm1212, %v3731, 0
    %v3738 = vsel %vm1212, %v3733, 0
    %3740 = vmatprep.subr.bf16.mxu0 0
    %3741 = vmatpush1.bf16.xpose.msra.mxu0 %v3738
    %3742 = vmatprep.subr.bf16.mxu0 0
    %3743 = vmatpush1.bf16.xpose.msra.mxu0 0
    %3744 = vmatprep.subr.bf16.mxu0 0
    %3745 = vmatpush1.bf16.xpose.msra.mxu0 0
    %3746 = vmatprep.subr.bf16.mxu0 0
    %3747 = vmatpush1.bf16.xpose.msra.mxu0 0
    %3748 = vmatprep.subr.bf16.mxu0 0
    %3749 = vmatpush1.bf16.xpose.msra.mxu0 0
    %3750 = vmatprep.subr.bf16.mxu0 0
    %3751 = vmatpush1.bf16.xpose.msra.mxu0 0
    %3752 = vmatprep.subr.bf16.mxu0 0
    %3753 = vmatpush1.bf16.xpose.msra.mxu0 0
    %3754 = vmatprep.subr.bf16.mxu0 0
    %3755 = vmatpush1.bf16.xpose.msra.mxu0 0
    %3756 = vmatprep.subr.bf16.mxu0 0
    %3757 = vmatpush1.bf16.xpose.msra.mxu0 0
    %3758 = vmatprep.subr.bf16.mxu0 0
    %3759 = vmatpush1.bf16.xpose.msra.mxu0 0
    %3760 = vmatprep.subr.bf16.mxu0 0
    %3761 = vmatpush1.bf16.xpose.msra.mxu0 0
    %3762 = vmatprep.subr.bf16.mxu0 0
    %3763 = vmatpush1.bf16.xpose.msra.mxu0 0
    %3764 = vmatprep.subr.bf16.mxu0 0
    %3765 = vmatpush1.bf16.xpose.msra.mxu0 0
    %3766 = vmatprep.subr.bf16.mxu0 0
    %3767 = vmatpush1.bf16.xpose.msra.mxu0 0
    %3768 = vmatprep.subr.bf16.mxu0 0
    %3769 = vmatpush1.bf16.xpose.msra.mxu0 0
    %3770 = vmatprep.subr.bf16.mxu0 0
    %3771 = vmatpush1.bf16.xpose.msra.mxu0 0
    %3772 = vmatprep.mubr.bf16.mxu0 0
    %3773 = vmatmul.mubr.bf16.gmra.mrb[0].mxu0 %v3735
    %v3774 = vpop.f32.mrb[0].mxu0
    %v3775 = vadd.f32 0.0, %v3774
    %v3776 = vpop.f32.mrb[0].mxu0
    %v3777 = vpop.f32.mrb[0].mxu0
    %v3778 = vadd.f32 0.0, %v3777
    %v3779 = vpop.f32.mrb[0].mxu0
    %3780 = vdwg.mxu0
    %3781 = vrot.lane.b32.xlu0 %v1114, 96
    %v3782 = vpop.permute.xlu0 %3781
    %3783 = vrot.lane.b32.xlu0 %v1114, 32
    %v3784 = vpop.permute.xlu0 %3783
    %v3786 = vsel %vm1212, %v3782, 0
    %v3789 = vsel %vm1212, %v3784, 0
    %3791 = vmatprep.subr.bf16.mxu0 0
    %3792 = vmatpush1.bf16.xpose.msra.mxu0 %v3789
    %3793 = vmatprep.subr.bf16.mxu0 0
    %3794 = vmatpush1.bf16.xpose.msra.mxu0 0
    %3795 = vmatprep.subr.bf16.mxu0 0
    %3796 = vmatpush1.bf16.xpose.msra.mxu0 0
    %3797 = vmatprep.subr.bf16.mxu0 0
    %3798 = vmatpush1.bf16.xpose.msra.mxu0 0
    %3799 = vmatprep.subr.bf16.mxu0 0
    %3800 = vmatpush1.bf16.xpose.msra.mxu0 0
    %3801 = vmatprep.subr.bf16.mxu0 0
    %3802 = vmatpush1.bf16.xpose.msra.mxu0 0
    %3803 = vmatprep.subr.bf16.mxu0 0
    %3804 = vmatpush1.bf16.xpose.msra.mxu0 0
    %3805 = vmatprep.subr.bf16.mxu0 0
    %3806 = vmatpush1.bf16.xpose.msra.mxu0 0
    %3807 = vmatprep.subr.bf16.mxu0 0
    %3808 = vmatpush1.bf16.xpose.msra.mxu0 0
    %3809 = vmatprep.subr.bf16.mxu0 0
    %3810 = vmatpush1.bf16.xpose.msra.mxu0 0
    %3811 = vmatprep.subr.bf16.mxu0 0
    %3812 = vmatpush1.bf16.xpose.msra.mxu0 0
    %3813 = vmatprep.subr.bf16.mxu0 0
    %3814 = vmatpush1.bf16.xpose.msra.mxu0 0
    %3815 = vmatprep.subr.bf16.mxu0 0
    %3816 = vmatpush1.bf16.xpose.msra.mxu0 0
    %3817 = vmatprep.subr.bf16.mxu0 0
    %3818 = vmatpush1.bf16.xpose.msra.mxu0 0
    %3819 = vmatprep.subr.bf16.mxu0 0
    %3820 = vmatpush1.bf16.xpose.msra.mxu0 0
    %3821 = vmatprep.subr.bf16.mxu0 0
    %3822 = vmatpush1.bf16.xpose.msra.mxu0 0
    %3823 = vmatprep.mubr.bf16.mxu0 0
    %3824 = vmatmul.mubr.bf16.gmra.mrb[0].mxu0 %v3786
    %v3825 = vpop.f32.mrb[0].mxu0
    %v3826 = vadd.f32 0.0, %v3825
    %v3827 = vpop.f32.mrb[0].mxu0
    %v3828 = vpop.f32.mrb[0].mxu0
    %v3829 = vadd.f32 0.0, %v3828
    %v3830 = vpop.f32.mrb[0].mxu0
    %3831 = vdwg.mxu0
    %3832 = vrot.lane.b32.xlu0 %v1115, 96
    %v3833 = vpop.permute.xlu0 %3832
    %3834 = vrot.lane.b32.xlu0 %v1115, 32
    %v3835 = vpop.permute.xlu0 %3834
    %v3837 = vsel %vm1212, %v3833, 0
    %v3840 = vsel %vm1212, %v3835, 0
    %3842 = vmatprep.subr.bf16.mxu0 0
    %3843 = vmatpush1.bf16.xpose.msra.mxu0 %v3840
    %3844 = vmatprep.subr.bf16.mxu0 0
    %3845 = vmatpush1.bf16.xpose.msra.mxu0 0
    %3846 = vmatprep.subr.bf16.mxu0 0
    %3847 = vmatpush1.bf16.xpose.msra.mxu0 0
    %3848 = vmatprep.subr.bf16.mxu0 0
    %3849 = vmatpush1.bf16.xpose.msra.mxu0 0
    %3850 = vmatprep.subr.bf16.mxu0 0
    %3851 = vmatpush1.bf16.xpose.msra.mxu0 0
    %3852 = vmatprep.subr.bf16.mxu0 0
    %3853 = vmatpush1.bf16.xpose.msra.mxu0 0
    %3854 = vmatprep.subr.bf16.mxu0 0
    %3855 = vmatpush1.bf16.xpose.msra.mxu0 0
    %3856 = vmatprep.subr.bf16.mxu0 0
    %3857 = vmatpush1.bf16.xpose.msra.mxu0 0
    %3858 = vmatprep.subr.bf16.mxu0 0
    %3859 = vmatpush1.bf16.xpose.msra.mxu0 0
    %3860 = vmatprep.subr.bf16.mxu0 0
    %3861 = vmatpush1.bf16.xpose.msra.mxu0 0
    %3862 = vmatprep.subr.bf16.mxu0 0
    %3863 = vmatpush1.bf16.xpose.msra.mxu0 0
    %3864 = vmatprep.subr.bf16.mxu0 0
    %3865 = vmatpush1.bf16.xpose.msra.mxu0 0
    %3866 = vmatprep.subr.bf16.mxu0 0
    %3867 = vmatpush1.bf16.xpose.msra.mxu0 0
    %3868 = vmatprep.subr.bf16.mxu0 0
    %3869 = vmatpush1.bf16.xpose.msra.mxu0 0
    %3870 = vmatprep.subr.bf16.mxu0 0
    %3871 = vmatpush1.bf16.xpose.msra.mxu0 0
    %3872 = vmatprep.subr.bf16.mxu0 0
    %3873 = vmatpush1.bf16.xpose.msra.mxu0 0
    %3874 = vmatprep.mubr.bf16.mxu0 0
    %3875 = vmatmul.mubr.bf16.gmra.mrb[0].mxu0 %v3837
    %v3876 = vpop.f32.mrb[0].mxu0
    %v3877 = vadd.f32 0.0, %v3876
    %v3878 = vpop.f32.mrb[0].mxu0
    %v3879 = vpop.f32.mrb[0].mxu0
    %v3880 = vadd.f32 0.0, %v3879
    %v3881 = vpop.f32.mrb[0].mxu0
    %3882 = vdwg.mxu0
    %3883 = vrot.lane.b32.xlu0 %v1116, 96
    %v3884 = vpop.permute.xlu0 %3883
    %3885 = vrot.lane.b32.xlu0 %v1116, 32
    %v3886 = vpop.permute.xlu0 %3885
    %v3888 = vsel %vm1212, %v3884, 0
    %v3891 = vsel %vm1212, %v3886, 0
    %3893 = vmatprep.subr.bf16.mxu0 0
    %3894 = vmatpush1.bf16.xpose.msra.mxu0 %v3891
    %3895 = vmatprep.subr.bf16.mxu0 0
    %3896 = vmatpush1.bf16.xpose.msra.mxu0 0
    %3897 = vmatprep.subr.bf16.mxu0 0
    %3898 = vmatpush1.bf16.xpose.msra.mxu0 0
    %3899 = vmatprep.subr.bf16.mxu0 0
    %3900 = vmatpush1.bf16.xpose.msra.mxu0 0
    %3901 = vmatprep.subr.bf16.mxu0 0
    %3902 = vmatpush1.bf16.xpose.msra.mxu0 0
    %3903 = vmatprep.subr.bf16.mxu0 0
    %3904 = vmatpush1.bf16.xpose.msra.mxu0 0
    %3905 = vmatprep.subr.bf16.mxu0 0
    %3906 = vmatpush1.bf16.xpose.msra.mxu0 0
    %3907 = vmatprep.subr.bf16.mxu0 0
    %3908 = vmatpush1.bf16.xpose.msra.mxu0 0
    %3909 = vmatprep.subr.bf16.mxu0 0
    %3910 = vmatpush1.bf16.xpose.msra.mxu0 0
    %3911 = vmatprep.subr.bf16.mxu0 0
    %3912 = vmatpush1.bf16.xpose.msra.mxu0 0
    %3913 = vmatprep.subr.bf16.mxu0 0
    %3914 = vmatpush1.bf16.xpose.msra.mxu0 0
    %3915 = vmatprep.subr.bf16.mxu0 0
    %3916 = vmatpush1.bf16.xpose.msra.mxu0 0
    %3917 = vmatprep.subr.bf16.mxu0 0
    %3918 = vmatpush1.bf16.xpose.msra.mxu0 0
    %3919 = vmatprep.subr.bf16.mxu0 0
    %3920 = vmatpush1.bf16.xpose.msra.mxu0 0
    %3921 = vmatprep.subr.bf16.mxu0 0
    %3922 = vmatpush1.bf16.xpose.msra.mxu0 0
    %3923 = vmatprep.subr.bf16.mxu0 0
    %3924 = vmatpush1.bf16.xpose.msra.mxu0 0
    %3925 = vmatprep.mubr.bf16.mxu0 0
    %3926 = vmatmul.mubr.bf16.gmra.mrb[0].mxu0 %v3888
    %v3927 = vpop.f32.mrb[0].mxu0
    %v3928 = vadd.f32 0.0, %v3927
    %v3929 = vpop.f32.mrb[0].mxu0
    %v3930 = vpop.f32.mrb[0].mxu0
    %v3931 = vadd.f32 0.0, %v3930
    %v3932 = vpop.f32.mrb[0].mxu0
    %3933 = vdwg.mxu0
    %3934 = vrot.lane.b32.xlu0 %v1117, 96
    %v3935 = vpop.permute.xlu0 %3934
    %3936 = vrot.lane.b32.xlu0 %v1117, 32
    %v3937 = vpop.permute.xlu0 %3936
    %v3939 = vsel %vm1212, %v3935, 0
    %v3942 = vsel %vm1212, %v3937, 0
    %3944 = vmatprep.subr.bf16.mxu0 0
    %3945 = vmatpush1.bf16.xpose.msra.mxu0 %v3942
    %3946 = vmatprep.subr.bf16.mxu0 0
    %3947 = vmatpush1.bf16.xpose.msra.mxu0 0
    %3948 = vmatprep.subr.bf16.mxu0 0
    %3949 = vmatpush1.bf16.xpose.msra.mxu0 0
    %3950 = vmatprep.subr.bf16.mxu0 0
    %3951 = vmatpush1.bf16.xpose.msra.mxu0 0
    %3952 = vmatprep.subr.bf16.mxu0 0
    %3953 = vmatpush1.bf16.xpose.msra.mxu0 0
    %3954 = vmatprep.subr.bf16.mxu0 0
    %3955 = vmatpush1.bf16.xpose.msra.mxu0 0
    %3956 = vmatprep.subr.bf16.mxu0 0
    %3957 = vmatpush1.bf16.xpose.msra.mxu0 0
    %3958 = vmatprep.subr.bf16.mxu0 0
    %3959 = vmatpush1.bf16.xpose.msra.mxu0 0
    %3960 = vmatprep.subr.bf16.mxu0 0
    %3961 = vmatpush1.bf16.xpose.msra.mxu0 0
    %3962 = vmatprep.subr.bf16.mxu0 0
    %3963 = vmatpush1.bf16.xpose.msra.mxu0 0
    %3964 = vmatprep.subr.bf16.mxu0 0
    %3965 = vmatpush1.bf16.xpose.msra.mxu0 0
    %3966 = vmatprep.subr.bf16.mxu0 0
    %3967 = vmatpush1.bf16.xpose.msra.mxu0 0
    %3968 = vmatprep.subr.bf16.mxu0 0
    %3969 = vmatpush1.bf16.xpose.msra.mxu0 0
    %3970 = vmatprep.subr.bf16.mxu0 0
    %3971 = vmatpush1.bf16.xpose.msra.mxu0 0
    %3972 = vmatprep.subr.bf16.mxu0 0
    %3973 = vmatpush1.bf16.xpose.msra.mxu0 0
    %3974 = vmatprep.subr.bf16.mxu0 0
    %3975 = vmatpush1.bf16.xpose.msra.mxu0 0
    %3976 = vmatprep.mubr.bf16.mxu0 0
    %3977 = vmatmul.mubr.bf16.gmra.mrb[0].mxu0 %v3939
    %v3978 = vpop.f32.mrb[0].mxu0
    %v3979 = vadd.f32 0.0, %v3978
    %v3980 = vpop.f32.mrb[0].mxu0
    %v3981 = vpop.f32.mrb[0].mxu0
    %v3982 = vadd.f32 0.0, %v3981
    %v3983 = vpop.f32.mrb[0].mxu0
    %3984 = vdwg.mxu0
    %3985 = vrot.lane.b32.xlu0 %v1118, 96
    %v3986 = vpop.permute.xlu0 %3985
    %3987 = vrot.lane.b32.xlu0 %v1118, 32
    %v3988 = vpop.permute.xlu0 %3987
    %v3990 = vsel %vm1212, %v3986, 0
    %v3993 = vsel %vm1212, %v3988, 0
    %3995 = vmatprep.subr.bf16.mxu0 0
    %3996 = vmatpush1.bf16.xpose.msra.mxu0 %v3993
    %3997 = vmatprep.subr.bf16.mxu0 0
    %3998 = vmatpush1.bf16.xpose.msra.mxu0 0
    %3999 = vmatprep.subr.bf16.mxu0 0
    %4000 = vmatpush1.bf16.xpose.msra.mxu0 0
    %4001 = vmatprep.subr.bf16.mxu0 0
    %4002 = vmatpush1.bf16.xpose.msra.mxu0 0
    %4003 = vmatprep.subr.bf16.mxu0 0
    %4004 = vmatpush1.bf16.xpose.msra.mxu0 0
    %4005 = vmatprep.subr.bf16.mxu0 0
    %4006 = vmatpush1.bf16.xpose.msra.mxu0 0
    %4007 = vmatprep.subr.bf16.mxu0 0
    %4008 = vmatpush1.bf16.xpose.msra.mxu0 0
    %4009 = vmatprep.subr.bf16.mxu0 0
    %4010 = vmatpush1.bf16.xpose.msra.mxu0 0
    %4011 = vmatprep.subr.bf16.mxu0 0
    %4012 = vmatpush1.bf16.xpose.msra.mxu0 0
    %4013 = vmatprep.subr.bf16.mxu0 0
    %4014 = vmatpush1.bf16.xpose.msra.mxu0 0
    %4015 = vmatprep.subr.bf16.mxu0 0
    %4016 = vmatpush1.bf16.xpose.msra.mxu0 0
    %4017 = vmatprep.subr.bf16.mxu0 0
    %4018 = vmatpush1.bf16.xpose.msra.mxu0 0
    %4019 = vmatprep.subr.bf16.mxu0 0
    %4020 = vmatpush1.bf16.xpose.msra.mxu0 0
    %4021 = vmatprep.subr.bf16.mxu0 0
    %4022 = vmatpush1.bf16.xpose.msra.mxu0 0
    %4023 = vmatprep.subr.bf16.mxu0 0
    %4024 = vmatpush1.bf16.xpose.msra.mxu0 0
    %4025 = vmatprep.subr.bf16.mxu0 0
    %4026 = vmatpush1.bf16.xpose.msra.mxu0 0
    %4027 = vmatprep.mubr.bf16.mxu0 0
    %4028 = vmatmul.mubr.bf16.gmra.mrb[0].mxu0 %v3990
    %v4029 = vpop.f32.mrb[0].mxu0
    %v4030 = vadd.f32 0.0, %v4029
    %v4031 = vpop.f32.mrb[0].mxu0
    %v4032 = vpop.f32.mrb[0].mxu0
    %v4033 = vadd.f32 0.0, %v4032
    %v4034 = vpop.f32.mrb[0].mxu0
    %4035 = vdwg.mxu0
    %4036 = vrot.lane.b32.xlu0 %v1119, 96
    %v4037 = vpop.permute.xlu0 %4036
    %4038 = vrot.lane.b32.xlu0 %v1119, 32
    %v4039 = vpop.permute.xlu0 %4038
    %v4041 = vsel %vm1212, %v4037, 0
    %v4044 = vsel %vm1212, %v4039, 0
    %4046 = vmatprep.subr.bf16.mxu0 0
    %4047 = vmatpush1.bf16.xpose.msra.mxu0 %v4044
    %4048 = vmatprep.subr.bf16.mxu0 0
    %4049 = vmatpush1.bf16.xpose.msra.mxu0 0
    %4050 = vmatprep.subr.bf16.mxu0 0
    %4051 = vmatpush1.bf16.xpose.msra.mxu0 0
    %4052 = vmatprep.subr.bf16.mxu0 0
    %4053 = vmatpush1.bf16.xpose.msra.mxu0 0
    %4054 = vmatprep.subr.bf16.mxu0 0
    %4055 = vmatpush1.bf16.xpose.msra.mxu0 0
    %4056 = vmatprep.subr.bf16.mxu0 0
    %4057 = vmatpush1.bf16.xpose.msra.mxu0 0
    %4058 = vmatprep.subr.bf16.mxu0 0
    %4059 = vmatpush1.bf16.xpose.msra.mxu0 0
    %4060 = vmatprep.subr.bf16.mxu0 0
    %4061 = vmatpush1.bf16.xpose.msra.mxu0 0
    %4062 = vmatprep.subr.bf16.mxu0 0
    %4063 = vmatpush1.bf16.xpose.msra.mxu0 0
    %4064 = vmatprep.subr.bf16.mxu0 0
    %4065 = vmatpush1.bf16.xpose.msra.mxu0 0
    %4066 = vmatprep.subr.bf16.mxu0 0
    %4067 = vmatpush1.bf16.xpose.msra.mxu0 0
    %4068 = vmatprep.subr.bf16.mxu0 0
    %4069 = vmatpush1.bf16.xpose.msra.mxu0 0
    %4070 = vmatprep.subr.bf16.mxu0 0
    %4071 = vmatpush1.bf16.xpose.msra.mxu0 0
    %4072 = vmatprep.subr.bf16.mxu0 0
    %4073 = vmatpush1.bf16.xpose.msra.mxu0 0
    %4074 = vmatprep.subr.bf16.mxu0 0
    %4075 = vmatpush1.bf16.xpose.msra.mxu0 0
    %4076 = vmatprep.subr.bf16.mxu0 0
    %4077 = vmatpush1.bf16.xpose.msra.mxu0 0
    %4078 = vmatprep.mubr.bf16.mxu0 0
    %4079 = vmatmul.mubr.bf16.gmra.mrb[0].mxu0 %v4041
    %v4080 = vpop.f32.mrb[0].mxu0
    %v4081 = vadd.f32 0.0, %v4080
    %v4082 = vpop.f32.mrb[0].mxu0
    %v4083 = vpop.f32.mrb[0].mxu0
    %v4084 = vadd.f32 0.0, %v4083
    %v4085 = vpop.f32.mrb[0].mxu0
    %4086 = vdwg.mxu0
    %4087 = vrot.lane.b32.xlu0 %v1120, 96
    %v4088 = vpop.permute.xlu0 %4087
    %4089 = vrot.lane.b32.xlu0 %v1120, 32
    %v4090 = vpop.permute.xlu0 %4089
    %v4092 = vsel %vm1212, %v4088, 0
    %v4095 = vsel %vm1212, %v4090, 0
    %4097 = vmatprep.subr.bf16.mxu0 0
    %4098 = vmatpush1.bf16.xpose.msra.mxu0 %v4095
    %4099 = vmatprep.subr.bf16.mxu0 0
    %4100 = vmatpush1.bf16.xpose.msra.mxu0 0
    %4101 = vmatprep.subr.bf16.mxu0 0
    %4102 = vmatpush1.bf16.xpose.msra.mxu0 0
    %4103 = vmatprep.subr.bf16.mxu0 0
    %4104 = vmatpush1.bf16.xpose.msra.mxu0 0
    %4105 = vmatprep.subr.bf16.mxu0 0
    %4106 = vmatpush1.bf16.xpose.msra.mxu0 0
    %4107 = vmatprep.subr.bf16.mxu0 0
    %4108 = vmatpush1.bf16.xpose.msra.mxu0 0
    %4109 = vmatprep.subr.bf16.mxu0 0
    %4110 = vmatpush1.bf16.xpose.msra.mxu0 0
    %4111 = vmatprep.subr.bf16.mxu0 0
    %4112 = vmatpush1.bf16.xpose.msra.mxu0 0
    %4113 = vmatprep.subr.bf16.mxu0 0
    %4114 = vmatpush1.bf16.xpose.msra.mxu0 0
    %4115 = vmatprep.subr.bf16.mxu0 0
    %4116 = vmatpush1.bf16.xpose.msra.mxu0 0
    %4117 = vmatprep.subr.bf16.mxu0 0
    %4118 = vmatpush1.bf16.xpose.msra.mxu0 0
    %4119 = vmatprep.subr.bf16.mxu0 0
    %4120 = vmatpush1.bf16.xpose.msra.mxu0 0
    %4121 = vmatprep.subr.bf16.mxu0 0
    %4122 = vmatpush1.bf16.xpose.msra.mxu0 0
    %4123 = vmatprep.subr.bf16.mxu0 0
    %4124 = vmatpush1.bf16.xpose.msra.mxu0 0
    %4125 = vmatprep.subr.bf16.mxu0 0
    %4126 = vmatpush1.bf16.xpose.msra.mxu0 0
    %4127 = vmatprep.subr.bf16.mxu0 0
    %4128 = vmatpush1.bf16.xpose.msra.mxu0 0
    %4129 = vmatprep.mubr.bf16.mxu0 0
    %4130 = vmatmul.mubr.bf16.gmra.mrb[0].mxu0 %v4092
    %v4131 = vpop.f32.mrb[0].mxu0
    %v4132 = vadd.f32 0.0, %v4131
    %v4133 = vpop.f32.mrb[0].mxu0
    %v4134 = vpop.f32.mrb[0].mxu0
    %v4135 = vadd.f32 0.0, %v4134
    %v4136 = vpop.f32.mrb[0].mxu0
    %4137 = vdwg.mxu0
    %4138 = vrot.lane.b32.xlu0 %v1121, 96
    %v4139 = vpop.permute.xlu0 %4138
    %4140 = vrot.lane.b32.xlu0 %v1121, 32
    %v4141 = vpop.permute.xlu0 %4140
    %v4143 = vsel %vm1212, %v4139, 0
    %v4146 = vsel %vm1212, %v4141, 0
    %4148 = vmatprep.subr.bf16.mxu0 0
    %4149 = vmatpush1.bf16.xpose.msra.mxu0 %v4146
    %4150 = vmatprep.subr.bf16.mxu0 0
    %4151 = vmatpush1.bf16.xpose.msra.mxu0 0
    %4152 = vmatprep.subr.bf16.mxu0 0
    %4153 = vmatpush1.bf16.xpose.msra.mxu0 0
    %4154 = vmatprep.subr.bf16.mxu0 0
    %4155 = vmatpush1.bf16.xpose.msra.mxu0 0
    %4156 = vmatprep.subr.bf16.mxu0 0
    %4157 = vmatpush1.bf16.xpose.msra.mxu0 0
    %4158 = vmatprep.subr.bf16.mxu0 0
    %4159 = vmatpush1.bf16.xpose.msra.mxu0 0
    %4160 = vmatprep.subr.bf16.mxu0 0
    %4161 = vmatpush1.bf16.xpose.msra.mxu0 0
    %4162 = vmatprep.subr.bf16.mxu0 0
    %4163 = vmatpush1.bf16.xpose.msra.mxu0 0
    %4164 = vmatprep.subr.bf16.mxu0 0
    %4165 = vmatpush1.bf16.xpose.msra.mxu0 0
    %4166 = vmatprep.subr.bf16.mxu0 0
    %4167 = vmatpush1.bf16.xpose.msra.mxu0 0
    %4168 = vmatprep.subr.bf16.mxu0 0
    %4169 = vmatpush1.bf16.xpose.msra.mxu0 0
    %4170 = vmatprep.subr.bf16.mxu0 0
    %4171 = vmatpush1.bf16.xpose.msra.mxu0 0
    %4172 = vmatprep.subr.bf16.mxu0 0
    %4173 = vmatpush1.bf16.xpose.msra.mxu0 0
    %4174 = vmatprep.subr.bf16.mxu0 0
    %4175 = vmatpush1.bf16.xpose.msra.mxu0 0
    %4176 = vmatprep.subr.bf16.mxu0 0
    %4177 = vmatpush1.bf16.xpose.msra.mxu0 0
    %4178 = vmatprep.subr.bf16.mxu0 0
    %4179 = vmatpush1.bf16.xpose.msra.mxu0 0
    %4180 = vmatprep.mubr.bf16.mxu0 0
    %4181 = vmatmul.mubr.bf16.gmra.mrb[0].mxu0 %v4143
    %v4182 = vpop.f32.mrb[0].mxu0
    %v4183 = vadd.f32 0.0, %v4182
    %v4184 = vpop.f32.mrb[0].mxu0
    %v4185 = vpop.f32.mrb[0].mxu0
    %v4186 = vadd.f32 0.0, %v4185
    %v4187 = vpop.f32.mrb[0].mxu0
    %4188 = vdwg.mxu0
    %4189 = vrot.lane.b32.xlu0 %v1122, 96
    %v4190 = vpop.permute.xlu0 %4189
    %4191 = vrot.lane.b32.xlu0 %v1122, 32
    %v4192 = vpop.permute.xlu0 %4191
    %v4194 = vsel %vm1212, %v4190, 0
    %v4197 = vsel %vm1212, %v4192, 0
    %4199 = vmatprep.subr.bf16.mxu0 0
    %4200 = vmatpush1.bf16.xpose.msra.mxu0 %v4197
    %4201 = vmatprep.subr.bf16.mxu0 0
    %4202 = vmatpush1.bf16.xpose.msra.mxu0 0
    %4203 = vmatprep.subr.bf16.mxu0 0
    %4204 = vmatpush1.bf16.xpose.msra.mxu0 0
    %4205 = vmatprep.subr.bf16.mxu0 0
    %4206 = vmatpush1.bf16.xpose.msra.mxu0 0
    %4207 = vmatprep.subr.bf16.mxu0 0
    %4208 = vmatpush1.bf16.xpose.msra.mxu0 0
    %4209 = vmatprep.subr.bf16.mxu0 0
    %4210 = vmatpush1.bf16.xpose.msra.mxu0 0
    %4211 = vmatprep.subr.bf16.mxu0 0
    %4212 = vmatpush1.bf16.xpose.msra.mxu0 0
    %4213 = vmatprep.subr.bf16.mxu0 0
    %4214 = vmatpush1.bf16.xpose.msra.mxu0 0
    %4215 = vmatprep.subr.bf16.mxu0 0
    %4216 = vmatpush1.bf16.xpose.msra.mxu0 0
    %4217 = vmatprep.subr.bf16.mxu0 0
    %4218 = vmatpush1.bf16.xpose.msra.mxu0 0
    %4219 = vmatprep.subr.bf16.mxu0 0
    %4220 = vmatpush1.bf16.xpose.msra.mxu0 0
    %4221 = vmatprep.subr.bf16.mxu0 0
    %4222 = vmatpush1.bf16.xpose.msra.mxu0 0
    %4223 = vmatprep.subr.bf16.mxu0 0
    %4224 = vmatpush1.bf16.xpose.msra.mxu0 0
    %4225 = vmatprep.subr.bf16.mxu0 0
    %4226 = vmatpush1.bf16.xpose.msra.mxu0 0
    %4227 = vmatprep.subr.bf16.mxu0 0
    %4228 = vmatpush1.bf16.xpose.msra.mxu0 0
    %4229 = vmatprep.subr.bf16.mxu0 0
    %4230 = vmatpush1.bf16.xpose.msra.mxu0 0
    %4231 = vmatprep.mubr.bf16.mxu0 0
    %4232 = vmatmul.mubr.bf16.gmra.mrb[0].mxu0 %v4194
    %v4233 = vpop.f32.mrb[0].mxu0
    %v4234 = vadd.f32 0.0, %v4233
    %v4235 = vpop.f32.mrb[0].mxu0
    %v4236 = vpop.f32.mrb[0].mxu0
    %v4237 = vadd.f32 0.0, %v4236
    %v4238 = vpop.f32.mrb[0].mxu0
    %4239 = vdwg.mxu0
    %4240 = vrot.lane.b32.xlu0 %v1123, 96
    %v4241 = vpop.permute.xlu0 %4240
    %4242 = vrot.lane.b32.xlu0 %v1123, 32
    %v4243 = vpop.permute.xlu0 %4242
    %v4245 = vsel %vm1212, %v4241, 0
    %v4248 = vsel %vm1212, %v4243, 0
    %4250 = vmatprep.subr.bf16.mxu0 0
    %4251 = vmatpush1.bf16.xpose.msra.mxu0 %v4248
    %4252 = vmatprep.subr.bf16.mxu0 0
    %4253 = vmatpush1.bf16.xpose.msra.mxu0 0
    %4254 = vmatprep.subr.bf16.mxu0 0
    %4255 = vmatpush1.bf16.xpose.msra.mxu0 0
    %4256 = vmatprep.subr.bf16.mxu0 0
    %4257 = vmatpush1.bf16.xpose.msra.mxu0 0
    %4258 = vmatprep.subr.bf16.mxu0 0
    %4259 = vmatpush1.bf16.xpose.msra.mxu0 0
    %4260 = vmatprep.subr.bf16.mxu0 0
    %4261 = vmatpush1.bf16.xpose.msra.mxu0 0
    %4262 = vmatprep.subr.bf16.mxu0 0
    %4263 = vmatpush1.bf16.xpose.msra.mxu0 0
    %4264 = vmatprep.subr.bf16.mxu0 0
    %4265 = vmatpush1.bf16.xpose.msra.mxu0 0
    %4266 = vmatprep.subr.bf16.mxu0 0
    %4267 = vmatpush1.bf16.xpose.msra.mxu0 0
    %4268 = vmatprep.subr.bf16.mxu0 0
    %4269 = vmatpush1.bf16.xpose.msra.mxu0 0
    %4270 = vmatprep.subr.bf16.mxu0 0
    %4271 = vmatpush1.bf16.xpose.msra.mxu0 0
    %4272 = vmatprep.subr.bf16.mxu0 0
    %4273 = vmatpush1.bf16.xpose.msra.mxu0 0
    %4274 = vmatprep.subr.bf16.mxu0 0
    %4275 = vmatpush1.bf16.xpose.msra.mxu0 0
    %4276 = vmatprep.subr.bf16.mxu0 0
    %4277 = vmatpush1.bf16.xpose.msra.mxu0 0
    %4278 = vmatprep.subr.bf16.mxu0 0
    %4279 = vmatpush1.bf16.xpose.msra.mxu0 0
    %4280 = vmatprep.subr.bf16.mxu0 0
    %4281 = vmatpush1.bf16.xpose.msra.mxu0 0
    %4282 = vmatprep.mubr.bf16.mxu0 0
    %4283 = vmatmul.mubr.bf16.gmra.mrb[0].mxu0 %v4245
    %v4284 = vpop.f32.mrb[0].mxu0
    %v4285 = vadd.f32 0.0, %v4284
    %v4286 = vpop.f32.mrb[0].mxu0
    %v4287 = vpop.f32.mrb[0].mxu0
    %v4288 = vadd.f32 0.0, %v4287
    %v4289 = vpop.f32.mrb[0].mxu0
    %4290 = vdwg.mxu0
    %4291 = vrot.lane.b32.xlu0 %v1124, 96
    %v4292 = vpop.permute.xlu0 %4291
    %4293 = vrot.lane.b32.xlu0 %v1124, 32
    %v4294 = vpop.permute.xlu0 %4293
    %v4296 = vsel %vm1212, %v4292, 0
    %v4299 = vsel %vm1212, %v4294, 0
    %4301 = vmatprep.subr.bf16.mxu0 0
    %4302 = vmatpush1.bf16.xpose.msra.mxu0 %v4299
    %4303 = vmatprep.subr.bf16.mxu0 0
    %4304 = vmatpush1.bf16.xpose.msra.mxu0 0
    %4305 = vmatprep.subr.bf16.mxu0 0
    %4306 = vmatpush1.bf16.xpose.msra.mxu0 0
    %4307 = vmatprep.subr.bf16.mxu0 0
    %4308 = vmatpush1.bf16.xpose.msra.mxu0 0
    %4309 = vmatprep.subr.bf16.mxu0 0
    %4310 = vmatpush1.bf16.xpose.msra.mxu0 0
    %4311 = vmatprep.subr.bf16.mxu0 0
    %4312 = vmatpush1.bf16.xpose.msra.mxu0 0
    %4313 = vmatprep.subr.bf16.mxu0 0
    %4314 = vmatpush1.bf16.xpose.msra.mxu0 0
    %4315 = vmatprep.subr.bf16.mxu0 0
    %4316 = vmatpush1.bf16.xpose.msra.mxu0 0
    %4317 = vmatprep.subr.bf16.mxu0 0
    %4318 = vmatpush1.bf16.xpose.msra.mxu0 0
    %4319 = vmatprep.subr.bf16.mxu0 0
    %4320 = vmatpush1.bf16.xpose.msra.mxu0 0
    %4321 = vmatprep.subr.bf16.mxu0 0
    %4322 = vmatpush1.bf16.xpose.msra.mxu0 0
    %4323 = vmatprep.subr.bf16.mxu0 0
    %4324 = vmatpush1.bf16.xpose.msra.mxu0 0
    %4325 = vmatprep.subr.bf16.mxu0 0
    %4326 = vmatpush1.bf16.xpose.msra.mxu0 0
    %4327 = vmatprep.subr.bf16.mxu0 0
    %4328 = vmatpush1.bf16.xpose.msra.mxu0 0
    %4329 = vmatprep.subr.bf16.mxu0 0
    %4330 = vmatpush1.bf16.xpose.msra.mxu0 0
    %4331 = vmatprep.subr.bf16.mxu0 0
    %4332 = vmatpush1.bf16.xpose.msra.mxu0 0
    %4333 = vmatprep.mubr.bf16.mxu0 0
    %4334 = vmatmul.mubr.bf16.gmra.mrb[0].mxu0 %v4296
    %v4335 = vpop.f32.mrb[0].mxu0
    %v4336 = vadd.f32 0.0, %v4335
    %v4337 = vpop.f32.mrb[0].mxu0
    %v4338 = vpop.f32.mrb[0].mxu0
    %v4339 = vadd.f32 0.0, %v4338
    %v4340 = vpop.f32.mrb[0].mxu0
    %4341 = vdwg.mxu0
    %4342 = vrot.lane.b32.xlu0 %v1125, 96
    %v4343 = vpop.permute.xlu0 %4342
    %4344 = vrot.lane.b32.xlu0 %v1125, 32
    %v4345 = vpop.permute.xlu0 %4344
    %v4347 = vsel %vm1212, %v4343, 0
    %v4350 = vsel %vm1212, %v4345, 0
    %4352 = vmatprep.subr.bf16.mxu0 0
    %4353 = vmatpush1.bf16.xpose.msra.mxu0 %v4350
    %4354 = vmatprep.subr.bf16.mxu0 0
    %4355 = vmatpush1.bf16.xpose.msra.mxu0 0
    %4356 = vmatprep.subr.bf16.mxu0 0
    %4357 = vmatpush1.bf16.xpose.msra.mxu0 0
    %4358 = vmatprep.subr.bf16.mxu0 0
    %4359 = vmatpush1.bf16.xpose.msra.mxu0 0
    %4360 = vmatprep.subr.bf16.mxu0 0
    %4361 = vmatpush1.bf16.xpose.msra.mxu0 0
    %4362 = vmatprep.subr.bf16.mxu0 0
    %4363 = vmatpush1.bf16.xpose.msra.mxu0 0
    %4364 = vmatprep.subr.bf16.mxu0 0
    %4365 = vmatpush1.bf16.xpose.msra.mxu0 0
    %4366 = vmatprep.subr.bf16.mxu0 0
    %4367 = vmatpush1.bf16.xpose.msra.mxu0 0
    %4368 = vmatprep.subr.bf16.mxu0 0
    %4369 = vmatpush1.bf16.xpose.msra.mxu0 0
    %4370 = vmatprep.subr.bf16.mxu0 0
    %4371 = vmatpush1.bf16.xpose.msra.mxu0 0
    %4372 = vmatprep.subr.bf16.mxu0 0
    %4373 = vmatpush1.bf16.xpose.msra.mxu0 0
    %4374 = vmatprep.subr.bf16.mxu0 0
    %4375 = vmatpush1.bf16.xpose.msra.mxu0 0
    %4376 = vmatprep.subr.bf16.mxu0 0
    %4377 = vmatpush1.bf16.xpose.msra.mxu0 0
    %4378 = vmatprep.subr.bf16.mxu0 0
    %4379 = vmatpush1.bf16.xpose.msra.mxu0 0
    %4380 = vmatprep.subr.bf16.mxu0 0
    %4381 = vmatpush1.bf16.xpose.msra.mxu0 0
    %4382 = vmatprep.subr.bf16.mxu0 0
    %4383 = vmatpush1.bf16.xpose.msra.mxu0 0
    %4384 = vmatprep.mubr.bf16.mxu0 0
    %4385 = vmatmul.mubr.bf16.gmra.mrb[0].mxu0 %v4347
    %v4386 = vpop.f32.mrb[0].mxu0
    %v4387 = vadd.f32 0.0, %v4386
    %v4388 = vpop.f32.mrb[0].mxu0
    %v4389 = vpop.f32.mrb[0].mxu0
    %v4390 = vadd.f32 0.0, %v4389
    %v4391 = vpop.f32.mrb[0].mxu0
    %4392 = vdwg.mxu0
    %4393 = vrot.lane.b32.xlu0 %v1126, 96
    %v4394 = vpop.permute.xlu0 %4393
    %4395 = vrot.lane.b32.xlu0 %v1126, 32
    %v4396 = vpop.permute.xlu0 %4395
    %v4398 = vsel %vm1212, %v4394, 0
    %v4401 = vsel %vm1212, %v4396, 0
    %4403 = vmatprep.subr.bf16.mxu0 0
    %4404 = vmatpush1.bf16.xpose.msra.mxu0 %v4401
    %4405 = vmatprep.subr.bf16.mxu0 0
    %4406 = vmatpush1.bf16.xpose.msra.mxu0 0
    %4407 = vmatprep.subr.bf16.mxu0 0
    %4408 = vmatpush1.bf16.xpose.msra.mxu0 0
    %4409 = vmatprep.subr.bf16.mxu0 0
    %4410 = vmatpush1.bf16.xpose.msra.mxu0 0
    %4411 = vmatprep.subr.bf16.mxu0 0
    %4412 = vmatpush1.bf16.xpose.msra.mxu0 0
    %4413 = vmatprep.subr.bf16.mxu0 0
    %4414 = vmatpush1.bf16.xpose.msra.mxu0 0
    %4415 = vmatprep.subr.bf16.mxu0 0
    %4416 = vmatpush1.bf16.xpose.msra.mxu0 0
    %4417 = vmatprep.subr.bf16.mxu0 0
    %4418 = vmatpush1.bf16.xpose.msra.mxu0 0
    %4419 = vmatprep.subr.bf16.mxu0 0
    %4420 = vmatpush1.bf16.xpose.msra.mxu0 0
    %4421 = vmatprep.subr.bf16.mxu0 0
    %4422 = vmatpush1.bf16.xpose.msra.mxu0 0
    %4423 = vmatprep.subr.bf16.mxu0 0
    %4424 = vmatpush1.bf16.xpose.msra.mxu0 0
    %4425 = vmatprep.subr.bf16.mxu0 0
    %4426 = vmatpush1.bf16.xpose.msra.mxu0 0
    %4427 = vmatprep.subr.bf16.mxu0 0
    %4428 = vmatpush1.bf16.xpose.msra.mxu0 0
    %4429 = vmatprep.subr.bf16.mxu0 0
    %4430 = vmatpush1.bf16.xpose.msra.mxu0 0
    %4431 = vmatprep.subr.bf16.mxu0 0
    %4432 = vmatpush1.bf16.xpose.msra.mxu0 0
    %4433 = vmatprep.subr.bf16.mxu0 0
    %4434 = vmatpush1.bf16.xpose.msra.mxu0 0
    %4435 = vmatprep.mubr.bf16.mxu0 0
    %4436 = vmatmul.mubr.bf16.gmra.mrb[0].mxu0 %v4398
    %v4437 = vpop.f32.mrb[0].mxu0
    %v4438 = vadd.f32 0.0, %v4437
    %v4439 = vpop.f32.mrb[0].mxu0
    %v4440 = vpop.f32.mrb[0].mxu0
    %v4441 = vadd.f32 0.0, %v4440
    %v4442 = vpop.f32.mrb[0].mxu0
    %4443 = vdwg.mxu0
    %4444 = vrot.lane.b32.xlu0 %v1127, 96
    %v4445 = vpop.permute.xlu0 %4444
    %4446 = vrot.lane.b32.xlu0 %v1127, 32
    %v4447 = vpop.permute.xlu0 %4446
    %v4449 = vsel %vm1212, %v4445, 0
    %v4452 = vsel %vm1212, %v4447, 0
    %4454 = vmatprep.subr.bf16.mxu0 0
    %4455 = vmatpush1.bf16.xpose.msra.mxu0 %v4452
    %4456 = vmatprep.subr.bf16.mxu0 0
    %4457 = vmatpush1.bf16.xpose.msra.mxu0 0
    %4458 = vmatprep.subr.bf16.mxu0 0
    %4459 = vmatpush1.bf16.xpose.msra.mxu0 0
    %4460 = vmatprep.subr.bf16.mxu0 0
    %4461 = vmatpush1.bf16.xpose.msra.mxu0 0
    %4462 = vmatprep.subr.bf16.mxu0 0
    %4463 = vmatpush1.bf16.xpose.msra.mxu0 0
    %4464 = vmatprep.subr.bf16.mxu0 0
    %4465 = vmatpush1.bf16.xpose.msra.mxu0 0
    %4466 = vmatprep.subr.bf16.mxu0 0
    %4467 = vmatpush1.bf16.xpose.msra.mxu0 0
    %4468 = vmatprep.subr.bf16.mxu0 0
    %4469 = vmatpush1.bf16.xpose.msra.mxu0 0
    %4470 = vmatprep.subr.bf16.mxu0 0
    %4471 = vmatpush1.bf16.xpose.msra.mxu0 0
    %4472 = vmatprep.subr.bf16.mxu0 0
    %4473 = vmatpush1.bf16.xpose.msra.mxu0 0
    %4474 = vmatprep.subr.bf16.mxu0 0
    %4475 = vmatpush1.bf16.xpose.msra.mxu0 0
    %4476 = vmatprep.subr.bf16.mxu0 0
    %4477 = vmatpush1.bf16.xpose.msra.mxu0 0
    %4478 = vmatprep.subr.bf16.mxu0 0
    %4479 = vmatpush1.bf16.xpose.msra.mxu0 0
    %4480 = vmatprep.subr.bf16.mxu0 0
    %4481 = vmatpush1.bf16.xpose.msra.mxu0 0
    %4482 = vmatprep.subr.bf16.mxu0 0
    %4483 = vmatpush1.bf16.xpose.msra.mxu0 0
    %4484 = vmatprep.subr.bf16.mxu0 0
    %4485 = vmatpush1.bf16.xpose.msra.mxu0 0
    %4486 = vmatprep.mubr.bf16.mxu0 0
    %4487 = vmatmul.mubr.bf16.gmra.mrb[0].mxu0 %v4449
    %v4488 = vpop.f32.mrb[0].mxu0
    %v4489 = vadd.f32 0.0, %v4488
    %v4490 = vpop.f32.mrb[0].mxu0
    %v4491 = vpop.f32.mrb[0].mxu0
    %v4492 = vadd.f32 0.0, %v4491
    %v4493 = vpop.f32.mrb[0].mxu0
    %4494 = vdwg.mxu0
    %4495 = vrot.lane.b32.xlu0 %v1128, 96
    %v4496 = vpop.permute.xlu0 %4495
    %4497 = vrot.lane.b32.xlu0 %v1128, 32
    %v4498 = vpop.permute.xlu0 %4497
    %v4500 = vsel %vm1212, %v4496, 0
    %v4503 = vsel %vm1212, %v4498, 0
    %4505 = vmatprep.subr.bf16.mxu0 0
    %4506 = vmatpush1.bf16.xpose.msra.mxu0 %v4503
    %4507 = vmatprep.subr.bf16.mxu0 0
    %4508 = vmatpush1.bf16.xpose.msra.mxu0 0
    %4509 = vmatprep.subr.bf16.mxu0 0
    %4510 = vmatpush1.bf16.xpose.msra.mxu0 0
    %4511 = vmatprep.subr.bf16.mxu0 0
    %4512 = vmatpush1.bf16.xpose.msra.mxu0 0
    %4513 = vmatprep.subr.bf16.mxu0 0
    %4514 = vmatpush1.bf16.xpose.msra.mxu0 0
    %4515 = vmatprep.subr.bf16.mxu0 0
    %4516 = vmatpush1.bf16.xpose.msra.mxu0 0
    %4517 = vmatprep.subr.bf16.mxu0 0
    %4518 = vmatpush1.bf16.xpose.msra.mxu0 0
    %4519 = vmatprep.subr.bf16.mxu0 0
    %4520 = vmatpush1.bf16.xpose.msra.mxu0 0
    %4521 = vmatprep.subr.bf16.mxu0 0
    %4522 = vmatpush1.bf16.xpose.msra.mxu0 0
    %4523 = vmatprep.subr.bf16.mxu0 0
    %4524 = vmatpush1.bf16.xpose.msra.mxu0 0
    %4525 = vmatprep.subr.bf16.mxu0 0
    %4526 = vmatpush1.bf16.xpose.msra.mxu0 0
    %4527 = vmatprep.subr.bf16.mxu0 0
    %4528 = vmatpush1.bf16.xpose.msra.mxu0 0
    %4529 = vmatprep.subr.bf16.mxu0 0
    %4530 = vmatpush1.bf16.xpose.msra.mxu0 0
    %4531 = vmatprep.subr.bf16.mxu0 0
    %4532 = vmatpush1.bf16.xpose.msra.mxu0 0
    %4533 = vmatprep.subr.bf16.mxu0 0
    %4534 = vmatpush1.bf16.xpose.msra.mxu0 0
    %4535 = vmatprep.subr.bf16.mxu0 0
    %4536 = vmatpush1.bf16.xpose.msra.mxu0 0
    %4537 = vmatprep.mubr.bf16.mxu0 0
    %4538 = vmatmul.mubr.bf16.gmra.mrb[0].mxu0 %v4500
    %v4539 = vpop.f32.mrb[0].mxu0
    %v4540 = vadd.f32 0.0, %v4539
    %v4541 = vpop.f32.mrb[0].mxu0
    %v4542 = vpop.f32.mrb[0].mxu0
    %v4543 = vadd.f32 0.0, %v4542
    %v4544 = vpop.f32.mrb[0].mxu0
    %4545 = vdwg.mxu0
    %v4546 = vmul.f32 %v3775, 0.2
    %v4547 = vmul.f32 %v3778, 0.2
    %v4548 = vmul.f32 %v3826, 0.2
    %v4549 = vmul.f32 %v3829, 0.2
    %v4550 = vmul.f32 %v3877, 0.2
    %v4551 = vmul.f32 %v3880, 0.2
    %v4552 = vmul.f32 %v3928, 0.2
    %v4553 = vmul.f32 %v3931, 0.2
    %v4554 = vmul.f32 %v3979, 0.2
    %v4555 = vmul.f32 %v3982, 0.2
    %v4556 = vmul.f32 %v4030, 0.2
    %v4557 = vmul.f32 %v4033, 0.2
    %v4558 = vmul.f32 %v4081, 0.2
    %v4559 = vmul.f32 %v4084, 0.2
    %v4560 = vmul.f32 %v4132, 0.2
    %v4561 = vmul.f32 %v4135, 0.2
    %v4562 = vmul.f32 %v4183, 0.2
    %v4563 = vmul.f32 %v4186, 0.2
    %v4564 = vmul.f32 %v4234, 0.2
    %v4565 = vmul.f32 %v4237, 0.2
    %v4566 = vmul.f32 %v4285, 0.2
    %v4567 = vmul.f32 %v4288, 0.2
    %v4568 = vmul.f32 %v4336, 0.2
    %v4569 = vmul.f32 %v4339, 0.2
    %v4570 = vmul.f32 %v4387, 0.2
    %v4571 = vmul.f32 %v4390, 0.2
    %v4572 = vmul.f32 %v4438, 0.2
    %v4573 = vmul.f32 %v4441, 0.2
    %v4574 = vmul.f32 %v4489, 0.2
    %v4575 = vmul.f32 %v4492, 0.2
    %v4576 = vmul.f32 %v4540, 0.2
    %v4577 = vmul.f32 %v4543, 0.2
    %v4578 = vadd.f32 %v4546, %v2045
    %v4579 = vadd.f32 %v4547, %v2045
    %v4580 = vadd.f32 %v4548, %v2049
    %v4581 = vadd.f32 %v4549, %v2049
    %v4582 = vadd.f32 %v4550, %v2053
    %v4583 = vadd.f32 %v4551, %v2053
    %v4584 = vadd.f32 %v4552, %v2057
    %v4585 = vadd.f32 %v4553, %v2057
    %v4586 = vadd.f32 %v4554, %v2061
    %v4587 = vadd.f32 %v4555, %v2061
    %v4588 = vadd.f32 %v4556, %v2065
    %v4589 = vadd.f32 %v4557, %v2065
    %v4590 = vadd.f32 %v4558, %v2069
    %v4591 = vadd.f32 %v4559, %v2069
    %v4592 = vadd.f32 %v4560, %v2073
    %v4593 = vadd.f32 %v4561, %v2073
    %v4594 = vadd.f32 %v4562, %v2077
    %v4595 = vadd.f32 %v4563, %v2077
    %v4596 = vadd.f32 %v4564, %v2081
    %v4597 = vadd.f32 %v4565, %v2081
    %v4598 = vadd.f32 %v4566, %v2085
    %v4599 = vadd.f32 %v4567, %v2085
    %v4600 = vadd.f32 %v4568, %v2089
    %v4601 = vadd.f32 %v4569, %v2089
    %v4602 = vadd.f32 %v4570, %v2093
    %v4603 = vadd.f32 %v4571, %v2093
    %v4604 = vadd.f32 %v4572, %v2097
    %v4605 = vadd.f32 %v4573, %v2097
    %v4606 = vadd.f32 %v4574, %v2101
    %v4607 = vadd.f32 %v4575, %v2101
    %v4608 = vadd.f32 %v4576, %v2105
    %v4609 = vadd.f32 %v4577, %v2105
    %v4610 = vsel %vm2154, %v4578, -inf
    %4611 = vmax.xlane.f32.xlu0 %v4610
    %v4612 = vpop.xlane.xlu0 %4611
    %v4613 = vsel %vm2158, %v4579, -inf
    %4614 = vmax.xlane.f32.xlu0 %v4613
    %v4615 = vpop.xlane.xlu0 %4614
    %v4616 = vsel %vm2154, %v4580, -inf
    %4617 = vmax.xlane.f32.xlu0 %v4616
    %v4618 = vpop.xlane.xlu0 %4617
    %v4619 = vsel %vm2158, %v4581, -inf
    %4620 = vmax.xlane.f32.xlu0 %v4619
    %v4621 = vpop.xlane.xlu0 %4620
    %v4622 = vsel %vm2154, %v4582, -inf
    %4623 = vmax.xlane.f32.xlu0 %v4622
    %v4624 = vpop.xlane.xlu0 %4623
    %v4625 = vsel %vm2158, %v4583, -inf
    %4626 = vmax.xlane.f32.xlu0 %v4625
    %v4627 = vpop.xlane.xlu0 %4626
    %v4628 = vsel %vm2154, %v4584, -inf
    %4629 = vmax.xlane.f32.xlu0 %v4628
    %v4630 = vpop.xlane.xlu0 %4629
    %v4631 = vsel %vm2158, %v4585, -inf
    %4632 = vmax.xlane.f32.xlu0 %v4631
    %v4633 = vpop.xlane.xlu0 %4632
    %v4634 = vsel %vm2154, %v4586, -inf
    %4635 = vmax.xlane.f32.xlu0 %v4634
    %v4636 = vpop.xlane.xlu0 %4635
    %v4637 = vsel %vm2158, %v4587, -inf
    %4638 = vmax.xlane.f32.xlu0 %v4637
    %v4639 = vpop.xlane.xlu0 %4638
    %v4640 = vsel %vm2154, %v4588, -inf
    %4641 = vmax.xlane.f32.xlu0 %v4640
    %v4642 = vpop.xlane.xlu0 %4641
    %v4643 = vsel %vm2158, %v4589, -inf
    %4644 = vmax.xlane.f32.xlu0 %v4643
    %v4645 = vpop.xlane.xlu0 %4644
    %v4646 = vsel %vm2154, %v4590, -inf
    %4647 = vmax.xlane.f32.xlu0 %v4646
    %v4648 = vpop.xlane.xlu0 %4647
    %v4649 = vsel %vm2158, %v4591, -inf
    %4650 = vmax.xlane.f32.xlu0 %v4649
    %v4651 = vpop.xlane.xlu0 %4650
    %v4652 = vsel %vm2154, %v4592, -inf
    %4653 = vmax.xlane.f32.xlu0 %v4652
    %v4654 = vpop.xlane.xlu0 %4653
    %v4655 = vsel %vm2158, %v4593, -inf
    %4656 = vmax.xlane.f32.xlu0 %v4655
    %v4657 = vpop.xlane.xlu0 %4656
    %v4658 = vsel %vm2154, %v4594, -inf
    %4659 = vmax.xlane.f32.xlu0 %v4658
    %v4660 = vpop.xlane.xlu0 %4659
    %v4661 = vsel %vm2158, %v4595, -inf
    %4662 = vmax.xlane.f32.xlu0 %v4661
    %v4663 = vpop.xlane.xlu0 %4662
    %v4664 = vsel %vm2154, %v4596, -inf
    %4665 = vmax.xlane.f32.xlu0 %v4664
    %v4666 = vpop.xlane.xlu0 %4665
    %v4667 = vsel %vm2158, %v4597, -inf
    %4668 = vmax.xlane.f32.xlu0 %v4667
    %v4669 = vpop.xlane.xlu0 %4668
    %v4670 = vsel %vm2154, %v4598, -inf
    %4671 = vmax.xlane.f32.xlu0 %v4670
    %v4672 = vpop.xlane.xlu0 %4671
    %v4673 = vsel %vm2158, %v4599, -inf
    %4674 = vmax.xlane.f32.xlu0 %v4673
    %v4675 = vpop.xlane.xlu0 %4674
    %v4676 = vsel %vm2154, %v4600, -inf
    %4677 = vmax.xlane.f32.xlu0 %v4676
    %v4678 = vpop.xlane.xlu0 %4677
    %v4679 = vsel %vm2158, %v4601, -inf
    %4680 = vmax.xlane.f32.xlu0 %v4679
    %v4681 = vpop.xlane.xlu0 %4680
    %v4682 = vsel %vm2154, %v4602, -inf
    %4683 = vmax.xlane.f32.xlu0 %v4682
    %v4684 = vpop.xlane.xlu0 %4683
    %v4685 = vsel %vm2158, %v4603, -inf
    %4686 = vmax.xlane.f32.xlu0 %v4685
    %v4687 = vpop.xlane.xlu0 %4686
    %v4688 = vsel %vm2154, %v4604, -inf
    %4689 = vmax.xlane.f32.xlu0 %v4688
    %v4690 = vpop.xlane.xlu0 %4689
    %v4691 = vsel %vm2158, %v4605, -inf
    %4692 = vmax.xlane.f32.xlu0 %v4691
    %v4693 = vpop.xlane.xlu0 %4692
    %v4694 = vsel %vm2154, %v4606, -inf
    %4695 = vmax.xlane.f32.xlu0 %v4694
    %v4696 = vpop.xlane.xlu0 %4695
    %v4697 = vsel %vm2158, %v4607, -inf
    %4698 = vmax.xlane.f32.xlu0 %v4697
    %v4699 = vpop.xlane.xlu0 %4698
    %v4700 = vsel %vm2154, %v4608, -inf
    %4701 = vmax.xlane.f32.xlu0 %v4700
    %v4702 = vpop.xlane.xlu0 %4701
    %v4703 = vsel %vm2158, %v4609, -inf
    %4704 = vmax.xlane.f32.xlu0 %v4703
    %v4705 = vpop.xlane.xlu0 %4704
    %v4706 = vsub.f32 %v4578, %v4612
    %v4707 = vsub.f32 %v4579, %v4615
    %v4708 = vsub.f32 %v4580, %v4618
    %v4709 = vsub.f32 %v4581, %v4621
    %v4710 = vsub.f32 %v4582, %v4624
    %v4711 = vsub.f32 %v4583, %v4627
    %v4712 = vsub.f32 %v4584, %v4630
    %v4713 = vsub.f32 %v4585, %v4633
    %v4714 = vsub.f32 %v4586, %v4636
    %v4715 = vsub.f32 %v4587, %v4639
    %v4716 = vsub.f32 %v4588, %v4642
    %v4717 = vsub.f32 %v4589, %v4645
    %v4718 = vsub.f32 %v4590, %v4648
    %v4719 = vsub.f32 %v4591, %v4651
    %v4720 = vsub.f32 %v4592, %v4654
    %v4721 = vsub.f32 %v4593, %v4657
    %v4722 = vsub.f32 %v4594, %v4660
    %v4723 = vsub.f32 %v4595, %v4663
    %v4724 = vsub.f32 %v4596, %v4666
    %v4725 = vsub.f32 %v4597, %v4669
    %v4726 = vsub.f32 %v4598, %v4672
    %v4727 = vsub.f32 %v4599, %v4675
    %v4728 = vsub.f32 %v4600, %v4678
    %v4729 = vsub.f32 %v4601, %v4681
    %v4730 = vsub.f32 %v4602, %v4684
    %v4731 = vsub.f32 %v4603, %v4687
    %v4732 = vsub.f32 %v4604, %v4690
    %v4733 = vsub.f32 %v4605, %v4693
    %v4734 = vsub.f32 %v4606, %v4696
    %v4735 = vsub.f32 %v4607, %v4699
    %v4736 = vsub.f32 %v4608, %v4702
    %v4737 = vsub.f32 %v4609, %v4705
    %v4738 = vmul.f32 %v4706, 1.442695
    %v4739 = vpow.pop %v4738
    %v4740 = vmul.f32 %v4707, 1.442695
    %v4741 = vpow.pop %v4740
    %v4742 = vmul.f32 %v4708, 1.442695
    %v4743 = vpow.pop %v4742
    %v4744 = vmul.f32 %v4709, 1.442695
    %v4745 = vpow.pop %v4744
    %v4746 = vmul.f32 %v4710, 1.442695
    %v4747 = vpow.pop %v4746
    %v4748 = vmul.f32 %v4711, 1.442695
    %v4749 = vpow.pop %v4748
    %v4750 = vmul.f32 %v4712, 1.442695
    %v4751 = vpow.pop %v4750
    %v4752 = vmul.f32 %v4713, 1.442695
    %v4753 = vpow.pop %v4752
    %v4754 = vmul.f32 %v4714, 1.442695
    %v4755 = vpow.pop %v4754
    %v4756 = vmul.f32 %v4715, 1.442695
    %v4757 = vpow.pop %v4756
    %v4758 = vmul.f32 %v4716, 1.442695
    %v4759 = vpow.pop %v4758
    %v4760 = vmul.f32 %v4717, 1.442695
    %v4761 = vpow.pop %v4760
    %v4762 = vmul.f32 %v4718, 1.442695
    %v4763 = vpow.pop %v4762
    %v4764 = vmul.f32 %v4719, 1.442695
    %v4765 = vpow.pop %v4764
    %v4766 = vmul.f32 %v4720, 1.442695
    %v4767 = vpow.pop %v4766
    %v4768 = vmul.f32 %v4721, 1.442695
    %v4769 = vpow.pop %v4768
    %v4770 = vmul.f32 %v4722, 1.442695
    %v4771 = vpow.pop %v4770
    %v4772 = vmul.f32 %v4723, 1.442695
    %v4773 = vpow.pop %v4772
    %v4774 = vmul.f32 %v4724, 1.442695
    %v4775 = vpow.pop %v4774
    %v4776 = vmul.f32 %v4725, 1.442695
    %v4777 = vpow.pop %v4776
    %v4778 = vmul.f32 %v4726, 1.442695
    %v4779 = vpow.pop %v4778
    %v4780 = vmul.f32 %v4727, 1.442695
    %v4781 = vpow.pop %v4780
    %v4782 = vmul.f32 %v4728, 1.442695
    %v4783 = vpow.pop %v4782
    %v4784 = vmul.f32 %v4729, 1.442695
    %v4785 = vpow.pop %v4784
    %v4786 = vmul.f32 %v4730, 1.442695
    %v4787 = vpow.pop %v4786
    %v4788 = vmul.f32 %v4731, 1.442695
    %v4789 = vpow.pop %v4788
    %v4790 = vmul.f32 %v4732, 1.442695
    %v4791 = vpow.pop %v4790
    %v4792 = vmul.f32 %v4733, 1.442695
    %v4793 = vpow.pop %v4792
    %v4794 = vmul.f32 %v4734, 1.442695
    %v4795 = vpow.pop %v4794
    %v4796 = vmul.f32 %v4735, 1.442695
    %v4797 = vpow.pop %v4796
    %v4798 = vmul.f32 %v4736, 1.442695
    %v4799 = vpow.pop %v4798
    %v4800 = vmul.f32 %v4737, 1.442695
    %v4801 = vpow.pop %v4800
    %v4802 = vsel %vm2154, %v4739, 0.0
    %4803 = vadd.xlane.f32.xlu0 %v4802
    %v4804 = vpop.xlane.xlu0 %4803
    %v4805 = vsel %vm2158, %v4741, 0.0
    %4806 = vadd.xlane.f32.xlu0 %v4805
    %v4807 = vpop.xlane.xlu0 %4806
    %v4808 = vsel %vm2154, %v4743, 0.0
    %4809 = vadd.xlane.f32.xlu0 %v4808
    %v4810 = vpop.xlane.xlu0 %4809
    %v4811 = vsel %vm2158, %v4745, 0.0
    %4812 = vadd.xlane.f32.xlu0 %v4811
    %v4813 = vpop.xlane.xlu0 %4812
    %v4814 = vsel %vm2154, %v4747, 0.0
    %4815 = vadd.xlane.f32.xlu0 %v4814
    %v4816 = vpop.xlane.xlu0 %4815
    %v4817 = vsel %vm2158, %v4749, 0.0
    %4818 = vadd.xlane.f32.xlu0 %v4817
    %v4819 = vpop.xlane.xlu0 %4818
    %v4820 = vsel %vm2154, %v4751, 0.0
    %4821 = vadd.xlane.f32.xlu0 %v4820
    %v4822 = vpop.xlane.xlu0 %4821
    %v4823 = vsel %vm2158, %v4753, 0.0
    %4824 = vadd.xlane.f32.xlu0 %v4823
    %v4825 = vpop.xlane.xlu0 %4824
    %v4826 = vsel %vm2154, %v4755, 0.0
    %4827 = vadd.xlane.f32.xlu0 %v4826
    %v4828 = vpop.xlane.xlu0 %4827
    %v4829 = vsel %vm2158, %v4757, 0.0
    %4830 = vadd.xlane.f32.xlu0 %v4829
    %v4831 = vpop.xlane.xlu0 %4830
    %v4832 = vsel %vm2154, %v4759, 0.0
    %4833 = vadd.xlane.f32.xlu0 %v4832
    %v4834 = vpop.xlane.xlu0 %4833
    %v4835 = vsel %vm2158, %v4761, 0.0
    %4836 = vadd.xlane.f32.xlu0 %v4835
    %v4837 = vpop.xlane.xlu0 %4836
    %v4838 = vsel %vm2154, %v4763, 0.0
    %4839 = vadd.xlane.f32.xlu0 %v4838
    %v4840 = vpop.xlane.xlu0 %4839
    %v4841 = vsel %vm2158, %v4765, 0.0
    %4842 = vadd.xlane.f32.xlu0 %v4841
    %v4843 = vpop.xlane.xlu0 %4842
    %v4844 = vsel %vm2154, %v4767, 0.0
    %4845 = vadd.xlane.f32.xlu0 %v4844
    %v4846 = vpop.xlane.xlu0 %4845
    %v4847 = vsel %vm2158, %v4769, 0.0
    %4848 = vadd.xlane.f32.xlu0 %v4847
    %v4849 = vpop.xlane.xlu0 %4848
    %v4850 = vsel %vm2154, %v4771, 0.0
    %4851 = vadd.xlane.f32.xlu0 %v4850
    %v4852 = vpop.xlane.xlu0 %4851
    %v4853 = vsel %vm2158, %v4773, 0.0
    %4854 = vadd.xlane.f32.xlu0 %v4853
    %v4855 = vpop.xlane.xlu0 %4854
    %v4856 = vsel %vm2154, %v4775, 0.0
    %4857 = vadd.xlane.f32.xlu0 %v4856
    %v4858 = vpop.xlane.xlu0 %4857
    %v4859 = vsel %vm2158, %v4777, 0.0
    %4860 = vadd.xlane.f32.xlu0 %v4859
    %v4861 = vpop.xlane.xlu0 %4860
    %v4862 = vsel %vm2154, %v4779, 0.0
    %4863 = vadd.xlane.f32.xlu0 %v4862
    %v4864 = vpop.xlane.xlu0 %4863
    %v4865 = vsel %vm2158, %v4781, 0.0
    %4866 = vadd.xlane.f32.xlu0 %v4865
    %v4867 = vpop.xlane.xlu0 %4866
    %v4868 = vsel %vm2154, %v4783, 0.0
    %4869 = vadd.xlane.f32.xlu0 %v4868
    %v4870 = vpop.xlane.xlu0 %4869
    %v4871 = vsel %vm2158, %v4785, 0.0
    %4872 = vadd.xlane.f32.xlu0 %v4871
    %v4873 = vpop.xlane.xlu0 %4872
    %v4874 = vsel %vm2154, %v4787, 0.0
    %4875 = vadd.xlane.f32.xlu0 %v4874
    %v4876 = vpop.xlane.xlu0 %4875
    %v4877 = vsel %vm2158, %v4789, 0.0
    %4878 = vadd.xlane.f32.xlu0 %v4877
    %v4879 = vpop.xlane.xlu0 %4878
    %v4880 = vsel %vm2154, %v4791, 0.0
    %4881 = vadd.xlane.f32.xlu0 %v4880
    %v4882 = vpop.xlane.xlu0 %4881
    %v4883 = vsel %vm2158, %v4793, 0.0
    %4884 = vadd.xlane.f32.xlu0 %v4883
    %v4885 = vpop.xlane.xlu0 %4884
    %v4886 = vsel %vm2154, %v4795, 0.0
    %4887 = vadd.xlane.f32.xlu0 %v4886
    %v4888 = vpop.xlane.xlu0 %4887
    %v4889 = vsel %vm2158, %v4797, 0.0
    %4890 = vadd.xlane.f32.xlu0 %v4889
    %v4891 = vpop.xlane.xlu0 %4890
    %v4892 = vsel %vm2154, %v4799, 0.0
    %4893 = vadd.xlane.f32.xlu0 %v4892
    %v4894 = vpop.xlane.xlu0 %4893
    %v4895 = vsel %vm2158, %v4801, 0.0
    %4896 = vadd.xlane.f32.xlu0 %v4895
    %v4897 = vpop.xlane.xlu0 %4896
    %v4898 = vrcp.pop %v4804
    %v4899 = vrcp.pop %v4807
    %v4900 = vrcp.pop %v4810
    %v4901 = vrcp.pop %v4813
    %v4902 = vrcp.pop %v4816
    %v4903 = vrcp.pop %v4819
    %v4904 = vrcp.pop %v4822
    %v4905 = vrcp.pop %v4825
    %v4906 = vrcp.pop %v4828
    %v4907 = vrcp.pop %v4831
    %v4908 = vrcp.pop %v4834
    %v4909 = vrcp.pop %v4837
    %v4910 = vrcp.pop %v4840
    %v4911 = vrcp.pop %v4843
    %v4912 = vrcp.pop %v4846
    %v4913 = vrcp.pop %v4849
    %v4914 = vrcp.pop %v4852
    %v4915 = vrcp.pop %v4855
    %v4916 = vrcp.pop %v4858
    %v4917 = vrcp.pop %v4861
    %v4918 = vrcp.pop %v4864
    %v4919 = vrcp.pop %v4867
    %v4920 = vrcp.pop %v4870
    %v4921 = vrcp.pop %v4873
    %v4922 = vrcp.pop %v4876
    %v4923 = vrcp.pop %v4879
    %v4924 = vrcp.pop %v4882
    %v4925 = vrcp.pop %v4885
    %v4926 = vrcp.pop %v4888
    %v4927 = vrcp.pop %v4891
    %v4928 = vrcp.pop %v4894
    %v4929 = vrcp.pop %v4897
    %v4930 = vmul.f32 %v4739, %v4898
    %v4931 = vmul.f32 %v4741, %v4899
    %v4932 = vmul.f32 %v4743, %v4900
    %v4933 = vmul.f32 %v4745, %v4901
    %v4934 = vmul.f32 %v4747, %v4902
    %v4935 = vmul.f32 %v4749, %v4903
    %v4936 = vmul.f32 %v4751, %v4904
    %v4937 = vmul.f32 %v4753, %v4905
    %v4938 = vmul.f32 %v4755, %v4906
    %v4939 = vmul.f32 %v4757, %v4907
    %v4940 = vmul.f32 %v4759, %v4908
    %v4941 = vmul.f32 %v4761, %v4909
    %v4942 = vmul.f32 %v4763, %v4910
    %v4943 = vmul.f32 %v4765, %v4911
    %v4944 = vmul.f32 %v4767, %v4912
    %v4945 = vmul.f32 %v4769, %v4913
    %v4946 = vmul.f32 %v4771, %v4914
    %v4947 = vmul.f32 %v4773, %v4915
    %v4948 = vmul.f32 %v4775, %v4916
    %v4949 = vmul.f32 %v4777, %v4917
    %v4950 = vmul.f32 %v4779, %v4918
    %v4951 = vmul.f32 %v4781, %v4919
    %v4952 = vmul.f32 %v4783, %v4920
    %v4953 = vmul.f32 %v4785, %v4921
    %v4954 = vmul.f32 %v4787, %v4922
    %v4955 = vmul.f32 %v4789, %v4923
    %v4956 = vmul.f32 %v4791, %v4924
    %v4957 = vmul.f32 %v4793, %v4925
    %v4958 = vmul.f32 %v4795, %v4926
    %v4959 = vmul.f32 %v4797, %v4927
    %v4960 = vmul.f32 %v4799, %v4928
    %v4961 = vmul.f32 %v4801, %v4929
    %v4962 = vpack.c.bf16 %v4931, %v4930
    %v4963 = vpack.c.bf16 %v4933, %v4932
    %v4964 = vpack.c.bf16 %v4935, %v4934
    %v4965 = vpack.c.bf16 %v4937, %v4936
    %v4966 = vpack.c.bf16 %v4939, %v4938
    %v4967 = vpack.c.bf16 %v4941, %v4940
    %v4968 = vpack.c.bf16 %v4943, %v4942
    %v4969 = vpack.c.bf16 %v4945, %v4944
    %v4970 = vpack.c.bf16 %v4947, %v4946
    %v4971 = vpack.c.bf16 %v4949, %v4948
    %v4972 = vpack.c.bf16 %v4951, %v4950
    %v4973 = vpack.c.bf16 %v4953, %v4952
    %v4974 = vpack.c.bf16 %v4955, %v4954
    %v4975 = vpack.c.bf16 %v4957, %v4956
    %v4976 = vpack.c.bf16 %v4959, %v4958
    %v4977 = vpack.c.bf16 %v4961, %v4960
    %v4979 = vsel %vm2154, %v4962, 0
    %v4982 = vsel %vm2527, %v3714, 0
    %4984 = vmatprep.subr.bf16.mxu0 0
    %4985 = vmatpush1.bf16.msra.mxu0 %v4982
    %4986 = vmatprep.subr.bf16.mxu0 0
    %4987 = vmatpush1.bf16.msra.mxu0 0
    %4988 = vmatprep.subr.bf16.mxu0 0
    %4989 = vmatpush1.bf16.msra.mxu0 0
    %4990 = vmatprep.subr.bf16.mxu0 0
    %4991 = vmatpush1.bf16.msra.mxu0 0
    %4992 = vmatprep.subr.bf16.mxu0 0
    %4993 = vmatpush1.bf16.msra.mxu0 0
    %4994 = vmatprep.subr.bf16.mxu0 0
    %4995 = vmatpush1.bf16.msra.mxu0 0
    %4996 = vmatprep.subr.bf16.mxu0 0
    %4997 = vmatpush1.bf16.msra.mxu0 0
    %4998 = vmatprep.subr.bf16.mxu0 0
    %4999 = vmatpush1.bf16.msra.mxu0 0
    %5000 = vmatprep.subr.bf16.mxu0 0
    %5001 = vmatpush1.bf16.msra.mxu0 0
    %5002 = vmatprep.subr.bf16.mxu0 0
    %5003 = vmatpush1.bf16.msra.mxu0 0
    %5004 = vmatprep.subr.bf16.mxu0 0
    %5005 = vmatpush1.bf16.msra.mxu0 0
    %5006 = vmatprep.subr.bf16.mxu0 0
    %5007 = vmatpush1.bf16.msra.mxu0 0
    %5008 = vmatprep.subr.bf16.mxu0 0
    %5009 = vmatpush1.bf16.msra.mxu0 0
    %5010 = vmatprep.subr.bf16.mxu0 0
    %5011 = vmatpush1.bf16.msra.mxu0 0
    %5012 = vmatprep.subr.bf16.mxu0 0
    %5013 = vmatpush1.bf16.msra.mxu0 0
    %5014 = vmatprep.subr.bf16.mxu0 0
    %5015 = vmatpush1.bf16.msra.mxu0 0
    %5016 = vmatprep.mubr.bf16.mxu0 0
    %5017 = vmatmul.mubr.bf16.gmra.mrb[0].mxu0 %v4979
    %v5018 = vpop.f32.mrb[0].mxu0
    %v5019 = vadd.f32 0.0, %v5018
    %v5020 = vpop.f32.mrb[0].mxu0
    %v5021 = vpop.f32.mrb[0].mxu0
    %v5022 = vadd.f32 0.0, %v5021
    %v5023 = vpop.f32.mrb[0].mxu0
    %5024 = vdwg.mxu0
    %v5026 = vsel %vm2154, %v4963, 0
    %v5029 = vsel %vm2527, %v3715, 0
    %5031 = vmatprep.subr.bf16.mxu0 0
    %5032 = vmatpush1.bf16.msra.mxu0 %v5029
    %5033 = vmatprep.subr.bf16.mxu0 0
    %5034 = vmatpush1.bf16.msra.mxu0 0
    %5035 = vmatprep.subr.bf16.mxu0 0
    %5036 = vmatpush1.bf16.msra.mxu0 0
    %5037 = vmatprep.subr.bf16.mxu0 0
    %5038 = vmatpush1.bf16.msra.mxu0 0
    %5039 = vmatprep.subr.bf16.mxu0 0
    %5040 = vmatpush1.bf16.msra.mxu0 0
    %5041 = vmatprep.subr.bf16.mxu0 0
    %5042 = vmatpush1.bf16.msra.mxu0 0
    %5043 = vmatprep.subr.bf16.mxu0 0
    %5044 = vmatpush1.bf16.msra.mxu0 0
    %5045 = vmatprep.subr.bf16.mxu0 0
    %5046 = vmatpush1.bf16.msra.mxu0 0
    %5047 = vmatprep.subr.bf16.mxu0 0
    %5048 = vmatpush1.bf16.msra.mxu0 0
    %5049 = vmatprep.subr.bf16.mxu0 0
    %5050 = vmatpush1.bf16.msra.mxu0 0
    %5051 = vmatprep.subr.bf16.mxu0 0
    %5052 = vmatpush1.bf16.msra.mxu0 0
    %5053 = vmatprep.subr.bf16.mxu0 0
    %5054 = vmatpush1.bf16.msra.mxu0 0
    %5055 = vmatprep.subr.bf16.mxu0 0
    %5056 = vmatpush1.bf16.msra.mxu0 0
    %5057 = vmatprep.subr.bf16.mxu0 0
    %5058 = vmatpush1.bf16.msra.mxu0 0
    %5059 = vmatprep.subr.bf16.mxu0 0
    %5060 = vmatpush1.bf16.msra.mxu0 0
    %5061 = vmatprep.subr.bf16.mxu0 0
    %5062 = vmatpush1.bf16.msra.mxu0 0
    %5063 = vmatprep.mubr.bf16.mxu0 0
    %5064 = vmatmul.mubr.bf16.gmra.mrb[0].mxu0 %v5026
    %v5065 = vpop.f32.mrb[0].mxu0
    %v5066 = vadd.f32 0.0, %v5065
    %v5067 = vpop.f32.mrb[0].mxu0
    %v5068 = vpop.f32.mrb[0].mxu0
    %v5069 = vadd.f32 0.0, %v5068
    %v5070 = vpop.f32.mrb[0].mxu0
    %5071 = vdwg.mxu0
    %v5073 = vsel %vm2154, %v4964, 0
    %v5076 = vsel %vm2527, %v3716, 0
    %5078 = vmatprep.subr.bf16.mxu0 0
    %5079 = vmatpush1.bf16.msra.mxu0 %v5076
    %5080 = vmatprep.subr.bf16.mxu0 0
    %5081 = vmatpush1.bf16.msra.mxu0 0
    %5082 = vmatprep.subr.bf16.mxu0 0
    %5083 = vmatpush1.bf16.msra.mxu0 0
    %5084 = vmatprep.subr.bf16.mxu0 0
    %5085 = vmatpush1.bf16.msra.mxu0 0
    %5086 = vmatprep.subr.bf16.mxu0 0
    %5087 = vmatpush1.bf16.msra.mxu0 0
    %5088 = vmatprep.subr.bf16.mxu0 0
    %5089 = vmatpush1.bf16.msra.mxu0 0
    %5090 = vmatprep.subr.bf16.mxu0 0
    %5091 = vmatpush1.bf16.msra.mxu0 0
    %5092 = vmatprep.subr.bf16.mxu0 0
    %5093 = vmatpush1.bf16.msra.mxu0 0
    %5094 = vmatprep.subr.bf16.mxu0 0
    %5095 = vmatpush1.bf16.msra.mxu0 0
    %5096 = vmatprep.subr.bf16.mxu0 0
    %5097 = vmatpush1.bf16.msra.mxu0 0
    %5098 = vmatprep.subr.bf16.mxu0 0
    %5099 = vmatpush1.bf16.msra.mxu0 0
    %5100 = vmatprep.subr.bf16.mxu0 0
    %5101 = vmatpush1.bf16.msra.mxu0 0
    %5102 = vmatprep.subr.bf16.mxu0 0
    %5103 = vmatpush1.bf16.msra.mxu0 0
    %5104 = vmatprep.subr.bf16.mxu0 0
    %5105 = vmatpush1.bf16.msra.mxu0 0
    %5106 = vmatprep.subr.bf16.mxu0 0
    %5107 = vmatpush1.bf16.msra.mxu0 0
    %5108 = vmatprep.subr.bf16.mxu0 0
    %5109 = vmatpush1.bf16.msra.mxu0 0
    %5110 = vmatprep.mubr.bf16.mxu0 0
    %5111 = vmatmul.mubr.bf16.gmra.mrb[0].mxu0 %v5073
    %v5112 = vpop.f32.mrb[0].mxu0
    %v5113 = vadd.f32 0.0, %v5112
    %v5114 = vpop.f32.mrb[0].mxu0
    %v5115 = vpop.f32.mrb[0].mxu0
    %v5116 = vadd.f32 0.0, %v5115
    %v5117 = vpop.f32.mrb[0].mxu0
    %5118 = vdwg.mxu0
    %v5120 = vsel %vm2154, %v4965, 0
    %v5123 = vsel %vm2527, %v3717, 0
    %5125 = vmatprep.subr.bf16.mxu0 0
    %5126 = vmatpush1.bf16.msra.mxu0 %v5123
    %5127 = vmatprep.subr.bf16.mxu0 0
    %5128 = vmatpush1.bf16.msra.mxu0 0
    %5129 = vmatprep.subr.bf16.mxu0 0
    %5130 = vmatpush1.bf16.msra.mxu0 0
    %5131 = vmatprep.subr.bf16.mxu0 0
    %5132 = vmatpush1.bf16.msra.mxu0 0
    %5133 = vmatprep.subr.bf16.mxu0 0
    %5134 = vmatpush1.bf16.msra.mxu0 0
    %5135 = vmatprep.subr.bf16.mxu0 0
    %5136 = vmatpush1.bf16.msra.mxu0 0
    %5137 = vmatprep.subr.bf16.mxu0 0
    %5138 = vmatpush1.bf16.msra.mxu0 0
    %5139 = vmatprep.subr.bf16.mxu0 0
    %5140 = vmatpush1.bf16.msra.mxu0 0
    %5141 = vmatprep.subr.bf16.mxu0 0
    %5142 = vmatpush1.bf16.msra.mxu0 0
    %5143 = vmatprep.subr.bf16.mxu0 0
    %5144 = vmatpush1.bf16.msra.mxu0 0
    %5145 = vmatprep.subr.bf16.mxu0 0
    %5146 = vmatpush1.bf16.msra.mxu0 0
    %5147 = vmatprep.subr.bf16.mxu0 0
    %5148 = vmatpush1.bf16.msra.mxu0 0
    %5149 = vmatprep.subr.bf16.mxu0 0
    %5150 = vmatpush1.bf16.msra.mxu0 0
    %5151 = vmatprep.subr.bf16.mxu0 0
    %5152 = vmatpush1.bf16.msra.mxu0 0
    %5153 = vmatprep.subr.bf16.mxu0 0
    %5154 = vmatpush1.bf16.msra.mxu0 0
    %5155 = vmatprep.subr.bf16.mxu0 0
    %5156 = vmatpush1.bf16.msra.mxu0 0
    %5157 = vmatprep.mubr.bf16.mxu0 0
    %5158 = vmatmul.mubr.bf16.gmra.mrb[0].mxu0 %v5120
    %v5159 = vpop.f32.mrb[0].mxu0
    %v5160 = vadd.f32 0.0, %v5159
    %v5161 = vpop.f32.mrb[0].mxu0
    %v5162 = vpop.f32.mrb[0].mxu0
    %v5163 = vadd.f32 0.0, %v5162
    %v5164 = vpop.f32.mrb[0].mxu0
    %5165 = vdwg.mxu0
    %v5167 = vsel %vm2154, %v4966, 0
    %v5170 = vsel %vm2527, %v3718, 0
    %5172 = vmatprep.subr.bf16.mxu0 0
    %5173 = vmatpush1.bf16.msra.mxu0 %v5170
    %5174 = vmatprep.subr.bf16.mxu0 0
    %5175 = vmatpush1.bf16.msra.mxu0 0
    %5176 = vmatprep.subr.bf16.mxu0 0
    %5177 = vmatpush1.bf16.msra.mxu0 0
    %5178 = vmatprep.subr.bf16.mxu0 0
    %5179 = vmatpush1.bf16.msra.mxu0 0
    %5180 = vmatprep.subr.bf16.mxu0 0
    %5181 = vmatpush1.bf16.msra.mxu0 0
    %5182 = vmatprep.subr.bf16.mxu0 0
    %5183 = vmatpush1.bf16.msra.mxu0 0
    %5184 = vmatprep.subr.bf16.mxu0 0
    %5185 = vmatpush1.bf16.msra.mxu0 0
    %5186 = vmatprep.subr.bf16.mxu0 0
    %5187 = vmatpush1.bf16.msra.mxu0 0
    %5188 = vmatprep.subr.bf16.mxu0 0
    %5189 = vmatpush1.bf16.msra.mxu0 0
    %5190 = vmatprep.subr.bf16.mxu0 0
    %5191 = vmatpush1.bf16.msra.mxu0 0
    %5192 = vmatprep.subr.bf16.mxu0 0
    %5193 = vmatpush1.bf16.msra.mxu0 0
    %5194 = vmatprep.subr.bf16.mxu0 0
    %5195 = vmatpush1.bf16.msra.mxu0 0
    %5196 = vmatprep.subr.bf16.mxu0 0
    %5197 = vmatpush1.bf16.msra.mxu0 0
    %5198 = vmatprep.subr.bf16.mxu0 0
    %5199 = vmatpush1.bf16.msra.mxu0 0
    %5200 = vmatprep.subr.bf16.mxu0 0
    %5201 = vmatpush1.bf16.msra.mxu0 0
    %5202 = vmatprep.subr.bf16.mxu0 0
    %5203 = vmatpush1.bf16.msra.mxu0 0
    %5204 = vmatprep.mubr.bf16.mxu0 0
    %5205 = vmatmul.mubr.bf16.gmra.mrb[0].mxu0 %v5167
    %v5206 = vpop.f32.mrb[0].mxu0
    %v5207 = vadd.f32 0.0, %v5206
    %v5208 = vpop.f32.mrb[0].mxu0
    %v5209 = vpop.f32.mrb[0].mxu0
    %v5210 = vadd.f32 0.0, %v5209
    %v5211 = vpop.f32.mrb[0].mxu0
    %5212 = vdwg.mxu0
    %v5214 = vsel %vm2154, %v4967, 0
    %v5217 = vsel %vm2527, %v3719, 0
    %5219 = vmatprep.subr.bf16.mxu0 0
    %5220 = vmatpush1.bf16.msra.mxu0 %v5217
    %5221 = vmatprep.subr.bf16.mxu0 0
    %5222 = vmatpush1.bf16.msra.mxu0 0
    %5223 = vmatprep.subr.bf16.mxu0 0
    %5224 = vmatpush1.bf16.msra.mxu0 0
    %5225 = vmatprep.subr.bf16.mxu0 0
    %5226 = vmatpush1.bf16.msra.mxu0 0
    %5227 = vmatprep.subr.bf16.mxu0 0
    %5228 = vmatpush1.bf16.msra.mxu0 0
    %5229 = vmatprep.subr.bf16.mxu0 0
    %5230 = vmatpush1.bf16.msra.mxu0 0
    %5231 = vmatprep.subr.bf16.mxu0 0
    %5232 = vmatpush1.bf16.msra.mxu0 0
    %5233 = vmatprep.subr.bf16.mxu0 0
    %5234 = vmatpush1.bf16.msra.mxu0 0
    %5235 = vmatprep.subr.bf16.mxu0 0
    %5236 = vmatpush1.bf16.msra.mxu0 0
    %5237 = vmatprep.subr.bf16.mxu0 0
    %5238 = vmatpush1.bf16.msra.mxu0 0
    %5239 = vmatprep.subr.bf16.mxu0 0
    %5240 = vmatpush1.bf16.msra.mxu0 0
    %5241 = vmatprep.subr.bf16.mxu0 0
    %5242 = vmatpush1.bf16.msra.mxu0 0
    %5243 = vmatprep.subr.bf16.mxu0 0
    %5244 = vmatpush1.bf16.msra.mxu0 0
    %5245 = vmatprep.subr.bf16.mxu0 0
    %5246 = vmatpush1.bf16.msra.mxu0 0
    %5247 = vmatprep.subr.bf16.mxu0 0
    %5248 = vmatpush1.bf16.msra.mxu0 0
    %5249 = vmatprep.subr.bf16.mxu0 0
    %5250 = vmatpush1.bf16.msra.mxu0 0
    %5251 = vmatprep.mubr.bf16.mxu0 0
    %5252 = vmatmul.mubr.bf16.gmra.mrb[0].mxu0 %v5214
    %v5253 = vpop.f32.mrb[0].mxu0
    %v5254 = vadd.f32 0.0, %v5253
    %v5255 = vpop.f32.mrb[0].mxu0
    %v5256 = vpop.f32.mrb[0].mxu0
    %v5257 = vadd.f32 0.0, %v5256
    %v5258 = vpop.f32.mrb[0].mxu0
    %5259 = vdwg.mxu0
    %v5261 = vsel %vm2154, %v4968, 0
    %v5264 = vsel %vm2527, %v3720, 0
    %5266 = vmatprep.subr.bf16.mxu0 0
    %5267 = vmatpush1.bf16.msra.mxu0 %v5264
    %5268 = vmatprep.subr.bf16.mxu0 0
    %5269 = vmatpush1.bf16.msra.mxu0 0
    %5270 = vmatprep.subr.bf16.mxu0 0
    %5271 = vmatpush1.bf16.msra.mxu0 0
    %5272 = vmatprep.subr.bf16.mxu0 0
    %5273 = vmatpush1.bf16.msra.mxu0 0
    %5274 = vmatprep.subr.bf16.mxu0 0
    %5275 = vmatpush1.bf16.msra.mxu0 0
    %5276 = vmatprep.subr.bf16.mxu0 0
    %5277 = vmatpush1.bf16.msra.mxu0 0
    %5278 = vmatprep.subr.bf16.mxu0 0
    %5279 = vmatpush1.bf16.msra.mxu0 0
    %5280 = vmatprep.subr.bf16.mxu0 0
    %5281 = vmatpush1.bf16.msra.mxu0 0
    %5282 = vmatprep.subr.bf16.mxu0 0
    %5283 = vmatpush1.bf16.msra.mxu0 0
    %5284 = vmatprep.subr.bf16.mxu0 0
    %5285 = vmatpush1.bf16.msra.mxu0 0
    %5286 = vmatprep.subr.bf16.mxu0 0
    %5287 = vmatpush1.bf16.msra.mxu0 0
    %5288 = vmatprep.subr.bf16.mxu0 0
    %5289 = vmatpush1.bf16.msra.mxu0 0
    %5290 = vmatprep.subr.bf16.mxu0 0
    %5291 = vmatpush1.bf16.msra.mxu0 0
    %5292 = vmatprep.subr.bf16.mxu0 0
    %5293 = vmatpush1.bf16.msra.mxu0 0
    %5294 = vmatprep.subr.bf16.mxu0 0
    %5295 = vmatpush1.bf16.msra.mxu0 0
    %5296 = vmatprep.subr.bf16.mxu0 0
    %5297 = vmatpush1.bf16.msra.mxu0 0
    %5298 = vmatprep.mubr.bf16.mxu0 0
    %5299 = vmatmul.mubr.bf16.gmra.mrb[0].mxu0 %v5261
    %v5300 = vpop.f32.mrb[0].mxu0
    %v5301 = vadd.f32 0.0, %v5300
    %v5302 = vpop.f32.mrb[0].mxu0
    %v5303 = vpop.f32.mrb[0].mxu0
    %v5304 = vadd.f32 0.0, %v5303
    %v5305 = vpop.f32.mrb[0].mxu0
    %5306 = vdwg.mxu0
    %v5308 = vsel %vm2154, %v4969, 0
    %v5311 = vsel %vm2527, %v3721, 0
    %5313 = vmatprep.subr.bf16.mxu0 0
    %5314 = vmatpush1.bf16.msra.mxu0 %v5311
    %5315 = vmatprep.subr.bf16.mxu0 0
    %5316 = vmatpush1.bf16.msra.mxu0 0
    %5317 = vmatprep.subr.bf16.mxu0 0
    %5318 = vmatpush1.bf16.msra.mxu0 0
    %5319 = vmatprep.subr.bf16.mxu0 0
    %5320 = vmatpush1.bf16.msra.mxu0 0
    %5321 = vmatprep.subr.bf16.mxu0 0
    %5322 = vmatpush1.bf16.msra.mxu0 0
    %5323 = vmatprep.subr.bf16.mxu0 0
    %5324 = vmatpush1.bf16.msra.mxu0 0
    %5325 = vmatprep.subr.bf16.mxu0 0
    %5326 = vmatpush1.bf16.msra.mxu0 0
    %5327 = vmatprep.subr.bf16.mxu0 0
    %5328 = vmatpush1.bf16.msra.mxu0 0
    %5329 = vmatprep.subr.bf16.mxu0 0
    %5330 = vmatpush1.bf16.msra.mxu0 0
    %5331 = vmatprep.subr.bf16.mxu0 0
    %5332 = vmatpush1.bf16.msra.mxu0 0
    %5333 = vmatprep.subr.bf16.mxu0 0
    %5334 = vmatpush1.bf16.msra.mxu0 0
    %5335 = vmatprep.subr.bf16.mxu0 0
    %5336 = vmatpush1.bf16.msra.mxu0 0
    %5337 = vmatprep.subr.bf16.mxu0 0
    %5338 = vmatpush1.bf16.msra.mxu0 0
    %5339 = vmatprep.subr.bf16.mxu0 0
    %5340 = vmatpush1.bf16.msra.mxu0 0
    %5341 = vmatprep.subr.bf16.mxu0 0
    %5342 = vmatpush1.bf16.msra.mxu0 0
    %5343 = vmatprep.subr.bf16.mxu0 0
    %5344 = vmatpush1.bf16.msra.mxu0 0
    %5345 = vmatprep.mubr.bf16.mxu0 0
    %5346 = vmatmul.mubr.bf16.gmra.mrb[0].mxu0 %v5308
    %v5347 = vpop.f32.mrb[0].mxu0
    %v5348 = vadd.f32 0.0, %v5347
    %v5349 = vpop.f32.mrb[0].mxu0
    %v5350 = vpop.f32.mrb[0].mxu0
    %v5351 = vadd.f32 0.0, %v5350
    %v5352 = vpop.f32.mrb[0].mxu0
    %5353 = vdwg.mxu0
    %v5355 = vsel %vm2154, %v4970, 0
    %v5358 = vsel %vm2527, %v3722, 0
    %5360 = vmatprep.subr.bf16.mxu0 0
    %5361 = vmatpush1.bf16.msra.mxu0 %v5358
    %5362 = vmatprep.subr.bf16.mxu0 0
    %5363 = vmatpush1.bf16.msra.mxu0 0
    %5364 = vmatprep.subr.bf16.mxu0 0
    %5365 = vmatpush1.bf16.msra.mxu0 0
    %5366 = vmatprep.subr.bf16.mxu0 0
    %5367 = vmatpush1.bf16.msra.mxu0 0
    %5368 = vmatprep.subr.bf16.mxu0 0
    %5369 = vmatpush1.bf16.msra.mxu0 0
    %5370 = vmatprep.subr.bf16.mxu0 0
    %5371 = vmatpush1.bf16.msra.mxu0 0
    %5372 = vmatprep.subr.bf16.mxu0 0
    %5373 = vmatpush1.bf16.msra.mxu0 0
    %5374 = vmatprep.subr.bf16.mxu0 0
    %5375 = vmatpush1.bf16.msra.mxu0 0
    %5376 = vmatprep.subr.bf16.mxu0 0
    %5377 = vmatpush1.bf16.msra.mxu0 0
    %5378 = vmatprep.subr.bf16.mxu0 0
    %5379 = vmatpush1.bf16.msra.mxu0 0
    %5380 = vmatprep.subr.bf16.mxu0 0
    %5381 = vmatpush1.bf16.msra.mxu0 0
    %5382 = vmatprep.subr.bf16.mxu0 0
    %5383 = vmatpush1.bf16.msra.mxu0 0
    %5384 = vmatprep.subr.bf16.mxu0 0
    %5385 = vmatpush1.bf16.msra.mxu0 0
    %5386 = vmatprep.subr.bf16.mxu0 0
    %5387 = vmatpush1.bf16.msra.mxu0 0
    %5388 = vmatprep.subr.bf16.mxu0 0
    %5389 = vmatpush1.bf16.msra.mxu0 0
    %5390 = vmatprep.subr.bf16.mxu0 0
    %5391 = vmatpush1.bf16.msra.mxu0 0
    %5392 = vmatprep.mubr.bf16.mxu0 0
    %5393 = vmatmul.mubr.bf16.gmra.mrb[0].mxu0 %v5355
    %v5394 = vpop.f32.mrb[0].mxu0
    %v5395 = vadd.f32 0.0, %v5394
    %v5396 = vpop.f32.mrb[0].mxu0
    %v5397 = vpop.f32.mrb[0].mxu0
    %v5398 = vadd.f32 0.0, %v5397
    %v5399 = vpop.f32.mrb[0].mxu0
    %5400 = vdwg.mxu0
    %v5402 = vsel %vm2154, %v4971, 0
    %v5405 = vsel %vm2527, %v3723, 0
    %5407 = vmatprep.subr.bf16.mxu0 0
    %5408 = vmatpush1.bf16.msra.mxu0 %v5405
    %5409 = vmatprep.subr.bf16.mxu0 0
    %5410 = vmatpush1.bf16.msra.mxu0 0
    %5411 = vmatprep.subr.bf16.mxu0 0
    %5412 = vmatpush1.bf16.msra.mxu0 0
    %5413 = vmatprep.subr.bf16.mxu0 0
    %5414 = vmatpush1.bf16.msra.mxu0 0
    %5415 = vmatprep.subr.bf16.mxu0 0
    %5416 = vmatpush1.bf16.msra.mxu0 0
    %5417 = vmatprep.subr.bf16.mxu0 0
    %5418 = vmatpush1.bf16.msra.mxu0 0
    %5419 = vmatprep.subr.bf16.mxu0 0
    %5420 = vmatpush1.bf16.msra.mxu0 0
    %5421 = vmatprep.subr.bf16.mxu0 0
    %5422 = vmatpush1.bf16.msra.mxu0 0
    %5423 = vmatprep.subr.bf16.mxu0 0
    %5424 = vmatpush1.bf16.msra.mxu0 0
    %5425 = vmatprep.subr.bf16.mxu0 0
    %5426 = vmatpush1.bf16.msra.mxu0 0
    %5427 = vmatprep.subr.bf16.mxu0 0
    %5428 = vmatpush1.bf16.msra.mxu0 0
    %5429 = vmatprep.subr.bf16.mxu0 0
    %5430 = vmatpush1.bf16.msra.mxu0 0
    %5431 = vmatprep.subr.bf16.mxu0 0
    %5432 = vmatpush1.bf16.msra.mxu0 0
    %5433 = vmatprep.subr.bf16.mxu0 0
    %5434 = vmatpush1.bf16.msra.mxu0 0
    %5435 = vmatprep.subr.bf16.mxu0 0
    %5436 = vmatpush1.bf16.msra.mxu0 0
    %5437 = vmatprep.subr.bf16.mxu0 0
    %5438 = vmatpush1.bf16.msra.mxu0 0
    %5439 = vmatprep.mubr.bf16.mxu0 0
    %5440 = vmatmul.mubr.bf16.gmra.mrb[0].mxu0 %v5402
    %v5441 = vpop.f32.mrb[0].mxu0
    %v5442 = vadd.f32 0.0, %v5441
    %v5443 = vpop.f32.mrb[0].mxu0
    %v5444 = vpop.f32.mrb[0].mxu0
    %v5445 = vadd.f32 0.0, %v5444
    %v5446 = vpop.f32.mrb[0].mxu0
    %5447 = vdwg.mxu0
    %v5449 = vsel %vm2154, %v4972, 0
    %v5452 = vsel %vm2527, %v3724, 0
    %5454 = vmatprep.subr.bf16.mxu0 0
    %5455 = vmatpush1.bf16.msra.mxu0 %v5452
    %5456 = vmatprep.subr.bf16.mxu0 0
    %5457 = vmatpush1.bf16.msra.mxu0 0
    %5458 = vmatprep.subr.bf16.mxu0 0
    %5459 = vmatpush1.bf16.msra.mxu0 0
    %5460 = vmatprep.subr.bf16.mxu0 0
    %5461 = vmatpush1.bf16.msra.mxu0 0
    %5462 = vmatprep.subr.bf16.mxu0 0
    %5463 = vmatpush1.bf16.msra.mxu0 0
    %5464 = vmatprep.subr.bf16.mxu0 0
    %5465 = vmatpush1.bf16.msra.mxu0 0
    %5466 = vmatprep.subr.bf16.mxu0 0
    %5467 = vmatpush1.bf16.msra.mxu0 0
    %5468 = vmatprep.subr.bf16.mxu0 0
    %5469 = vmatpush1.bf16.msra.mxu0 0
    %5470 = vmatprep.subr.bf16.mxu0 0
    %5471 = vmatpush1.bf16.msra.mxu0 0
    %5472 = vmatprep.subr.bf16.mxu0 0
    %5473 = vmatpush1.bf16.msra.mxu0 0
    %5474 = vmatprep.subr.bf16.mxu0 0
    %5475 = vmatpush1.bf16.msra.mxu0 0
    %5476 = vmatprep.subr.bf16.mxu0 0
    %5477 = vmatpush1.bf16.msra.mxu0 0
    %5478 = vmatprep.subr.bf16.mxu0 0
    %5479 = vmatpush1.bf16.msra.mxu0 0
    %5480 = vmatprep.subr.bf16.mxu0 0
    %5481 = vmatpush1.bf16.msra.mxu0 0
    %5482 = vmatprep.subr.bf16.mxu0 0
    %5483 = vmatpush1.bf16.msra.mxu0 0
    %5484 = vmatprep.subr.bf16.mxu0 0
    %5485 = vmatpush1.bf16.msra.mxu0 0
    %5486 = vmatprep.mubr.bf16.mxu0 0
    %5487 = vmatmul.mubr.bf16.gmra.mrb[0].mxu0 %v5449
    %v5488 = vpop.f32.mrb[0].mxu0
    %v5489 = vadd.f32 0.0, %v5488
    %v5490 = vpop.f32.mrb[0].mxu0
    %v5491 = vpop.f32.mrb[0].mxu0
    %v5492 = vadd.f32 0.0, %v5491
    %v5493 = vpop.f32.mrb[0].mxu0
    %5494 = vdwg.mxu0
    %v5496 = vsel %vm2154, %v4973, 0
    %v5499 = vsel %vm2527, %v3725, 0
    %5501 = vmatprep.subr.bf16.mxu0 0
    %5502 = vmatpush1.bf16.msra.mxu0 %v5499
    %5503 = vmatprep.subr.bf16.mxu0 0
    %5504 = vmatpush1.bf16.msra.mxu0 0
    %5505 = vmatprep.subr.bf16.mxu0 0
    %5506 = vmatpush1.bf16.msra.mxu0 0
    %5507 = vmatprep.subr.bf16.mxu0 0
    %5508 = vmatpush1.bf16.msra.mxu0 0
    %5509 = vmatprep.subr.bf16.mxu0 0
    %5510 = vmatpush1.bf16.msra.mxu0 0
    %5511 = vmatprep.subr.bf16.mxu0 0
    %5512 = vmatpush1.bf16.msra.mxu0 0
    %5513 = vmatprep.subr.bf16.mxu0 0
    %5514 = vmatpush1.bf16.msra.mxu0 0
    %5515 = vmatprep.subr.bf16.mxu0 0
    %5516 = vmatpush1.bf16.msra.mxu0 0
    %5517 = vmatprep.subr.bf16.mxu0 0
    %5518 = vmatpush1.bf16.msra.mxu0 0
    %5519 = vmatprep.subr.bf16.mxu0 0
    %5520 = vmatpush1.bf16.msra.mxu0 0
    %5521 = vmatprep.subr.bf16.mxu0 0
    %5522 = vmatpush1.bf16.msra.mxu0 0
    %5523 = vmatprep.subr.bf16.mxu0 0
    %5524 = vmatpush1.bf16.msra.mxu0 0
    %5525 = vmatprep.subr.bf16.mxu0 0
    %5526 = vmatpush1.bf16.msra.mxu0 0
    %5527 = vmatprep.subr.bf16.mxu0 0
    %5528 = vmatpush1.bf16.msra.mxu0 0
    %5529 = vmatprep.subr.bf16.mxu0 0
    %5530 = vmatpush1.bf16.msra.mxu0 0
    %5531 = vmatprep.subr.bf16.mxu0 0
    %5532 = vmatpush1.bf16.msra.mxu0 0
    %5533 = vmatprep.mubr.bf16.mxu0 0
    %5534 = vmatmul.mubr.bf16.gmra.mrb[0].mxu0 %v5496
    %v5535 = vpop.f32.mrb[0].mxu0
    %v5536 = vadd.f32 0.0, %v5535
    %v5537 = vpop.f32.mrb[0].mxu0
    %v5538 = vpop.f32.mrb[0].mxu0
    %v5539 = vadd.f32 0.0, %v5538
    %v5540 = vpop.f32.mrb[0].mxu0
    %5541 = vdwg.mxu0
    %v5543 = vsel %vm2154, %v4974, 0
    %v5546 = vsel %vm2527, %v3726, 0
    %5548 = vmatprep.subr.bf16.mxu0 0
    %5549 = vmatpush1.bf16.msra.mxu0 %v5546
    %5550 = vmatprep.subr.bf16.mxu0 0
    %5551 = vmatpush1.bf16.msra.mxu0 0
    %5552 = vmatprep.subr.bf16.mxu0 0
    %5553 = vmatpush1.bf16.msra.mxu0 0
    %5554 = vmatprep.subr.bf16.mxu0 0
    %5555 = vmatpush1.bf16.msra.mxu0 0
    %5556 = vmatprep.subr.bf16.mxu0 0
    %5557 = vmatpush1.bf16.msra.mxu0 0
    %5558 = vmatprep.subr.bf16.mxu0 0
    %5559 = vmatpush1.bf16.msra.mxu0 0
    %5560 = vmatprep.subr.bf16.mxu0 0
    %5561 = vmatpush1.bf16.msra.mxu0 0
    %5562 = vmatprep.subr.bf16.mxu0 0
    %5563 = vmatpush1.bf16.msra.mxu0 0
    %5564 = vmatprep.subr.bf16.mxu0 0
    %5565 = vmatpush1.bf16.msra.mxu0 0
    %5566 = vmatprep.subr.bf16.mxu0 0
    %5567 = vmatpush1.bf16.msra.mxu0 0
    %5568 = vmatprep.subr.bf16.mxu0 0
    %5569 = vmatpush1.bf16.msra.mxu0 0
    %5570 = vmatprep.subr.bf16.mxu0 0
    %5571 = vmatpush1.bf16.msra.mxu0 0
    %5572 = vmatprep.subr.bf16.mxu0 0
    %5573 = vmatpush1.bf16.msra.mxu0 0
    %5574 = vmatprep.subr.bf16.mxu0 0
    %5575 = vmatpush1.bf16.msra.mxu0 0
    %5576 = vmatprep.subr.bf16.mxu0 0
    %5577 = vmatpush1.bf16.msra.mxu0 0
    %5578 = vmatprep.subr.bf16.mxu0 0
    %5579 = vmatpush1.bf16.msra.mxu0 0
    %5580 = vmatprep.mubr.bf16.mxu0 0
    %5581 = vmatmul.mubr.bf16.gmra.mrb[0].mxu0 %v5543
    %v5582 = vpop.f32.mrb[0].mxu0
    %v5583 = vadd.f32 0.0, %v5582
    %v5584 = vpop.f32.mrb[0].mxu0
    %v5585 = vpop.f32.mrb[0].mxu0
    %v5586 = vadd.f32 0.0, %v5585
    %v5587 = vpop.f32.mrb[0].mxu0
    %5588 = vdwg.mxu0
    %v5590 = vsel %vm2154, %v4975, 0
    %v5593 = vsel %vm2527, %v3727, 0
    %5595 = vmatprep.subr.bf16.mxu0 0
    %5596 = vmatpush1.bf16.msra.mxu0 %v5593
    %5597 = vmatprep.subr.bf16.mxu0 0
    %5598 = vmatpush1.bf16.msra.mxu0 0
    %5599 = vmatprep.subr.bf16.mxu0 0
    %5600 = vmatpush1.bf16.msra.mxu0 0
    %5601 = vmatprep.subr.bf16.mxu0 0
    %5602 = vmatpush1.bf16.msra.mxu0 0
    %5603 = vmatprep.subr.bf16.mxu0 0
    %5604 = vmatpush1.bf16.msra.mxu0 0
    %5605 = vmatprep.subr.bf16.mxu0 0
    %5606 = vmatpush1.bf16.msra.mxu0 0
    %5607 = vmatprep.subr.bf16.mxu0 0
    %5608 = vmatpush1.bf16.msra.mxu0 0
    %5609 = vmatprep.subr.bf16.mxu0 0
    %5610 = vmatpush1.bf16.msra.mxu0 0
    %5611 = vmatprep.subr.bf16.mxu0 0
    %5612 = vmatpush1.bf16.msra.mxu0 0
    %5613 = vmatprep.subr.bf16.mxu0 0
    %5614 = vmatpush1.bf16.msra.mxu0 0
    %5615 = vmatprep.subr.bf16.mxu0 0
    %5616 = vmatpush1.bf16.msra.mxu0 0
    %5617 = vmatprep.subr.bf16.mxu0 0
    %5618 = vmatpush1.bf16.msra.mxu0 0
    %5619 = vmatprep.subr.bf16.mxu0 0
    %5620 = vmatpush1.bf16.msra.mxu0 0
    %5621 = vmatprep.subr.bf16.mxu0 0
    %5622 = vmatpush1.bf16.msra.mxu0 0
    %5623 = vmatprep.subr.bf16.mxu0 0
    %5624 = vmatpush1.bf16.msra.mxu0 0
    %5625 = vmatprep.subr.bf16.mxu0 0
    %5626 = vmatpush1.bf16.msra.mxu0 0
    %5627 = vmatprep.mubr.bf16.mxu0 0
    %5628 = vmatmul.mubr.bf16.gmra.mrb[0].mxu0 %v5590
    %v5629 = vpop.f32.mrb[0].mxu0
    %v5630 = vadd.f32 0.0, %v5629
    %v5631 = vpop.f32.mrb[0].mxu0
    %v5632 = vpop.f32.mrb[0].mxu0
    %v5633 = vadd.f32 0.0, %v5632
    %v5634 = vpop.f32.mrb[0].mxu0
    %5635 = vdwg.mxu0
    %v5637 = vsel %vm2154, %v4976, 0
    %v5640 = vsel %vm2527, %v3728, 0
    %5642 = vmatprep.subr.bf16.mxu0 0
    %5643 = vmatpush1.bf16.msra.mxu0 %v5640
    %5644 = vmatprep.subr.bf16.mxu0 0
    %5645 = vmatpush1.bf16.msra.mxu0 0
    %5646 = vmatprep.subr.bf16.mxu0 0
    %5647 = vmatpush1.bf16.msra.mxu0 0
    %5648 = vmatprep.subr.bf16.mxu0 0
    %5649 = vmatpush1.bf16.msra.mxu0 0
    %5650 = vmatprep.subr.bf16.mxu0 0
    %5651 = vmatpush1.bf16.msra.mxu0 0
    %5652 = vmatprep.subr.bf16.mxu0 0
    %5653 = vmatpush1.bf16.msra.mxu0 0
    %5654 = vmatprep.subr.bf16.mxu0 0
    %5655 = vmatpush1.bf16.msra.mxu0 0
    %5656 = vmatprep.subr.bf16.mxu0 0
    %5657 = vmatpush1.bf16.msra.mxu0 0
    %5658 = vmatprep.subr.bf16.mxu0 0
    %5659 = vmatpush1.bf16.msra.mxu0 0
    %5660 = vmatprep.subr.bf16.mxu0 0
    %5661 = vmatpush1.bf16.msra.mxu0 0
    %5662 = vmatprep.subr.bf16.mxu0 0
    %5663 = vmatpush1.bf16.msra.mxu0 0
    %5664 = vmatprep.subr.bf16.mxu0 0
    %5665 = vmatpush1.bf16.msra.mxu0 0
    %5666 = vmatprep.subr.bf16.mxu0 0
    %5667 = vmatpush1.bf16.msra.mxu0 0
    %5668 = vmatprep.subr.bf16.mxu0 0
    %5669 = vmatpush1.bf16.msra.mxu0 0
    %5670 = vmatprep.subr.bf16.mxu0 0
    %5671 = vmatpush1.bf16.msra.mxu0 0
    %5672 = vmatprep.subr.bf16.mxu0 0
    %5673 = vmatpush1.bf16.msra.mxu0 0
    %5674 = vmatprep.mubr.bf16.mxu0 0
    %5675 = vmatmul.mubr.bf16.gmra.mrb[0].mxu0 %v5637
    %v5676 = vpop.f32.mrb[0].mxu0
    %v5677 = vadd.f32 0.0, %v5676
    %v5678 = vpop.f32.mrb[0].mxu0
    %v5679 = vpop.f32.mrb[0].mxu0
    %v5680 = vadd.f32 0.0, %v5679
    %v5681 = vpop.f32.mrb[0].mxu0
    %5682 = vdwg.mxu0
    %v5684 = vsel %vm2154, %v4977, 0
    %v5687 = vsel %vm2527, %v3729, 0
    %5689 = vmatprep.subr.bf16.mxu0 0
    %5690 = vmatpush1.bf16.msra.mxu0 %v5687
    %5691 = vmatprep.subr.bf16.mxu0 0
    %5692 = vmatpush1.bf16.msra.mxu0 0
    %5693 = vmatprep.subr.bf16.mxu0 0
    %5694 = vmatpush1.bf16.msra.mxu0 0
    %5695 = vmatprep.subr.bf16.mxu0 0
    %5696 = vmatpush1.bf16.msra.mxu0 0
    %5697 = vmatprep.subr.bf16.mxu0 0
    %5698 = vmatpush1.bf16.msra.mxu0 0
    %5699 = vmatprep.subr.bf16.mxu0 0
    %5700 = vmatpush1.bf16.msra.mxu0 0
    %5701 = vmatprep.subr.bf16.mxu0 0
    %5702 = vmatpush1.bf16.msra.mxu0 0
    %5703 = vmatprep.subr.bf16.mxu0 0
    %5704 = vmatpush1.bf16.msra.mxu0 0
    %5705 = vmatprep.subr.bf16.mxu0 0
    %5706 = vmatpush1.bf16.msra.mxu0 0
    %5707 = vmatprep.subr.bf16.mxu0 0
    %5708 = vmatpush1.bf16.msra.mxu0 0
    %5709 = vmatprep.subr.bf16.mxu0 0
    %5710 = vmatpush1.bf16.msra.mxu0 0
    %5711 = vmatprep.subr.bf16.mxu0 0
    %5712 = vmatpush1.bf16.msra.mxu0 0
    %5713 = vmatprep.subr.bf16.mxu0 0
    %5714 = vmatpush1.bf16.msra.mxu0 0
    %5715 = vmatprep.subr.bf16.mxu0 0
    %5716 = vmatpush1.bf16.msra.mxu0 0
    %5717 = vmatprep.subr.bf16.mxu0 0
    %5718 = vmatpush1.bf16.msra.mxu0 0
    %5719 = vmatprep.subr.bf16.mxu0 0
    %5720 = vmatpush1.bf16.msra.mxu0 0
    %5721 = vmatprep.mubr.bf16.mxu0 0
    %5722 = vmatmul.mubr.bf16.gmra.mrb[0].mxu0 %v5684
    %v5723 = vpop.f32.mrb[0].mxu0
    %v5724 = vadd.f32 0.0, %v5723
    %v5725 = vpop.f32.mrb[0].mxu0
    %v5726 = vpop.f32.mrb[0].mxu0
    %v5727 = vadd.f32 0.0, %v5726
    %v5728 = vpop.f32.mrb[0].mxu0
    %5729 = vdwg.mxu0
    %5730 = vrot.lane.b32.xlu0 %v3380, 103
    %v5731 = vpop.permute.xlu0 %5730
    %5732 = vrot.lane.b32.xlu0 %v3384, 103
    %v5733 = vpop.permute.xlu0 %5732
    %5734 = vrot.lane.b32.xlu0 %v3388, 103
    %v5735 = vpop.permute.xlu0 %5734
    %5736 = vrot.lane.b32.xlu0 %v3392, 103
    %v5737 = vpop.permute.xlu0 %5736
    %5738 = vrot.lane.b32.xlu0 %v3396, 103
    %v5739 = vpop.permute.xlu0 %5738
    %5740 = vrot.lane.b32.xlu0 %v3400, 103
    %v5741 = vpop.permute.xlu0 %5740
    %5742 = vrot.lane.b32.xlu0 %v3404, 103
    %v5743 = vpop.permute.xlu0 %5742
    %5744 = vrot.lane.b32.xlu0 %v3408, 103
    %v5745 = vpop.permute.xlu0 %5744
    %5746 = vrot.lane.b32.xlu0 %v3412, 103
    %v5747 = vpop.permute.xlu0 %5746
    %5748 = vrot.lane.b32.xlu0 %v3416, 103
    %v5749 = vpop.permute.xlu0 %5748
    %5750 = vrot.lane.b32.xlu0 %v3420, 103
    %v5751 = vpop.permute.xlu0 %5750
    %5752 = vrot.lane.b32.xlu0 %v3424, 103
    %v5753 = vpop.permute.xlu0 %5752
    %5754 = vrot.lane.b32.xlu0 %v3428, 103
    %v5755 = vpop.permute.xlu0 %5754
    %5756 = vrot.lane.b32.xlu0 %v3432, 103
    %v5757 = vpop.permute.xlu0 %5756
    %5758 = vrot.lane.b32.xlu0 %v3436, 103
    %v5759 = vpop.permute.xlu0 %5758
    %5760 = vrot.lane.b32.xlu0 %v3440, 103
    %v5761 = vpop.permute.xlu0 %5760
    %v5778 = vmul.f32 %v5019, %v5731
    %v5779 = vmul.f32 %v5022, %v5731
    %v5780 = vmul.f32 %v5066, %v5733
    %v5781 = vmul.f32 %v5069, %v5733
    %v5782 = vmul.f32 %v5113, %v5735
    %v5783 = vmul.f32 %v5116, %v5735
    %v5784 = vmul.f32 %v5160, %v5737
    %v5785 = vmul.f32 %v5163, %v5737
    %v5786 = vmul.f32 %v5207, %v5739
    %v5787 = vmul.f32 %v5210, %v5739
    %v5788 = vmul.f32 %v5254, %v5741
    %v5789 = vmul.f32 %v5257, %v5741
    %v5790 = vmul.f32 %v5301, %v5743
    %v5791 = vmul.f32 %v5304, %v5743
    %v5792 = vmul.f32 %v5348, %v5745
    %v5793 = vmul.f32 %v5351, %v5745
    %v5794 = vmul.f32 %v5395, %v5747
    %v5795 = vmul.f32 %v5398, %v5747
    %v5796 = vmul.f32 %v5442, %v5749
    %v5797 = vmul.f32 %v5445, %v5749
    %v5798 = vmul.f32 %v5489, %v5751
    %v5799 = vmul.f32 %v5492, %v5751
    %v5800 = vmul.f32 %v5536, %v5753
    %v5801 = vmul.f32 %v5539, %v5753
    %v5802 = vmul.f32 %v5583, %v5755
    %v5803 = vmul.f32 %v5586, %v5755
    %v5804 = vmul.f32 %v5630, %v5757
    %v5805 = vmul.f32 %v5633, %v5757
    %v5806 = vmul.f32 %v5677, %v5759
    %v5807 = vmul.f32 %v5680, %v5759
    %v5808 = vmul.f32 %v5724, %v5761
    %v5809 = vmul.f32 %v5727, %v5761
    %v5810 = vsel %vm1212, %v5778, 0.0
    %5811 = vadd.xlane.f32.xlu0 %v5810
    %v5812 = vpop.xlane.xlu0 %5811
    %v5813 = vsel %vm3492, %v5779, 0.0
    %5814 = vadd.xlane.f32.xlu0 %v5813
    %v5815 = vpop.xlane.xlu0 %5814
    %v5816 = vsel %vm1212, %v5780, 0.0
    %5817 = vadd.xlane.f32.xlu0 %v5816
    %v5818 = vpop.xlane.xlu0 %5817
    %v5819 = vsel %vm3492, %v5781, 0.0
    %5820 = vadd.xlane.f32.xlu0 %v5819
    %v5821 = vpop.xlane.xlu0 %5820
    %v5822 = vsel %vm1212, %v5782, 0.0
    %5823 = vadd.xlane.f32.xlu0 %v5822
    %v5824 = vpop.xlane.xlu0 %5823
    %v5825 = vsel %vm3492, %v5783, 0.0
    %5826 = vadd.xlane.f32.xlu0 %v5825
    %v5827 = vpop.xlane.xlu0 %5826
    %v5828 = vsel %vm1212, %v5784, 0.0
    %5829 = vadd.xlane.f32.xlu0 %v5828
    %v5830 = vpop.xlane.xlu0 %5829
    %v5831 = vsel %vm3492, %v5785, 0.0
    %5832 = vadd.xlane.f32.xlu0 %v5831
    %v5833 = vpop.xlane.xlu0 %5832
    %v5834 = vsel %vm1212, %v5786, 0.0
    %5835 = vadd.xlane.f32.xlu0 %v5834
    %v5836 = vpop.xlane.xlu0 %5835
    %v5837 = vsel %vm3492, %v5787, 0.0
    %5838 = vadd.xlane.f32.xlu0 %v5837
    %v5839 = vpop.xlane.xlu0 %5838
    %v5840 = vsel %vm1212, %v5788, 0.0
    %5841 = vadd.xlane.f32.xlu0 %v5840
    %v5842 = vpop.xlane.xlu0 %5841
    %v5843 = vsel %vm3492, %v5789, 0.0
    %5844 = vadd.xlane.f32.xlu0 %v5843
    %v5845 = vpop.xlane.xlu0 %5844
    %v5846 = vsel %vm1212, %v5790, 0.0
    %5847 = vadd.xlane.f32.xlu0 %v5846
    %v5848 = vpop.xlane.xlu0 %5847
    %v5849 = vsel %vm3492, %v5791, 0.0
    %5850 = vadd.xlane.f32.xlu0 %v5849
    %v5851 = vpop.xlane.xlu0 %5850
    %v5852 = vsel %vm1212, %v5792, 0.0
    %5853 = vadd.xlane.f32.xlu0 %v5852
    %v5854 = vpop.xlane.xlu0 %5853
    %v5855 = vsel %vm3492, %v5793, 0.0
    %5856 = vadd.xlane.f32.xlu0 %v5855
    %v5857 = vpop.xlane.xlu0 %5856
    %v5858 = vsel %vm1212, %v5794, 0.0
    %5859 = vadd.xlane.f32.xlu0 %v5858
    %v5860 = vpop.xlane.xlu0 %5859
    %v5861 = vsel %vm3492, %v5795, 0.0
    %5862 = vadd.xlane.f32.xlu0 %v5861
    %v5863 = vpop.xlane.xlu0 %5862
    %v5864 = vsel %vm1212, %v5796, 0.0
    %5865 = vadd.xlane.f32.xlu0 %v5864
    %v5866 = vpop.xlane.xlu0 %5865
    %v5867 = vsel %vm3492, %v5797, 0.0
    %5868 = vadd.xlane.f32.xlu0 %v5867
    %v5869 = vpop.xlane.xlu0 %5868
    %v5870 = vsel %vm1212, %v5798, 0.0
    %5871 = vadd.xlane.f32.xlu0 %v5870
    %v5872 = vpop.xlane.xlu0 %5871
    %v5873 = vsel %vm3492, %v5799, 0.0
    %5874 = vadd.xlane.f32.xlu0 %v5873
    %v5875 = vpop.xlane.xlu0 %5874
    %v5876 = vsel %vm1212, %v5800, 0.0
    %5877 = vadd.xlane.f32.xlu0 %v5876
    %v5878 = vpop.xlane.xlu0 %5877
    %v5879 = vsel %vm3492, %v5801, 0.0
    %5880 = vadd.xlane.f32.xlu0 %v5879
    %v5881 = vpop.xlane.xlu0 %5880
    %v5882 = vsel %vm1212, %v5802, 0.0
    %5883 = vadd.xlane.f32.xlu0 %v5882
    %v5884 = vpop.xlane.xlu0 %5883
    %v5885 = vsel %vm3492, %v5803, 0.0
    %5886 = vadd.xlane.f32.xlu0 %v5885
    %v5887 = vpop.xlane.xlu0 %5886
    %v5888 = vsel %vm1212, %v5804, 0.0
    %5889 = vadd.xlane.f32.xlu0 %v5888
    %v5890 = vpop.xlane.xlu0 %5889
    %v5891 = vsel %vm3492, %v5805, 0.0
    %5892 = vadd.xlane.f32.xlu0 %v5891
    %v5893 = vpop.xlane.xlu0 %5892
    %v5894 = vsel %vm1212, %v5806, 0.0
    %5895 = vadd.xlane.f32.xlu0 %v5894
    %v5896 = vpop.xlane.xlu0 %5895
    %v5897 = vsel %vm3492, %v5807, 0.0
    %5898 = vadd.xlane.f32.xlu0 %v5897
    %v5899 = vpop.xlane.xlu0 %5898
    %v5900 = vsel %vm1212, %v5808, 0.0
    %5901 = vadd.xlane.f32.xlu0 %v5900
    %v5902 = vpop.xlane.xlu0 %5901
    %v5903 = vsel %vm3492, %v5809, 0.0
    %5904 = vadd.xlane.f32.xlu0 %v5903
    %v5905 = vpop.xlane.xlu0 %5904
    %v5906 = vadd.f32 %v3586, %v5812
    %v5907 = vadd.f32 %v3587, %v5815
    %v5908 = vadd.f32 %v3588, %v5818
    %v5909 = vadd.f32 %v3589, %v5821
    %v5910 = vadd.f32 %v3590, %v5824
    %v5911 = vadd.f32 %v3591, %v5827
    %v5912 = vadd.f32 %v3592, %v5830
    %v5913 = vadd.f32 %v3593, %v5833
    %v5914 = vadd.f32 %v3594, %v5836
    %v5915 = vadd.f32 %v3595, %v5839
    %v5916 = vadd.f32 %v3596, %v5842
    %v5917 = vadd.f32 %v3597, %v5845
    %v5918 = vadd.f32 %v3598, %v5848
    %v5919 = vadd.f32 %v3599, %v5851
    %v5920 = vadd.f32 %v3600, %v5854
    %v5921 = vadd.f32 %v3601, %v5857
    %v5922 = vadd.f32 %v3602, %v5860
    %v5923 = vadd.f32 %v3603, %v5863
    %v5924 = vadd.f32 %v3604, %v5866
    %v5925 = vadd.f32 %v3605, %v5869
    %v5926 = vadd.f32 %v3606, %v5872
    %v5927 = vadd.f32 %v3607, %v5875
    %v5928 = vadd.f32 %v3608, %v5878
    %v5929 = vadd.f32 %v3609, %v5881
    %v5930 = vadd.f32 %v3610, %v5884
    %v5931 = vadd.f32 %v3611, %v5887
    %v5932 = vadd.f32 %v3612, %v5890
    %v5933 = vadd.f32 %v3613, %v5893
    %v5934 = vadd.f32 %v3614, %v5896
    %v5935 = vadd.f32 %v3615, %v5899
    %v5936 = vadd.f32 %v3616, %v5902
    %v5937 = vadd.f32 %v3617, %v5905
    %v5970 = vlaneseq
    %v5971 = vand.u32 %v5970, 127
    %v5972 = vlaneseq
    %v5973 = vshrl.u32 %v5972, 7
    %v5974 = vsub.s32 %v5971, %v5973
    %v5975 = vrot.slane %v5906, %v5974
    %v5976 = vadd.s32 %v5971, 4294967288
    %v5977 = vlaneseq
    %v5978 = vshrl.u32 %v5977, 7
    %v5979 = vsub.s32 %v5976, %v5978
    %v5980 = vrot.slane %v5907, %v5979
    %vm5981 = vcmask 130112
    %v5982 = vsel %vm5981, %v5980, %v5975
    %v5983 = vlaneseq
    %v5984 = vshrl.u32 %v5983, 7
    %v5985 = vsub.s32 %v5971, %v5984
    %v5986 = vrot.slane %v5908, %v5985
    %v5987 = vlaneseq
    %v5988 = vshrl.u32 %v5987, 7
    %v5989 = vsub.s32 %v5976, %v5988
    %v5990 = vrot.slane %v5909, %v5989
    %v5991 = vsel %vm5981, %v5990, %v5986
    %v5992 = vlaneseq
    %v5993 = vshrl.u32 %v5992, 7
    %v5994 = vsub.s32 %v5971, %v5993
    %v5995 = vrot.slane %v5910, %v5994
    %v5996 = vlaneseq
    %v5997 = vshrl.u32 %v5996, 7
    %v5998 = vsub.s32 %v5976, %v5997
    %v5999 = vrot.slane %v5911, %v5998
    %v6000 = vsel %vm5981, %v5999, %v5995
    %v6001 = vlaneseq
    %v6002 = vshrl.u32 %v6001, 7
    %v6003 = vsub.s32 %v5971, %v6002
    %v6004 = vrot.slane %v5912, %v6003
    %v6005 = vlaneseq
    %v6006 = vshrl.u32 %v6005, 7
    %v6007 = vsub.s32 %v5976, %v6006
    %v6008 = vrot.slane %v5913, %v6007
    %v6009 = vsel %vm5981, %v6008, %v6004
    %v6010 = vlaneseq
    %v6011 = vshrl.u32 %v6010, 7
    %v6012 = vsub.s32 %v5971, %v6011
    %v6013 = vrot.slane %v5914, %v6012
    %v6014 = vlaneseq
    %v6015 = vshrl.u32 %v6014, 7
    %v6016 = vsub.s32 %v5976, %v6015
    %v6017 = vrot.slane %v5915, %v6016
    %v6018 = vsel %vm5981, %v6017, %v6013
    %v6019 = vlaneseq
    %v6020 = vshrl.u32 %v6019, 7
    %v6021 = vsub.s32 %v5971, %v6020
    %v6022 = vrot.slane %v5916, %v6021
    %v6023 = vlaneseq
    %v6024 = vshrl.u32 %v6023, 7
    %v6025 = vsub.s32 %v5976, %v6024
    %v6026 = vrot.slane %v5917, %v6025
    %v6027 = vsel %vm5981, %v6026, %v6022
    %v6028 = vlaneseq
    %v6029 = vshrl.u32 %v6028, 7
    %v6030 = vsub.s32 %v5971, %v6029
    %v6031 = vrot.slane %v5918, %v6030
    %v6032 = vlaneseq
    %v6033 = vshrl.u32 %v6032, 7
    %v6034 = vsub.s32 %v5976, %v6033
    %v6035 = vrot.slane %v5919, %v6034
    %v6036 = vsel %vm5981, %v6035, %v6031
    %v6037 = vlaneseq
    %v6038 = vshrl.u32 %v6037, 7
    %v6039 = vsub.s32 %v5971, %v6038
    %v6040 = vrot.slane %v5920, %v6039
    %v6041 = vlaneseq
    %v6042 = vshrl.u32 %v6041, 7
    %v6043 = vsub.s32 %v5976, %v6042
    %v6044 = vrot.slane %v5921, %v6043
    %v6045 = vsel %vm5981, %v6044, %v6040
    %v6046 = vlaneseq
    %v6047 = vshrl.u32 %v6046, 7
    %v6048 = vsub.s32 %v5971, %v6047
    %v6049 = vrot.slane %v5922, %v6048
    %v6050 = vlaneseq
    %v6051 = vshrl.u32 %v6050, 7
    %v6052 = vsub.s32 %v5976, %v6051
    %v6053 = vrot.slane %v5923, %v6052
    %v6054 = vsel %vm5981, %v6053, %v6049
    %v6055 = vlaneseq
    %v6056 = vshrl.u32 %v6055, 7
    %v6057 = vsub.s32 %v5971, %v6056
    %v6058 = vrot.slane %v5924, %v6057
    %v6059 = vlaneseq
    %v6060 = vshrl.u32 %v6059, 7
    %v6061 = vsub.s32 %v5976, %v6060
    %v6062 = vrot.slane %v5925, %v6061
    %v6063 = vsel %vm5981, %v6062, %v6058
    %v6064 = vlaneseq
    %v6065 = vshrl.u32 %v6064, 7
    %v6066 = vsub.s32 %v5971, %v6065
    %v6067 = vrot.slane %v5926, %v6066
    %v6068 = vlaneseq
    %v6069 = vshrl.u32 %v6068, 7
    %v6070 = vsub.s32 %v5976, %v6069
    %v6071 = vrot.slane %v5927, %v6070
    %v6072 = vsel %vm5981, %v6071, %v6067
    %v6073 = vlaneseq
    %v6074 = vshrl.u32 %v6073, 7
    %v6075 = vsub.s32 %v5971, %v6074
    %v6076 = vrot.slane %v5928, %v6075
    %v6077 = vlaneseq
    %v6078 = vshrl.u32 %v6077, 7
    %v6079 = vsub.s32 %v5976, %v6078
    %v6080 = vrot.slane %v5929, %v6079
    %v6081 = vsel %vm5981, %v6080, %v6076
    %v6082 = vlaneseq
    %v6083 = vshrl.u32 %v6082, 7
    %v6084 = vsub.s32 %v5971, %v6083
    %v6085 = vrot.slane %v5930, %v6084
    %v6086 = vlaneseq
    %v6087 = vshrl.u32 %v6086, 7
    %v6088 = vsub.s32 %v5976, %v6087
    %v6089 = vrot.slane %v5931, %v6088
    %v6090 = vsel %vm5981, %v6089, %v6085
    %v6091 = vlaneseq
    %v6092 = vshrl.u32 %v6091, 7
    %v6093 = vsub.s32 %v5971, %v6092
    %v6094 = vrot.slane %v5932, %v6093
    %v6095 = vlaneseq
    %v6096 = vshrl.u32 %v6095, 7
    %v6097 = vsub.s32 %v5976, %v6096
    %v6098 = vrot.slane %v5933, %v6097
    %v6099 = vsel %vm5981, %v6098, %v6094
    %v6100 = vlaneseq
    %v6101 = vshrl.u32 %v6100, 7
    %v6102 = vsub.s32 %v5971, %v6101
    %v6103 = vrot.slane %v5934, %v6102
    %v6104 = vlaneseq
    %v6105 = vshrl.u32 %v6104, 7
    %v6106 = vsub.s32 %v5976, %v6105
    %v6107 = vrot.slane %v5935, %v6106
    %v6108 = vsel %vm5981, %v6107, %v6103
    %v6109 = vlaneseq
    %v6110 = vshrl.u32 %v6109, 7
    %v6111 = vsub.s32 %v5971, %v6110
    %v6112 = vrot.slane %v5936, %v6111
    %v6113 = vlaneseq
    %v6114 = vshrl.u32 %v6113, 7
    %v6115 = vsub.s32 %v5976, %v6114
    %v6116 = vrot.slane %v5937, %v6115
    %v6117 = vsel %vm5981, %v6116, %v6112
    %vm6118 = vcmask 1041409
    %v6119 = vsel %vm6118, %v5991, %v5982
    %vm6120 = vcmask 1042434
    %v6121 = vsel %vm6120, %v6000, %v6119
    %vm6122 = vcmask 1043459
    %v6123 = vsel %vm6122, %v6009, %v6121
    %vm6124 = vcmask 1044484
    %v6125 = vsel %vm6124, %v6018, %v6123
    %vm6126 = vcmask 1045509
    %v6127 = vsel %vm6126, %v6027, %v6125
    %vm6128 = vcmask 1046534
    %v6129 = vsel %vm6128, %v6036, %v6127
    %vm6130 = vcmask 1047559
    %v6131 = vsel %vm6130, %v6045, %v6129
    %v6132 = vsel %vm6118, %v6063, %v6054
    %v6133 = vsel %vm6120, %v6072, %v6132
    %v6134 = vsel %vm6122, %v6081, %v6133
    %v6135 = vsel %vm6124, %v6090, %v6134
    %v6136 = vsel %vm6126, %v6099, %v6135
    %v6137 = vsel %vm6128, %v6108, %v6136
    %v6138 = vsel %vm6130, %v6117, %v6137
    %v6141 = vsel %vm2154, %v6131, -inf
    %6142 = vmax.xlane.f32.xlu0 %v6141
    %v6143 = vpop.xlane.xlu0 %6142
    %v6144 = vsel %vm2154, %v6138, -inf
    %6145 = vmax.xlane.f32.xlu0 %v6144
    %v6146 = vpop.xlane.xlu0 %6145
    %v6149 = vlaneseq
    %v6150 = vshrl.u32 %v6149, 7
    %v6151 = vsub.s32 0, %v6150
    %v6152 = vrot.slane %v6143, %v6151
    %v6153 = vlaneseq
    %v6154 = vshrl.u32 %v6153, 7
    %v6155 = vsub.s32 1, %v6154
    %v6156 = vrot.slane %v6143, %v6155
    %v6157 = vlaneseq
    %v6158 = vshrl.u32 %v6157, 7
    %v6159 = vsub.s32 2, %v6158
    %v6160 = vrot.slane %v6143, %v6159
    %v6161 = vlaneseq
    %v6162 = vshrl.u32 %v6161, 7
    %v6163 = vsub.s32 3, %v6162
    %v6164 = vrot.slane %v6143, %v6163
    %v6165 = vlaneseq
    %v6166 = vshrl.u32 %v6165, 7
    %v6167 = vsub.s32 4, %v6166
    %v6168 = vrot.slane %v6143, %v6167
    %v6169 = vlaneseq
    %v6170 = vshrl.u32 %v6169, 7
    %v6171 = vsub.s32 5, %v6170
    %v6172 = vrot.slane %v6143, %v6171
    %v6173 = vlaneseq
    %v6174 = vshrl.u32 %v6173, 7
    %v6175 = vsub.s32 6, %v6174
    %v6176 = vrot.slane %v6143, %v6175
    %v6177 = vlaneseq
    %v6178 = vshrl.u32 %v6177, 7
    %v6179 = vsub.s32 7, %v6178
    %v6180 = vrot.slane %v6143, %v6179
    %v6181 = vlaneseq
    %v6182 = vshrl.u32 %v6181, 7
    %v6183 = vsub.s32 0, %v6182
    %v6184 = vrot.slane %v6146, %v6183
    %v6185 = vlaneseq
    %v6186 = vshrl.u32 %v6185, 7
    %v6187 = vsub.s32 1, %v6186
    %v6188 = vrot.slane %v6146, %v6187
    %v6189 = vlaneseq
    %v6190 = vshrl.u32 %v6189, 7
    %v6191 = vsub.s32 2, %v6190
    %v6192 = vrot.slane %v6146, %v6191
    %v6193 = vlaneseq
    %v6194 = vshrl.u32 %v6193, 7
    %v6195 = vsub.s32 3, %v6194
    %v6196 = vrot.slane %v6146, %v6195
    %v6197 = vlaneseq
    %v6198 = vshrl.u32 %v6197, 7
    %v6199 = vsub.s32 4, %v6198
    %v6200 = vrot.slane %v6146, %v6199
    %v6201 = vlaneseq
    %v6202 = vshrl.u32 %v6201, 7
    %v6203 = vsub.s32 5, %v6202
    %v6204 = vrot.slane %v6146, %v6203
    %v6205 = vlaneseq
    %v6206 = vshrl.u32 %v6205, 7
    %v6207 = vsub.s32 6, %v6206
    %v6208 = vrot.slane %v6146, %v6207
    %v6209 = vlaneseq
    %v6210 = vshrl.u32 %v6209, 7
    %v6211 = vsub.s32 7, %v6210
    %v6212 = vrot.slane %v6146, %v6211
    %v6229 = vsub.f32 %v5906, %v6152
    %v6230 = vsub.f32 %v5907, %v6152
    %v6231 = vsub.f32 %v5908, %v6156
    %v6232 = vsub.f32 %v5909, %v6156
    %v6233 = vsub.f32 %v5910, %v6160
    %v6234 = vsub.f32 %v5911, %v6160
    %v6235 = vsub.f32 %v5912, %v6164
    %v6236 = vsub.f32 %v5913, %v6164
    %v6237 = vsub.f32 %v5914, %v6168
    %v6238 = vsub.f32 %v5915, %v6168
    %v6239 = vsub.f32 %v5916, %v6172
    %v6240 = vsub.f32 %v5917, %v6172
    %v6241 = vsub.f32 %v5918, %v6176
    %v6242 = vsub.f32 %v5919, %v6176
    %v6243 = vsub.f32 %v5920, %v6180
    %v6244 = vsub.f32 %v5921, %v6180
    %v6245 = vsub.f32 %v5922, %v6184
    %v6246 = vsub.f32 %v5923, %v6184
    %v6247 = vsub.f32 %v5924, %v6188
    %v6248 = vsub.f32 %v5925, %v6188
    %v6249 = vsub.f32 %v5926, %v6192
    %v6250 = vsub.f32 %v5927, %v6192
    %v6251 = vsub.f32 %v5928, %v6196
    %v6252 = vsub.f32 %v5929, %v6196
    %v6253 = vsub.f32 %v5930, %v6200
    %v6254 = vsub.f32 %v5931, %v6200
    %v6255 = vsub.f32 %v5932, %v6204
    %v6256 = vsub.f32 %v5933, %v6204
    %v6257 = vsub.f32 %v5934, %v6208
    %v6258 = vsub.f32 %v5935, %v6208
    %v6259 = vsub.f32 %v5936, %v6212
    %v6260 = vsub.f32 %v5937, %v6212
    %v6261 = vmul.f32 %v6229, 1.442695
    %v6262 = vpow.pop %v6261
    %v6263 = vmul.f32 %v6230, 1.442695
    %v6264 = vpow.pop %v6263
    %v6265 = vmul.f32 %v6231, 1.442695
    %v6266 = vpow.pop %v6265
    %v6267 = vmul.f32 %v6232, 1.442695
    %v6268 = vpow.pop %v6267
    %v6269 = vmul.f32 %v6233, 1.442695
    %v6270 = vpow.pop %v6269
    %v6271 = vmul.f32 %v6234, 1.442695
    %v6272 = vpow.pop %v6271
    %v6273 = vmul.f32 %v6235, 1.442695
    %v6274 = vpow.pop %v6273
    %v6275 = vmul.f32 %v6236, 1.442695
    %v6276 = vpow.pop %v6275
    %v6277 = vmul.f32 %v6237, 1.442695
    %v6278 = vpow.pop %v6277
    %v6279 = vmul.f32 %v6238, 1.442695
    %v6280 = vpow.pop %v6279
    %v6281 = vmul.f32 %v6239, 1.442695
    %v6282 = vpow.pop %v6281
    %v6283 = vmul.f32 %v6240, 1.442695
    %v6284 = vpow.pop %v6283
    %v6285 = vmul.f32 %v6241, 1.442695
    %v6286 = vpow.pop %v6285
    %v6287 = vmul.f32 %v6242, 1.442695
    %v6288 = vpow.pop %v6287
    %v6289 = vmul.f32 %v6243, 1.442695
    %v6290 = vpow.pop %v6289
    %v6291 = vmul.f32 %v6244, 1.442695
    %v6292 = vpow.pop %v6291
    %v6293 = vmul.f32 %v6245, 1.442695
    %v6294 = vpow.pop %v6293
    %v6295 = vmul.f32 %v6246, 1.442695
    %v6296 = vpow.pop %v6295
    %v6297 = vmul.f32 %v6247, 1.442695
    %v6298 = vpow.pop %v6297
    %v6299 = vmul.f32 %v6248, 1.442695
    %v6300 = vpow.pop %v6299
    %v6301 = vmul.f32 %v6249, 1.442695
    %v6302 = vpow.pop %v6301
    %v6303 = vmul.f32 %v6250, 1.442695
    %v6304 = vpow.pop %v6303
    %v6305 = vmul.f32 %v6251, 1.442695
    %v6306 = vpow.pop %v6305
    %v6307 = vmul.f32 %v6252, 1.442695
    %v6308 = vpow.pop %v6307
    %v6309 = vmul.f32 %v6253, 1.442695
    %v6310 = vpow.pop %v6309
    %v6311 = vmul.f32 %v6254, 1.442695
    %v6312 = vpow.pop %v6311
    %v6313 = vmul.f32 %v6255, 1.442695
    %v6314 = vpow.pop %v6313
    %v6315 = vmul.f32 %v6256, 1.442695
    %v6316 = vpow.pop %v6315
    %v6317 = vmul.f32 %v6257, 1.442695
    %v6318 = vpow.pop %v6317
    %v6319 = vmul.f32 %v6258, 1.442695
    %v6320 = vpow.pop %v6319
    %v6321 = vmul.f32 %v6259, 1.442695
    %v6322 = vpow.pop %v6321
    %v6323 = vmul.f32 %v6260, 1.442695
    %v6324 = vpow.pop %v6323
    %6357 = vset.pattern.permute.xlu0 0
    %6358 = vperm.xlu0 %6357, %v6262
    %v6359 = vpop.permute.xlu0 %6358
    %6360 = vset.pattern.permute.xlu0 0
    %6361 = vperm.xlu0 %6360, %v6264
    %v6362 = vpop.permute.xlu0 %6361
    %6363 = vset.pattern.permute.xlu0 0
    %6364 = vperm.xlu0 %6363, %v6266
    %v6365 = vpop.permute.xlu0 %6364
    %6366 = vset.pattern.permute.xlu0 0
    %6367 = vperm.xlu0 %6366, %v6268
    %v6368 = vpop.permute.xlu0 %6367
    %6369 = vset.pattern.permute.xlu0 0
    %6370 = vperm.xlu0 %6369, %v6270
    %v6371 = vpop.permute.xlu0 %6370
    %6372 = vset.pattern.permute.xlu0 0
    %6373 = vperm.xlu0 %6372, %v6272
    %v6374 = vpop.permute.xlu0 %6373
    %6375 = vset.pattern.permute.xlu0 0
    %6376 = vperm.xlu0 %6375, %v6274
    %v6377 = vpop.permute.xlu0 %6376
    %6378 = vset.pattern.permute.xlu0 0
    %6379 = vperm.xlu0 %6378, %v6276
    %v6380 = vpop.permute.xlu0 %6379
    %6381 = vset.pattern.permute.xlu0 0
    %6382 = vperm.xlu0 %6381, %v6278
    %v6383 = vpop.permute.xlu0 %6382
    %6384 = vset.pattern.permute.xlu0 0
    %6385 = vperm.xlu0 %6384, %v6280
    %v6386 = vpop.permute.xlu0 %6385
    %6387 = vset.pattern.permute.xlu0 0
    %6388 = vperm.xlu0 %6387, %v6282
    %v6389 = vpop.permute.xlu0 %6388
    %6390 = vset.pattern.permute.xlu0 0
    %6391 = vperm.xlu0 %6390, %v6284
    %v6392 = vpop.permute.xlu0 %6391
    %6393 = vset.pattern.permute.xlu0 0
    %6394 = vperm.xlu0 %6393, %v6286
    %v6395 = vpop.permute.xlu0 %6394
    %6396 = vset.pattern.permute.xlu0 0
    %6397 = vperm.xlu0 %6396, %v6288
    %v6398 = vpop.permute.xlu0 %6397
    %6399 = vset.pattern.permute.xlu0 0
    %6400 = vperm.xlu0 %6399, %v6290
    %v6401 = vpop.permute.xlu0 %6400
    %6402 = vset.pattern.permute.xlu0 0
    %6403 = vperm.xlu0 %6402, %v6292
    %v6404 = vpop.permute.xlu0 %6403
    %6405 = vset.pattern.permute.xlu0 0
    %6406 = vperm.xlu0 %6405, %v6294
    %v6407 = vpop.permute.xlu0 %6406
    %6408 = vset.pattern.permute.xlu0 0
    %6409 = vperm.xlu0 %6408, %v6296
    %v6410 = vpop.permute.xlu0 %6409
    %6411 = vset.pattern.permute.xlu0 0
    %6412 = vperm.xlu0 %6411, %v6298
    %v6413 = vpop.permute.xlu0 %6412
    %6414 = vset.pattern.permute.xlu0 0
    %6415 = vperm.xlu0 %6414, %v6300
    %v6416 = vpop.permute.xlu0 %6415
    %6417 = vset.pattern.permute.xlu0 0
    %6418 = vperm.xlu0 %6417, %v6302
    %v6419 = vpop.permute.xlu0 %6418
    %6420 = vset.pattern.permute.xlu0 0
    %6421 = vperm.xlu0 %6420, %v6304
    %v6422 = vpop.permute.xlu0 %6421
    %6423 = vset.pattern.permute.xlu0 0
    %6424 = vperm.xlu0 %6423, %v6306
    %v6425 = vpop.permute.xlu0 %6424
    %6426 = vset.pattern.permute.xlu0 0
    %6427 = vperm.xlu0 %6426, %v6308
    %v6428 = vpop.permute.xlu0 %6427
    %6429 = vset.pattern.permute.xlu0 0
    %6430 = vperm.xlu0 %6429, %v6310
    %v6431 = vpop.permute.xlu0 %6430
    %6432 = vset.pattern.permute.xlu0 0
    %6433 = vperm.xlu0 %6432, %v6312
    %v6434 = vpop.permute.xlu0 %6433
    %6435 = vset.pattern.permute.xlu0 0
    %6436 = vperm.xlu0 %6435, %v6314
    %v6437 = vpop.permute.xlu0 %6436
    %6438 = vset.pattern.permute.xlu0 0
    %6439 = vperm.xlu0 %6438, %v6316
    %v6440 = vpop.permute.xlu0 %6439
    %6441 = vset.pattern.permute.xlu0 0
    %6442 = vperm.xlu0 %6441, %v6318
    %v6443 = vpop.permute.xlu0 %6442
    %6444 = vset.pattern.permute.xlu0 0
    %6445 = vperm.xlu0 %6444, %v6320
    %v6446 = vpop.permute.xlu0 %6445
    %6447 = vset.pattern.permute.xlu0 0
    %6448 = vperm.xlu0 %6447, %v6322
    %v6449 = vpop.permute.xlu0 %6448
    %6450 = vset.pattern.permute.xlu0 0
    %6451 = vperm.xlu0 %6450, %v6324
    %v6452 = vpop.permute.xlu0 %6451
    %v6453 = vlaneseq
    %v6454 = vshrl.u32 %v6453, 7
    %v6455 = vsub.s32 %v5971, %v6454
    %v6456 = vrot.slane %v6359, %v6455
    %v6457 = vlaneseq
    %v6458 = vshrl.u32 %v6457, 7
    %v6459 = vsub.s32 %v5976, %v6458
    %v6460 = vrot.slane %v6362, %v6459
    %v6461 = vsel %vm5981, %v6460, %v6456
    %v6462 = vlaneseq
    %v6463 = vshrl.u32 %v6462, 7
    %v6464 = vsub.s32 %v5971, %v6463
    %v6465 = vrot.slane %v6365, %v6464
    %v6466 = vlaneseq
    %v6467 = vshrl.u32 %v6466, 7
    %v6468 = vsub.s32 %v5976, %v6467
    %v6469 = vrot.slane %v6368, %v6468
    %v6470 = vsel %vm5981, %v6469, %v6465
    %v6471 = vlaneseq
    %v6472 = vshrl.u32 %v6471, 7
    %v6473 = vsub.s32 %v5971, %v6472
    %v6474 = vrot.slane %v6371, %v6473
    %v6475 = vlaneseq
    %v6476 = vshrl.u32 %v6475, 7
    %v6477 = vsub.s32 %v5976, %v6476
    %v6478 = vrot.slane %v6374, %v6477
    %v6479 = vsel %vm5981, %v6478, %v6474
    %v6480 = vlaneseq
    %v6481 = vshrl.u32 %v6480, 7
    %v6482 = vsub.s32 %v5971, %v6481
    %v6483 = vrot.slane %v6377, %v6482
    %v6484 = vlaneseq
    %v6485 = vshrl.u32 %v6484, 7
    %v6486 = vsub.s32 %v5976, %v6485
    %v6487 = vrot.slane %v6380, %v6486
    %v6488 = vsel %vm5981, %v6487, %v6483
    %v6489 = vlaneseq
    %v6490 = vshrl.u32 %v6489, 7
    %v6491 = vsub.s32 %v5971, %v6490
    %v6492 = vrot.slane %v6383, %v6491
    %v6493 = vlaneseq
    %v6494 = vshrl.u32 %v6493, 7
    %v6495 = vsub.s32 %v5976, %v6494
    %v6496 = vrot.slane %v6386, %v6495
    %v6497 = vsel %vm5981, %v6496, %v6492
    %v6498 = vlaneseq
    %v6499 = vshrl.u32 %v6498, 7
    %v6500 = vsub.s32 %v5971, %v6499
    %v6501 = vrot.slane %v6389, %v6500
    %v6502 = vlaneseq
    %v6503 = vshrl.u32 %v6502, 7
    %v6504 = vsub.s32 %v5976, %v6503
    %v6505 = vrot.slane %v6392, %v6504
    %v6506 = vsel %vm5981, %v6505, %v6501
    %v6507 = vlaneseq
    %v6508 = vshrl.u32 %v6507, 7
    %v6509 = vsub.s32 %v5971, %v6508
    %v6510 = vrot.slane %v6395, %v6509
    %v6511 = vlaneseq
    %v6512 = vshrl.u32 %v6511, 7
    %v6513 = vsub.s32 %v5976, %v6512
    %v6514 = vrot.slane %v6398, %v6513
    %v6515 = vsel %vm5981, %v6514, %v6510
    %v6516 = vlaneseq
    %v6517 = vshrl.u32 %v6516, 7
    %v6518 = vsub.s32 %v5971, %v6517
    %v6519 = vrot.slane %v6401, %v6518
    %v6520 = vlaneseq
    %v6521 = vshrl.u32 %v6520, 7
    %v6522 = vsub.s32 %v5976, %v6521
    %v6523 = vrot.slane %v6404, %v6522
    %v6524 = vsel %vm5981, %v6523, %v6519
    %v6525 = vlaneseq
    %v6526 = vshrl.u32 %v6525, 7
    %v6527 = vsub.s32 %v5971, %v6526
    %v6528 = vrot.slane %v6407, %v6527
    %v6529 = vlaneseq
    %v6530 = vshrl.u32 %v6529, 7
    %v6531 = vsub.s32 %v5976, %v6530
    %v6532 = vrot.slane %v6410, %v6531
    %v6533 = vsel %vm5981, %v6532, %v6528
    %v6534 = vlaneseq
    %v6535 = vshrl.u32 %v6534, 7
    %v6536 = vsub.s32 %v5971, %v6535
    %v6537 = vrot.slane %v6413, %v6536
    %v6538 = vlaneseq
    %v6539 = vshrl.u32 %v6538, 7
    %v6540 = vsub.s32 %v5976, %v6539
    %v6541 = vrot.slane %v6416, %v6540
    %v6542 = vsel %vm5981, %v6541, %v6537
    %v6543 = vlaneseq
    %v6544 = vshrl.u32 %v6543, 7
    %v6545 = vsub.s32 %v5971, %v6544
    %v6546 = vrot.slane %v6419, %v6545
    %v6547 = vlaneseq
    %v6548 = vshrl.u32 %v6547, 7
    %v6549 = vsub.s32 %v5976, %v6548
    %v6550 = vrot.slane %v6422, %v6549
    %v6551 = vsel %vm5981, %v6550, %v6546
    %v6552 = vlaneseq
    %v6553 = vshrl.u32 %v6552, 7
    %v6554 = vsub.s32 %v5971, %v6553
    %v6555 = vrot.slane %v6425, %v6554
    %v6556 = vlaneseq
    %v6557 = vshrl.u32 %v6556, 7
    %v6558 = vsub.s32 %v5976, %v6557
    %v6559 = vrot.slane %v6428, %v6558
    %v6560 = vsel %vm5981, %v6559, %v6555
    %v6561 = vlaneseq
    %v6562 = vshrl.u32 %v6561, 7
    %v6563 = vsub.s32 %v5971, %v6562
    %v6564 = vrot.slane %v6431, %v6563
    %v6565 = vlaneseq
    %v6566 = vshrl.u32 %v6565, 7
    %v6567 = vsub.s32 %v5976, %v6566
    %v6568 = vrot.slane %v6434, %v6567
    %v6569 = vsel %vm5981, %v6568, %v6564
    %v6570 = vlaneseq
    %v6571 = vshrl.u32 %v6570, 7
    %v6572 = vsub.s32 %v5971, %v6571
    %v6573 = vrot.slane %v6437, %v6572
    %v6574 = vlaneseq
    %v6575 = vshrl.u32 %v6574, 7
    %v6576 = vsub.s32 %v5976, %v6575
    %v6577 = vrot.slane %v6440, %v6576
    %v6578 = vsel %vm5981, %v6577, %v6573
    %v6579 = vlaneseq
    %v6580 = vshrl.u32 %v6579, 7
    %v6581 = vsub.s32 %v5971, %v6580
    %v6582 = vrot.slane %v6443, %v6581
    %v6583 = vlaneseq
    %v6584 = vshrl.u32 %v6583, 7
    %v6585 = vsub.s32 %v5976, %v6584
    %v6586 = vrot.slane %v6446, %v6585
    %v6587 = vsel %vm5981, %v6586, %v6582
    %v6588 = vlaneseq
    %v6589 = vshrl.u32 %v6588, 7
    %v6590 = vsub.s32 %v5971, %v6589
    %v6591 = vrot.slane %v6449, %v6590
    %v6592 = vlaneseq
    %v6593 = vshrl.u32 %v6592, 7
    %v6594 = vsub.s32 %v5976, %v6593
    %v6595 = vrot.slane %v6452, %v6594
    %v6596 = vsel %vm5981, %v6595, %v6591
    %v6597 = vsel %vm6118, %v6470, %v6461
    %v6598 = vsel %vm6120, %v6479, %v6597
    %v6599 = vsel %vm6122, %v6488, %v6598
    %v6600 = vsel %vm6124, %v6497, %v6599
    %v6601 = vsel %vm6126, %v6506, %v6600
    %v6602 = vsel %vm6128, %v6515, %v6601
    %v6603 = vsel %vm6130, %v6524, %v6602
    %v6604 = vsel %vm6118, %v6542, %v6533
    %v6605 = vsel %vm6120, %v6551, %v6604
    %v6606 = vsel %vm6122, %v6560, %v6605
    %v6607 = vsel %vm6124, %v6569, %v6606
    %v6608 = vsel %vm6126, %v6578, %v6607
    %v6609 = vsel %vm6128, %v6587, %v6608
    %v6610 = vsel %vm6130, %v6596, %v6609
    %v6613 = vsel %vm2154, %v6603, 0.0
    %6614 = vadd.xlane.f32.xlu0 %v6613
    %v6615 = vpop.xlane.xlu0 %6614
    %v6616 = vsel %vm2154, %v6610, 0.0
    %6617 = vadd.xlane.f32.xlu0 %v6616
    %v6618 = vpop.xlane.xlu0 %6617
    %v6619 = vrcp.pop %v6615
    %v6620 = vrcp.pop %v6618
    %v6623 = vlaneseq
    %v6624 = vshrl.u32 %v6623, 7
    %v6625 = vsub.s32 0, %v6624
    %v6626 = vrot.slane %v6619, %v6625
    %v6627 = vlaneseq
    %v6628 = vshrl.u32 %v6627, 7
    %v6629 = vsub.s32 1, %v6628
    %v6630 = vrot.slane %v6619, %v6629
    %v6631 = vlaneseq
    %v6632 = vshrl.u32 %v6631, 7
    %v6633 = vsub.s32 2, %v6632
    %v6634 = vrot.slane %v6619, %v6633
    %v6635 = vlaneseq
    %v6636 = vshrl.u32 %v6635, 7
    %v6637 = vsub.s32 3, %v6636
    %v6638 = vrot.slane %v6619, %v6637
    %v6639 = vlaneseq
    %v6640 = vshrl.u32 %v6639, 7
    %v6641 = vsub.s32 4, %v6640
    %v6642 = vrot.slane %v6619, %v6641
    %v6643 = vlaneseq
    %v6644 = vshrl.u32 %v6643, 7
    %v6645 = vsub.s32 5, %v6644
    %v6646 = vrot.slane %v6619, %v6645
    %v6647 = vlaneseq
    %v6648 = vshrl.u32 %v6647, 7
    %v6649 = vsub.s32 6, %v6648
    %v6650 = vrot.slane %v6619, %v6649
    %v6651 = vlaneseq
    %v6652 = vshrl.u32 %v6651, 7
    %v6653 = vsub.s32 7, %v6652
    %v6654 = vrot.slane %v6619, %v6653
    %v6655 = vlaneseq
    %v6656 = vshrl.u32 %v6655, 7
    %v6657 = vsub.s32 0, %v6656
    %v6658 = vrot.slane %v6620, %v6657
    %v6659 = vlaneseq
    %v6660 = vshrl.u32 %v6659, 7
    %v6661 = vsub.s32 1, %v6660
    %v6662 = vrot.slane %v6620, %v6661
    %v6663 = vlaneseq
    %v6664 = vshrl.u32 %v6663, 7
    %v6665 = vsub.s32 2, %v6664
    %v6666 = vrot.slane %v6620, %v6665
    %v6667 = vlaneseq
    %v6668 = vshrl.u32 %v6667, 7
    %v6669 = vsub.s32 3, %v6668
    %v6670 = vrot.slane %v6620, %v6669
    %v6671 = vlaneseq
    %v6672 = vshrl.u32 %v6671, 7
    %v6673 = vsub.s32 4, %v6672
    %v6674 = vrot.slane %v6620, %v6673
    %v6675 = vlaneseq
    %v6676 = vshrl.u32 %v6675, 7
    %v6677 = vsub.s32 5, %v6676
    %v6678 = vrot.slane %v6620, %v6677
    %v6679 = vlaneseq
    %v6680 = vshrl.u32 %v6679, 7
    %v6681 = vsub.s32 6, %v6680
    %v6682 = vrot.slane %v6620, %v6681
    %v6683 = vlaneseq
    %v6684 = vshrl.u32 %v6683, 7
    %v6685 = vsub.s32 7, %v6684
    %v6686 = vrot.slane %v6620, %v6685
    %v6703 = vmul.f32 %v6262, %v6626
    %v6704 = vmul.f32 %v6264, %v6626
    %v6705 = vmul.f32 %v6266, %v6630
    %v6706 = vmul.f32 %v6268, %v6630
    %v6707 = vmul.f32 %v6270, %v6634
    %v6708 = vmul.f32 %v6272, %v6634
    %v6709 = vmul.f32 %v6274, %v6638
    %v6710 = vmul.f32 %v6276, %v6638
    %v6711 = vmul.f32 %v6278, %v6642
    %v6712 = vmul.f32 %v6280, %v6642
    %v6713 = vmul.f32 %v6282, %v6646
    %v6714 = vmul.f32 %v6284, %v6646
    %v6715 = vmul.f32 %v6286, %v6650
    %v6716 = vmul.f32 %v6288, %v6650
    %v6717 = vmul.f32 %v6290, %v6654
    %v6718 = vmul.f32 %v6292, %v6654
    %v6719 = vmul.f32 %v6294, %v6658
    %v6720 = vmul.f32 %v6296, %v6658
    %v6721 = vmul.f32 %v6298, %v6662
    %v6722 = vmul.f32 %v6300, %v6662
    %v6723 = vmul.f32 %v6302, %v6666
    %v6724 = vmul.f32 %v6304, %v6666
    %v6725 = vmul.f32 %v6306, %v6670
    %v6726 = vmul.f32 %v6308, %v6670
    %v6727 = vmul.f32 %v6310, %v6674
    %v6728 = vmul.f32 %v6312, %v6674
    %v6729 = vmul.f32 %v6314, %v6678
    %v6730 = vmul.f32 %v6316, %v6678
    %v6731 = vmul.f32 %v6318, %v6682
    %v6732 = vmul.f32 %v6320, %v6682
    %v6733 = vmul.f32 %v6322, %v6686
    %v6734 = vmul.f32 %v6324, %v6686
    %6736 = vset.pattern.permute.xlu0 0
    %6737 = vperm.xlu0 %6736, %v6703
    %v6738 = vpop.permute.xlu0 %6737
    %6741 = vset.pattern.permute.xlu0 0
    %6742 = vperm.xlu0 %6741, %v6704
    %v6743 = vpop.permute.xlu0 %6742
    %6746 = vset.pattern.permute.xlu0 0
    %6747 = vperm.xlu0 %6746, %v6705
    %v6748 = vpop.permute.xlu0 %6747
    %6751 = vset.pattern.permute.xlu0 0
    %6752 = vperm.xlu0 %6751, %v6706
    %v6753 = vpop.permute.xlu0 %6752
    %6756 = vset.pattern.permute.xlu0 0
    %6757 = vperm.xlu0 %6756, %v6707
    %v6758 = vpop.permute.xlu0 %6757
    %6761 = vset.pattern.permute.xlu0 0
    %6762 = vperm.xlu0 %6761, %v6708
    %v6763 = vpop.permute.xlu0 %6762
    %6766 = vset.pattern.permute.xlu0 0
    %6767 = vperm.xlu0 %6766, %v6709
    %v6768 = vpop.permute.xlu0 %6767
    %6771 = vset.pattern.permute.xlu0 0
    %6772 = vperm.xlu0 %6771, %v6710
    %v6773 = vpop.permute.xlu0 %6772
    %6776 = vset.pattern.permute.xlu0 0
    %6777 = vperm.xlu0 %6776, %v6711
    %v6778 = vpop.permute.xlu0 %6777
    %6781 = vset.pattern.permute.xlu0 0
    %6782 = vperm.xlu0 %6781, %v6712
    %v6783 = vpop.permute.xlu0 %6782
    %6786 = vset.pattern.permute.xlu0 0
    %6787 = vperm.xlu0 %6786, %v6713
    %v6788 = vpop.permute.xlu0 %6787
    %6791 = vset.pattern.permute.xlu0 0
    %6792 = vperm.xlu0 %6791, %v6714
    %v6793 = vpop.permute.xlu0 %6792
    %6796 = vset.pattern.permute.xlu0 0
    %6797 = vperm.xlu0 %6796, %v6715
    %v6798 = vpop.permute.xlu0 %6797
    %6801 = vset.pattern.permute.xlu0 0
    %6802 = vperm.xlu0 %6801, %v6716
    %v6803 = vpop.permute.xlu0 %6802
    %6806 = vset.pattern.permute.xlu0 0
    %6807 = vperm.xlu0 %6806, %v6717
    %v6808 = vpop.permute.xlu0 %6807
    %6811 = vset.pattern.permute.xlu0 0
    %6812 = vperm.xlu0 %6811, %v6718
    %v6813 = vpop.permute.xlu0 %6812
    %6816 = vset.pattern.permute.xlu0 0
    %6817 = vperm.xlu0 %6816, %v6719
    %v6818 = vpop.permute.xlu0 %6817
    %6821 = vset.pattern.permute.xlu0 0
    %6822 = vperm.xlu0 %6821, %v6720
    %v6823 = vpop.permute.xlu0 %6822
    %6826 = vset.pattern.permute.xlu0 0
    %6827 = vperm.xlu0 %6826, %v6721
    %v6828 = vpop.permute.xlu0 %6827
    %6831 = vset.pattern.permute.xlu0 0
    %6832 = vperm.xlu0 %6831, %v6722
    %v6833 = vpop.permute.xlu0 %6832
    %6836 = vset.pattern.permute.xlu0 0
    %6837 = vperm.xlu0 %6836, %v6723
    %v6838 = vpop.permute.xlu0 %6837
    %6841 = vset.pattern.permute.xlu0 0
    %6842 = vperm.xlu0 %6841, %v6724
    %v6843 = vpop.permute.xlu0 %6842
    %6846 = vset.pattern.permute.xlu0 0
    %6847 = vperm.xlu0 %6846, %v6725
    %v6848 = vpop.permute.xlu0 %6847
    %6851 = vset.pattern.permute.xlu0 0
    %6852 = vperm.xlu0 %6851, %v6726
    %v6853 = vpop.permute.xlu0 %6852
    %6856 = vset.pattern.permute.xlu0 0
    %6857 = vperm.xlu0 %6856, %v6727
    %v6858 = vpop.permute.xlu0 %6857
    %6861 = vset.pattern.permute.xlu0 0
    %6862 = vperm.xlu0 %6861, %v6728
    %v6863 = vpop.permute.xlu0 %6862
    %6866 = vset.pattern.permute.xlu0 0
    %6867 = vperm.xlu0 %6866, %v6729
    %v6868 = vpop.permute.xlu0 %6867
    %6871 = vset.pattern.permute.xlu0 0
    %6872 = vperm.xlu0 %6871, %v6730
    %v6873 = vpop.permute.xlu0 %6872
    %6876 = vset.pattern.permute.xlu0 0
    %6877 = vperm.xlu0 %6876, %v6731
    %v6878 = vpop.permute.xlu0 %6877
    %6881 = vset.pattern.permute.xlu0 0
    %6882 = vperm.xlu0 %6881, %v6732
    %v6883 = vpop.permute.xlu0 %6882
    %6886 = vset.pattern.permute.xlu0 0
    %6887 = vperm.xlu0 %6886, %v6733
    %v6888 = vpop.permute.xlu0 %6887
    %6891 = vset.pattern.permute.xlu0 0
    %6892 = vperm.xlu0 %6891, %v6734
    %v6893 = vpop.permute.xlu0 %6892
    %v6895 = vmul.f32 %v6738, %v2566
    %v6896 = vmul.f32 %v6743, %v2569
    %v6897 = vmul.f32 %v6748, %v2613
    %v6898 = vmul.f32 %v6753, %v2616
    %v6899 = vmul.f32 %v6758, %v2660
    %v6900 = vmul.f32 %v6763, %v2663
    %v6901 = vmul.f32 %v6768, %v2707
    %v6902 = vmul.f32 %v6773, %v2710
    %v6903 = vmul.f32 %v6778, %v2754
    %v6904 = vmul.f32 %v6783, %v2757
    %v6905 = vmul.f32 %v6788, %v2801
    %v6906 = vmul.f32 %v6793, %v2804
    %v6907 = vmul.f32 %v6798, %v2848
    %v6908 = vmul.f32 %v6803, %v2851
    %v6909 = vmul.f32 %v6808, %v2895
    %v6910 = vmul.f32 %v6813, %v2898
    %v6911 = vmul.f32 %v6818, %v2942
    %v6912 = vmul.f32 %v6823, %v2945
    %v6913 = vmul.f32 %v6828, %v2989
    %v6914 = vmul.f32 %v6833, %v2992
    %v6915 = vmul.f32 %v6838, %v3036
    %v6916 = vmul.f32 %v6843, %v3039
    %v6917 = vmul.f32 %v6848, %v3083
    %v6918 = vmul.f32 %v6853, %v3086
    %v6919 = vmul.f32 %v6858, %v3130
    %v6920 = vmul.f32 %v6863, %v3133
    %v6921 = vmul.f32 %v6868, %v3177
    %v6922 = vmul.f32 %v6873, %v3180
    %v6923 = vmul.f32 %v6878, %v3224
    %v6924 = vmul.f32 %v6883, %v3227
    %v6925 = vmul.f32 %v6888, %v3271
    %v6926 = vmul.f32 %v6893, %v3274
    %v6927 = vsel %vm1212, %v6895, 0.0
    %v6928 = vsel %vm3492, %v6896, 0.0
    %v6929 = vadd.f32 %v6927, %v6928
    %v6930 = vrot.slane %v6929, 4
    %v6931 = vadd.f32 %v6929, %v6930
    %v6932 = vrot.slane %v6931, 2
    %v6933 = vadd.f32 %v6931, %v6932
    %v6934 = vrot.slane %v6933, 1
    %v6935 = vadd.f32 %v6933, %v6934
    %v6936 = vsel %vm1212, %v6897, 0.0
    %v6937 = vsel %vm3492, %v6898, 0.0
    %v6938 = vadd.f32 %v6936, %v6937
    %v6939 = vrot.slane %v6938, 4
    %v6940 = vadd.f32 %v6938, %v6939
    %v6941 = vrot.slane %v6940, 2
    %v6942 = vadd.f32 %v6940, %v6941
    %v6943 = vrot.slane %v6942, 1
    %v6944 = vadd.f32 %v6942, %v6943
    %v6945 = vsel %vm1212, %v6899, 0.0
    %v6946 = vsel %vm3492, %v6900, 0.0
    %v6947 = vadd.f32 %v6945, %v6946
    %v6948 = vrot.slane %v6947, 4
    %v6949 = vadd.f32 %v6947, %v6948
    %v6950 = vrot.slane %v6949, 2
    %v6951 = vadd.f32 %v6949, %v6950
    %v6952 = vrot.slane %v6951, 1
    %v6953 = vadd.f32 %v6951, %v6952
    %v6954 = vsel %vm1212, %v6901, 0.0
    %v6955 = vsel %vm3492, %v6902, 0.0
    %v6956 = vadd.f32 %v6954, %v6955
    %v6957 = vrot.slane %v6956, 4
    %v6958 = vadd.f32 %v6956, %v6957
    %v6959 = vrot.slane %v6958, 2
    %v6960 = vadd.f32 %v6958, %v6959
    %v6961 = vrot.slane %v6960, 1
    %v6962 = vadd.f32 %v6960, %v6961
    %v6963 = vsel %vm1212, %v6903, 0.0
    %v6964 = vsel %vm3492, %v6904, 0.0
    %v6965 = vadd.f32 %v6963, %v6964
    %v6966 = vrot.slane %v6965, 4
    %v6967 = vadd.f32 %v6965, %v6966
    %v6968 = vrot.slane %v6967, 2
    %v6969 = vadd.f32 %v6967, %v6968
    %v6970 = vrot.slane %v6969, 1
    %v6971 = vadd.f32 %v6969, %v6970
    %v6972 = vsel %vm1212, %v6905, 0.0
    %v6973 = vsel %vm3492, %v6906, 0.0
    %v6974 = vadd.f32 %v6972, %v6973
    %v6975 = vrot.slane %v6974, 4
    %v6976 = vadd.f32 %v6974, %v6975
    %v6977 = vrot.slane %v6976, 2
    %v6978 = vadd.f32 %v6976, %v6977
    %v6979 = vrot.slane %v6978, 1
    %v6980 = vadd.f32 %v6978, %v6979
    %v6981 = vsel %vm1212, %v6907, 0.0
    %v6982 = vsel %vm3492, %v6908, 0.0
    %v6983 = vadd.f32 %v6981, %v6982
    %v6984 = vrot.slane %v6983, 4
    %v6985 = vadd.f32 %v6983, %v6984
    %v6986 = vrot.slane %v6985, 2
    %v6987 = vadd.f32 %v6985, %v6986
    %v6988 = vrot.slane %v6987, 1
    %v6989 = vadd.f32 %v6987, %v6988
    %v6990 = vsel %vm1212, %v6909, 0.0
    %v6991 = vsel %vm3492, %v6910, 0.0
    %v6992 = vadd.f32 %v6990, %v6991
    %v6993 = vrot.slane %v6992, 4
    %v6994 = vadd.f32 %v6992, %v6993
    %v6995 = vrot.slane %v6994, 2
    %v6996 = vadd.f32 %v6994, %v6995
    %v6997 = vrot.slane %v6996, 1
    %v6998 = vadd.f32 %v6996, %v6997
    %v6999 = vsel %vm1212, %v6911, 0.0
    %v7000 = vsel %vm3492, %v6912, 0.0
    %v7001 = vadd.f32 %v6999, %v7000
    %v7002 = vrot.slane %v7001, 4
    %v7003 = vadd.f32 %v7001, %v7002
    %v7004 = vrot.slane %v7003, 2
    %v7005 = vadd.f32 %v7003, %v7004
    %v7006 = vrot.slane %v7005, 1
    %v7007 = vadd.f32 %v7005, %v7006
    %v7008 = vsel %vm1212, %v6913, 0.0
    %v7009 = vsel %vm3492, %v6914, 0.0
    %v7010 = vadd.f32 %v7008, %v7009
    %v7011 = vrot.slane %v7010, 4
    %v7012 = vadd.f32 %v7010, %v7011
    %v7013 = vrot.slane %v7012, 2
    %v7014 = vadd.f32 %v7012, %v7013
    %v7015 = vrot.slane %v7014, 1
    %v7016 = vadd.f32 %v7014, %v7015
    %v7017 = vsel %vm1212, %v6915, 0.0
    %v7018 = vsel %vm3492, %v6916, 0.0
    %v7019 = vadd.f32 %v7017, %v7018
    %v7020 = vrot.slane %v7019, 4
    %v7021 = vadd.f32 %v7019, %v7020
    %v7022 = vrot.slane %v7021, 2
    %v7023 = vadd.f32 %v7021, %v7022
    %v7024 = vrot.slane %v7023, 1
    %v7025 = vadd.f32 %v7023, %v7024
    %v7026 = vsel %vm1212, %v6917, 0.0
    %v7027 = vsel %vm3492, %v6918, 0.0
    %v7028 = vadd.f32 %v7026, %v7027
    %v7029 = vrot.slane %v7028, 4
    %v7030 = vadd.f32 %v7028, %v7029
    %v7031 = vrot.slane %v7030, 2
    %v7032 = vadd.f32 %v7030, %v7031
    %v7033 = vrot.slane %v7032, 1
    %v7034 = vadd.f32 %v7032, %v7033
    %v7035 = vsel %vm1212, %v6919, 0.0
    %v7036 = vsel %vm3492, %v6920, 0.0
    %v7037 = vadd.f32 %v7035, %v7036
    %v7038 = vrot.slane %v7037, 4
    %v7039 = vadd.f32 %v7037, %v7038
    %v7040 = vrot.slane %v7039, 2
    %v7041 = vadd.f32 %v7039, %v7040
    %v7042 = vrot.slane %v7041, 1
    %v7043 = vadd.f32 %v7041, %v7042
    %v7044 = vsel %vm1212, %v6921, 0.0
    %v7045 = vsel %vm3492, %v6922, 0.0
    %v7046 = vadd.f32 %v7044, %v7045
    %v7047 = vrot.slane %v7046, 4
    %v7048 = vadd.f32 %v7046, %v7047
    %v7049 = vrot.slane %v7048, 2
    %v7050 = vadd.f32 %v7048, %v7049
    %v7051 = vrot.slane %v7050, 1
    %v7052 = vadd.f32 %v7050, %v7051
    %v7053 = vsel %vm1212, %v6923, 0.0
    %v7054 = vsel %vm3492, %v6924, 0.0
    %v7055 = vadd.f32 %v7053, %v7054
    %v7056 = vrot.slane %v7055, 4
    %v7057 = vadd.f32 %v7055, %v7056
    %v7058 = vrot.slane %v7057, 2
    %v7059 = vadd.f32 %v7057, %v7058
    %v7060 = vrot.slane %v7059, 1
    %v7061 = vadd.f32 %v7059, %v7060
    %v7062 = vsel %vm1212, %v6925, 0.0
    %v7063 = vsel %vm3492, %v6926, 0.0
    %v7064 = vadd.f32 %v7062, %v7063
    %v7065 = vrot.slane %v7064, 4
    %v7066 = vadd.f32 %v7064, %v7065
    %v7067 = vrot.slane %v7066, 2
    %v7068 = vadd.f32 %v7066, %v7067
    %v7069 = vrot.slane %v7068, 1
    %v7070 = vadd.f32 %v7068, %v7069
    %v7071 = vmul.f32 %v6738, %v5019
    %v7072 = vmul.f32 %v6743, %v5022
    %v7073 = vmul.f32 %v6748, %v5066
    %v7074 = vmul.f32 %v6753, %v5069
    %v7075 = vmul.f32 %v6758, %v5113
    %v7076 = vmul.f32 %v6763, %v5116
    %v7077 = vmul.f32 %v6768, %v5160
    %v7078 = vmul.f32 %v6773, %v5163
    %v7079 = vmul.f32 %v6778, %v5207
    %v7080 = vmul.f32 %v6783, %v5210
    %v7081 = vmul.f32 %v6788, %v5254
    %v7082 = vmul.f32 %v6793, %v5257
    %v7083 = vmul.f32 %v6798, %v5301
    %v7084 = vmul.f32 %v6803, %v5304
    %v7085 = vmul.f32 %v6808, %v5348
    %v7086 = vmul.f32 %v6813, %v5351
    %v7087 = vmul.f32 %v6818, %v5395
    %v7088 = vmul.f32 %v6823, %v5398
    %v7089 = vmul.f32 %v6828, %v5442
    %v7090 = vmul.f32 %v6833, %v5445
    %v7091 = vmul.f32 %v6838, %v5489
    %v7092 = vmul.f32 %v6843, %v5492
    %v7093 = vmul.f32 %v6848, %v5536
    %v7094 = vmul.f32 %v6853, %v5539
    %v7095 = vmul.f32 %v6858, %v5583
    %v7096 = vmul.f32 %v6863, %v5586
    %v7097 = vmul.f32 %v6868, %v5630
    %v7098 = vmul.f32 %v6873, %v5633
    %v7099 = vmul.f32 %v6878, %v5677
    %v7100 = vmul.f32 %v6883, %v5680
    %v7101 = vmul.f32 %v6888, %v5724
    %v7102 = vmul.f32 %v6893, %v5727
    %v7103 = vsel %vm1212, %v7071, 0.0
    %v7104 = vsel %vm3492, %v7072, 0.0
    %v7105 = vadd.f32 %v7103, %v7104
    %v7106 = vrot.slane %v7105, 4
    %v7107 = vadd.f32 %v7105, %v7106
    %v7108 = vrot.slane %v7107, 2
    %v7109 = vadd.f32 %v7107, %v7108
    %v7110 = vrot.slane %v7109, 1
    %v7111 = vadd.f32 %v7109, %v7110
    %v7112 = vsel %vm1212, %v7073, 0.0
    %v7113 = vsel %vm3492, %v7074, 0.0
    %v7114 = vadd.f32 %v7112, %v7113
    %v7115 = vrot.slane %v7114, 4
    %v7116 = vadd.f32 %v7114, %v7115
    %v7117 = vrot.slane %v7116, 2
    %v7118 = vadd.f32 %v7116, %v7117
    %v7119 = vrot.slane %v7118, 1
    %v7120 = vadd.f32 %v7118, %v7119
    %v7121 = vsel %vm1212, %v7075, 0.0
    %v7122 = vsel %vm3492, %v7076, 0.0
    %v7123 = vadd.f32 %v7121, %v7122
    %v7124 = vrot.slane %v7123, 4
    %v7125 = vadd.f32 %v7123, %v7124
    %v7126 = vrot.slane %v7125, 2
    %v7127 = vadd.f32 %v7125, %v7126
    %v7128 = vrot.slane %v7127, 1
    %v7129 = vadd.f32 %v7127, %v7128
    %v7130 = vsel %vm1212, %v7077, 0.0
    %v7131 = vsel %vm3492, %v7078, 0.0
    %v7132 = vadd.f32 %v7130, %v7131
    %v7133 = vrot.slane %v7132, 4
    %v7134 = vadd.f32 %v7132, %v7133
    %v7135 = vrot.slane %v7134, 2
    %v7136 = vadd.f32 %v7134, %v7135
    %v7137 = vrot.slane %v7136, 1
    %v7138 = vadd.f32 %v7136, %v7137
    %v7139 = vsel %vm1212, %v7079, 0.0
    %v7140 = vsel %vm3492, %v7080, 0.0
    %v7141 = vadd.f32 %v7139, %v7140
    %v7142 = vrot.slane %v7141, 4
    %v7143 = vadd.f32 %v7141, %v7142
    %v7144 = vrot.slane %v7143, 2
    %v7145 = vadd.f32 %v7143, %v7144
    %v7146 = vrot.slane %v7145, 1
    %v7147 = vadd.f32 %v7145, %v7146
    %v7148 = vsel %vm1212, %v7081, 0.0
    %v7149 = vsel %vm3492, %v7082, 0.0
    %v7150 = vadd.f32 %v7148, %v7149
    %v7151 = vrot.slane %v7150, 4
    %v7152 = vadd.f32 %v7150, %v7151
    %v7153 = vrot.slane %v7152, 2
    %v7154 = vadd.f32 %v7152, %v7153
    %v7155 = vrot.slane %v7154, 1
    %v7156 = vadd.f32 %v7154, %v7155
    %v7157 = vsel %vm1212, %v7083, 0.0
    %v7158 = vsel %vm3492, %v7084, 0.0
    %v7159 = vadd.f32 %v7157, %v7158
    %v7160 = vrot.slane %v7159, 4
    %v7161 = vadd.f32 %v7159, %v7160
    %v7162 = vrot.slane %v7161, 2
    %v7163 = vadd.f32 %v7161, %v7162
    %v7164 = vrot.slane %v7163, 1
    %v7165 = vadd.f32 %v7163, %v7164
    %v7166 = vsel %vm1212, %v7085, 0.0
    %v7167 = vsel %vm3492, %v7086, 0.0
    %v7168 = vadd.f32 %v7166, %v7167
    %v7169 = vrot.slane %v7168, 4
    %v7170 = vadd.f32 %v7168, %v7169
    %v7171 = vrot.slane %v7170, 2
    %v7172 = vadd.f32 %v7170, %v7171
    %v7173 = vrot.slane %v7172, 1
    %v7174 = vadd.f32 %v7172, %v7173
    %v7175 = vsel %vm1212, %v7087, 0.0
    %v7176 = vsel %vm3492, %v7088, 0.0
    %v7177 = vadd.f32 %v7175, %v7176
    %v7178 = vrot.slane %v7177, 4
    %v7179 = vadd.f32 %v7177, %v7178
    %v7180 = vrot.slane %v7179, 2
    %v7181 = vadd.f32 %v7179, %v7180
    %v7182 = vrot.slane %v7181, 1
    %v7183 = vadd.f32 %v7181, %v7182
    %v7184 = vsel %vm1212, %v7089, 0.0
    %v7185 = vsel %vm3492, %v7090, 0.0
    %v7186 = vadd.f32 %v7184, %v7185
    %v7187 = vrot.slane %v7186, 4
    %v7188 = vadd.f32 %v7186, %v7187
    %v7189 = vrot.slane %v7188, 2
    %v7190 = vadd.f32 %v7188, %v7189
    %v7191 = vrot.slane %v7190, 1
    %v7192 = vadd.f32 %v7190, %v7191
    %v7193 = vsel %vm1212, %v7091, 0.0
    %v7194 = vsel %vm3492, %v7092, 0.0
    %v7195 = vadd.f32 %v7193, %v7194
    %v7196 = vrot.slane %v7195, 4
    %v7197 = vadd.f32 %v7195, %v7196
    %v7198 = vrot.slane %v7197, 2
    %v7199 = vadd.f32 %v7197, %v7198
    %v7200 = vrot.slane %v7199, 1
    %v7201 = vadd.f32 %v7199, %v7200
    %v7202 = vsel %vm1212, %v7093, 0.0
    %v7203 = vsel %vm3492, %v7094, 0.0
    %v7204 = vadd.f32 %v7202, %v7203
    %v7205 = vrot.slane %v7204, 4
    %v7206 = vadd.f32 %v7204, %v7205
    %v7207 = vrot.slane %v7206, 2
    %v7208 = vadd.f32 %v7206, %v7207
    %v7209 = vrot.slane %v7208, 1
    %v7210 = vadd.f32 %v7208, %v7209
    %v7211 = vsel %vm1212, %v7095, 0.0
    %v7212 = vsel %vm3492, %v7096, 0.0
    %v7213 = vadd.f32 %v7211, %v7212
    %v7214 = vrot.slane %v7213, 4
    %v7215 = vadd.f32 %v7213, %v7214
    %v7216 = vrot.slane %v7215, 2
    %v7217 = vadd.f32 %v7215, %v7216
    %v7218 = vrot.slane %v7217, 1
    %v7219 = vadd.f32 %v7217, %v7218
    %v7220 = vsel %vm1212, %v7097, 0.0
    %v7221 = vsel %vm3492, %v7098, 0.0
    %v7222 = vadd.f32 %v7220, %v7221
    %v7223 = vrot.slane %v7222, 4
    %v7224 = vadd.f32 %v7222, %v7223
    %v7225 = vrot.slane %v7224, 2
    %v7226 = vadd.f32 %v7224, %v7225
    %v7227 = vrot.slane %v7226, 1
    %v7228 = vadd.f32 %v7226, %v7227
    %v7229 = vsel %vm1212, %v7099, 0.0
    %v7230 = vsel %vm3492, %v7100, 0.0
    %v7231 = vadd.f32 %v7229, %v7230
    %v7232 = vrot.slane %v7231, 4
    %v7233 = vadd.f32 %v7231, %v7232
    %v7234 = vrot.slane %v7233, 2
    %v7235 = vadd.f32 %v7233, %v7234
    %v7236 = vrot.slane %v7235, 1
    %v7237 = vadd.f32 %v7235, %v7236
    %v7238 = vsel %vm1212, %v7101, 0.0
    %v7239 = vsel %vm3492, %v7102, 0.0
    %v7240 = vadd.f32 %v7238, %v7239
    %v7241 = vrot.slane %v7240, 4
    %v7242 = vadd.f32 %v7240, %v7241
    %v7243 = vrot.slane %v7242, 2
    %v7244 = vadd.f32 %v7242, %v7243
    %v7245 = vrot.slane %v7244, 1
    %v7246 = vadd.f32 %v7244, %v7245
    %v7263 = vsel %vm6118, %v6944, %v6935
    %v7264 = vsel %vm6120, %v6953, %v7263
    %v7265 = vsel %vm6122, %v6962, %v7264
    %v7266 = vsel %vm6124, %v6971, %v7265
    %v7267 = vsel %vm6126, %v6980, %v7266
    %v7268 = vsel %vm6128, %v6989, %v7267
    %v7269 = vsel %vm6130, %v6998, %v7268
    %v7270 = vsel %vm6118, %v7016, %v7007
    %v7271 = vsel %vm6120, %v7025, %v7270
    %v7272 = vsel %vm6122, %v7034, %v7271
    %v7273 = vsel %vm6124, %v7043, %v7272
    %v7274 = vsel %vm6126, %v7052, %v7273
    %v7275 = vsel %vm6128, %v7061, %v7274
    %v7276 = vsel %vm6130, %v7070, %v7275
    %v7295 = vsel %vm6118, %v7120, %v7111
    %v7296 = vsel %vm6120, %v7129, %v7295
    %v7297 = vsel %vm6122, %v7138, %v7296
    %v7298 = vsel %vm6124, %v7147, %v7297
    %v7299 = vsel %vm6126, %v7156, %v7298
    %v7300 = vsel %vm6128, %v7165, %v7299
    %v7301 = vsel %vm6130, %v7174, %v7300
    %v7302 = vsel %vm6118, %v7192, %v7183
    %v7303 = vsel %vm6120, %v7201, %v7302
    %v7304 = vsel %vm6122, %v7210, %v7303
    %v7305 = vsel %vm6124, %v7219, %v7304
    %v7306 = vsel %vm6126, %v7228, %v7305
    %v7307 = vsel %vm6128, %v7237, %v7306
    %v7308 = vsel %vm6130, %v7246, %v7307
    %7309 = vrot.lane.b32.xlu0 %v7301, 25
    %v7310 = vpop.permute.xlu0 %7309
    %7311 = vrot.lane.b32.xlu0 %v7308, 25
    %v7312 = vpop.permute.xlu0 %7311
    %v7315 = vsel %vm1212, %v7269, %v7310
    %v7316 = vsel %vm1212, %v7276, %v7312
    %7317 = vst.msk [vmem:[#allocation2] sm:$0xff] %vm575, %v7315
    %7318 = vst.msk [vmem:[#allocation2 + $0x8] sm:$0xff] %vm575, %v7316
    // Predicated region
    $region26: #{title_layer_forward.1} parent=1 // pred_check
      _
    $region27: #{title_layer_forward.1} parent=1 // pred_check_branch
      %7320 = sbr.rel (0) target = $region29
    $region28: #{title_layer_forward.1} parent=1 // pred_region
      %s7322 = ssub.s32 256, 256
      %7323 = vsyncadd [#allocation3], %s7322
      %s7324 = sshll.u32 [#allocation2], 4
      %s7325 = int_to_ptr.vmem [resolvable:$true] %s7324
      %7330 = dma.vmem_to_hbm [thread:$0]  %s7325, 256, %s6, [#allocation3], 128, 128, 8
    $region29: #{title_layer_forward.1} parent=1 // pred_fallthru
      _
    // Predicated region
    $region30: #{title_layer_forward.1} parent=1 // pred_check
      _
    $region31: #{title_layer_forward.1} parent=1 // pred_check_branch
      %7332 = sbr.rel (0) target = $region33
    $region32: #{title_layer_forward.1} parent=1 // pred_region
      %7333 = dma.done [#allocation3], 256
    $region33: #{title_layer_forward.1} parent=1 // pred_fallthru
      _
    %7334 = vsyncpa [#allocation3], 1

</llo_original>
